<compile_context>
chip_gen: v7x
topology: tpu7x:2x2x1
jax: 0.10.0
libtpu: 0.0.40
codegen_flags: <defaults>
</compile_context>

<pallas_src>
import jax
import jax.numpy as jnp
from jax import lax
from jax.experimental import pallas as pl
from jax.experimental.pallas import tpu as pltpu

CIN, COUT, KH, KW = 32, 64, 3, 3
H_IN = W_IN = 26
H_CONV = W_CONV = 24                   # 26 - 3 + 1
H_POOL = W_POOL = 12                   # after 2x2 max pool
N_POOL = H_POOL * W_POOL               # 144 pooled positions per image
K_PATCH = KH * KW * CIN                # 288
FC_IN, FC_OUT = COUT * N_POOL, 128     # 9216 -> 128

# Lane-dense packing: two horizontally adjacent pooled positions per matmul row.
N_ROW = H_POOL * (W_POOL // 2)         # 72 packed rows per image
K2 = 2 * K_PATCH                       # 576 (pair of 288-feature patches)
N2 = 2 * COUT                          # 128 output columns -> unmasked full-lane stores


# ---------- kernel 1: conv-as-matmul + bias + ReLU + 2x2 max-pool (fused, 1 matmul) ----
def _conv_pool_kernel(cols_ref, w_ref, b_ref, o_ref):
    # cols_ref: (4*m, 576) bf16 -- the 4 pool-corner im2col blocks of one image group,
    #                              stacked along rows (corner-major, m rows per corner).
    # w_ref:    (576, 128) bf16 -- block-diagonal [[W,0],[0,W]] conv weight.
    # b_ref:    (1, 128)   f32  -- conv bias, duplicated for the position pair.
    # o_ref:    (m, 128)   bf16 -- pooled + ReLU features, lane-dense, (h,w,c) order.
    m = o_ref.shape[0]
    acc = jnp.dot(cols_ref[...], w_ref[...], preferred_element_type=jnp.float32)
    pooled = jnp.maximum(jnp.maximum(acc[0 * m:1 * m], acc[1 * m:2 * m]),
                         jnp.maximum(acc[2 * m:3 * m], acc[3 * m:4 * m]))
    # bias is identical for the 4 window members and ReLU is monotone, so
    # max-then-bias-then-ReLU == pool(ReLU(conv + bias)).
    o_ref[...] = jnp.maximum(pooled + b_ref[...], 0.0).astype(o_ref.dtype)


def conv_pool_relu(cols, w_pair, b_pair, group):
    # cols: (ngroups*4*group*72, 576) bf16, group-major so each grid step reads one slab.
    m = group * N_ROW
    ngroups = cols.shape[0] // (4 * m)
    return pl.pallas_call(
        _conv_pool_kernel,
        out_shape=jax.ShapeDtypeStruct((ngroups * m, N2), jnp.bfloat16),
        grid_spec=pltpu.PrefetchScalarGridSpec(
            num_scalar_prefetch=0,
            grid=(ngroups,),
            in_specs=[
                pl.BlockSpec((4 * m, K2), lambda g: (g, 0)),
                pl.BlockSpec((K2, N2), lambda g: (0, 0)),     # weight stays resident
                pl.BlockSpec((1, N2), lambda g: (0, 0)),
            ],
            out_specs=pl.BlockSpec((m, N2), lambda g: (g, 0)),
        ),
        compiler_params=pltpu.CompilerParams(
            dimension_semantics=("parallel",)),               # shards groups on v7x TCs
    )(cols, w_pair, b_pair)


# ---------- kernel 2: fc1 + bias + ReLU (full-N=128, batch-tiled M) --------------------
def _fc_kernel(x_ref, w_ref, b_ref, o_ref):
    # x_ref: (TB, 9216) bf16; w_ref: (9216, 128) bf16; b_ref: (1, 128) f32
    # o_ref: (TB, 128) f32 -- full-lane stores.
    acc = jnp.dot(x_ref[...], w_ref[...], preferred_element_type=jnp.float32)
    o_ref[...] = jnp.maximum(acc + b_ref[...], 0.0)


def fc_relu(feat, w_fc, b_fc, tile_b):
    # feat: (B, 9216) bf16; w_fc: (9216, 128) bf16; b_fc: (1, 128) f32
    bsz = feat.shape[0]
    return pl.pallas_call(
        _fc_kernel,
        out_shape=jax.ShapeDtypeStruct((bsz, FC_OUT), jnp.float32),
        grid_spec=pltpu.PrefetchScalarGridSpec(
            num_scalar_prefetch=0,
            grid=(bsz // tile_b,),
            in_specs=[
                pl.BlockSpec((tile_b, FC_IN), lambda i: (i, 0)),
                pl.BlockSpec((FC_IN, FC_OUT), lambda i: (0, 0)),   # weight stays resident
                pl.BlockSpec((1, FC_OUT), lambda i: (0, 0)),
            ],
            out_specs=pl.BlockSpec((tile_b, FC_OUT), lambda i: (i, 0)),
        ),
        compiler_params=pltpu.CompilerParams(
            dimension_semantics=("parallel",)),   # >1 batch tile -> megacore on v7x
    )(feat, w_fc, b_fc)


# ------------------------------------ parameters --------------------------------------
def init_params(key):
    # Raw parameters in PyTorch layouts.
    k1, k2, k3, k4 = jax.random.split(key, 4)
    conv_w = jax.random.normal(k1, (COUT, CIN, KH, KW), jnp.float32) * 0.05
    conv_b = jax.random.normal(k2, (COUT,), jnp.float32) * 0.05
    fc_w = jax.random.normal(k3, (FC_OUT, FC_IN), jnp.float32) * 0.02
    fc_b = jax.random.normal(k4, (FC_OUT,), jnp.float32) * 0.02
    return conv_w, conv_b, fc_w, fc_b


def prepare_params(raw):
    # One-time layout/dtype transforms (hoisted out of the per-call forward path).
    conv_w, conv_b, fc_w, fc_b = raw
    # conv weight [cout, cin, kh, kw] -> [(ky, kx, cin), cout]
    w2 = jnp.transpose(conv_w, (2, 3, 1, 0)).reshape(K_PATCH, COUT)
    # Block-diagonal [[W,0],[0,W]] (576,128): each cols row holds TWO adjacent pooled
    # positions' patches, so one matmul row yields 128 lane-dense output columns.
    # (The zero half doubles MXU MACs but the kernel is DMA-bound, not MXU-bound.)
    w_pair = jnp.zeros((K2, N2), jnp.float32)
    w_pair = w_pair.at[:K_PATCH, :COUT].set(w2).at[K_PATCH:, COUT:].set(w2)
    w_pair = w_pair.astype(jnp.bfloat16)                               # (576, 128)
    b_pair = jnp.concatenate([conv_b, conv_b]).reshape(1, N2).astype(jnp.float32)
    # fc weight [128, 9216] with input indexed (c, h, w) (torch.flatten of NCHW):
    # reorder columns to (h, w, c) to match kernel-1's output order, transpose, bf16.
    w_hwc = jnp.transpose(fc_w.reshape(FC_OUT, COUT, H_POOL, W_POOL),
                          (0, 2, 3, 1)).reshape(FC_OUT, FC_IN)
    w_fc = w_hwc.T.astype(jnp.bfloat16)                                # (9216, 128)
    b_fc = fc_b.reshape(1, FC_OUT).astype(jnp.float32)                 # (1, 128)
    return w_pair, b_pair, w_fc, b_fc


# ------------------------------------- tiling choices ----------------------------------
def _pick_conv_group(bsz, cap=8):
    # Images per kernel-1 grid step: largest divisor of B up to `cap`.
    # cap=8 keeps double-buffered cols (~0.35 MiB/img padded) inside even v5e's 16 MiB
    # default scoped-VMEM budget and v7x's 64 MiB physical VMEM, while amortizing the
    # ~0.35 us/step overhead and keeping >=2 steps per TC for B>=16 (v7x megacore).
    g = min(bsz, cap)
    while bsz % g:
        g -= 1
    return g


def _pick_fc_tile(bsz, cap=128):
    # Batch tile for fc1: bounds the resident activation block (~2.25 MiB at TB=128)
    # while the (9216,128) weight stays resident across tiles.
    if bsz <= cap:
        return bsz
    for tb in range(cap, 7, -8):
        if bsz % tb == 0:
            return tb
    return bsz


# -------------------------------------- forward ---------------------------------------
def center_forward(x_nchw, params):
    w_pair, b_pair, w_fc, b_fc = params
    bsz = x_nchw.shape[0]
    group = _pick_conv_group(bsz)
    ngroups = bsz // group

    # XLA glue: NCHW -> NHWC in bf16 immediately (halves glue-chain HBM traffic), then
    # the four 2x2 pool-corner im2col blocks, two adjacent pooled positions packed per
    # row (576 features), laid out group-major so each kernel-1 grid step reads one
    # contiguous (4*group*72, 576) slab.
    # TODO(synk): im2col still materializes ~650 KiB/image in HBM; building the columns
    # in-kernel from the raw 43 KiB/image NHWC block needs strided on-chip gathers that
    # are risky to lower, so it stays as XLA glue.
    x = jnp.transpose(x_nchw, (0, 2, 3, 1)).astype(jnp.bfloat16)       # (B, 26, 26, 32)
    corners = []
    for dh in range(2):
        for dw in range(2):
            taps = [x[:, dh + ky: dh + ky + 2 * H_POOL - 1: 2,
                      dw + kx: dw + kx + 2 * W_POOL - 1: 2, :]
                    for ky in range(KH) for kx in range(KW)]           # each (B,12,12,32)
            c = jnp.concatenate(taps, axis=-1)                         # (B,12,12,288)
            corners.append(c.reshape(bsz, N_ROW, K2))                  # (B,72,576) contig
    cols = jnp.stack(corners, axis=0)                                  # (4,B,72,576)
    cols = cols.reshape(4, ngroups, group * N_ROW, K2)
    cols = jnp.transpose(cols, (1, 0, 2, 3)).reshape(ngroups * 4 * group * N_ROW, K2)

    # Pallas kernel 1: conv + bias + ReLU + 2x2 max-pool (fused, lane-dense output).
    feat = conv_pool_relu(cols, w_pair, b_pair, group)                 # (B*72, 128) bf16
    feat = feat.reshape(bsz, FC_IN)                                    # free: (h,w,c) order

    # TODO(synk): dropout1 / dropout2 are identity here (eval-mode semantics).

    # Pallas kernel 2: fc1 + bias + ReLU.
    return fc_relu(feat, w_fc, b_fc, _pick_fc_tile(bsz))               # (B, 128) f32


# -------------------------------- pure-JAX reference ----------------------------------
def _reference_forward(x_nchw, raw):
    conv_w, conv_b, fc_w, fc_b = raw
    y = lax.conv_general_dilated(x_nchw, conv_w, window_strides=(1, 1),
                                 padding="VALID",
                                 dimension_numbers=("NCHW", "OIHW", "NCHW"))
    y = jnp.maximum(y + conv_b[None, :, None, None], 0.0)
    y = y.reshape(x_nchw.shape[0], COUT, H_POOL, 2, W_POOL, 2).max(axis=(3, 5))
    y = y.reshape(x_nchw.shape[0], FC_IN)                              # (c, h, w) flatten
    return jnp.maximum(y @ fc_w.T + fc_b, 0.0)


if __name__ == "__main__":
    key = jax.random.PRNGKey(0)
    kx, kp = jax.random.split(key)
    # Shapes implied by the module: 32 in-channels, 26x26 spatial so that
    # conv(3x3) -> 24x24, pool -> 12x12, flatten -> 64*12*12 = 9216 = fc1 in.
    x = jax.random.normal(kx, (2, 32, 26, 26), jnp.float32)
    raw = init_params(kp)
    params = prepare_params(raw)         # one-time transform, outside the jitted forward

    out = jax.jit(center_forward)(x, params)
    out = jax.block_until_ready(out)
    assert out.shape == (2, FC_OUT), out.shape
    assert bool(jnp.all(out >= 0.0))     # post-ReLU

    ref = _reference_forward(x, raw)     # f32 reference; kernels use bf16 inputs
    assert bool(jnp.allclose(out, ref, rtol=1e-1, atol=1e-1)), \
        float(jnp.max(jnp.abs(out - ref)))
    print("KERNEL_OK")
</pallas_src>

<mosaic_0001>
module attributes {stable_mosaic.version = 11 : i64} {
  func.func @_conv_pool_kernel(%arg0: i32, %arg1: memref<576x576xbf16, #tpu.memory_space<vmem>>, %arg2: memref<576x128xbf16, #tpu.memory_space<vmem>>, %arg3: memref<1x128xf32, #tpu.memory_space<vmem>>, %arg4: memref<144x128xbf16, #tpu.memory_space<vmem>>) attributes {dimension_semantics = [#tpu.dimension_semantics<parallel>], iteration_bounds = array<i64: 1>, scalar_prefetch = 0 : i64, scratch_operands = 0 : i64, tpu.core_type = #tpu.core_type<tc>, window_params = [{transform_indices = @transform_0, window_bounds = array<i64: 576, 576>}, {pipeline_mode = #tpu.pipeline_mode<synchronous>, transform_indices = @transform_1, window_bounds = array<i64: 576, 128>}, {pipeline_mode = #tpu.pipeline_mode<synchronous>, transform_indices = @transform_2, window_bounds = array<i64: 1, 128>}, {transform_indices = @transform_3, window_bounds = array<i64: 144, 128>}]} {
    %c0 = arith.constant 0 : index
    %c0_0 = arith.constant 0 : index
    %0 = vector.load %arg1[%c0, %c0_0] : memref<576x576xbf16, #tpu.memory_space<vmem>>, vector<576x576xbf16>
    %c0_1 = arith.constant 0 : index
    %c0_2 = arith.constant 0 : index
    %1 = vector.load %arg2[%c0_1, %c0_2] : memref<576x128xbf16, #tpu.memory_space<vmem>>, vector<576x128xbf16>
    %cst = arith.constant dense<0.000000e+00> : vector<576x128xf32>
    %2 = tpu.matmul %0, %1, %cst {dimension_numbers = #tpu.dot_dimension_numbers<[1], [0], [0], [1], [0, 0, 1, 1], [], []>} : vector<576x576xbf16>, vector<576x128xbf16>, vector<576x128xf32> -> vector<576x128xf32>
    %3 = vector.extract_strided_slice %2 {offsets = [0, 0], sizes = [144, 128], strides = [1, 1]} : vector<576x128xf32> to vector<144x128xf32>
    %4 = vector.extract_strided_slice %2 {offsets = [144, 0], sizes = [144, 128], strides = [1, 1]} : vector<576x128xf32> to vector<144x128xf32>
    %5 = arith.maximumf %3, %4 : vector<144x128xf32>
    %6 = vector.extract_strided_slice %2 {offsets = [288, 0], sizes = [144, 128], strides = [1, 1]} : vector<576x128xf32> to vector<144x128xf32>
    %7 = vector.extract_strided_slice %2 {offsets = [432, 0], sizes = [144, 128], strides = [1, 1]} : vector<576x128xf32> to vector<144x128xf32>
    %8 = arith.maximumf %6, %7 : vector<144x128xf32>
    %9 = arith.maximumf %5, %8 : vector<144x128xf32>
    %c0_3 = arith.constant 0 : index
    %c0_4 = arith.constant 0 : index
    %10 = vector.load %arg3[%c0_3, %c0_4] : memref<1x128xf32, #tpu.memory_space<vmem>>, vector<1x128xf32>
    %11 = vector.broadcast %10 : vector<1x128xf32> to vector<144x128xf32>
    %12 = arith.addf %9, %11 : vector<144x128xf32>
    %cst_5 = arith.constant 0.000000e+00 : f32
    %13 = vector.broadcast %cst_5 : f32 to vector<144x128xf32>
    %14 = arith.maximumf %12, %13 : vector<144x128xf32>
    %15 = arith.truncf %14 : vector<144x128xf32> to vector<144x128xbf16>
    %c0_6 = arith.constant 0 : index
    %c0_7 = arith.constant 0 : index
    %16 = vector.load %arg4[%c0_6, %c0_7] : memref<144x128xbf16, #tpu.memory_space<vmem>>, vector<144x128xbf16>
    tpu.vector_store %arg4[%c0_6, %c0_7], %15 {strides = array<i32>} : memref<144x128xbf16, #tpu.memory_space<vmem>>, vector<144x128xbf16>,
    return
  }
  func.func @transform_0(%arg0: i32) -> (i32, i32) {
    %c0_i32 = arith.constant 0 : i32
    %c0_i32_0 = arith.constant 0 : i32
    return %arg0, %c0_i32 : i32, i32
  }
  func.func @transform_1(%arg0: i32) -> (i32, i32) {
    %c0_i32 = arith.constant 0 : i32
    %c0_i32_0 = arith.constant 0 : i32
    %c0_i32_1 = arith.constant 0 : i32
    return %c0_i32, %c0_i32_0 : i32, i32
  }
  func.func @transform_2(%arg0: i32) -> (i32, i32) {
    %c0_i32 = arith.constant 0 : i32
    %c0_i32_0 = arith.constant 0 : i32
    %c0_i32_1 = arith.constant 0 : i32
    return %c0_i32, %c0_i32_0 : i32, i32
  }
  func.func @transform_3(%arg0: i32) -> (i32, i32) {
    %c0_i32 = arith.constant 0 : i32
    %c0_i32_0 = arith.constant 0 : i32
    return %arg0, %c0_i32 : i32, i32
  }
}

module attributes {stable_mosaic.version = 11 : i64} {
  func.func @_fc_kernel(%arg0: i32, %arg1: memref<2x9216xbf16, #tpu.memory_space<vmem>>, %arg2: memref<9216x128xbf16, #tpu.memory_space<vmem>>, %arg3: memref<1x128xf32, #tpu.memory_space<vmem>>, %arg4: memref<2x128xf32, #tpu.memory_space<vmem>>) attributes {dimension_semantics = [#tpu.dimension_semantics<parallel>], iteration_bounds = array<i64: 1>, scalar_prefetch = 0 : i64, scratch_operands = 0 : i64, tpu.core_type = #tpu.core_type<tc>, window_params = [{transform_indices = @transform_0, window_bounds = array<i64: 2, 9216>}, {pipeline_mode = #tpu.pipeline_mode<synchronous>, transform_indices = @transform_1, window_bounds = array<i64: 9216, 128>}, {pipeline_mode = #tpu.pipeline_mode<synchronous>, transform_indices = @transform_2, window_bounds = array<i64: 1, 128>}, {transform_indices = @transform_3, window_bounds = array<i64: 2, 128>}]} {
    %c0 = arith.constant 0 : index
    %c0_0 = arith.constant 0 : index
    %0 = vector.load %arg1[%c0, %c0_0] : memref<2x9216xbf16, #tpu.memory_space<vmem>>, vector<2x9216xbf16>
    %c0_1 = arith.constant 0 : index
    %c0_2 = arith.constant 0 : index
    %1 = vector.load %arg2[%c0_1, %c0_2] : memref<9216x128xbf16, #tpu.memory_space<vmem>>, vector<9216x128xbf16>
    %cst = arith.constant dense<0.000000e+00> : vector<2x128xf32>
    %2 = tpu.matmul %0, %1, %cst {dimension_numbers = #tpu.dot_dimension_numbers<[1], [0], [0], [1], [0, 0, 1, 1], [], []>} : vector<2x9216xbf16>, vector<9216x128xbf16>, vector<2x128xf32> -> vector<2x128xf32>
    %c0_3 = arith.constant 0 : index
    %c0_4 = arith.constant 0 : index
    %3 = vector.load %arg3[%c0_3, %c0_4] : memref<1x128xf32, #tpu.memory_space<vmem>>, vector<1x128xf32>
    %4 = vector.broadcast %3 : vector<1x128xf32> to vector<2x128xf32>
    %5 = arith.addf %2, %4 : vector<2x128xf32>
    %cst_5 = arith.constant 0.000000e+00 : f32
    %6 = vector.broadcast %cst_5 : f32 to vector<2x128xf32>
    %7 = arith.maximumf %5, %6 : vector<2x128xf32>
    %c0_6 = arith.constant 0 : index
    %c0_7 = arith.constant 0 : index
    %8 = vector.load %arg4[%c0_6, %c0_7] : memref<2x128xf32, #tpu.memory_space<vmem>>, vector<2x128xf32>
    tpu.vector_store %arg4[%c0_6, %c0_7], %7 {strides = array<i32>} : memref<2x128xf32, #tpu.memory_space<vmem>>, vector<2x128xf32>,
    return
  }
  func.func @transform_0(%arg0: i32) -> (i32, i32) {
    %c0_i32 = arith.constant 0 : i32
    %c0_i32_0 = arith.constant 0 : i32
    return %arg0, %c0_i32 : i32, i32
  }
  func.func @transform_1(%arg0: i32) -> (i32, i32) {
    %c0_i32 = arith.constant 0 : i32
    %c0_i32_0 = arith.constant 0 : i32
    %c0_i32_1 = arith.constant 0 : i32
    return %c0_i32, %c0_i32_0 : i32, i32
  }
  func.func @transform_2(%arg0: i32) -> (i32, i32) {
    %c0_i32 = arith.constant 0 : i32
    %c0_i32_0 = arith.constant 0 : i32
    %c0_i32_1 = arith.constant 0 : i32
    return %c0_i32, %c0_i32_0 : i32, i32
  }
  func.func @transform_3(%arg0: i32) -> (i32, i32) {
    %c0_i32 = arith.constant 0 : i32
    %c0_i32_0 = arith.constant 0 : i32
    return %arg0, %c0_i32 : i32, i32
  }
}

</mosaic_0001>

<llo_original>
// kernel: center_forward.2
$region0: #{center_forward.2}
  #allocation0 [shape = 'u32[]', space=smem, size = 0x4, offset = 0x4, fixed_abs, tag = 'smem constant byte address 0x4 - core index']
  #allocation1 [shape = 'u32[144,128]{1,0:T(1,128)}', space=vmem, size = 0x12000, scoped, tag = 'internal scratch']
  %s0 = inlined_call_operand.vmem [shape: bf16[576,576], index: 0, kind: input, shape index: {}]
  %s1 = inlined_call_operand.vmem [shape: bf16[576,128], index: 1, kind: input, shape index: {}]
  %s2 = inlined_call_operand.vmem [shape: f32[1,128], index: 2, kind: input, shape index: {}]
  %s3 = inlined_call_operand.vmem [shape: bf16[144,128], index: 3, kind: output, shape index: {}]
  %s4 = sld [smem:[#allocation0]]
  $region22: #{center_forward.2} parent=0
    _
  %s6 = ssub.s32 1, %s4
  %s7 = scalar_select 0, %s6, %s4
  // Predicated region
  $region2: #{center_forward.2} parent=0 // pred_check
    _
  $region3: #{center_forward.2} parent=0 // pred_check_branch
    %9 = sbr.rel (0) target = $region5
  $region4: #{center_forward.2} parent=0 // pred_region
    _
  $region5: #{center_forward.2} parent=0 // pred_fallthru
    _
  // Predicated region
  $region6: #{center_forward.2} parent=0 // pred_check
    _
  $region7: #{center_forward.2} parent=0 // pred_check_branch
    %11 = sbr.rel (0) target = $region9
  $region8: #{center_forward.2} parent=0 // pred_region
    _
  $region9: #{center_forward.2} parent=0 // pred_fallthru
    _
  // Predicated region
  $region10: #{center_forward.2} parent=0 // pred_check
    _
  $region11: #{center_forward.2} parent=0 // pred_check_branch
    %13 = sbr.rel (0) target = $region13
  $region12: #{center_forward.2} parent=0 // pred_region
    _
  $region13: #{center_forward.2} parent=0 // pred_fallthru
    _
  %v15 = vld [vmem:[%s0] sm:$0xff]
  %v16 = vld [vmem:[%s0 + $0x8] sm:$0xff]
  %v17 = vld [vmem:[%s0 + $0x10] sm:$0xf]
  %v18 = vld [vmem:[%s0 + $0x14] sm:$0xff]
  %v19 = vld [vmem:[%s0 + $0x1c] sm:$0xff]
  %v20 = vld [vmem:[%s0 + $0x24] sm:$0xf]
  %v21 = vld [vmem:[%s0 + $0x28] sm:$0xff]
  %v22 = vld [vmem:[%s0 + $0x30] sm:$0xff]
  %v23 = vld [vmem:[%s0 + $0x38] sm:$0xf]
  %v24 = vld [vmem:[%s0 + $0x3c] sm:$0xff]
  %v25 = vld [vmem:[%s0 + $0x44] sm:$0xff]
  %v26 = vld [vmem:[%s0 + $0x4c] sm:$0xf]
  %v27 = vld [vmem:[%s0 + $0x50] sm:$0xff]
  %v28 = vld [vmem:[%s0 + $0x58] sm:$0xff]
  %v29 = vld [vmem:[%s0 + $0x60] sm:$0xf]
  %v30 = vld [vmem:[%s0 + $0x64] sm:$0xff]
  %v31 = vld [vmem:[%s0 + $0x6c] sm:$0xff]
  %v32 = vld [vmem:[%s0 + $0x74] sm:$0xf]
  %v33 = vld [vmem:[%s0 + $0x78] sm:$0xff]
  %v34 = vld [vmem:[%s0 + $0x80] sm:$0xff]
  %v35 = vld [vmem:[%s0 + $0x88] sm:$0xf]
  %v36 = vld [vmem:[%s0 + $0x8c] sm:$0xff]
  %v37 = vld [vmem:[%s0 + $0x94] sm:$0xff]
  %v38 = vld [vmem:[%s0 + $0x9c] sm:$0xf]
  %v39 = vld [vmem:[%s0 + $0xa0] sm:$0xff]
  %v40 = vld [vmem:[%s0 + $0xa8] sm:$0xff]
  %v41 = vld [vmem:[%s0 + $0xb0] sm:$0xf]
  %v42 = vld [vmem:[%s0 + $0xb4] sm:$0xff]
  %v43 = vld [vmem:[%s0 + $0xbc] sm:$0xff]
  %v44 = vld [vmem:[%s0 + $0xc4] sm:$0xf]
  %v45 = vld [vmem:[%s0 + $0xc8] sm:$0xff]
  %v46 = vld [vmem:[%s0 + $0xd0] sm:$0xff]
  %v47 = vld [vmem:[%s0 + $0xd8] sm:$0xf]
  %v48 = vld [vmem:[%s0 + $0xdc] sm:$0xff]
  %v49 = vld [vmem:[%s0 + $0xe4] sm:$0xff]
  %v50 = vld [vmem:[%s0 + $0xec] sm:$0xf]
  %v51 = vld [vmem:[%s0 + $0xf0] sm:$0xff]
  %v52 = vld [vmem:[%s0 + $0xf8] sm:$0xff]
  %v53 = vld [vmem:[%s0 + $0x100] sm:$0xf]
  %v54 = vld [vmem:[%s0 + $0x104] sm:$0xff]
  %v55 = vld [vmem:[%s0 + $0x10c] sm:$0xff]
  %v56 = vld [vmem:[%s0 + $0x114] sm:$0xf]
  %v57 = vld [vmem:[%s0 + $0x118] sm:$0xff]
  %v58 = vld [vmem:[%s0 + $0x120] sm:$0xff]
  %v59 = vld [vmem:[%s0 + $0x128] sm:$0xf]
  %v60 = vld [vmem:[%s0 + $0x12c] sm:$0xff]
  %v61 = vld [vmem:[%s0 + $0x134] sm:$0xff]
  %v62 = vld [vmem:[%s0 + $0x13c] sm:$0xf]
  %v63 = vld [vmem:[%s0 + $0x140] sm:$0xff]
  %v64 = vld [vmem:[%s0 + $0x148] sm:$0xff]
  %v65 = vld [vmem:[%s0 + $0x150] sm:$0xf]
  %v66 = vld [vmem:[%s0 + $0x154] sm:$0xff]
  %v67 = vld [vmem:[%s0 + $0x15c] sm:$0xff]
  %v68 = vld [vmem:[%s0 + $0x164] sm:$0xf]
  %v69 = vld [vmem:[%s0 + $0x168] sm:$0xff]
  %v70 = vld [vmem:[%s0 + $0x170] sm:$0xff]
  %v71 = vld [vmem:[%s0 + $0x178] sm:$0xf]
  %v72 = vld [vmem:[%s0 + $0x17c] sm:$0xff]
  %v73 = vld [vmem:[%s0 + $0x184] sm:$0xff]
  %v74 = vld [vmem:[%s0 + $0x18c] sm:$0xf]
  %v75 = vld [vmem:[%s0 + $0x190] sm:$0xff]
  %v76 = vld [vmem:[%s0 + $0x198] sm:$0xff]
  %v77 = vld [vmem:[%s0 + $0x1a0] sm:$0xf]
  %v78 = vld [vmem:[%s0 + $0x1a4] sm:$0xff]
  %v79 = vld [vmem:[%s0 + $0x1ac] sm:$0xff]
  %v80 = vld [vmem:[%s0 + $0x1b4] sm:$0xf]
  %v81 = vld [vmem:[%s0 + $0x1b8] sm:$0xff]
  %v82 = vld [vmem:[%s0 + $0x1c0] sm:$0xff]
  %v83 = vld [vmem:[%s0 + $0x1c8] sm:$0xf]
  %v84 = vld [vmem:[%s0 + $0x1cc] sm:$0xff]
  %v85 = vld [vmem:[%s0 + $0x1d4] sm:$0xff]
  %v86 = vld [vmem:[%s0 + $0x1dc] sm:$0xf]
  %v87 = vld [vmem:[%s0 + $0x1e0] sm:$0xff]
  %v88 = vld [vmem:[%s0 + $0x1e8] sm:$0xff]
  %v89 = vld [vmem:[%s0 + $0x1f0] sm:$0xf]
  %v90 = vld [vmem:[%s0 + $0x1f4] sm:$0xff]
  %v91 = vld [vmem:[%s0 + $0x1fc] sm:$0xff]
  %v92 = vld [vmem:[%s0 + $0x204] sm:$0xf]
  %v93 = vld [vmem:[%s0 + $0x208] sm:$0xff]
  %v94 = vld [vmem:[%s0 + $0x210] sm:$0xff]
  %v95 = vld [vmem:[%s0 + $0x218] sm:$0xf]
  %v96 = vld [vmem:[%s0 + $0x21c] sm:$0xff]
  %v97 = vld [vmem:[%s0 + $0x224] sm:$0xff]
  %v98 = vld [vmem:[%s0 + $0x22c] sm:$0xf]
  %v99 = vld [vmem:[%s0 + $0x230] sm:$0xff]
  %v100 = vld [vmem:[%s0 + $0x238] sm:$0xff]
  %v101 = vld [vmem:[%s0 + $0x240] sm:$0xf]
  %v102 = vld [vmem:[%s0 + $0x244] sm:$0xff]
  %v103 = vld [vmem:[%s0 + $0x24c] sm:$0xff]
  %v104 = vld [vmem:[%s0 + $0x254] sm:$0xf]
  %v105 = vld [vmem:[%s0 + $0x258] sm:$0xff]
  %v106 = vld [vmem:[%s0 + $0x260] sm:$0xff]
  %v107 = vld [vmem:[%s0 + $0x268] sm:$0xf]
  %v108 = vld [vmem:[%s0 + $0x26c] sm:$0xff]
  %v109 = vld [vmem:[%s0 + $0x274] sm:$0xff]
  %v110 = vld [vmem:[%s0 + $0x27c] sm:$0xf]
  %v111 = vld [vmem:[%s0 + $0x280] sm:$0xff]
  %v112 = vld [vmem:[%s0 + $0x288] sm:$0xff]
  %v113 = vld [vmem:[%s0 + $0x290] sm:$0xf]
  %v114 = vld [vmem:[%s0 + $0x294] sm:$0xff]
  %v115 = vld [vmem:[%s0 + $0x29c] sm:$0xff]
  %v116 = vld [vmem:[%s0 + $0x2a4] sm:$0xf]
  %v117 = vld [vmem:[%s0 + $0x2a8] sm:$0xff]
  %v118 = vld [vmem:[%s0 + $0x2b0] sm:$0xff]
  %v119 = vld [vmem:[%s0 + $0x2b8] sm:$0xf]
  %v120 = vld [vmem:[%s0 + $0x2bc] sm:$0xff]
  %v121 = vld [vmem:[%s0 + $0x2c4] sm:$0xff]
  %v122 = vld [vmem:[%s0 + $0x2cc] sm:$0xf]
  %v123 = vld [vmem:[%s0 + $0x2d0] sm:$0xff]
  %v124 = vld [vmem:[%s0 + $0x2d8] sm:$0xff]
  %v125 = vld [vmem:[%s0 + $0x2e0] sm:$0xf]
  %v126 = vld [vmem:[%s0 + $0x2e4] sm:$0xff]
  %v127 = vld [vmem:[%s0 + $0x2ec] sm:$0xff]
  %v128 = vld [vmem:[%s0 + $0x2f4] sm:$0xf]
  %v129 = vld [vmem:[%s0 + $0x2f8] sm:$0xff]
  %v130 = vld [vmem:[%s0 + $0x300] sm:$0xff]
  %v131 = vld [vmem:[%s0 + $0x308] sm:$0xf]
  %v132 = vld [vmem:[%s0 + $0x30c] sm:$0xff]
  %v133 = vld [vmem:[%s0 + $0x314] sm:$0xff]
  %v134 = vld [vmem:[%s0 + $0x31c] sm:$0xf]
  %v135 = vld [vmem:[%s0 + $0x320] sm:$0xff]
  %v136 = vld [vmem:[%s0 + $0x328] sm:$0xff]
  %v137 = vld [vmem:[%s0 + $0x330] sm:$0xf]
  %v138 = vld [vmem:[%s0 + $0x334] sm:$0xff]
  %v139 = vld [vmem:[%s0 + $0x33c] sm:$0xff]
  %v140 = vld [vmem:[%s0 + $0x344] sm:$0xf]
  %v141 = vld [vmem:[%s0 + $0x348] sm:$0xff]
  %v142 = vld [vmem:[%s0 + $0x350] sm:$0xff]
  %v143 = vld [vmem:[%s0 + $0x358] sm:$0xf]
  %v144 = vld [vmem:[%s0 + $0x35c] sm:$0xff]
  %v145 = vld [vmem:[%s0 + $0x364] sm:$0xff]
  %v146 = vld [vmem:[%s0 + $0x36c] sm:$0xf]
  %v147 = vld [vmem:[%s0 + $0x370] sm:$0xff]
  %v148 = vld [vmem:[%s0 + $0x378] sm:$0xff]
  %v149 = vld [vmem:[%s0 + $0x380] sm:$0xf]
  %v150 = vld [vmem:[%s0 + $0x384] sm:$0xff]
  %v151 = vld [vmem:[%s0 + $0x38c] sm:$0xff]
  %v152 = vld [vmem:[%s0 + $0x394] sm:$0xf]
  %v153 = vld [vmem:[%s0 + $0x398] sm:$0xff]
  %v154 = vld [vmem:[%s0 + $0x3a0] sm:$0xff]
  %v155 = vld [vmem:[%s0 + $0x3a8] sm:$0xf]
  %v156 = vld [vmem:[%s0 + $0x3ac] sm:$0xff]
  %v157 = vld [vmem:[%s0 + $0x3b4] sm:$0xff]
  %v158 = vld [vmem:[%s0 + $0x3bc] sm:$0xf]
  %v159 = vld [vmem:[%s0 + $0x3c0] sm:$0xff]
  %v160 = vld [vmem:[%s0 + $0x3c8] sm:$0xff]
  %v161 = vld [vmem:[%s0 + $0x3d0] sm:$0xf]
  %v162 = vld [vmem:[%s0 + $0x3d4] sm:$0xff]
  %v163 = vld [vmem:[%s0 + $0x3dc] sm:$0xff]
  %v164 = vld [vmem:[%s0 + $0x3e4] sm:$0xf]
  %v165 = vld [vmem:[%s0 + $0x3e8] sm:$0xff]
  %v166 = vld [vmem:[%s0 + $0x3f0] sm:$0xff]
  %v167 = vld [vmem:[%s0 + $0x3f8] sm:$0xf]
  %v168 = vld [vmem:[%s0 + $0x3fc] sm:$0xff]
  %v169 = vld [vmem:[%s0 + $0x404] sm:$0xff]
  %v170 = vld [vmem:[%s0 + $0x40c] sm:$0xf]
  %v171 = vld [vmem:[%s0 + $0x410] sm:$0xff]
  %v172 = vld [vmem:[%s0 + $0x418] sm:$0xff]
  %v173 = vld [vmem:[%s0 + $0x420] sm:$0xf]
  %v174 = vld [vmem:[%s0 + $0x424] sm:$0xff]
  %v175 = vld [vmem:[%s0 + $0x42c] sm:$0xff]
  %v176 = vld [vmem:[%s0 + $0x434] sm:$0xf]
  %v177 = vld [vmem:[%s0 + $0x438] sm:$0xff]
  %v178 = vld [vmem:[%s0 + $0x440] sm:$0xff]
  %v179 = vld [vmem:[%s0 + $0x448] sm:$0xf]
  %v180 = vld [vmem:[%s0 + $0x44c] sm:$0xff]
  %v181 = vld [vmem:[%s0 + $0x454] sm:$0xff]
  %v182 = vld [vmem:[%s0 + $0x45c] sm:$0xf]
  %v183 = vld [vmem:[%s0 + $0x460] sm:$0xff]
  %v184 = vld [vmem:[%s0 + $0x468] sm:$0xff]
  %v185 = vld [vmem:[%s0 + $0x470] sm:$0xf]
  %v186 = vld [vmem:[%s0 + $0x474] sm:$0xff]
  %v187 = vld [vmem:[%s0 + $0x47c] sm:$0xff]
  %v188 = vld [vmem:[%s0 + $0x484] sm:$0xf]
  %v189 = vld [vmem:[%s0 + $0x488] sm:$0xff]
  %v190 = vld [vmem:[%s0 + $0x490] sm:$0xff]
  %v191 = vld [vmem:[%s0 + $0x498] sm:$0xf]
  %v192 = vld [vmem:[%s0 + $0x49c] sm:$0xff]
  %v193 = vld [vmem:[%s0 + $0x4a4] sm:$0xff]
  %v194 = vld [vmem:[%s0 + $0x4ac] sm:$0xf]
  %v195 = vld [vmem:[%s0 + $0x4b0] sm:$0xff]
  %v196 = vld [vmem:[%s0 + $0x4b8] sm:$0xff]
  %v197 = vld [vmem:[%s0 + $0x4c0] sm:$0xf]
  %v198 = vld [vmem:[%s0 + $0x4c4] sm:$0xff]
  %v199 = vld [vmem:[%s0 + $0x4cc] sm:$0xff]
  %v200 = vld [vmem:[%s0 + $0x4d4] sm:$0xf]
  %v201 = vld [vmem:[%s0 + $0x4d8] sm:$0xff]
  %v202 = vld [vmem:[%s0 + $0x4e0] sm:$0xff]
  %v203 = vld [vmem:[%s0 + $0x4e8] sm:$0xf]
  %v204 = vld [vmem:[%s0 + $0x4ec] sm:$0xff]
  %v205 = vld [vmem:[%s0 + $0x4f4] sm:$0xff]
  %v206 = vld [vmem:[%s0 + $0x4fc] sm:$0xf]
  %v207 = vld [vmem:[%s0 + $0x500] sm:$0xff]
  %v208 = vld [vmem:[%s0 + $0x508] sm:$0xff]
  %v209 = vld [vmem:[%s0 + $0x510] sm:$0xf]
  %v210 = vld [vmem:[%s0 + $0x514] sm:$0xff]
  %v211 = vld [vmem:[%s0 + $0x51c] sm:$0xff]
  %v212 = vld [vmem:[%s0 + $0x524] sm:$0xf]
  %v213 = vld [vmem:[%s0 + $0x528] sm:$0xff]
  %v214 = vld [vmem:[%s0 + $0x530] sm:$0xff]
  %v215 = vld [vmem:[%s0 + $0x538] sm:$0xf]
  %v216 = vld [vmem:[%s0 + $0x53c] sm:$0xff]
  %v217 = vld [vmem:[%s0 + $0x544] sm:$0xff]
  %v218 = vld [vmem:[%s0 + $0x54c] sm:$0xf]
  %v219 = vld [vmem:[%s0 + $0x550] sm:$0xff]
  %v220 = vld [vmem:[%s0 + $0x558] sm:$0xff]
  %v221 = vld [vmem:[%s0 + $0x560] sm:$0xf]
  %v222 = vld [vmem:[%s0 + $0x564] sm:$0xff]
  %v223 = vld [vmem:[%s0 + $0x56c] sm:$0xff]
  %v224 = vld [vmem:[%s0 + $0x574] sm:$0xf]
  %v225 = vld [vmem:[%s0 + $0x578] sm:$0xff]
  %v226 = vld [vmem:[%s0 + $0x580] sm:$0xff]
  %v227 = vld [vmem:[%s0 + $0x588] sm:$0xf]
  %v228 = vld [vmem:[%s0 + $0x58c] sm:$0xff]
  %v229 = vld [vmem:[%s0 + $0x594] sm:$0xff]
  %v230 = vld [vmem:[%s0 + $0x59c] sm:$0xf]
  %v231 = vld [vmem:[%s1] sm:$0xf]
  %v232 = vld [vmem:[%s1 + $0x4] sm:$0xf]
  %v233 = vld [vmem:[%s1 + $0x8] sm:$0xf]
  %v234 = vld [vmem:[%s1 + $0xc] sm:$0xf]
  %v235 = vld [vmem:[%s1 + $0x10] sm:$0xf]
  %v236 = vld [vmem:[%s1 + $0x14] sm:$0xf]
  %v237 = vld [vmem:[%s1 + $0x18] sm:$0xf]
  %v238 = vld [vmem:[%s1 + $0x1c] sm:$0xf]
  %v239 = vld [vmem:[%s1 + $0x20] sm:$0xf]
  %v240 = vld [vmem:[%s1 + $0x24] sm:$0xf]
  %v241 = vld [vmem:[%s1 + $0x28] sm:$0xf]
  %v242 = vld [vmem:[%s1 + $0x2c] sm:$0xf]
  %v243 = vld [vmem:[%s1 + $0x30] sm:$0xf]
  %v244 = vld [vmem:[%s1 + $0x34] sm:$0xf]
  %v245 = vld [vmem:[%s1 + $0x38] sm:$0xf]
  %v246 = vld [vmem:[%s1 + $0x3c] sm:$0xf]
  %v247 = vld [vmem:[%s1 + $0x40] sm:$0xf]
  %v248 = vld [vmem:[%s1 + $0x44] sm:$0xf]
  %v249 = vld [vmem:[%s1 + $0x48] sm:$0xf]
  %v250 = vld [vmem:[%s1 + $0x4c] sm:$0xf]
  %v251 = vld [vmem:[%s1 + $0x50] sm:$0xf]
  %v252 = vld [vmem:[%s1 + $0x54] sm:$0xf]
  %v253 = vld [vmem:[%s1 + $0x58] sm:$0xf]
  %v254 = vld [vmem:[%s1 + $0x5c] sm:$0xf]
  %v255 = vld [vmem:[%s1 + $0x60] sm:$0xf]
  %v256 = vld [vmem:[%s1 + $0x64] sm:$0xf]
  %v257 = vld [vmem:[%s1 + $0x68] sm:$0xf]
  %v258 = vld [vmem:[%s1 + $0x6c] sm:$0xf]
  %v259 = vld [vmem:[%s1 + $0x70] sm:$0xf]
  %v260 = vld [vmem:[%s1 + $0x74] sm:$0xf]
  %v261 = vld [vmem:[%s1 + $0x78] sm:$0xf]
  %v262 = vld [vmem:[%s1 + $0x7c] sm:$0xf]
  %v263 = vld [vmem:[%s1 + $0x80] sm:$0xf]
  %v264 = vld [vmem:[%s1 + $0x84] sm:$0xf]
  %v265 = vld [vmem:[%s1 + $0x88] sm:$0xf]
  %v266 = vld [vmem:[%s1 + $0x8c] sm:$0xf]
  %v267 = vld [vmem:[%s1 + $0x90] sm:$0xf]
  %v268 = vld [vmem:[%s1 + $0x94] sm:$0xf]
  %v269 = vld [vmem:[%s1 + $0x98] sm:$0xf]
  %v270 = vld [vmem:[%s1 + $0x9c] sm:$0xf]
  %v271 = vld [vmem:[%s1 + $0xa0] sm:$0xf]
  %v272 = vld [vmem:[%s1 + $0xa4] sm:$0xf]
  %v273 = vld [vmem:[%s1 + $0xa8] sm:$0xf]
  %v274 = vld [vmem:[%s1 + $0xac] sm:$0xf]
  %v275 = vld [vmem:[%s1 + $0xb0] sm:$0xf]
  %v276 = vld [vmem:[%s1 + $0xb4] sm:$0xf]
  %v277 = vld [vmem:[%s1 + $0xb8] sm:$0xf]
  %v278 = vld [vmem:[%s1 + $0xbc] sm:$0xf]
  %v279 = vld [vmem:[%s1 + $0xc0] sm:$0xf]
  %v280 = vld [vmem:[%s1 + $0xc4] sm:$0xf]
  %v281 = vld [vmem:[%s1 + $0xc8] sm:$0xf]
  %v282 = vld [vmem:[%s1 + $0xcc] sm:$0xf]
  %v283 = vld [vmem:[%s1 + $0xd0] sm:$0xf]
  %v284 = vld [vmem:[%s1 + $0xd4] sm:$0xf]
  %v285 = vld [vmem:[%s1 + $0xd8] sm:$0xf]
  %v286 = vld [vmem:[%s1 + $0xdc] sm:$0xf]
  %v287 = vld [vmem:[%s1 + $0xe0] sm:$0xf]
  %v288 = vld [vmem:[%s1 + $0xe4] sm:$0xf]
  %v289 = vld [vmem:[%s1 + $0xe8] sm:$0xf]
  %v290 = vld [vmem:[%s1 + $0xec] sm:$0xf]
  %v291 = vld [vmem:[%s1 + $0xf0] sm:$0xf]
  %v292 = vld [vmem:[%s1 + $0xf4] sm:$0xf]
  %v293 = vld [vmem:[%s1 + $0xf8] sm:$0xf]
  %v294 = vld [vmem:[%s1 + $0xfc] sm:$0xf]
  %v295 = vld [vmem:[%s1 + $0x100] sm:$0xf]
  %v296 = vld [vmem:[%s1 + $0x104] sm:$0xf]
  %v297 = vld [vmem:[%s1 + $0x108] sm:$0xf]
  %v298 = vld [vmem:[%s1 + $0x10c] sm:$0xf]
  %v299 = vld [vmem:[%s1 + $0x110] sm:$0xf]
  %v300 = vld [vmem:[%s1 + $0x114] sm:$0xf]
  %v301 = vld [vmem:[%s1 + $0x118] sm:$0xf]
  %v302 = vld [vmem:[%s1 + $0x11c] sm:$0xf]
  %v519 = vunpack.c.l.b16 %v15
  %v520 = vunpack.c.h.b16 %v15
  %v521 = vunpack.c.l.b16 %v16
  %v522 = vunpack.c.h.b16 %v16
  %v523 = vunpack.c.l.b16 %v17
  %v524 = vunpack.c.l.b16 %v18
  %v525 = vunpack.c.h.b16 %v18
  %v526 = vunpack.c.l.b16 %v19
  %v527 = vunpack.c.h.b16 %v19
  %v528 = vunpack.c.l.b16 %v20
  %v529 = vunpack.c.l.b16 %v21
  %v530 = vunpack.c.h.b16 %v21
  %v531 = vunpack.c.l.b16 %v22
  %v532 = vunpack.c.h.b16 %v22
  %v533 = vunpack.c.l.b16 %v23
  %v534 = vunpack.c.l.b16 %v24
  %v535 = vunpack.c.h.b16 %v24
  %v536 = vunpack.c.l.b16 %v25
  %v537 = vunpack.c.h.b16 %v25
  %v538 = vunpack.c.l.b16 %v26
  %v539 = vunpack.c.l.b16 %v27
  %v540 = vunpack.c.h.b16 %v27
  %v541 = vunpack.c.l.b16 %v28
  %v542 = vunpack.c.h.b16 %v28
  %v543 = vunpack.c.l.b16 %v29
  %v544 = vunpack.c.l.b16 %v30
  %v545 = vunpack.c.h.b16 %v30
  %v546 = vunpack.c.l.b16 %v31
  %v547 = vunpack.c.h.b16 %v31
  %v548 = vunpack.c.l.b16 %v32
  %v549 = vunpack.c.l.b16 %v33
  %v550 = vunpack.c.h.b16 %v33
  %v551 = vunpack.c.l.b16 %v34
  %v552 = vunpack.c.h.b16 %v34
  %v553 = vunpack.c.l.b16 %v35
  %v554 = vunpack.c.l.b16 %v36
  %v555 = vunpack.c.h.b16 %v36
  %v556 = vunpack.c.l.b16 %v37
  %v557 = vunpack.c.h.b16 %v37
  %v558 = vunpack.c.l.b16 %v38
  %v559 = vunpack.c.l.b16 %v39
  %v560 = vunpack.c.h.b16 %v39
  %v561 = vunpack.c.l.b16 %v40
  %v562 = vunpack.c.h.b16 %v40
  %v563 = vunpack.c.l.b16 %v41
  %v564 = vunpack.c.l.b16 %v42
  %v565 = vunpack.c.h.b16 %v42
  %v566 = vunpack.c.l.b16 %v43
  %v567 = vunpack.c.h.b16 %v43
  %v568 = vunpack.c.l.b16 %v44
  %v569 = vunpack.c.l.b16 %v45
  %v570 = vunpack.c.h.b16 %v45
  %v571 = vunpack.c.l.b16 %v46
  %v572 = vunpack.c.h.b16 %v46
  %v573 = vunpack.c.l.b16 %v47
  %v574 = vunpack.c.l.b16 %v48
  %v575 = vunpack.c.h.b16 %v48
  %v576 = vunpack.c.l.b16 %v49
  %v577 = vunpack.c.h.b16 %v49
  %v578 = vunpack.c.l.b16 %v50
  %v579 = vunpack.c.l.b16 %v51
  %v580 = vunpack.c.h.b16 %v51
  %v581 = vunpack.c.l.b16 %v52
  %v582 = vunpack.c.h.b16 %v52
  %v583 = vunpack.c.l.b16 %v53
  %v584 = vunpack.c.l.b16 %v54
  %v585 = vunpack.c.h.b16 %v54
  %v586 = vunpack.c.l.b16 %v55
  %v587 = vunpack.c.h.b16 %v55
  %v588 = vunpack.c.l.b16 %v56
  %v589 = vunpack.c.l.b16 %v57
  %v590 = vunpack.c.h.b16 %v57
  %v591 = vunpack.c.l.b16 %v58
  %v592 = vunpack.c.h.b16 %v58
  %v593 = vunpack.c.l.b16 %v59
  %v594 = vunpack.c.l.b16 %v60
  %v595 = vunpack.c.h.b16 %v60
  %v596 = vunpack.c.l.b16 %v61
  %v597 = vunpack.c.h.b16 %v61
  %v598 = vunpack.c.l.b16 %v62
  %v599 = vunpack.c.l.b16 %v63
  %v600 = vunpack.c.h.b16 %v63
  %v601 = vunpack.c.l.b16 %v64
  %v602 = vunpack.c.h.b16 %v64
  %v603 = vunpack.c.l.b16 %v65
  %v604 = vunpack.c.l.b16 %v66
  %v605 = vunpack.c.h.b16 %v66
  %v606 = vunpack.c.l.b16 %v67
  %v607 = vunpack.c.h.b16 %v67
  %v608 = vunpack.c.l.b16 %v68
  %v609 = vunpack.c.l.b16 %v69
  %v610 = vunpack.c.h.b16 %v69
  %v611 = vunpack.c.l.b16 %v70
  %v612 = vunpack.c.h.b16 %v70
  %v613 = vunpack.c.l.b16 %v71
  %v614 = vunpack.c.l.b16 %v72
  %v615 = vunpack.c.h.b16 %v72
  %v616 = vunpack.c.l.b16 %v73
  %v617 = vunpack.c.h.b16 %v73
  %v618 = vunpack.c.l.b16 %v74
  %v619 = vunpack.c.l.b16 %v75
  %v620 = vunpack.c.h.b16 %v75
  %v621 = vunpack.c.l.b16 %v76
  %v622 = vunpack.c.h.b16 %v76
  %v623 = vunpack.c.l.b16 %v77
  %v624 = vunpack.c.l.b16 %v78
  %v625 = vunpack.c.h.b16 %v78
  %v626 = vunpack.c.l.b16 %v79
  %v627 = vunpack.c.h.b16 %v79
  %v628 = vunpack.c.l.b16 %v80
  %v629 = vunpack.c.l.b16 %v81
  %v630 = vunpack.c.h.b16 %v81
  %v631 = vunpack.c.l.b16 %v82
  %v632 = vunpack.c.h.b16 %v82
  %v633 = vunpack.c.l.b16 %v83
  %v634 = vunpack.c.l.b16 %v84
  %v635 = vunpack.c.h.b16 %v84
  %v636 = vunpack.c.l.b16 %v85
  %v637 = vunpack.c.h.b16 %v85
  %v638 = vunpack.c.l.b16 %v86
  %v639 = vunpack.c.l.b16 %v87
  %v640 = vunpack.c.h.b16 %v87
  %v641 = vunpack.c.l.b16 %v88
  %v642 = vunpack.c.h.b16 %v88
  %v643 = vunpack.c.l.b16 %v89
  %v644 = vunpack.c.l.b16 %v90
  %v645 = vunpack.c.h.b16 %v90
  %v646 = vunpack.c.l.b16 %v91
  %v647 = vunpack.c.h.b16 %v91
  %v648 = vunpack.c.l.b16 %v92
  %v649 = vunpack.c.l.b16 %v93
  %v650 = vunpack.c.h.b16 %v93
  %v651 = vunpack.c.l.b16 %v94
  %v652 = vunpack.c.h.b16 %v94
  %v653 = vunpack.c.l.b16 %v95
  %v654 = vunpack.c.l.b16 %v96
  %v655 = vunpack.c.h.b16 %v96
  %v656 = vunpack.c.l.b16 %v97
  %v657 = vunpack.c.h.b16 %v97
  %v658 = vunpack.c.l.b16 %v98
  %v659 = vunpack.c.l.b16 %v99
  %v660 = vunpack.c.h.b16 %v99
  %v661 = vunpack.c.l.b16 %v100
  %v662 = vunpack.c.h.b16 %v100
  %v663 = vunpack.c.l.b16 %v101
  %v664 = vunpack.c.l.b16 %v102
  %v665 = vunpack.c.h.b16 %v102
  %v666 = vunpack.c.l.b16 %v103
  %v667 = vunpack.c.h.b16 %v103
  %v668 = vunpack.c.l.b16 %v104
  %v669 = vunpack.c.l.b16 %v105
  %v670 = vunpack.c.h.b16 %v105
  %v671 = vunpack.c.l.b16 %v106
  %v672 = vunpack.c.h.b16 %v106
  %v673 = vunpack.c.l.b16 %v107
  %v674 = vunpack.c.l.b16 %v108
  %v675 = vunpack.c.h.b16 %v108
  %v676 = vunpack.c.l.b16 %v109
  %v677 = vunpack.c.h.b16 %v109
  %v678 = vunpack.c.l.b16 %v110
  %v679 = vunpack.c.l.b16 %v111
  %v680 = vunpack.c.h.b16 %v111
  %v681 = vunpack.c.l.b16 %v112
  %v682 = vunpack.c.h.b16 %v112
  %v683 = vunpack.c.l.b16 %v113
  %v684 = vunpack.c.l.b16 %v114
  %v685 = vunpack.c.h.b16 %v114
  %v686 = vunpack.c.l.b16 %v115
  %v687 = vunpack.c.h.b16 %v115
  %v688 = vunpack.c.l.b16 %v116
  %v689 = vunpack.c.l.b16 %v117
  %v690 = vunpack.c.h.b16 %v117
  %v691 = vunpack.c.l.b16 %v118
  %v692 = vunpack.c.h.b16 %v118
  %v693 = vunpack.c.l.b16 %v119
  %v694 = vunpack.c.l.b16 %v120
  %v695 = vunpack.c.h.b16 %v120
  %v696 = vunpack.c.l.b16 %v121
  %v697 = vunpack.c.h.b16 %v121
  %v698 = vunpack.c.l.b16 %v122
  %v699 = vunpack.c.l.b16 %v123
  %v700 = vunpack.c.h.b16 %v123
  %v701 = vunpack.c.l.b16 %v124
  %v702 = vunpack.c.h.b16 %v124
  %v703 = vunpack.c.l.b16 %v125
  %v704 = vunpack.c.l.b16 %v126
  %v705 = vunpack.c.h.b16 %v126
  %v706 = vunpack.c.l.b16 %v127
  %v707 = vunpack.c.h.b16 %v127
  %v708 = vunpack.c.l.b16 %v128
  %v709 = vunpack.c.l.b16 %v129
  %v710 = vunpack.c.h.b16 %v129
  %v711 = vunpack.c.l.b16 %v130
  %v712 = vunpack.c.h.b16 %v130
  %v713 = vunpack.c.l.b16 %v131
  %v714 = vunpack.c.l.b16 %v132
  %v715 = vunpack.c.h.b16 %v132
  %v716 = vunpack.c.l.b16 %v133
  %v717 = vunpack.c.h.b16 %v133
  %v718 = vunpack.c.l.b16 %v134
  %v719 = vunpack.c.l.b16 %v135
  %v720 = vunpack.c.h.b16 %v135
  %v721 = vunpack.c.l.b16 %v136
  %v722 = vunpack.c.h.b16 %v136
  %v723 = vunpack.c.l.b16 %v137
  %v724 = vunpack.c.l.b16 %v138
  %v725 = vunpack.c.h.b16 %v138
  %v726 = vunpack.c.l.b16 %v139
  %v727 = vunpack.c.h.b16 %v139
  %v728 = vunpack.c.l.b16 %v140
  %v729 = vunpack.c.l.b16 %v141
  %v730 = vunpack.c.h.b16 %v141
  %v731 = vunpack.c.l.b16 %v142
  %v732 = vunpack.c.h.b16 %v142
  %v733 = vunpack.c.l.b16 %v143
  %v734 = vunpack.c.l.b16 %v144
  %v735 = vunpack.c.h.b16 %v144
  %v736 = vunpack.c.l.b16 %v145
  %v737 = vunpack.c.h.b16 %v145
  %v738 = vunpack.c.l.b16 %v146
  %v739 = vunpack.c.l.b16 %v147
  %v740 = vunpack.c.h.b16 %v147
  %v741 = vunpack.c.l.b16 %v148
  %v742 = vunpack.c.h.b16 %v148
  %v743 = vunpack.c.l.b16 %v149
  %v744 = vunpack.c.l.b16 %v150
  %v745 = vunpack.c.h.b16 %v150
  %v746 = vunpack.c.l.b16 %v151
  %v747 = vunpack.c.h.b16 %v151
  %v748 = vunpack.c.l.b16 %v152
  %v749 = vunpack.c.l.b16 %v153
  %v750 = vunpack.c.h.b16 %v153
  %v751 = vunpack.c.l.b16 %v154
  %v752 = vunpack.c.h.b16 %v154
  %v753 = vunpack.c.l.b16 %v155
  %v754 = vunpack.c.l.b16 %v156
  %v755 = vunpack.c.h.b16 %v156
  %v756 = vunpack.c.l.b16 %v157
  %v757 = vunpack.c.h.b16 %v157
  %v758 = vunpack.c.l.b16 %v158
  %v759 = vunpack.c.l.b16 %v159
  %v760 = vunpack.c.h.b16 %v159
  %v761 = vunpack.c.l.b16 %v160
  %v762 = vunpack.c.h.b16 %v160
  %v763 = vunpack.c.l.b16 %v161
  %v764 = vunpack.c.l.b16 %v162
  %v765 = vunpack.c.h.b16 %v162
  %v766 = vunpack.c.l.b16 %v163
  %v767 = vunpack.c.h.b16 %v163
  %v768 = vunpack.c.l.b16 %v164
  %v769 = vunpack.c.l.b16 %v165
  %v770 = vunpack.c.h.b16 %v165
  %v771 = vunpack.c.l.b16 %v166
  %v772 = vunpack.c.h.b16 %v166
  %v773 = vunpack.c.l.b16 %v167
  %v774 = vunpack.c.l.b16 %v168
  %v775 = vunpack.c.h.b16 %v168
  %v776 = vunpack.c.l.b16 %v169
  %v777 = vunpack.c.h.b16 %v169
  %v778 = vunpack.c.l.b16 %v170
  %v779 = vunpack.c.l.b16 %v171
  %v780 = vunpack.c.h.b16 %v171
  %v781 = vunpack.c.l.b16 %v172
  %v782 = vunpack.c.h.b16 %v172
  %v783 = vunpack.c.l.b16 %v173
  %v784 = vunpack.c.l.b16 %v174
  %v785 = vunpack.c.h.b16 %v174
  %v786 = vunpack.c.l.b16 %v175
  %v787 = vunpack.c.h.b16 %v175
  %v788 = vunpack.c.l.b16 %v176
  %v789 = vunpack.c.l.b16 %v177
  %v790 = vunpack.c.h.b16 %v177
  %v791 = vunpack.c.l.b16 %v178
  %v792 = vunpack.c.h.b16 %v178
  %v793 = vunpack.c.l.b16 %v179
  %v794 = vunpack.c.l.b16 %v180
  %v795 = vunpack.c.h.b16 %v180
  %v796 = vunpack.c.l.b16 %v181
  %v797 = vunpack.c.h.b16 %v181
  %v798 = vunpack.c.l.b16 %v182
  %v799 = vunpack.c.l.b16 %v183
  %v800 = vunpack.c.h.b16 %v183
  %v801 = vunpack.c.l.b16 %v184
  %v802 = vunpack.c.h.b16 %v184
  %v803 = vunpack.c.l.b16 %v185
  %v804 = vunpack.c.l.b16 %v186
  %v805 = vunpack.c.h.b16 %v186
  %v806 = vunpack.c.l.b16 %v187
  %v807 = vunpack.c.h.b16 %v187
  %v808 = vunpack.c.l.b16 %v188
  %v809 = vunpack.c.l.b16 %v189
  %v810 = vunpack.c.h.b16 %v189
  %v811 = vunpack.c.l.b16 %v190
  %v812 = vunpack.c.h.b16 %v190
  %v813 = vunpack.c.l.b16 %v191
  %v814 = vunpack.c.l.b16 %v192
  %v815 = vunpack.c.h.b16 %v192
  %v816 = vunpack.c.l.b16 %v193
  %v817 = vunpack.c.h.b16 %v193
  %v818 = vunpack.c.l.b16 %v194
  %v819 = vunpack.c.l.b16 %v195
  %v820 = vunpack.c.h.b16 %v195
  %v821 = vunpack.c.l.b16 %v196
  %v822 = vunpack.c.h.b16 %v196
  %v823 = vunpack.c.l.b16 %v197
  %v824 = vunpack.c.l.b16 %v198
  %v825 = vunpack.c.h.b16 %v198
  %v826 = vunpack.c.l.b16 %v199
  %v827 = vunpack.c.h.b16 %v199
  %v828 = vunpack.c.l.b16 %v200
  %v829 = vunpack.c.l.b16 %v201
  %v830 = vunpack.c.h.b16 %v201
  %v831 = vunpack.c.l.b16 %v202
  %v832 = vunpack.c.h.b16 %v202
  %v833 = vunpack.c.l.b16 %v203
  %v834 = vunpack.c.l.b16 %v204
  %v835 = vunpack.c.h.b16 %v204
  %v836 = vunpack.c.l.b16 %v205
  %v837 = vunpack.c.h.b16 %v205
  %v838 = vunpack.c.l.b16 %v206
  %v839 = vunpack.c.l.b16 %v207
  %v840 = vunpack.c.h.b16 %v207
  %v841 = vunpack.c.l.b16 %v208
  %v842 = vunpack.c.h.b16 %v208
  %v843 = vunpack.c.l.b16 %v209
  %v844 = vunpack.c.l.b16 %v210
  %v845 = vunpack.c.h.b16 %v210
  %v846 = vunpack.c.l.b16 %v211
  %v847 = vunpack.c.h.b16 %v211
  %v848 = vunpack.c.l.b16 %v212
  %v849 = vunpack.c.l.b16 %v213
  %v850 = vunpack.c.h.b16 %v213
  %v851 = vunpack.c.l.b16 %v214
  %v852 = vunpack.c.h.b16 %v214
  %v853 = vunpack.c.l.b16 %v215
  %v854 = vunpack.c.l.b16 %v216
  %v855 = vunpack.c.h.b16 %v216
  %v856 = vunpack.c.l.b16 %v217
  %v857 = vunpack.c.h.b16 %v217
  %v858 = vunpack.c.l.b16 %v218
  %v859 = vunpack.c.l.b16 %v219
  %v860 = vunpack.c.h.b16 %v219
  %v861 = vunpack.c.l.b16 %v220
  %v862 = vunpack.c.h.b16 %v220
  %v863 = vunpack.c.l.b16 %v221
  %v864 = vunpack.c.l.b16 %v222
  %v865 = vunpack.c.h.b16 %v222
  %v866 = vunpack.c.l.b16 %v223
  %v867 = vunpack.c.h.b16 %v223
  %v868 = vunpack.c.l.b16 %v224
  %v869 = vunpack.c.l.b16 %v225
  %v870 = vunpack.c.h.b16 %v225
  %v871 = vunpack.c.l.b16 %v226
  %v872 = vunpack.c.h.b16 %v226
  %v873 = vunpack.c.l.b16 %v227
  %v874 = vunpack.c.l.b16 %v228
  %v875 = vunpack.c.h.b16 %v228
  %v876 = vunpack.c.l.b16 %v229
  %v877 = vunpack.c.h.b16 %v229
  %v878 = vunpack.c.l.b16 %v230
  %v879 = vpack.c.b16 %v524, %v519
  %v880 = vpack.c.b16 %v525, %v520
  %v881 = vpack.c.b16 %v526, %v521
  %v882 = vpack.c.b16 %v527, %v522
  %v883 = vpack.c.b16 %v528, %v523
  %v884 = vpack.c.b16 %v534, %v529
  %v885 = vpack.c.b16 %v535, %v530
  %v886 = vpack.c.b16 %v536, %v531
  %v887 = vpack.c.b16 %v537, %v532
  %v888 = vpack.c.b16 %v538, %v533
  %v889 = vpack.c.b16 %v544, %v539
  %v890 = vpack.c.b16 %v545, %v540
  %v891 = vpack.c.b16 %v546, %v541
  %v892 = vpack.c.b16 %v547, %v542
  %v893 = vpack.c.b16 %v548, %v543
  %v894 = vpack.c.b16 %v554, %v549
  %v895 = vpack.c.b16 %v555, %v550
  %v896 = vpack.c.b16 %v556, %v551
  %v897 = vpack.c.b16 %v557, %v552
  %v898 = vpack.c.b16 %v558, %v553
  %v899 = vpack.c.b16 %v564, %v559
  %v900 = vpack.c.b16 %v565, %v560
  %v901 = vpack.c.b16 %v566, %v561
  %v902 = vpack.c.b16 %v567, %v562
  %v903 = vpack.c.b16 %v568, %v563
  %v904 = vpack.c.b16 %v574, %v569
  %v905 = vpack.c.b16 %v575, %v570
  %v906 = vpack.c.b16 %v576, %v571
  %v907 = vpack.c.b16 %v577, %v572
  %v908 = vpack.c.b16 %v578, %v573
  %v909 = vpack.c.b16 %v584, %v579
  %v910 = vpack.c.b16 %v585, %v580
  %v911 = vpack.c.b16 %v586, %v581
  %v912 = vpack.c.b16 %v587, %v582
  %v913 = vpack.c.b16 %v588, %v583
  %v914 = vpack.c.b16 %v594, %v589
  %v915 = vpack.c.b16 %v595, %v590
  %v916 = vpack.c.b16 %v596, %v591
  %v917 = vpack.c.b16 %v597, %v592
  %v918 = vpack.c.b16 %v598, %v593
  %v919 = vpack.c.b16 %v604, %v599
  %v920 = vpack.c.b16 %v605, %v600
  %v921 = vpack.c.b16 %v606, %v601
  %v922 = vpack.c.b16 %v607, %v602
  %v923 = vpack.c.b16 %v608, %v603
  %v924 = vpack.c.b16 %v614, %v609
  %v925 = vpack.c.b16 %v615, %v610
  %v926 = vpack.c.b16 %v616, %v611
  %v927 = vpack.c.b16 %v617, %v612
  %v928 = vpack.c.b16 %v618, %v613
  %v929 = vpack.c.b16 %v624, %v619
  %v930 = vpack.c.b16 %v625, %v620
  %v931 = vpack.c.b16 %v626, %v621
  %v932 = vpack.c.b16 %v627, %v622
  %v933 = vpack.c.b16 %v628, %v623
  %v934 = vpack.c.b16 %v634, %v629
  %v935 = vpack.c.b16 %v635, %v630
  %v936 = vpack.c.b16 %v636, %v631
  %v937 = vpack.c.b16 %v637, %v632
  %v938 = vpack.c.b16 %v638, %v633
  %v939 = vpack.c.b16 %v644, %v639
  %v940 = vpack.c.b16 %v645, %v640
  %v941 = vpack.c.b16 %v646, %v641
  %v942 = vpack.c.b16 %v647, %v642
  %v943 = vpack.c.b16 %v648, %v643
  %v944 = vpack.c.b16 %v654, %v649
  %v945 = vpack.c.b16 %v655, %v650
  %v946 = vpack.c.b16 %v656, %v651
  %v947 = vpack.c.b16 %v657, %v652
  %v948 = vpack.c.b16 %v658, %v653
  %v949 = vpack.c.b16 %v664, %v659
  %v950 = vpack.c.b16 %v665, %v660
  %v951 = vpack.c.b16 %v666, %v661
  %v952 = vpack.c.b16 %v667, %v662
  %v953 = vpack.c.b16 %v668, %v663
  %v954 = vpack.c.b16 %v674, %v669
  %v955 = vpack.c.b16 %v675, %v670
  %v956 = vpack.c.b16 %v676, %v671
  %v957 = vpack.c.b16 %v677, %v672
  %v958 = vpack.c.b16 %v678, %v673
  %v959 = vpack.c.b16 %v684, %v679
  %v960 = vpack.c.b16 %v685, %v680
  %v961 = vpack.c.b16 %v686, %v681
  %v962 = vpack.c.b16 %v687, %v682
  %v963 = vpack.c.b16 %v688, %v683
  %v964 = vpack.c.b16 %v694, %v689
  %v965 = vpack.c.b16 %v695, %v690
  %v966 = vpack.c.b16 %v696, %v691
  %v967 = vpack.c.b16 %v697, %v692
  %v968 = vpack.c.b16 %v698, %v693
  %v969 = vpack.c.b16 %v704, %v699
  %v970 = vpack.c.b16 %v705, %v700
  %v971 = vpack.c.b16 %v706, %v701
  %v972 = vpack.c.b16 %v707, %v702
  %v973 = vpack.c.b16 %v708, %v703
  %v974 = vpack.c.b16 %v714, %v709
  %v975 = vpack.c.b16 %v715, %v710
  %v976 = vpack.c.b16 %v716, %v711
  %v977 = vpack.c.b16 %v717, %v712
  %v978 = vpack.c.b16 %v718, %v713
  %v979 = vpack.c.b16 %v724, %v719
  %v980 = vpack.c.b16 %v725, %v720
  %v981 = vpack.c.b16 %v726, %v721
  %v982 = vpack.c.b16 %v727, %v722
  %v983 = vpack.c.b16 %v728, %v723
  %v984 = vpack.c.b16 %v734, %v729
  %v985 = vpack.c.b16 %v735, %v730
  %v986 = vpack.c.b16 %v736, %v731
  %v987 = vpack.c.b16 %v737, %v732
  %v988 = vpack.c.b16 %v738, %v733
  %v989 = vpack.c.b16 %v744, %v739
  %v990 = vpack.c.b16 %v745, %v740
  %v991 = vpack.c.b16 %v746, %v741
  %v992 = vpack.c.b16 %v747, %v742
  %v993 = vpack.c.b16 %v748, %v743
  %v994 = vpack.c.b16 %v754, %v749
  %v995 = vpack.c.b16 %v755, %v750
  %v996 = vpack.c.b16 %v756, %v751
  %v997 = vpack.c.b16 %v757, %v752
  %v998 = vpack.c.b16 %v758, %v753
  %v999 = vpack.c.b16 %v764, %v759
  %v1000 = vpack.c.b16 %v765, %v760
  %v1001 = vpack.c.b16 %v766, %v761
  %v1002 = vpack.c.b16 %v767, %v762
  %v1003 = vpack.c.b16 %v768, %v763
  %v1004 = vpack.c.b16 %v774, %v769
  %v1005 = vpack.c.b16 %v775, %v770
  %v1006 = vpack.c.b16 %v776, %v771
  %v1007 = vpack.c.b16 %v777, %v772
  %v1008 = vpack.c.b16 %v778, %v773
  %v1009 = vpack.c.b16 %v784, %v779
  %v1010 = vpack.c.b16 %v785, %v780
  %v1011 = vpack.c.b16 %v786, %v781
  %v1012 = vpack.c.b16 %v787, %v782
  %v1013 = vpack.c.b16 %v788, %v783
  %v1014 = vpack.c.b16 %v794, %v789
  %v1015 = vpack.c.b16 %v795, %v790
  %v1016 = vpack.c.b16 %v796, %v791
  %v1017 = vpack.c.b16 %v797, %v792
  %v1018 = vpack.c.b16 %v798, %v793
  %v1019 = vpack.c.b16 %v804, %v799
  %v1020 = vpack.c.b16 %v805, %v800
  %v1021 = vpack.c.b16 %v806, %v801
  %v1022 = vpack.c.b16 %v807, %v802
  %v1023 = vpack.c.b16 %v808, %v803
  %v1024 = vpack.c.b16 %v814, %v809
  %v1025 = vpack.c.b16 %v815, %v810
  %v1026 = vpack.c.b16 %v816, %v811
  %v1027 = vpack.c.b16 %v817, %v812
  %v1028 = vpack.c.b16 %v818, %v813
  %v1029 = vpack.c.b16 %v824, %v819
  %v1030 = vpack.c.b16 %v825, %v820
  %v1031 = vpack.c.b16 %v826, %v821
  %v1032 = vpack.c.b16 %v827, %v822
  %v1033 = vpack.c.b16 %v828, %v823
  %v1034 = vpack.c.b16 %v834, %v829
  %v1035 = vpack.c.b16 %v835, %v830
  %v1036 = vpack.c.b16 %v836, %v831
  %v1037 = vpack.c.b16 %v837, %v832
  %v1038 = vpack.c.b16 %v838, %v833
  %v1039 = vpack.c.b16 %v844, %v839
  %v1040 = vpack.c.b16 %v845, %v840
  %v1041 = vpack.c.b16 %v846, %v841
  %v1042 = vpack.c.b16 %v847, %v842
  %v1043 = vpack.c.b16 %v848, %v843
  %v1044 = vpack.c.b16 %v854, %v849
  %v1045 = vpack.c.b16 %v855, %v850
  %v1046 = vpack.c.b16 %v856, %v851
  %v1047 = vpack.c.b16 %v857, %v852
  %v1048 = vpack.c.b16 %v858, %v853
  %v1049 = vpack.c.b16 %v864, %v859
  %v1050 = vpack.c.b16 %v865, %v860
  %v1051 = vpack.c.b16 %v866, %v861
  %v1052 = vpack.c.b16 %v867, %v862
  %v1053 = vpack.c.b16 %v868, %v863
  %v1054 = vpack.c.b16 %v874, %v869
  %v1055 = vpack.c.b16 %v875, %v870
  %v1056 = vpack.c.b16 %v876, %v871
  %v1057 = vpack.c.b16 %v877, %v872
  %v1058 = vpack.c.b16 %v878, %v873
  %v1275 = vunpack.c.l.b16 %v231
  %v1276 = vunpack.c.l.b16 %v232
  %v1277 = vunpack.c.l.b16 %v233
  %v1278 = vunpack.c.l.b16 %v234
  %v1279 = vunpack.c.l.b16 %v235
  %v1280 = vunpack.c.l.b16 %v236
  %v1281 = vunpack.c.l.b16 %v237
  %v1282 = vunpack.c.l.b16 %v238
  %v1283 = vunpack.c.l.b16 %v239
  %v1284 = vunpack.c.l.b16 %v240
  %v1285 = vunpack.c.l.b16 %v241
  %v1286 = vunpack.c.l.b16 %v242
  %v1287 = vunpack.c.l.b16 %v243
  %v1288 = vunpack.c.l.b16 %v244
  %v1289 = vunpack.c.l.b16 %v245
  %v1290 = vunpack.c.l.b16 %v246
  %v1291 = vunpack.c.l.b16 %v247
  %v1292 = vunpack.c.l.b16 %v248
  %v1293 = vunpack.c.l.b16 %v249
  %v1294 = vunpack.c.l.b16 %v250
  %v1295 = vunpack.c.l.b16 %v251
  %v1296 = vunpack.c.l.b16 %v252
  %v1297 = vunpack.c.l.b16 %v253
  %v1298 = vunpack.c.l.b16 %v254
  %v1299 = vunpack.c.l.b16 %v255
  %v1300 = vunpack.c.l.b16 %v256
  %v1301 = vunpack.c.l.b16 %v257
  %v1302 = vunpack.c.l.b16 %v258
  %v1303 = vunpack.c.l.b16 %v259
  %v1304 = vunpack.c.l.b16 %v260
  %v1305 = vunpack.c.l.b16 %v261
  %v1306 = vunpack.c.l.b16 %v262
  %v1307 = vunpack.c.l.b16 %v263
  %v1308 = vunpack.c.l.b16 %v264
  %v1309 = vunpack.c.l.b16 %v265
  %v1310 = vunpack.c.l.b16 %v266
  %v1311 = vunpack.c.l.b16 %v267
  %v1312 = vunpack.c.l.b16 %v268
  %v1313 = vunpack.c.l.b16 %v269
  %v1314 = vunpack.c.l.b16 %v270
  %v1315 = vunpack.c.l.b16 %v271
  %v1316 = vunpack.c.l.b16 %v272
  %v1317 = vunpack.c.l.b16 %v273
  %v1318 = vunpack.c.l.b16 %v274
  %v1319 = vunpack.c.l.b16 %v275
  %v1320 = vunpack.c.l.b16 %v276
  %v1321 = vunpack.c.l.b16 %v277
  %v1322 = vunpack.c.l.b16 %v278
  %v1323 = vunpack.c.l.b16 %v279
  %v1324 = vunpack.c.l.b16 %v280
  %v1325 = vunpack.c.l.b16 %v281
  %v1326 = vunpack.c.l.b16 %v282
  %v1327 = vunpack.c.l.b16 %v283
  %v1328 = vunpack.c.l.b16 %v284
  %v1329 = vunpack.c.l.b16 %v285
  %v1330 = vunpack.c.l.b16 %v286
  %v1331 = vunpack.c.l.b16 %v287
  %v1332 = vunpack.c.l.b16 %v288
  %v1333 = vunpack.c.l.b16 %v289
  %v1334 = vunpack.c.l.b16 %v290
  %v1335 = vunpack.c.l.b16 %v291
  %v1336 = vunpack.c.l.b16 %v292
  %v1337 = vunpack.c.l.b16 %v293
  %v1338 = vunpack.c.l.b16 %v294
  %v1339 = vunpack.c.l.b16 %v295
  %v1340 = vunpack.c.l.b16 %v296
  %v1341 = vunpack.c.l.b16 %v297
  %v1342 = vunpack.c.l.b16 %v298
  %v1343 = vunpack.c.l.b16 %v299
  %v1344 = vunpack.c.l.b16 %v300
  %v1345 = vunpack.c.l.b16 %v301
  %v1346 = vunpack.c.l.b16 %v302
  %v1347 = vpack.c.b16 %v1276, %v1275
  %v1348 = vpack.c.b16 %v1278, %v1277
  %v1349 = vpack.c.b16 %v1280, %v1279
  %v1350 = vpack.c.b16 %v1282, %v1281
  %v1351 = vpack.c.b16 %v1284, %v1283
  %v1352 = vpack.c.b16 %v1286, %v1285
  %v1353 = vpack.c.b16 %v1288, %v1287
  %v1354 = vpack.c.b16 %v1290, %v1289
  %v1355 = vpack.c.b16 %v1292, %v1291
  %v1356 = vpack.c.b16 %v1294, %v1293
  %v1357 = vpack.c.b16 %v1296, %v1295
  %v1358 = vpack.c.b16 %v1298, %v1297
  %v1359 = vpack.c.b16 %v1300, %v1299
  %v1360 = vpack.c.b16 %v1302, %v1301
  %v1361 = vpack.c.b16 %v1304, %v1303
  %v1362 = vpack.c.b16 %v1306, %v1305
  %v1363 = vpack.c.b16 %v1308, %v1307
  %v1364 = vpack.c.b16 %v1310, %v1309
  %v1365 = vpack.c.b16 %v1312, %v1311
  %v1366 = vpack.c.b16 %v1314, %v1313
  %v1367 = vpack.c.b16 %v1316, %v1315
  %v1368 = vpack.c.b16 %v1318, %v1317
  %v1369 = vpack.c.b16 %v1320, %v1319
  %v1370 = vpack.c.b16 %v1322, %v1321
  %v1371 = vpack.c.b16 %v1324, %v1323
  %v1372 = vpack.c.b16 %v1326, %v1325
  %v1373 = vpack.c.b16 %v1328, %v1327
  %v1374 = vpack.c.b16 %v1330, %v1329
  %v1375 = vpack.c.b16 %v1332, %v1331
  %v1376 = vpack.c.b16 %v1334, %v1333
  %v1377 = vpack.c.b16 %v1336, %v1335
  %v1378 = vpack.c.b16 %v1338, %v1337
  %v1379 = vpack.c.b16 %v1340, %v1339
  %v1380 = vpack.c.b16 %v1342, %v1341
  %v1381 = vpack.c.b16 %v1344, %v1343
  %v1382 = vpack.c.b16 %v1346, %v1345
  %vm1419 = vcmask 523264
  %v1421 = vsel %vm1419, %v883, 0
  %v1424 = vsel %vm1419, %v888, 0
  %v1427 = vsel %vm1419, %v893, 0
  %v1430 = vsel %vm1419, %v898, 0
  %v1433 = vsel %vm1419, %v903, 0
  %v1436 = vsel %vm1419, %v908, 0
  %v1439 = vsel %vm1419, %v913, 0
  %v1442 = vsel %vm1419, %v918, 0
  %v1445 = vsel %vm1419, %v923, 0
  %v1448 = vsel %vm1419, %v928, 0
  %v1451 = vsel %vm1419, %v933, 0
  %v1454 = vsel %vm1419, %v938, 0
  %v1457 = vsel %vm1419, %v943, 0
  %v1460 = vsel %vm1419, %v948, 0
  %v1463 = vsel %vm1419, %v953, 0
  %v1466 = vsel %vm1419, %v958, 0
  %v1469 = vsel %vm1419, %v963, 0
  %v1472 = vsel %vm1419, %v968, 0
  %v1475 = vsel %vm1419, %v973, 0
  %v1478 = vsel %vm1419, %v978, 0
  %v1481 = vsel %vm1419, %v983, 0
  %v1484 = vsel %vm1419, %v988, 0
  %v1487 = vsel %vm1419, %v993, 0
  %v1490 = vsel %vm1419, %v998, 0
  %v1493 = vsel %vm1419, %v1003, 0
  %v1496 = vsel %vm1419, %v1008, 0
  %v1499 = vsel %vm1419, %v1013, 0
  %v1502 = vsel %vm1419, %v1018, 0
  %v1505 = vsel %vm1419, %v1023, 0
  %v1508 = vsel %vm1419, %v1028, 0
  %v1511 = vsel %vm1419, %v1033, 0
  %v1514 = vsel %vm1419, %v1038, 0
  %v1517 = vsel %vm1419, %v1043, 0
  %v1520 = vsel %vm1419, %v1048, 0
  %v1523 = vsel %vm1419, %v1053, 0
  %v1526 = vsel %vm1419, %v1058, 0
  %1528 = vmatprep.subr.bf16.mxu0 0
  %1529 = vmatpush1.bf16.msra.mxu0 %v1347
  %1530 = vmatprep.subr.bf16.mxu0 0
  %1531 = vmatpush1.bf16.msra.mxu0 %v1348
  %1532 = vmatprep.subr.bf16.mxu0 0
  %1533 = vmatpush1.bf16.msra.mxu0 %v1349
  %1534 = vmatprep.subr.bf16.mxu0 0
  %1535 = vmatpush1.bf16.msra.mxu0 %v1350
  %1536 = vmatprep.subr.bf16.mxu0 0
  %1537 = vmatpush1.bf16.msra.mxu0 %v1351
  %1538 = vmatprep.subr.bf16.mxu0 0
  %1539 = vmatpush1.bf16.msra.mxu0 %v1352
  %1540 = vmatprep.subr.bf16.mxu0 0
  %1541 = vmatpush1.bf16.msra.mxu0 %v1353
  %1542 = vmatprep.subr.bf16.mxu0 0
  %1543 = vmatpush1.bf16.msra.mxu0 %v1354
  %1544 = vmatprep.subr.bf16.mxu0 0
  %1545 = vmatpush1.bf16.msra.mxu0 %v1355
  %1546 = vmatprep.subr.bf16.mxu0 0
  %1547 = vmatpush1.bf16.msra.mxu0 %v1356
  %1548 = vmatprep.subr.bf16.mxu0 0
  %1549 = vmatpush1.bf16.msra.mxu0 %v1357
  %1550 = vmatprep.subr.bf16.mxu0 0
  %1551 = vmatpush1.bf16.msra.mxu0 %v1358
  %1552 = vmatprep.subr.bf16.mxu0 0
  %1553 = vmatpush1.bf16.msra.mxu0 %v1359
  %1554 = vmatprep.subr.bf16.mxu0 0
  %1555 = vmatpush1.bf16.msra.mxu0 %v1360
  %1556 = vmatprep.subr.bf16.mxu0 0
  %1557 = vmatpush1.bf16.msra.mxu0 %v1361
  %1558 = vmatprep.subr.bf16.mxu0 0
  %1559 = vmatpush1.bf16.msra.mxu0 %v1362
  %1560 = vmatprep.mubr.bf16.mxu0 %v880
  %1561 = vmatmul.mubr.bf16.gmra.mrb[0].mxu0 %v879
  %v1562 = vpop.f32.mrb[0].mxu0
  %v1563 = vadd.f32 0.0, %v1562
  %v1564 = vpop.f32.mrb[0].mxu0
  %v1565 = vpop.f32.mrb[0].mxu0
  %v1566 = vadd.f32 0.0, %v1565
  %v1567 = vpop.f32.mrb[0].mxu0
  %1568 = vmatprep.mubr.bf16.mxu0 %v885
  %1569 = vmatmul.mubr.bf16.gmra.mrb[0].mxu0 %v884
  %v1570 = vpop.f32.mrb[0].mxu0
  %v1571 = vadd.f32 0.0, %v1570
  %v1572 = vpop.f32.mrb[0].mxu0
  %v1573 = vpop.f32.mrb[0].mxu0
  %v1574 = vadd.f32 0.0, %v1573
  %v1575 = vpop.f32.mrb[0].mxu0
  %1576 = vmatprep.mubr.bf16.mxu0 %v890
  %1577 = vmatmul.mubr.bf16.gmra.mrb[0].mxu0 %v889
  %v1578 = vpop.f32.mrb[0].mxu0
  %v1579 = vadd.f32 0.0, %v1578
  %v1580 = vpop.f32.mrb[0].mxu0
  %v1581 = vpop.f32.mrb[0].mxu0
  %v1582 = vadd.f32 0.0, %v1581
  %v1583 = vpop.f32.mrb[0].mxu0
  %1584 = vmatprep.mubr.bf16.mxu0 %v895
  %1585 = vmatmul.mubr.bf16.gmra.mrb[0].mxu0 %v894
  %v1586 = vpop.f32.mrb[0].mxu0
  %v1587 = vadd.f32 0.0, %v1586
  %v1588 = vpop.f32.mrb[0].mxu0
  %v1589 = vpop.f32.mrb[0].mxu0
  %v1590 = vadd.f32 0.0, %v1589
  %v1591 = vpop.f32.mrb[0].mxu0
  %1592 = vmatprep.mubr.bf16.mxu0 %v900
  %1593 = vmatmul.mubr.bf16.gmra.mrb[0].mxu0 %v899
  %v1594 = vpop.f32.mrb[0].mxu0
  %v1595 = vadd.f32 0.0, %v1594
  %v1596 = vpop.f32.mrb[0].mxu0
  %v1597 = vpop.f32.mrb[0].mxu0
  %v1598 = vadd.f32 0.0, %v1597
  %v1599 = vpop.f32.mrb[0].mxu0
  %1600 = vmatprep.mubr.bf16.mxu0 %v905
  %1601 = vmatmul.mubr.bf16.gmra.mrb[0].mxu0 %v904
  %v1602 = vpop.f32.mrb[0].mxu0
  %v1603 = vadd.f32 0.0, %v1602
  %v1604 = vpop.f32.mrb[0].mxu0
  %v1605 = vpop.f32.mrb[0].mxu0
  %v1606 = vadd.f32 0.0, %v1605
  %v1607 = vpop.f32.mrb[0].mxu0
  %1608 = vmatprep.mubr.bf16.mxu0 %v910
  %1609 = vmatmul.mubr.bf16.gmra.mrb[0].mxu0 %v909
  %v1610 = vpop.f32.mrb[0].mxu0
  %v1611 = vadd.f32 0.0, %v1610
  %v1612 = vpop.f32.mrb[0].mxu0
  %v1613 = vpop.f32.mrb[0].mxu0
  %v1614 = vadd.f32 0.0, %v1613
  %v1615 = vpop.f32.mrb[0].mxu0
  %1616 = vmatprep.mubr.bf16.mxu0 %v915
  %1617 = vmatmul.mubr.bf16.gmra.mrb[0].mxu0 %v914
  %v1618 = vpop.f32.mrb[0].mxu0
  %v1619 = vadd.f32 0.0, %v1618
  %v1620 = vpop.f32.mrb[0].mxu0
  %v1621 = vpop.f32.mrb[0].mxu0
  %v1622 = vadd.f32 0.0, %v1621
  %v1623 = vpop.f32.mrb[0].mxu0
  %1624 = vmatprep.mubr.bf16.mxu0 %v920
  %1625 = vmatmul.mubr.bf16.gmra.mrb[0].mxu0 %v919
  %v1626 = vpop.f32.mrb[0].mxu0
  %v1627 = vadd.f32 0.0, %v1626
  %v1628 = vpop.f32.mrb[0].mxu0
  %v1629 = vpop.f32.mrb[0].mxu0
  %v1630 = vadd.f32 0.0, %v1629
  %v1631 = vpop.f32.mrb[0].mxu0
  %1632 = vmatprep.mubr.bf16.mxu0 %v925
  %1633 = vmatmul.mubr.bf16.gmra.mrb[0].mxu0 %v924
  %v1634 = vpop.f32.mrb[0].mxu0
  %v1635 = vadd.f32 0.0, %v1634
  %v1636 = vpop.f32.mrb[0].mxu0
  %v1637 = vpop.f32.mrb[0].mxu0
  %v1638 = vadd.f32 0.0, %v1637
  %v1639 = vpop.f32.mrb[0].mxu0
  %1640 = vmatprep.mubr.bf16.mxu0 %v930
  %1641 = vmatmul.mubr.bf16.gmra.mrb[0].mxu0 %v929
  %v1642 = vpop.f32.mrb[0].mxu0
  %v1643 = vadd.f32 0.0, %v1642
  %v1644 = vpop.f32.mrb[0].mxu0
  %v1645 = vpop.f32.mrb[0].mxu0
  %v1646 = vadd.f32 0.0, %v1645
  %v1647 = vpop.f32.mrb[0].mxu0
  %1648 = vmatprep.mubr.bf16.mxu0 %v935
  %1649 = vmatmul.mubr.bf16.gmra.mrb[0].mxu0 %v934
  %v1650 = vpop.f32.mrb[0].mxu0
  %v1651 = vadd.f32 0.0, %v1650
  %v1652 = vpop.f32.mrb[0].mxu0
  %v1653 = vpop.f32.mrb[0].mxu0
  %v1654 = vadd.f32 0.0, %v1653
  %v1655 = vpop.f32.mrb[0].mxu0
  %1656 = vmatprep.mubr.bf16.mxu0 %v940
  %1657 = vmatmul.mubr.bf16.gmra.mrb[0].mxu0 %v939
  %v1658 = vpop.f32.mrb[0].mxu0
  %v1659 = vadd.f32 0.0, %v1658
  %v1660 = vpop.f32.mrb[0].mxu0
  %v1661 = vpop.f32.mrb[0].mxu0
  %v1662 = vadd.f32 0.0, %v1661
  %v1663 = vpop.f32.mrb[0].mxu0
  %1664 = vmatprep.mubr.bf16.mxu0 %v945
  %1665 = vmatmul.mubr.bf16.gmra.mrb[0].mxu0 %v944
  %v1666 = vpop.f32.mrb[0].mxu0
  %v1667 = vadd.f32 0.0, %v1666
  %v1668 = vpop.f32.mrb[0].mxu0
  %v1669 = vpop.f32.mrb[0].mxu0
  %v1670 = vadd.f32 0.0, %v1669
  %v1671 = vpop.f32.mrb[0].mxu0
  %1672 = vmatprep.mubr.bf16.mxu0 %v950
  %1673 = vmatmul.mubr.bf16.gmra.mrb[0].mxu0 %v949
  %v1674 = vpop.f32.mrb[0].mxu0
  %v1675 = vadd.f32 0.0, %v1674
  %v1676 = vpop.f32.mrb[0].mxu0
  %v1677 = vpop.f32.mrb[0].mxu0
  %v1678 = vadd.f32 0.0, %v1677
  %v1679 = vpop.f32.mrb[0].mxu0
  %1680 = vmatprep.mubr.bf16.mxu0 %v955
  %1681 = vmatmul.mubr.bf16.gmra.mrb[0].mxu0 %v954
  %v1682 = vpop.f32.mrb[0].mxu0
  %v1683 = vadd.f32 0.0, %v1682
  %v1684 = vpop.f32.mrb[0].mxu0
  %v1685 = vpop.f32.mrb[0].mxu0
  %v1686 = vadd.f32 0.0, %v1685
  %v1687 = vpop.f32.mrb[0].mxu0
  %1688 = vmatprep.mubr.bf16.mxu0 %v960
  %1689 = vmatmul.mubr.bf16.gmra.mrb[0].mxu0 %v959
  %v1690 = vpop.f32.mrb[0].mxu0
  %v1691 = vadd.f32 0.0, %v1690
  %v1692 = vpop.f32.mrb[0].mxu0
  %v1693 = vpop.f32.mrb[0].mxu0
  %v1694 = vadd.f32 0.0, %v1693
  %v1695 = vpop.f32.mrb[0].mxu0
  %1696 = vmatprep.mubr.bf16.mxu0 %v965
  %1697 = vmatmul.mubr.bf16.gmra.mrb[0].mxu0 %v964
  %v1698 = vpop.f32.mrb[0].mxu0
  %v1699 = vadd.f32 0.0, %v1698
  %v1700 = vpop.f32.mrb[0].mxu0
  %v1701 = vpop.f32.mrb[0].mxu0
  %v1702 = vadd.f32 0.0, %v1701
  %v1703 = vpop.f32.mrb[0].mxu0
  %1704 = vmatprep.mubr.bf16.mxu0 %v970
  %1705 = vmatmul.mubr.bf16.gmra.mrb[0].mxu0 %v969
  %v1706 = vpop.f32.mrb[0].mxu0
  %v1707 = vadd.f32 0.0, %v1706
  %v1708 = vpop.f32.mrb[0].mxu0
  %v1709 = vpop.f32.mrb[0].mxu0
  %v1710 = vadd.f32 0.0, %v1709
  %v1711 = vpop.f32.mrb[0].mxu0
  %1712 = vmatprep.mubr.bf16.mxu0 %v975
  %1713 = vmatmul.mubr.bf16.gmra.mrb[0].mxu0 %v974
  %v1714 = vpop.f32.mrb[0].mxu0
  %v1715 = vadd.f32 0.0, %v1714
  %v1716 = vpop.f32.mrb[0].mxu0
  %v1717 = vpop.f32.mrb[0].mxu0
  %v1718 = vadd.f32 0.0, %v1717
  %v1719 = vpop.f32.mrb[0].mxu0
  %1720 = vmatprep.mubr.bf16.mxu0 %v980
  %1721 = vmatmul.mubr.bf16.gmra.mrb[0].mxu0 %v979
  %v1722 = vpop.f32.mrb[0].mxu0
  %v1723 = vadd.f32 0.0, %v1722
  %v1724 = vpop.f32.mrb[0].mxu0
  %v1725 = vpop.f32.mrb[0].mxu0
  %v1726 = vadd.f32 0.0, %v1725
  %v1727 = vpop.f32.mrb[0].mxu0
  %1728 = vmatprep.mubr.bf16.mxu0 %v985
  %1729 = vmatmul.mubr.bf16.gmra.mrb[0].mxu0 %v984
  %v1730 = vpop.f32.mrb[0].mxu0
  %v1731 = vadd.f32 0.0, %v1730
  %v1732 = vpop.f32.mrb[0].mxu0
  %v1733 = vpop.f32.mrb[0].mxu0
  %v1734 = vadd.f32 0.0, %v1733
  %v1735 = vpop.f32.mrb[0].mxu0
  %1736 = vmatprep.mubr.bf16.mxu0 %v990
  %1737 = vmatmul.mubr.bf16.gmra.mrb[0].mxu0 %v989
  %v1738 = vpop.f32.mrb[0].mxu0
  %v1739 = vadd.f32 0.0, %v1738
  %v1740 = vpop.f32.mrb[0].mxu0
  %v1741 = vpop.f32.mrb[0].mxu0
  %v1742 = vadd.f32 0.0, %v1741
  %v1743 = vpop.f32.mrb[0].mxu0
  %1744 = vmatprep.mubr.bf16.mxu0 %v995
  %1745 = vmatmul.mubr.bf16.gmra.mrb[0].mxu0 %v994
  %v1746 = vpop.f32.mrb[0].mxu0
  %v1747 = vadd.f32 0.0, %v1746
  %v1748 = vpop.f32.mrb[0].mxu0
  %v1749 = vpop.f32.mrb[0].mxu0
  %v1750 = vadd.f32 0.0, %v1749
  %v1751 = vpop.f32.mrb[0].mxu0
  %1752 = vmatprep.mubr.bf16.mxu0 %v1000
  %1753 = vmatmul.mubr.bf16.gmra.mrb[0].mxu0 %v999
  %v1754 = vpop.f32.mrb[0].mxu0
  %v1755 = vadd.f32 0.0, %v1754
  %v1756 = vpop.f32.mrb[0].mxu0
  %v1757 = vpop.f32.mrb[0].mxu0
  %v1758 = vadd.f32 0.0, %v1757
  %v1759 = vpop.f32.mrb[0].mxu0
  %1760 = vmatprep.mubr.bf16.mxu0 %v1005
  %1761 = vmatmul.mubr.bf16.gmra.mrb[0].mxu0 %v1004
  %v1762 = vpop.f32.mrb[0].mxu0
  %v1763 = vadd.f32 0.0, %v1762
  %v1764 = vpop.f32.mrb[0].mxu0
  %v1765 = vpop.f32.mrb[0].mxu0
  %v1766 = vadd.f32 0.0, %v1765
  %v1767 = vpop.f32.mrb[0].mxu0
  %1768 = vmatprep.mubr.bf16.mxu0 %v1010
  %1769 = vmatmul.mubr.bf16.gmra.mrb[0].mxu0 %v1009
  %v1770 = vpop.f32.mrb[0].mxu0
  %v1771 = vadd.f32 0.0, %v1770
  %v1772 = vpop.f32.mrb[0].mxu0
  %v1773 = vpop.f32.mrb[0].mxu0
  %v1774 = vadd.f32 0.0, %v1773
  %v1775 = vpop.f32.mrb[0].mxu0
  %1776 = vmatprep.mubr.bf16.mxu0 %v1015
  %1777 = vmatmul.mubr.bf16.gmra.mrb[0].mxu0 %v1014
  %v1778 = vpop.f32.mrb[0].mxu0
  %v1779 = vadd.f32 0.0, %v1778
  %v1780 = vpop.f32.mrb[0].mxu0
  %v1781 = vpop.f32.mrb[0].mxu0
  %v1782 = vadd.f32 0.0, %v1781
  %v1783 = vpop.f32.mrb[0].mxu0
  %1784 = vmatprep.mubr.bf16.mxu0 %v1020
  %1785 = vmatmul.mubr.bf16.gmra.mrb[0].mxu0 %v1019
  %v1786 = vpop.f32.mrb[0].mxu0
  %v1787 = vadd.f32 0.0, %v1786
  %v1788 = vpop.f32.mrb[0].mxu0
  %v1789 = vpop.f32.mrb[0].mxu0
  %v1790 = vadd.f32 0.0, %v1789
  %v1791 = vpop.f32.mrb[0].mxu0
  %1792 = vmatprep.mubr.bf16.mxu0 %v1025
  %1793 = vmatmul.mubr.bf16.gmra.mrb[0].mxu0 %v1024
  %v1794 = vpop.f32.mrb[0].mxu0
  %v1795 = vadd.f32 0.0, %v1794
  %v1796 = vpop.f32.mrb[0].mxu0
  %v1797 = vpop.f32.mrb[0].mxu0
  %v1798 = vadd.f32 0.0, %v1797
  %v1799 = vpop.f32.mrb[0].mxu0
  %1800 = vmatprep.mubr.bf16.mxu0 %v1030
  %1801 = vmatmul.mubr.bf16.gmra.mrb[0].mxu0 %v1029
  %v1802 = vpop.f32.mrb[0].mxu0
  %v1803 = vadd.f32 0.0, %v1802
  %v1804 = vpop.f32.mrb[0].mxu0
  %v1805 = vpop.f32.mrb[0].mxu0
  %v1806 = vadd.f32 0.0, %v1805
  %v1807 = vpop.f32.mrb[0].mxu0
  %1808 = vmatprep.mubr.bf16.mxu0 %v1035
  %1809 = vmatmul.mubr.bf16.gmra.mrb[0].mxu0 %v1034
  %v1810 = vpop.f32.mrb[0].mxu0
  %v1811 = vadd.f32 0.0, %v1810
  %v1812 = vpop.f32.mrb[0].mxu0
  %v1813 = vpop.f32.mrb[0].mxu0
  %v1814 = vadd.f32 0.0, %v1813
  %v1815 = vpop.f32.mrb[0].mxu0
  %1816 = vmatprep.mubr.bf16.mxu0 %v1040
  %1817 = vmatmul.mubr.bf16.gmra.mrb[0].mxu0 %v1039
  %v1818 = vpop.f32.mrb[0].mxu0
  %v1819 = vadd.f32 0.0, %v1818
  %v1820 = vpop.f32.mrb[0].mxu0
  %v1821 = vpop.f32.mrb[0].mxu0
  %v1822 = vadd.f32 0.0, %v1821
  %v1823 = vpop.f32.mrb[0].mxu0
  %1824 = vmatprep.mubr.bf16.mxu0 %v1045
  %1825 = vmatmul.mubr.bf16.gmra.mrb[0].mxu0 %v1044
  %v1826 = vpop.f32.mrb[0].mxu0
  %v1827 = vadd.f32 0.0, %v1826
  %v1828 = vpop.f32.mrb[0].mxu0
  %v1829 = vpop.f32.mrb[0].mxu0
  %v1830 = vadd.f32 0.0, %v1829
  %v1831 = vpop.f32.mrb[0].mxu0
  %1832 = vmatprep.mubr.bf16.mxu0 %v1050
  %1833 = vmatmul.mubr.bf16.gmra.mrb[0].mxu0 %v1049
  %v1834 = vpop.f32.mrb[0].mxu0
  %v1835 = vadd.f32 0.0, %v1834
  %v1836 = vpop.f32.mrb[0].mxu0
  %v1837 = vpop.f32.mrb[0].mxu0
  %v1838 = vadd.f32 0.0, %v1837
  %v1839 = vpop.f32.mrb[0].mxu0
  %1840 = vmatprep.mubr.bf16.mxu0 %v1055
  %1841 = vmatmul.mubr.bf16.gmra.mrb[0].mxu0 %v1054
  %v1842 = vpop.f32.mrb[0].mxu0
  %v1843 = vadd.f32 0.0, %v1842
  %v1844 = vpop.f32.mrb[0].mxu0
  %v1845 = vpop.f32.mrb[0].mxu0
  %v1846 = vadd.f32 0.0, %v1845
  %v1847 = vpop.f32.mrb[0].mxu0
  %1848 = vdwg.mxu0
  %1849 = vmatprep.subr.bf16.mxu0 0
  %1850 = vmatpush1.bf16.msra.mxu0 %v1363
  %1851 = vmatprep.subr.bf16.mxu0 0
  %1852 = vmatpush1.bf16.msra.mxu0 %v1364
  %1853 = vmatprep.subr.bf16.mxu0 0
  %1854 = vmatpush1.bf16.msra.mxu0 %v1365
  %1855 = vmatprep.subr.bf16.mxu0 0
  %1856 = vmatpush1.bf16.msra.mxu0 %v1366
  %1857 = vmatprep.subr.bf16.mxu0 0
  %1858 = vmatpush1.bf16.msra.mxu0 %v1367
  %1859 = vmatprep.subr.bf16.mxu0 0
  %1860 = vmatpush1.bf16.msra.mxu0 %v1368
  %1861 = vmatprep.subr.bf16.mxu0 0
  %1862 = vmatpush1.bf16.msra.mxu0 %v1369
  %1863 = vmatprep.subr.bf16.mxu0 0
  %1864 = vmatpush1.bf16.msra.mxu0 %v1370
  %1865 = vmatprep.subr.bf16.mxu0 0
  %1866 = vmatpush1.bf16.msra.mxu0 %v1371
  %1867 = vmatprep.subr.bf16.mxu0 0
  %1868 = vmatpush1.bf16.msra.mxu0 %v1372
  %1869 = vmatprep.subr.bf16.mxu0 0
  %1870 = vmatpush1.bf16.msra.mxu0 %v1373
  %1871 = vmatprep.subr.bf16.mxu0 0
  %1872 = vmatpush1.bf16.msra.mxu0 %v1374
  %1873 = vmatprep.subr.bf16.mxu0 0
  %1874 = vmatpush1.bf16.msra.mxu0 %v1375
  %1875 = vmatprep.subr.bf16.mxu0 0
  %1876 = vmatpush1.bf16.msra.mxu0 %v1376
  %1877 = vmatprep.subr.bf16.mxu0 0
  %1878 = vmatpush1.bf16.msra.mxu0 %v1377
  %1879 = vmatprep.subr.bf16.mxu0 0
  %1880 = vmatpush1.bf16.msra.mxu0 %v1378
  %1881 = vmatprep.mubr.bf16.mxu0 %v882
  %1882 = vmatmul.mubr.bf16.gmra.mrb[0].mxu0 %v881
  %v1883 = vpop.f32.mrb[0].mxu0
  %v1884 = vadd.f32 %v1563, %v1883
  %v1885 = vpop.f32.mrb[0].mxu0
  %v1886 = vpop.f32.mrb[0].mxu0
  %v1887 = vadd.f32 %v1566, %v1886
  %v1888 = vpop.f32.mrb[0].mxu0
  %1889 = vmatprep.mubr.bf16.mxu0 %v887
  %1890 = vmatmul.mubr.bf16.gmra.mrb[0].mxu0 %v886
  %v1891 = vpop.f32.mrb[0].mxu0
  %v1892 = vadd.f32 %v1571, %v1891
  %v1893 = vpop.f32.mrb[0].mxu0
  %v1894 = vpop.f32.mrb[0].mxu0
  %v1895 = vadd.f32 %v1574, %v1894
  %v1896 = vpop.f32.mrb[0].mxu0
  %1897 = vmatprep.mubr.bf16.mxu0 %v892
  %1898 = vmatmul.mubr.bf16.gmra.mrb[0].mxu0 %v891
  %v1899 = vpop.f32.mrb[0].mxu0
  %v1900 = vadd.f32 %v1579, %v1899
  %v1901 = vpop.f32.mrb[0].mxu0
  %v1902 = vpop.f32.mrb[0].mxu0
  %v1903 = vadd.f32 %v1582, %v1902
  %v1904 = vpop.f32.mrb[0].mxu0
  %1905 = vmatprep.mubr.bf16.mxu0 %v897
  %1906 = vmatmul.mubr.bf16.gmra.mrb[0].mxu0 %v896
  %v1907 = vpop.f32.mrb[0].mxu0
  %v1908 = vadd.f32 %v1587, %v1907
  %v1909 = vpop.f32.mrb[0].mxu0
  %v1910 = vpop.f32.mrb[0].mxu0
  %v1911 = vadd.f32 %v1590, %v1910
  %v1912 = vpop.f32.mrb[0].mxu0
  %1913 = vmatprep.mubr.bf16.mxu0 %v902
  %1914 = vmatmul.mubr.bf16.gmra.mrb[0].mxu0 %v901
  %v1915 = vpop.f32.mrb[0].mxu0
  %v1916 = vadd.f32 %v1595, %v1915
  %v1917 = vpop.f32.mrb[0].mxu0
  %v1918 = vpop.f32.mrb[0].mxu0
  %v1919 = vadd.f32 %v1598, %v1918
  %v1920 = vpop.f32.mrb[0].mxu0
  %1921 = vmatprep.mubr.bf16.mxu0 %v907
  %1922 = vmatmul.mubr.bf16.gmra.mrb[0].mxu0 %v906
  %v1923 = vpop.f32.mrb[0].mxu0
  %v1924 = vadd.f32 %v1603, %v1923
  %v1925 = vpop.f32.mrb[0].mxu0
  %v1926 = vpop.f32.mrb[0].mxu0
  %v1927 = vadd.f32 %v1606, %v1926
  %v1928 = vpop.f32.mrb[0].mxu0
  %1929 = vmatprep.mubr.bf16.mxu0 %v912
  %1930 = vmatmul.mubr.bf16.gmra.mrb[0].mxu0 %v911
  %v1931 = vpop.f32.mrb[0].mxu0
  %v1932 = vadd.f32 %v1611, %v1931
  %v1933 = vpop.f32.mrb[0].mxu0
  %v1934 = vpop.f32.mrb[0].mxu0
  %v1935 = vadd.f32 %v1614, %v1934
  %v1936 = vpop.f32.mrb[0].mxu0
  %1937 = vmatprep.mubr.bf16.mxu0 %v917
  %1938 = vmatmul.mubr.bf16.gmra.mrb[0].mxu0 %v916
  %v1939 = vpop.f32.mrb[0].mxu0
  %v1940 = vadd.f32 %v1619, %v1939
  %v1941 = vpop.f32.mrb[0].mxu0
  %v1942 = vpop.f32.mrb[0].mxu0
  %v1943 = vadd.f32 %v1622, %v1942
  %v1944 = vpop.f32.mrb[0].mxu0
  %1945 = vmatprep.mubr.bf16.mxu0 %v922
  %1946 = vmatmul.mubr.bf16.gmra.mrb[0].mxu0 %v921
  %v1947 = vpop.f32.mrb[0].mxu0
  %v1948 = vadd.f32 %v1627, %v1947
  %v1949 = vpop.f32.mrb[0].mxu0
  %v1950 = vpop.f32.mrb[0].mxu0
  %v1951 = vadd.f32 %v1630, %v1950
  %v1952 = vpop.f32.mrb[0].mxu0
  %1953 = vmatprep.mubr.bf16.mxu0 %v927
  %1954 = vmatmul.mubr.bf16.gmra.mrb[0].mxu0 %v926
  %v1955 = vpop.f32.mrb[0].mxu0
  %v1956 = vadd.f32 %v1635, %v1955
  %v1957 = vpop.f32.mrb[0].mxu0
  %v1958 = vpop.f32.mrb[0].mxu0
  %v1959 = vadd.f32 %v1638, %v1958
  %v1960 = vpop.f32.mrb[0].mxu0
  %1961 = vmatprep.mubr.bf16.mxu0 %v932
  %1962 = vmatmul.mubr.bf16.gmra.mrb[0].mxu0 %v931
  %v1963 = vpop.f32.mrb[0].mxu0
  %v1964 = vadd.f32 %v1643, %v1963
  %v1965 = vpop.f32.mrb[0].mxu0
  %v1966 = vpop.f32.mrb[0].mxu0
  %v1967 = vadd.f32 %v1646, %v1966
  %v1968 = vpop.f32.mrb[0].mxu0
  %1969 = vmatprep.mubr.bf16.mxu0 %v937
  %1970 = vmatmul.mubr.bf16.gmra.mrb[0].mxu0 %v936
  %v1971 = vpop.f32.mrb[0].mxu0
  %v1972 = vadd.f32 %v1651, %v1971
  %v1973 = vpop.f32.mrb[0].mxu0
  %v1974 = vpop.f32.mrb[0].mxu0
  %v1975 = vadd.f32 %v1654, %v1974
  %v1976 = vpop.f32.mrb[0].mxu0
  %1977 = vmatprep.mubr.bf16.mxu0 %v942
  %1978 = vmatmul.mubr.bf16.gmra.mrb[0].mxu0 %v941
  %v1979 = vpop.f32.mrb[0].mxu0
  %v1980 = vadd.f32 %v1659, %v1979
  %v1981 = vpop.f32.mrb[0].mxu0
  %v1982 = vpop.f32.mrb[0].mxu0
  %v1983 = vadd.f32 %v1662, %v1982
  %v1984 = vpop.f32.mrb[0].mxu0
  %1985 = vmatprep.mubr.bf16.mxu0 %v947
  %1986 = vmatmul.mubr.bf16.gmra.mrb[0].mxu0 %v946
  %v1987 = vpop.f32.mrb[0].mxu0
  %v1988 = vadd.f32 %v1667, %v1987
  %v1989 = vpop.f32.mrb[0].mxu0
  %v1990 = vpop.f32.mrb[0].mxu0
  %v1991 = vadd.f32 %v1670, %v1990
  %v1992 = vpop.f32.mrb[0].mxu0
  %1993 = vmatprep.mubr.bf16.mxu0 %v952
  %1994 = vmatmul.mubr.bf16.gmra.mrb[0].mxu0 %v951
  %v1995 = vpop.f32.mrb[0].mxu0
  %v1996 = vadd.f32 %v1675, %v1995
  %v1997 = vpop.f32.mrb[0].mxu0
  %v1998 = vpop.f32.mrb[0].mxu0
  %v1999 = vadd.f32 %v1678, %v1998
  %v2000 = vpop.f32.mrb[0].mxu0
  %2001 = vmatprep.mubr.bf16.mxu0 %v957
  %2002 = vmatmul.mubr.bf16.gmra.mrb[0].mxu0 %v956
  %v2003 = vpop.f32.mrb[0].mxu0
  %v2004 = vadd.f32 %v1683, %v2003
  %v2005 = vpop.f32.mrb[0].mxu0
  %v2006 = vpop.f32.mrb[0].mxu0
  %v2007 = vadd.f32 %v1686, %v2006
  %v2008 = vpop.f32.mrb[0].mxu0
  %2009 = vmatprep.mubr.bf16.mxu0 %v962
  %2010 = vmatmul.mubr.bf16.gmra.mrb[0].mxu0 %v961
  %v2011 = vpop.f32.mrb[0].mxu0
  %v2012 = vadd.f32 %v1691, %v2011
  %v2013 = vpop.f32.mrb[0].mxu0
  %v2014 = vpop.f32.mrb[0].mxu0
  %v2015 = vadd.f32 %v1694, %v2014
  %v2016 = vpop.f32.mrb[0].mxu0
  %2017 = vmatprep.mubr.bf16.mxu0 %v967
  %2018 = vmatmul.mubr.bf16.gmra.mrb[0].mxu0 %v966
  %v2019 = vpop.f32.mrb[0].mxu0
  %v2020 = vadd.f32 %v1699, %v2019
  %v2021 = vpop.f32.mrb[0].mxu0
  %v2022 = vpop.f32.mrb[0].mxu0
  %v2023 = vadd.f32 %v1702, %v2022
  %v2024 = vpop.f32.mrb[0].mxu0
  %2025 = vmatprep.mubr.bf16.mxu0 %v972
  %2026 = vmatmul.mubr.bf16.gmra.mrb[0].mxu0 %v971
  %v2027 = vpop.f32.mrb[0].mxu0
  %v2028 = vadd.f32 %v1707, %v2027
  %v2029 = vpop.f32.mrb[0].mxu0
  %v2030 = vpop.f32.mrb[0].mxu0
  %v2031 = vadd.f32 %v1710, %v2030
  %v2032 = vpop.f32.mrb[0].mxu0
  %2033 = vmatprep.mubr.bf16.mxu0 %v977
  %2034 = vmatmul.mubr.bf16.gmra.mrb[0].mxu0 %v976
  %v2035 = vpop.f32.mrb[0].mxu0
  %v2036 = vadd.f32 %v1715, %v2035
  %v2037 = vpop.f32.mrb[0].mxu0
  %v2038 = vpop.f32.mrb[0].mxu0
  %v2039 = vadd.f32 %v1718, %v2038
  %v2040 = vpop.f32.mrb[0].mxu0
  %2041 = vmatprep.mubr.bf16.mxu0 %v982
  %2042 = vmatmul.mubr.bf16.gmra.mrb[0].mxu0 %v981
  %v2043 = vpop.f32.mrb[0].mxu0
  %v2044 = vadd.f32 %v1723, %v2043
  %v2045 = vpop.f32.mrb[0].mxu0
  %v2046 = vpop.f32.mrb[0].mxu0
  %v2047 = vadd.f32 %v1726, %v2046
  %v2048 = vpop.f32.mrb[0].mxu0
  %2049 = vmatprep.mubr.bf16.mxu0 %v987
  %2050 = vmatmul.mubr.bf16.gmra.mrb[0].mxu0 %v986
  %v2051 = vpop.f32.mrb[0].mxu0
  %v2052 = vadd.f32 %v1731, %v2051
  %v2053 = vpop.f32.mrb[0].mxu0
  %v2054 = vpop.f32.mrb[0].mxu0
  %v2055 = vadd.f32 %v1734, %v2054
  %v2056 = vpop.f32.mrb[0].mxu0
  %2057 = vmatprep.mubr.bf16.mxu0 %v992
  %2058 = vmatmul.mubr.bf16.gmra.mrb[0].mxu0 %v991
  %v2059 = vpop.f32.mrb[0].mxu0
  %v2060 = vadd.f32 %v1739, %v2059
  %v2061 = vpop.f32.mrb[0].mxu0
  %v2062 = vpop.f32.mrb[0].mxu0
  %v2063 = vadd.f32 %v1742, %v2062
  %v2064 = vpop.f32.mrb[0].mxu0
  %2065 = vmatprep.mubr.bf16.mxu0 %v997
  %2066 = vmatmul.mubr.bf16.gmra.mrb[0].mxu0 %v996
  %v2067 = vpop.f32.mrb[0].mxu0
  %v2068 = vadd.f32 %v1747, %v2067
  %v2069 = vpop.f32.mrb[0].mxu0
  %v2070 = vpop.f32.mrb[0].mxu0
  %v2071 = vadd.f32 %v1750, %v2070
  %v2072 = vpop.f32.mrb[0].mxu0
  %2073 = vmatprep.mubr.bf16.mxu0 %v1002
  %2074 = vmatmul.mubr.bf16.gmra.mrb[0].mxu0 %v1001
  %v2075 = vpop.f32.mrb[0].mxu0
  %v2076 = vadd.f32 %v1755, %v2075
  %v2077 = vpop.f32.mrb[0].mxu0
  %v2078 = vpop.f32.mrb[0].mxu0
  %v2079 = vadd.f32 %v1758, %v2078
  %v2080 = vpop.f32.mrb[0].mxu0
  %2081 = vmatprep.mubr.bf16.mxu0 %v1007
  %2082 = vmatmul.mubr.bf16.gmra.mrb[0].mxu0 %v1006
  %v2083 = vpop.f32.mrb[0].mxu0
  %v2084 = vadd.f32 %v1763, %v2083
  %v2085 = vpop.f32.mrb[0].mxu0
  %v2086 = vpop.f32.mrb[0].mxu0
  %v2087 = vadd.f32 %v1766, %v2086
  %v2088 = vpop.f32.mrb[0].mxu0
  %2089 = vmatprep.mubr.bf16.mxu0 %v1012
  %2090 = vmatmul.mubr.bf16.gmra.mrb[0].mxu0 %v1011
  %v2091 = vpop.f32.mrb[0].mxu0
  %v2092 = vadd.f32 %v1771, %v2091
  %v2093 = vpop.f32.mrb[0].mxu0
  %v2094 = vpop.f32.mrb[0].mxu0
  %v2095 = vadd.f32 %v1774, %v2094
  %v2096 = vpop.f32.mrb[0].mxu0
  %2097 = vmatprep.mubr.bf16.mxu0 %v1017
  %2098 = vmatmul.mubr.bf16.gmra.mrb[0].mxu0 %v1016
  %v2099 = vpop.f32.mrb[0].mxu0
  %v2100 = vadd.f32 %v1779, %v2099
  %v2101 = vpop.f32.mrb[0].mxu0
  %v2102 = vpop.f32.mrb[0].mxu0
  %v2103 = vadd.f32 %v1782, %v2102
  %v2104 = vpop.f32.mrb[0].mxu0
  %2105 = vmatprep.mubr.bf16.mxu0 %v1022
  %2106 = vmatmul.mubr.bf16.gmra.mrb[0].mxu0 %v1021
  %v2107 = vpop.f32.mrb[0].mxu0
  %v2108 = vadd.f32 %v1787, %v2107
  %v2109 = vpop.f32.mrb[0].mxu0
  %v2110 = vpop.f32.mrb[0].mxu0
  %v2111 = vadd.f32 %v1790, %v2110
  %v2112 = vpop.f32.mrb[0].mxu0
  %2113 = vmatprep.mubr.bf16.mxu0 %v1027
  %2114 = vmatmul.mubr.bf16.gmra.mrb[0].mxu0 %v1026
  %v2115 = vpop.f32.mrb[0].mxu0
  %v2116 = vadd.f32 %v1795, %v2115
  %v2117 = vpop.f32.mrb[0].mxu0
  %v2118 = vpop.f32.mrb[0].mxu0
  %v2119 = vadd.f32 %v1798, %v2118
  %v2120 = vpop.f32.mrb[0].mxu0
  %2121 = vmatprep.mubr.bf16.mxu0 %v1032
  %2122 = vmatmul.mubr.bf16.gmra.mrb[0].mxu0 %v1031
  %v2123 = vpop.f32.mrb[0].mxu0
  %v2124 = vadd.f32 %v1803, %v2123
  %v2125 = vpop.f32.mrb[0].mxu0
  %v2126 = vpop.f32.mrb[0].mxu0
  %v2127 = vadd.f32 %v1806, %v2126
  %v2128 = vpop.f32.mrb[0].mxu0
  %2129 = vmatprep.mubr.bf16.mxu0 %v1037
  %2130 = vmatmul.mubr.bf16.gmra.mrb[0].mxu0 %v1036
  %v2131 = vpop.f32.mrb[0].mxu0
  %v2132 = vadd.f32 %v1811, %v2131
  %v2133 = vpop.f32.mrb[0].mxu0
  %v2134 = vpop.f32.mrb[0].mxu0
  %v2135 = vadd.f32 %v1814, %v2134
  %v2136 = vpop.f32.mrb[0].mxu0
  %2137 = vmatprep.mubr.bf16.mxu0 %v1042
  %2138 = vmatmul.mubr.bf16.gmra.mrb[0].mxu0 %v1041
  %v2139 = vpop.f32.mrb[0].mxu0
  %v2140 = vadd.f32 %v1819, %v2139
  %v2141 = vpop.f32.mrb[0].mxu0
  %v2142 = vpop.f32.mrb[0].mxu0
  %v2143 = vadd.f32 %v1822, %v2142
  %v2144 = vpop.f32.mrb[0].mxu0
  %2145 = vmatprep.mubr.bf16.mxu0 %v1047
  %2146 = vmatmul.mubr.bf16.gmra.mrb[0].mxu0 %v1046
  %v2147 = vpop.f32.mrb[0].mxu0
  %v2148 = vadd.f32 %v1827, %v2147
  %v2149 = vpop.f32.mrb[0].mxu0
  %v2150 = vpop.f32.mrb[0].mxu0
  %v2151 = vadd.f32 %v1830, %v2150
  %v2152 = vpop.f32.mrb[0].mxu0
  %2153 = vmatprep.mubr.bf16.mxu0 %v1052
  %2154 = vmatmul.mubr.bf16.gmra.mrb[0].mxu0 %v1051
  %v2155 = vpop.f32.mrb[0].mxu0
  %v2156 = vadd.f32 %v1835, %v2155
  %v2157 = vpop.f32.mrb[0].mxu0
  %v2158 = vpop.f32.mrb[0].mxu0
  %v2159 = vadd.f32 %v1838, %v2158
  %v2160 = vpop.f32.mrb[0].mxu0
  %2161 = vmatprep.mubr.bf16.mxu0 %v1057
  %2162 = vmatmul.mubr.bf16.gmra.mrb[0].mxu0 %v1056
  %v2163 = vpop.f32.mrb[0].mxu0
  %v2164 = vadd.f32 %v1843, %v2163
  %v2165 = vpop.f32.mrb[0].mxu0
  %v2166 = vpop.f32.mrb[0].mxu0
  %v2167 = vadd.f32 %v1846, %v2166
  %v2168 = vpop.f32.mrb[0].mxu0
  %2169 = vdwg.mxu0
  %2170 = vmatprep.subr.bf16.mxu0 0
  %2171 = vmatpush1.bf16.msra.mxu0 %v1379
  %2172 = vmatprep.subr.bf16.mxu0 0
  %2173 = vmatpush1.bf16.msra.mxu0 %v1380
  %2174 = vmatprep.subr.bf16.mxu0 0
  %2175 = vmatpush1.bf16.msra.mxu0 %v1381
  %2176 = vmatprep.subr.bf16.mxu0 0
  %2177 = vmatpush1.bf16.msra.mxu0 %v1382
  %2178 = vmatprep.subr.bf16.mxu0 0
  %2179 = vmatpush1.bf16.msra.mxu0 0
  %2180 = vmatprep.subr.bf16.mxu0 0
  %2181 = vmatpush1.bf16.msra.mxu0 0
  %2182 = vmatprep.subr.bf16.mxu0 0
  %2183 = vmatpush1.bf16.msra.mxu0 0
  %2184 = vmatprep.subr.bf16.mxu0 0
  %2185 = vmatpush1.bf16.msra.mxu0 0
  %2186 = vmatprep.subr.bf16.mxu0 0
  %2187 = vmatpush1.bf16.msra.mxu0 0
  %2188 = vmatprep.subr.bf16.mxu0 0
  %2189 = vmatpush1.bf16.msra.mxu0 0
  %2190 = vmatprep.subr.bf16.mxu0 0
  %2191 = vmatpush1.bf16.msra.mxu0 0
  %2192 = vmatprep.subr.bf16.mxu0 0
  %2193 = vmatpush1.bf16.msra.mxu0 0
  %2194 = vmatprep.subr.bf16.mxu0 0
  %2195 = vmatpush1.bf16.msra.mxu0 0
  %2196 = vmatprep.subr.bf16.mxu0 0
  %2197 = vmatpush1.bf16.msra.mxu0 0
  %2198 = vmatprep.subr.bf16.mxu0 0
  %2199 = vmatpush1.bf16.msra.mxu0 0
  %2200 = vmatprep.subr.bf16.mxu0 0
  %2201 = vmatpush1.bf16.msra.mxu0 0
  %2202 = vmatprep.mubr.bf16.mxu0 0
  %2203 = vmatmul.mubr.bf16.gmra.mrb[0].mxu0 %v1421
  %v2204 = vpop.f32.mrb[0].mxu0
  %v2205 = vadd.f32 %v1884, %v2204
  %v2206 = vpop.f32.mrb[0].mxu0
  %v2207 = vpop.f32.mrb[0].mxu0
  %v2208 = vadd.f32 %v1887, %v2207
  %v2209 = vpop.f32.mrb[0].mxu0
  %2210 = vmatprep.mubr.bf16.mxu0 0
  %2211 = vmatmul.mubr.bf16.gmra.mrb[0].mxu0 %v1424
  %v2212 = vpop.f32.mrb[0].mxu0
  %v2213 = vadd.f32 %v1892, %v2212
  %v2214 = vpop.f32.mrb[0].mxu0
  %v2215 = vpop.f32.mrb[0].mxu0
  %v2216 = vadd.f32 %v1895, %v2215
  %v2217 = vpop.f32.mrb[0].mxu0
  %2218 = vmatprep.mubr.bf16.mxu0 0
  %2219 = vmatmul.mubr.bf16.gmra.mrb[0].mxu0 %v1427
  %v2220 = vpop.f32.mrb[0].mxu0
  %v2221 = vadd.f32 %v1900, %v2220
  %v2222 = vpop.f32.mrb[0].mxu0
  %v2223 = vpop.f32.mrb[0].mxu0
  %v2224 = vadd.f32 %v1903, %v2223
  %v2225 = vpop.f32.mrb[0].mxu0
  %2226 = vmatprep.mubr.bf16.mxu0 0
  %2227 = vmatmul.mubr.bf16.gmra.mrb[0].mxu0 %v1430
  %v2228 = vpop.f32.mrb[0].mxu0
  %v2229 = vadd.f32 %v1908, %v2228
  %v2230 = vpop.f32.mrb[0].mxu0
  %v2231 = vpop.f32.mrb[0].mxu0
  %v2232 = vadd.f32 %v1911, %v2231
  %v2233 = vpop.f32.mrb[0].mxu0
  %2234 = vmatprep.mubr.bf16.mxu0 0
  %2235 = vmatmul.mubr.bf16.gmra.mrb[0].mxu0 %v1433
  %v2236 = vpop.f32.mrb[0].mxu0
  %v2237 = vadd.f32 %v1916, %v2236
  %v2238 = vpop.f32.mrb[0].mxu0
  %v2239 = vpop.f32.mrb[0].mxu0
  %v2240 = vadd.f32 %v1919, %v2239
  %v2241 = vpop.f32.mrb[0].mxu0
  %2242 = vmatprep.mubr.bf16.mxu0 0
  %2243 = vmatmul.mubr.bf16.gmra.mrb[0].mxu0 %v1436
  %v2244 = vpop.f32.mrb[0].mxu0
  %v2245 = vadd.f32 %v1924, %v2244
  %v2246 = vpop.f32.mrb[0].mxu0
  %v2247 = vpop.f32.mrb[0].mxu0
  %v2248 = vadd.f32 %v1927, %v2247
  %v2249 = vpop.f32.mrb[0].mxu0
  %2250 = vmatprep.mubr.bf16.mxu0 0
  %2251 = vmatmul.mubr.bf16.gmra.mrb[0].mxu0 %v1439
  %v2252 = vpop.f32.mrb[0].mxu0
  %v2253 = vadd.f32 %v1932, %v2252
  %v2254 = vpop.f32.mrb[0].mxu0
  %v2255 = vpop.f32.mrb[0].mxu0
  %v2256 = vadd.f32 %v1935, %v2255
  %v2257 = vpop.f32.mrb[0].mxu0
  %2258 = vmatprep.mubr.bf16.mxu0 0
  %2259 = vmatmul.mubr.bf16.gmra.mrb[0].mxu0 %v1442
  %v2260 = vpop.f32.mrb[0].mxu0
  %v2261 = vadd.f32 %v1940, %v2260
  %v2262 = vpop.f32.mrb[0].mxu0
  %v2263 = vpop.f32.mrb[0].mxu0
  %v2264 = vadd.f32 %v1943, %v2263
  %v2265 = vpop.f32.mrb[0].mxu0
  %2266 = vmatprep.mubr.bf16.mxu0 0
  %2267 = vmatmul.mubr.bf16.gmra.mrb[0].mxu0 %v1445
  %v2268 = vpop.f32.mrb[0].mxu0
  %v2269 = vadd.f32 %v1948, %v2268
  %v2270 = vpop.f32.mrb[0].mxu0
  %v2271 = vpop.f32.mrb[0].mxu0
  %v2272 = vadd.f32 %v1951, %v2271
  %v2273 = vpop.f32.mrb[0].mxu0
  %2274 = vmatprep.mubr.bf16.mxu0 0
  %2275 = vmatmul.mubr.bf16.gmra.mrb[0].mxu0 %v1448
  %v2276 = vpop.f32.mrb[0].mxu0
  %v2277 = vadd.f32 %v1956, %v2276
  %v2278 = vpop.f32.mrb[0].mxu0
  %v2279 = vpop.f32.mrb[0].mxu0
  %v2280 = vadd.f32 %v1959, %v2279
  %v2281 = vpop.f32.mrb[0].mxu0
  %2282 = vmatprep.mubr.bf16.mxu0 0
  %2283 = vmatmul.mubr.bf16.gmra.mrb[0].mxu0 %v1451
  %v2284 = vpop.f32.mrb[0].mxu0
  %v2285 = vadd.f32 %v1964, %v2284
  %v2286 = vpop.f32.mrb[0].mxu0
  %v2287 = vpop.f32.mrb[0].mxu0
  %v2288 = vadd.f32 %v1967, %v2287
  %v2289 = vpop.f32.mrb[0].mxu0
  %2290 = vmatprep.mubr.bf16.mxu0 0
  %2291 = vmatmul.mubr.bf16.gmra.mrb[0].mxu0 %v1454
  %v2292 = vpop.f32.mrb[0].mxu0
  %v2293 = vadd.f32 %v1972, %v2292
  %v2294 = vpop.f32.mrb[0].mxu0
  %v2295 = vpop.f32.mrb[0].mxu0
  %v2296 = vadd.f32 %v1975, %v2295
  %v2297 = vpop.f32.mrb[0].mxu0
  %2298 = vmatprep.mubr.bf16.mxu0 0
  %2299 = vmatmul.mubr.bf16.gmra.mrb[0].mxu0 %v1457
  %v2300 = vpop.f32.mrb[0].mxu0
  %v2301 = vadd.f32 %v1980, %v2300
  %v2302 = vpop.f32.mrb[0].mxu0
  %v2303 = vpop.f32.mrb[0].mxu0
  %v2304 = vadd.f32 %v1983, %v2303
  %v2305 = vpop.f32.mrb[0].mxu0
  %2306 = vmatprep.mubr.bf16.mxu0 0
  %2307 = vmatmul.mubr.bf16.gmra.mrb[0].mxu0 %v1460
  %v2308 = vpop.f32.mrb[0].mxu0
  %v2309 = vadd.f32 %v1988, %v2308
  %v2310 = vpop.f32.mrb[0].mxu0
  %v2311 = vpop.f32.mrb[0].mxu0
  %v2312 = vadd.f32 %v1991, %v2311
  %v2313 = vpop.f32.mrb[0].mxu0
  %2314 = vmatprep.mubr.bf16.mxu0 0
  %2315 = vmatmul.mubr.bf16.gmra.mrb[0].mxu0 %v1463
  %v2316 = vpop.f32.mrb[0].mxu0
  %v2317 = vadd.f32 %v1996, %v2316
  %v2318 = vpop.f32.mrb[0].mxu0
  %v2319 = vpop.f32.mrb[0].mxu0
  %v2320 = vadd.f32 %v1999, %v2319
  %v2321 = vpop.f32.mrb[0].mxu0
  %2322 = vmatprep.mubr.bf16.mxu0 0
  %2323 = vmatmul.mubr.bf16.gmra.mrb[0].mxu0 %v1466
  %v2324 = vpop.f32.mrb[0].mxu0
  %v2325 = vadd.f32 %v2004, %v2324
  %v2326 = vpop.f32.mrb[0].mxu0
  %v2327 = vpop.f32.mrb[0].mxu0
  %v2328 = vadd.f32 %v2007, %v2327
  %v2329 = vpop.f32.mrb[0].mxu0
  %2330 = vmatprep.mubr.bf16.mxu0 0
  %2331 = vmatmul.mubr.bf16.gmra.mrb[0].mxu0 %v1469
  %v2332 = vpop.f32.mrb[0].mxu0
  %v2333 = vadd.f32 %v2012, %v2332
  %v2334 = vpop.f32.mrb[0].mxu0
  %v2335 = vpop.f32.mrb[0].mxu0
  %v2336 = vadd.f32 %v2015, %v2335
  %v2337 = vpop.f32.mrb[0].mxu0
  %2338 = vmatprep.mubr.bf16.mxu0 0
  %2339 = vmatmul.mubr.bf16.gmra.mrb[0].mxu0 %v1472
  %v2340 = vpop.f32.mrb[0].mxu0
  %v2341 = vadd.f32 %v2020, %v2340
  %v2342 = vpop.f32.mrb[0].mxu0
  %v2343 = vpop.f32.mrb[0].mxu0
  %v2344 = vadd.f32 %v2023, %v2343
  %v2345 = vpop.f32.mrb[0].mxu0
  %2346 = vmatprep.mubr.bf16.mxu0 0
  %2347 = vmatmul.mubr.bf16.gmra.mrb[0].mxu0 %v1475
  %v2348 = vpop.f32.mrb[0].mxu0
  %v2349 = vadd.f32 %v2028, %v2348
  %v2350 = vpop.f32.mrb[0].mxu0
  %v2351 = vpop.f32.mrb[0].mxu0
  %v2352 = vadd.f32 %v2031, %v2351
  %v2353 = vpop.f32.mrb[0].mxu0
  %2354 = vmatprep.mubr.bf16.mxu0 0
  %2355 = vmatmul.mubr.bf16.gmra.mrb[0].mxu0 %v1478
  %v2356 = vpop.f32.mrb[0].mxu0
  %v2357 = vadd.f32 %v2036, %v2356
  %v2358 = vpop.f32.mrb[0].mxu0
  %v2359 = vpop.f32.mrb[0].mxu0
  %v2360 = vadd.f32 %v2039, %v2359
  %v2361 = vpop.f32.mrb[0].mxu0
  %2362 = vmatprep.mubr.bf16.mxu0 0
  %2363 = vmatmul.mubr.bf16.gmra.mrb[0].mxu0 %v1481
  %v2364 = vpop.f32.mrb[0].mxu0
  %v2365 = vadd.f32 %v2044, %v2364
  %v2366 = vpop.f32.mrb[0].mxu0
  %v2367 = vpop.f32.mrb[0].mxu0
  %v2368 = vadd.f32 %v2047, %v2367
  %v2369 = vpop.f32.mrb[0].mxu0
  %2370 = vmatprep.mubr.bf16.mxu0 0
  %2371 = vmatmul.mubr.bf16.gmra.mrb[0].mxu0 %v1484
  %v2372 = vpop.f32.mrb[0].mxu0
  %v2373 = vadd.f32 %v2052, %v2372
  %v2374 = vpop.f32.mrb[0].mxu0
  %v2375 = vpop.f32.mrb[0].mxu0
  %v2376 = vadd.f32 %v2055, %v2375
  %v2377 = vpop.f32.mrb[0].mxu0
  %2378 = vmatprep.mubr.bf16.mxu0 0
  %2379 = vmatmul.mubr.bf16.gmra.mrb[0].mxu0 %v1487
  %v2380 = vpop.f32.mrb[0].mxu0
  %v2381 = vadd.f32 %v2060, %v2380
  %v2382 = vpop.f32.mrb[0].mxu0
  %v2383 = vpop.f32.mrb[0].mxu0
  %v2384 = vadd.f32 %v2063, %v2383
  %v2385 = vpop.f32.mrb[0].mxu0
  %2386 = vmatprep.mubr.bf16.mxu0 0
  %2387 = vmatmul.mubr.bf16.gmra.mrb[0].mxu0 %v1490
  %v2388 = vpop.f32.mrb[0].mxu0
  %v2389 = vadd.f32 %v2068, %v2388
  %v2390 = vpop.f32.mrb[0].mxu0
  %v2391 = vpop.f32.mrb[0].mxu0
  %v2392 = vadd.f32 %v2071, %v2391
  %v2393 = vpop.f32.mrb[0].mxu0
  %2394 = vmatprep.mubr.bf16.mxu0 0
  %2395 = vmatmul.mubr.bf16.gmra.mrb[0].mxu0 %v1493
  %v2396 = vpop.f32.mrb[0].mxu0
  %v2397 = vadd.f32 %v2076, %v2396
  %v2398 = vpop.f32.mrb[0].mxu0
  %v2399 = vpop.f32.mrb[0].mxu0
  %v2400 = vadd.f32 %v2079, %v2399
  %v2401 = vpop.f32.mrb[0].mxu0
  %2402 = vmatprep.mubr.bf16.mxu0 0
  %2403 = vmatmul.mubr.bf16.gmra.mrb[0].mxu0 %v1496
  %v2404 = vpop.f32.mrb[0].mxu0
  %v2405 = vadd.f32 %v2084, %v2404
  %v2406 = vpop.f32.mrb[0].mxu0
  %v2407 = vpop.f32.mrb[0].mxu0
  %v2408 = vadd.f32 %v2087, %v2407
  %v2409 = vpop.f32.mrb[0].mxu0
  %2410 = vmatprep.mubr.bf16.mxu0 0
  %2411 = vmatmul.mubr.bf16.gmra.mrb[0].mxu0 %v1499
  %v2412 = vpop.f32.mrb[0].mxu0
  %v2413 = vadd.f32 %v2092, %v2412
  %v2414 = vpop.f32.mrb[0].mxu0
  %v2415 = vpop.f32.mrb[0].mxu0
  %v2416 = vadd.f32 %v2095, %v2415
  %v2417 = vpop.f32.mrb[0].mxu0
  %2418 = vmatprep.mubr.bf16.mxu0 0
  %2419 = vmatmul.mubr.bf16.gmra.mrb[0].mxu0 %v1502
  %v2420 = vpop.f32.mrb[0].mxu0
  %v2421 = vadd.f32 %v2100, %v2420
  %v2422 = vpop.f32.mrb[0].mxu0
  %v2423 = vpop.f32.mrb[0].mxu0
  %v2424 = vadd.f32 %v2103, %v2423
  %v2425 = vpop.f32.mrb[0].mxu0
  %2426 = vmatprep.mubr.bf16.mxu0 0
  %2427 = vmatmul.mubr.bf16.gmra.mrb[0].mxu0 %v1505
  %v2428 = vpop.f32.mrb[0].mxu0
  %v2429 = vadd.f32 %v2108, %v2428
  %v2430 = vpop.f32.mrb[0].mxu0
  %v2431 = vpop.f32.mrb[0].mxu0
  %v2432 = vadd.f32 %v2111, %v2431
  %v2433 = vpop.f32.mrb[0].mxu0
  %2434 = vmatprep.mubr.bf16.mxu0 0
  %2435 = vmatmul.mubr.bf16.gmra.mrb[0].mxu0 %v1508
  %v2436 = vpop.f32.mrb[0].mxu0
  %v2437 = vadd.f32 %v2116, %v2436
  %v2438 = vpop.f32.mrb[0].mxu0
  %v2439 = vpop.f32.mrb[0].mxu0
  %v2440 = vadd.f32 %v2119, %v2439
  %v2441 = vpop.f32.mrb[0].mxu0
  %2442 = vmatprep.mubr.bf16.mxu0 0
  %2443 = vmatmul.mubr.bf16.gmra.mrb[0].mxu0 %v1511
  %v2444 = vpop.f32.mrb[0].mxu0
  %v2445 = vadd.f32 %v2124, %v2444
  %v2446 = vpop.f32.mrb[0].mxu0
  %v2447 = vpop.f32.mrb[0].mxu0
  %v2448 = vadd.f32 %v2127, %v2447
  %v2449 = vpop.f32.mrb[0].mxu0
  %2450 = vmatprep.mubr.bf16.mxu0 0
  %2451 = vmatmul.mubr.bf16.gmra.mrb[0].mxu0 %v1514
  %v2452 = vpop.f32.mrb[0].mxu0
  %v2453 = vadd.f32 %v2132, %v2452
  %v2454 = vpop.f32.mrb[0].mxu0
  %v2455 = vpop.f32.mrb[0].mxu0
  %v2456 = vadd.f32 %v2135, %v2455
  %v2457 = vpop.f32.mrb[0].mxu0
  %2458 = vmatprep.mubr.bf16.mxu0 0
  %2459 = vmatmul.mubr.bf16.gmra.mrb[0].mxu0 %v1517
  %v2460 = vpop.f32.mrb[0].mxu0
  %v2461 = vadd.f32 %v2140, %v2460
  %v2462 = vpop.f32.mrb[0].mxu0
  %v2463 = vpop.f32.mrb[0].mxu0
  %v2464 = vadd.f32 %v2143, %v2463
  %v2465 = vpop.f32.mrb[0].mxu0
  %2466 = vmatprep.mubr.bf16.mxu0 0
  %2467 = vmatmul.mubr.bf16.gmra.mrb[0].mxu0 %v1520
  %v2468 = vpop.f32.mrb[0].mxu0
  %v2469 = vadd.f32 %v2148, %v2468
  %v2470 = vpop.f32.mrb[0].mxu0
  %v2471 = vpop.f32.mrb[0].mxu0
  %v2472 = vadd.f32 %v2151, %v2471
  %v2473 = vpop.f32.mrb[0].mxu0
  %2474 = vmatprep.mubr.bf16.mxu0 0
  %2475 = vmatmul.mubr.bf16.gmra.mrb[0].mxu0 %v1523
  %v2476 = vpop.f32.mrb[0].mxu0
  %v2477 = vadd.f32 %v2156, %v2476
  %v2478 = vpop.f32.mrb[0].mxu0
  %v2479 = vpop.f32.mrb[0].mxu0
  %v2480 = vadd.f32 %v2159, %v2479
  %v2481 = vpop.f32.mrb[0].mxu0
  %2482 = vmatprep.mubr.bf16.mxu0 0
  %2483 = vmatmul.mubr.bf16.gmra.mrb[0].mxu0 %v1526
  %v2484 = vpop.f32.mrb[0].mxu0
  %v2485 = vadd.f32 %v2164, %v2484
  %v2486 = vpop.f32.mrb[0].mxu0
  %v2487 = vpop.f32.mrb[0].mxu0
  %v2488 = vadd.f32 %v2167, %v2487
  %v2489 = vpop.f32.mrb[0].mxu0
  %2490 = vdwg.mxu0
  %v2491 = vmax.f32 %v2205, %v2277
  %v2492 = vmax.f32 %v2208, %v2280
  %v2493 = vmax.f32 %v2213, %v2285
  %v2494 = vmax.f32 %v2216, %v2288
  %v2495 = vmax.f32 %v2221, %v2293
  %v2496 = vmax.f32 %v2224, %v2296
  %v2497 = vmax.f32 %v2229, %v2301
  %v2498 = vmax.f32 %v2232, %v2304
  %v2499 = vmax.f32 %v2237, %v2309
  %v2500 = vmax.f32 %v2240, %v2312
  %v2501 = vmax.f32 %v2245, %v2317
  %v2502 = vmax.f32 %v2248, %v2320
  %v2503 = vmax.f32 %v2253, %v2325
  %v2504 = vmax.f32 %v2256, %v2328
  %v2505 = vmax.f32 %v2261, %v2333
  %v2506 = vmax.f32 %v2264, %v2336
  %v2507 = vmax.f32 %v2269, %v2341
  %v2508 = vmax.f32 %v2272, %v2344
  %v2509 = vmax.f32 %v2349, %v2421
  %v2510 = vmax.f32 %v2352, %v2424
  %v2511 = vmax.f32 %v2357, %v2429
  %v2512 = vmax.f32 %v2360, %v2432
  %v2513 = vmax.f32 %v2365, %v2437
  %v2514 = vmax.f32 %v2368, %v2440
  %v2515 = vmax.f32 %v2373, %v2445
  %v2516 = vmax.f32 %v2376, %v2448
  %v2517 = vmax.f32 %v2381, %v2453
  %v2518 = vmax.f32 %v2384, %v2456
  %v2519 = vmax.f32 %v2389, %v2461
  %v2520 = vmax.f32 %v2392, %v2464
  %v2521 = vmax.f32 %v2397, %v2469
  %v2522 = vmax.f32 %v2400, %v2472
  %v2523 = vmax.f32 %v2405, %v2477
  %v2524 = vmax.f32 %v2408, %v2480
  %v2525 = vmax.f32 %v2413, %v2485
  %v2526 = vmax.f32 %v2416, %v2488
  %v2527 = vmax.f32 %v2491, %v2509
  %v2528 = vmax.f32 %v2492, %v2510
  %v2529 = vmax.f32 %v2493, %v2511
  %v2530 = vmax.f32 %v2494, %v2512
  %v2531 = vmax.f32 %v2495, %v2513
  %v2532 = vmax.f32 %v2496, %v2514
  %v2533 = vmax.f32 %v2497, %v2515
  %v2534 = vmax.f32 %v2498, %v2516
  %v2535 = vmax.f32 %v2499, %v2517
  %v2536 = vmax.f32 %v2500, %v2518
  %v2537 = vmax.f32 %v2501, %v2519
  %v2538 = vmax.f32 %v2502, %v2520
  %v2539 = vmax.f32 %v2503, %v2521
  %v2540 = vmax.f32 %v2504, %v2522
  %v2541 = vmax.f32 %v2505, %v2523
  %v2542 = vmax.f32 %v2506, %v2524
  %v2543 = vmax.f32 %v2507, %v2525
  %v2544 = vmax.f32 %v2508, %v2526
  %v2545 = vld [vmem:[%s2] sm:$0x1]
  %v2547 = vlaneseq
  %v2548 = vshrl.u32 %v2547, 7
  %v2549 = vsub.s32 0, %v2548
  %v2550 = vrot.slane %v2545, %v2549
  %v2552 = vadd.f32 %v2527, %v2550
  %v2553 = vadd.f32 %v2528, %v2550
  %v2554 = vadd.f32 %v2529, %v2550
  %v2555 = vadd.f32 %v2530, %v2550
  %v2556 = vadd.f32 %v2531, %v2550
  %v2557 = vadd.f32 %v2532, %v2550
  %v2558 = vadd.f32 %v2533, %v2550
  %v2559 = vadd.f32 %v2534, %v2550
  %v2560 = vadd.f32 %v2535, %v2550
  %v2561 = vadd.f32 %v2536, %v2550
  %v2562 = vadd.f32 %v2537, %v2550
  %v2563 = vadd.f32 %v2538, %v2550
  %v2564 = vadd.f32 %v2539, %v2550
  %v2565 = vadd.f32 %v2540, %v2550
  %v2566 = vadd.f32 %v2541, %v2550
  %v2567 = vadd.f32 %v2542, %v2550
  %v2568 = vadd.f32 %v2543, %v2550
  %v2569 = vadd.f32 %v2544, %v2550
  %v2570 = vmax.f32 %v2552, 0.0
  %v2571 = vmax.f32 %v2553, 0.0
  %v2572 = vmax.f32 %v2554, 0.0
  %v2573 = vmax.f32 %v2555, 0.0
  %v2574 = vmax.f32 %v2556, 0.0
  %v2575 = vmax.f32 %v2557, 0.0
  %v2576 = vmax.f32 %v2558, 0.0
  %v2577 = vmax.f32 %v2559, 0.0
  %v2578 = vmax.f32 %v2560, 0.0
  %v2579 = vmax.f32 %v2561, 0.0
  %v2580 = vmax.f32 %v2562, 0.0
  %v2581 = vmax.f32 %v2563, 0.0
  %v2582 = vmax.f32 %v2564, 0.0
  %v2583 = vmax.f32 %v2565, 0.0
  %v2584 = vmax.f32 %v2566, 0.0
  %v2585 = vmax.f32 %v2567, 0.0
  %v2586 = vmax.f32 %v2568, 0.0
  %v2587 = vmax.f32 %v2569, 0.0
  %v2588 = vpack.c.bf16 %v2571, %v2570
  %v2589 = vpack.c.bf16 %v2573, %v2572
  %v2590 = vpack.c.bf16 %v2575, %v2574
  %v2591 = vpack.c.bf16 %v2577, %v2576
  %v2592 = vpack.c.bf16 %v2579, %v2578
  %v2593 = vpack.c.bf16 %v2581, %v2580
  %v2594 = vpack.c.bf16 %v2583, %v2582
  %v2595 = vpack.c.bf16 %v2585, %v2584
  %v2596 = vpack.c.bf16 %v2587, %v2586
  %v2606 = vunpack.c.l.b16 %v2588
  %v2607 = vunpack.c.h.b16 %v2588
  %v2608 = vunpack.c.l.b16 %v2589
  %v2609 = vunpack.c.h.b16 %v2589
  %v2610 = vunpack.c.l.b16 %v2590
  %v2611 = vunpack.c.h.b16 %v2590
  %v2612 = vunpack.c.l.b16 %v2591
  %v2613 = vunpack.c.h.b16 %v2591
  %v2614 = vunpack.c.l.b16 %v2592
  %v2615 = vunpack.c.h.b16 %v2592
  %v2616 = vunpack.c.l.b16 %v2593
  %v2617 = vunpack.c.h.b16 %v2593
  %v2618 = vunpack.c.l.b16 %v2594
  %v2619 = vunpack.c.h.b16 %v2594
  %v2620 = vunpack.c.l.b16 %v2595
  %v2621 = vunpack.c.h.b16 %v2595
  %v2622 = vunpack.c.l.b16 %v2596
  %v2623 = vunpack.c.h.b16 %v2596
  %v2624 = vpack.c.b16 %v2606, %v2606
  %v2625 = vpack.c.b16 %v2607, %v2607
  %v2626 = vpack.c.b16 %v2608, %v2608
  %v2627 = vpack.c.b16 %v2609, %v2609
  %v2628 = vpack.c.b16 %v2610, %v2610
  %v2629 = vpack.c.b16 %v2611, %v2611
  %v2630 = vpack.c.b16 %v2612, %v2612
  %v2631 = vpack.c.b16 %v2613, %v2613
  %v2632 = vpack.c.b16 %v2614, %v2614
  %v2633 = vpack.c.b16 %v2615, %v2615
  %v2634 = vpack.c.b16 %v2616, %v2616
  %v2635 = vpack.c.b16 %v2617, %v2617
  %v2636 = vpack.c.b16 %v2618, %v2618
  %v2637 = vpack.c.b16 %v2619, %v2619
  %v2638 = vpack.c.b16 %v2620, %v2620
  %v2639 = vpack.c.b16 %v2621, %v2621
  %v2640 = vpack.c.b16 %v2622, %v2622
  %v2641 = vpack.c.b16 %v2623, %v2623
  %2660 = vst [vmem:[%s3] sm:$0xf] %v2624
  %2661 = vst [vmem:[%s3 + $0x4] sm:$0xf] %v2625
  %2662 = vst [vmem:[%s3 + $0x8] sm:$0xf] %v2626
  %2663 = vst [vmem:[%s3 + $0xc] sm:$0xf] %v2627
  %2664 = vst [vmem:[%s3 + $0x10] sm:$0xf] %v2628
  %2665 = vst [vmem:[%s3 + $0x14] sm:$0xf] %v2629
  %2666 = vst [vmem:[%s3 + $0x18] sm:$0xf] %v2630
  %2667 = vst [vmem:[%s3 + $0x1c] sm:$0xf] %v2631
  %2668 = vst [vmem:[%s3 + $0x20] sm:$0xf] %v2632
  %2669 = vst [vmem:[%s3 + $0x24] sm:$0xf] %v2633
  %2670 = vst [vmem:[%s3 + $0x28] sm:$0xf] %v2634
  %2671 = vst [vmem:[%s3 + $0x2c] sm:$0xf] %v2635
  %2672 = vst [vmem:[%s3 + $0x30] sm:$0xf] %v2636
  %2673 = vst [vmem:[%s3 + $0x34] sm:$0xf] %v2637
  %2674 = vst [vmem:[%s3 + $0x38] sm:$0xf] %v2638
  %2675 = vst [vmem:[%s3 + $0x3c] sm:$0xf] %v2639
  %2676 = vst [vmem:[%s3 + $0x40] sm:$0xf] %v2640
  %2677 = vst [vmem:[%s3 + $0x44] sm:$0xf] %v2641
  // Predicated region
  $region14: #{center_forward.2} parent=0 // pred_check
    _
  $region15: #{center_forward.2} parent=0 // pred_check_branch
    %2679 = sbr.rel (0) target = $region17
  $region16: #{center_forward.2} parent=0 // pred_region
    _
  $region17: #{center_forward.2} parent=0 // pred_fallthru
    _
  // Predicated region
  $region18: #{center_forward.2} parent=0 // pred_check
    _
  $region19: #{center_forward.2} parent=0 // pred_check_branch
    %2681 = sbr.rel (0) target = $region21
  $region20: #{center_forward.2} parent=0 // pred_region
    _
  $region21: #{center_forward.2} parent=0 // pred_fallthru
    _

// kernel: center_forward.3
$region0: #{center_forward.3}
  #allocation0 [shape = 'u32[]', space=smem, size = 0x4, offset = 0x4, fixed_abs, tag = 'smem constant byte address 0x4 - core index']
  #allocation1 [shape = 'u32[144,128]{1,0:T(1,128)}', space=vmem, size = 0x12000, scoped, tag = 'internal scratch']
  %s0 = inlined_call_operand.vmem [shape: bf16[2,9216], index: 0, kind: input, shape index: {}]
  %s1 = inlined_call_operand.vmem [shape: bf16[9216,128], index: 1, kind: input, shape index: {}]
  %s2 = inlined_call_operand.vmem [shape: f32[1,128], index: 2, kind: input, shape index: {}]
  %s3 = inlined_call_operand.hbm [shape: f32[2,128], index: 3, kind: output, shape index: {}]
  %s4 = sld [smem:[#allocation0]]
  $region22: #{center_forward.3} parent=0
    _
  %s6 = ssub.s32 1, %s4
  %s7 = scalar_select 0, %s6, %s4
  $region1: #{center_forward.3} parent=0
    #allocation2 [shape = 'u8[1024]{0}', space=vmem, size = 0x400, scoped, tag = 'output window, operand 0, single buffered']
    #allocation3 [shape = 's32[1]{0}', space=sflag, size = 0x4, scoped, tag = 'scoped memory for center_forward.3']
    %8 = vsyncpa [#allocation3], 0
    // Predicated region
    $region2: #{center_forward.3} parent=1 // pred_check
      _
    $region3: #{center_forward.3} parent=1 // pred_check_branch
      %10 = sbr.rel (0) target = $region5
    $region4: #{center_forward.3} parent=1 // pred_region
      _
    $region5: #{center_forward.3} parent=1 // pred_fallthru
      _
    // Predicated region
    $region6: #{center_forward.3} parent=1 // pred_check
      _
    $region7: #{center_forward.3} parent=1 // pred_check_branch
      %12 = sbr.rel (0) target = $region9
    $region8: #{center_forward.3} parent=1 // pred_region
      _
    $region9: #{center_forward.3} parent=1 // pred_fallthru
      _
    // Predicated region
    $region10: #{center_forward.3} parent=1 // pred_check
      _
    $region11: #{center_forward.3} parent=1 // pred_check_branch
      %14 = sbr.rel (0) target = $region13
    $region12: #{center_forward.3} parent=1 // pred_region
      _
    $region13: #{center_forward.3} parent=1 // pred_fallthru
      _
    %v16 = vld [vmem:[%s0] sm:$0xff]
    %v17 = vld [vmem:[%s0 + $0x8] sm:$0xff]
    %v18 = vld [vmem:[%s0 + $0x10] sm:$0xff]
    %v19 = vld [vmem:[%s0 + $0x18] sm:$0xff]
    %v20 = vld [vmem:[%s0 + $0x20] sm:$0xff]
    %v21 = vld [vmem:[%s0 + $0x28] sm:$0xff]
    %v22 = vld [vmem:[%s0 + $0x30] sm:$0xff]
    %v23 = vld [vmem:[%s0 + $0x38] sm:$0xff]
    %v24 = vld [vmem:[%s0 + $0x40] sm:$0xff]
    %v25 = vld [vmem:[%s1] sm:$0xf]
    %v26 = vld [vmem:[%s1 + $0x4] sm:$0xf]
    %v27 = vld [vmem:[%s1 + $0x8] sm:$0xf]
    %v28 = vld [vmem:[%s1 + $0xc] sm:$0xf]
    %v29 = vld [vmem:[%s1 + $0x10] sm:$0xf]
    %v30 = vld [vmem:[%s1 + $0x14] sm:$0xf]
    %v31 = vld [vmem:[%s1 + $0x18] sm:$0xf]
    %v32 = vld [vmem:[%s1 + $0x1c] sm:$0xf]
    %v33 = vld [vmem:[%s1 + $0x20] sm:$0xf]
    %v34 = vld [vmem:[%s1 + $0x24] sm:$0xf]
    %v35 = vld [vmem:[%s1 + $0x28] sm:$0xf]
    %v36 = vld [vmem:[%s1 + $0x2c] sm:$0xf]
    %v37 = vld [vmem:[%s1 + $0x30] sm:$0xf]
    %v38 = vld [vmem:[%s1 + $0x34] sm:$0xf]
    %v39 = vld [vmem:[%s1 + $0x38] sm:$0xf]
    %v40 = vld [vmem:[%s1 + $0x3c] sm:$0xf]
    %v41 = vld [vmem:[%s1 + $0x40] sm:$0xf]
    %v42 = vld [vmem:[%s1 + $0x44] sm:$0xf]
    %v43 = vld [vmem:[%s1 + $0x48] sm:$0xf]
    %v44 = vld [vmem:[%s1 + $0x4c] sm:$0xf]
    %v45 = vld [vmem:[%s1 + $0x50] sm:$0xf]
    %v46 = vld [vmem:[%s1 + $0x54] sm:$0xf]
    %v47 = vld [vmem:[%s1 + $0x58] sm:$0xf]
    %v48 = vld [vmem:[%s1 + $0x5c] sm:$0xf]
    %v49 = vld [vmem:[%s1 + $0x60] sm:$0xf]
    %v50 = vld [vmem:[%s1 + $0x64] sm:$0xf]
    %v51 = vld [vmem:[%s1 + $0x68] sm:$0xf]
    %v52 = vld [vmem:[%s1 + $0x6c] sm:$0xf]
    %v53 = vld [vmem:[%s1 + $0x70] sm:$0xf]
    %v54 = vld [vmem:[%s1 + $0x74] sm:$0xf]
    %v55 = vld [vmem:[%s1 + $0x78] sm:$0xf]
    %v56 = vld [vmem:[%s1 + $0x7c] sm:$0xf]
    %v57 = vld [vmem:[%s1 + $0x80] sm:$0xf]
    %v58 = vld [vmem:[%s1 + $0x84] sm:$0xf]
    %v59 = vld [vmem:[%s1 + $0x88] sm:$0xf]
    %v60 = vld [vmem:[%s1 + $0x8c] sm:$0xf]
    %v61 = vld [vmem:[%s1 + $0x90] sm:$0xf]
    %v62 = vld [vmem:[%s1 + $0x94] sm:$0xf]
    %v63 = vld [vmem:[%s1 + $0x98] sm:$0xf]
    %v64 = vld [vmem:[%s1 + $0x9c] sm:$0xf]
    %v65 = vld [vmem:[%s1 + $0xa0] sm:$0xf]
    %v66 = vld [vmem:[%s1 + $0xa4] sm:$0xf]
    %v67 = vld [vmem:[%s1 + $0xa8] sm:$0xf]
    %v68 = vld [vmem:[%s1 + $0xac] sm:$0xf]
    %v69 = vld [vmem:[%s1 + $0xb0] sm:$0xf]
    %v70 = vld [vmem:[%s1 + $0xb4] sm:$0xf]
    %v71 = vld [vmem:[%s1 + $0xb8] sm:$0xf]
    %v72 = vld [vmem:[%s1 + $0xbc] sm:$0xf]
    %v73 = vld [vmem:[%s1 + $0xc0] sm:$0xf]
    %v74 = vld [vmem:[%s1 + $0xc4] sm:$0xf]
    %v75 = vld [vmem:[%s1 + $0xc8] sm:$0xf]
    %v76 = vld [vmem:[%s1 + $0xcc] sm:$0xf]
    %v77 = vld [vmem:[%s1 + $0xd0] sm:$0xf]
    %v78 = vld [vmem:[%s1 + $0xd4] sm:$0xf]
    %v79 = vld [vmem:[%s1 + $0xd8] sm:$0xf]
    %v80 = vld [vmem:[%s1 + $0xdc] sm:$0xf]
    %v81 = vld [vmem:[%s1 + $0xe0] sm:$0xf]
    %v82 = vld [vmem:[%s1 + $0xe4] sm:$0xf]
    %v83 = vld [vmem:[%s1 + $0xe8] sm:$0xf]
    %v84 = vld [vmem:[%s1 + $0xec] sm:$0xf]
    %v85 = vld [vmem:[%s1 + $0xf0] sm:$0xf]
    %v86 = vld [vmem:[%s1 + $0xf4] sm:$0xf]
    %v87 = vld [vmem:[%s1 + $0xf8] sm:$0xf]
    %v88 = vld [vmem:[%s1 + $0xfc] sm:$0xf]
    %v89 = vld [vmem:[%s1 + $0x100] sm:$0xf]
    %v90 = vld [vmem:[%s1 + $0x104] sm:$0xf]
    %v91 = vld [vmem:[%s1 + $0x108] sm:$0xf]
    %v92 = vld [vmem:[%s1 + $0x10c] sm:$0xf]
    %v93 = vld [vmem:[%s1 + $0x110] sm:$0xf]
    %v94 = vld [vmem:[%s1 + $0x114] sm:$0xf]
    %v95 = vld [vmem:[%s1 + $0x118] sm:$0xf]
    %v96 = vld [vmem:[%s1 + $0x11c] sm:$0xf]
    %v97 = vld [vmem:[%s1 + $0x120] sm:$0xf]
    %v98 = vld [vmem:[%s1 + $0x124] sm:$0xf]
    %v99 = vld [vmem:[%s1 + $0x128] sm:$0xf]
    %v100 = vld [vmem:[%s1 + $0x12c] sm:$0xf]
    %v101 = vld [vmem:[%s1 + $0x130] sm:$0xf]
    %v102 = vld [vmem:[%s1 + $0x134] sm:$0xf]
    %v103 = vld [vmem:[%s1 + $0x138] sm:$0xf]
    %v104 = vld [vmem:[%s1 + $0x13c] sm:$0xf]
    %v105 = vld [vmem:[%s1 + $0x140] sm:$0xf]
    %v106 = vld [vmem:[%s1 + $0x144] sm:$0xf]
    %v107 = vld [vmem:[%s1 + $0x148] sm:$0xf]
    %v108 = vld [vmem:[%s1 + $0x14c] sm:$0xf]
    %v109 = vld [vmem:[%s1 + $0x150] sm:$0xf]
    %v110 = vld [vmem:[%s1 + $0x154] sm:$0xf]
    %v111 = vld [vmem:[%s1 + $0x158] sm:$0xf]
    %v112 = vld [vmem:[%s1 + $0x15c] sm:$0xf]
    %v113 = vld [vmem:[%s1 + $0x160] sm:$0xf]
    %v114 = vld [vmem:[%s1 + $0x164] sm:$0xf]
    %v115 = vld [vmem:[%s1 + $0x168] sm:$0xf]
    %v116 = vld [vmem:[%s1 + $0x16c] sm:$0xf]
    %v117 = vld [vmem:[%s1 + $0x170] sm:$0xf]
    %v118 = vld [vmem:[%s1 + $0x174] sm:$0xf]
    %v119 = vld [vmem:[%s1 + $0x178] sm:$0xf]
    %v120 = vld [vmem:[%s1 + $0x17c] sm:$0xf]
    %v121 = vld [vmem:[%s1 + $0x180] sm:$0xf]
    %v122 = vld [vmem:[%s1 + $0x184] sm:$0xf]
    %v123 = vld [vmem:[%s1 + $0x188] sm:$0xf]
    %v124 = vld [vmem:[%s1 + $0x18c] sm:$0xf]
    %v125 = vld [vmem:[%s1 + $0x190] sm:$0xf]
    %v126 = vld [vmem:[%s1 + $0x194] sm:$0xf]
    %v127 = vld [vmem:[%s1 + $0x198] sm:$0xf]
    %v128 = vld [vmem:[%s1 + $0x19c] sm:$0xf]
    %v129 = vld [vmem:[%s1 + $0x1a0] sm:$0xf]
    %v130 = vld [vmem:[%s1 + $0x1a4] sm:$0xf]
    %v131 = vld [vmem:[%s1 + $0x1a8] sm:$0xf]
    %v132 = vld [vmem:[%s1 + $0x1ac] sm:$0xf]
    %v133 = vld [vmem:[%s1 + $0x1b0] sm:$0xf]
    %v134 = vld [vmem:[%s1 + $0x1b4] sm:$0xf]
    %v135 = vld [vmem:[%s1 + $0x1b8] sm:$0xf]
    %v136 = vld [vmem:[%s1 + $0x1bc] sm:$0xf]
    %v137 = vld [vmem:[%s1 + $0x1c0] sm:$0xf]
    %v138 = vld [vmem:[%s1 + $0x1c4] sm:$0xf]
    %v139 = vld [vmem:[%s1 + $0x1c8] sm:$0xf]
    %v140 = vld [vmem:[%s1 + $0x1cc] sm:$0xf]
    %v141 = vld [vmem:[%s1 + $0x1d0] sm:$0xf]
    %v142 = vld [vmem:[%s1 + $0x1d4] sm:$0xf]
    %v143 = vld [vmem:[%s1 + $0x1d8] sm:$0xf]
    %v144 = vld [vmem:[%s1 + $0x1dc] sm:$0xf]
    %v145 = vld [vmem:[%s1 + $0x1e0] sm:$0xf]
    %v146 = vld [vmem:[%s1 + $0x1e4] sm:$0xf]
    %v147 = vld [vmem:[%s1 + $0x1e8] sm:$0xf]
    %v148 = vld [vmem:[%s1 + $0x1ec] sm:$0xf]
    %v149 = vld [vmem:[%s1 + $0x1f0] sm:$0xf]
    %v150 = vld [vmem:[%s1 + $0x1f4] sm:$0xf]
    %v151 = vld [vmem:[%s1 + $0x1f8] sm:$0xf]
    %v152 = vld [vmem:[%s1 + $0x1fc] sm:$0xf]
    %v153 = vld [vmem:[%s1 + $0x200] sm:$0xf]
    %v154 = vld [vmem:[%s1 + $0x204] sm:$0xf]
    %v155 = vld [vmem:[%s1 + $0x208] sm:$0xf]
    %v156 = vld [vmem:[%s1 + $0x20c] sm:$0xf]
    %v157 = vld [vmem:[%s1 + $0x210] sm:$0xf]
    %v158 = vld [vmem:[%s1 + $0x214] sm:$0xf]
    %v159 = vld [vmem:[%s1 + $0x218] sm:$0xf]
    %v160 = vld [vmem:[%s1 + $0x21c] sm:$0xf]
    %v161 = vld [vmem:[%s1 + $0x220] sm:$0xf]
    %v162 = vld [vmem:[%s1 + $0x224] sm:$0xf]
    %v163 = vld [vmem:[%s1 + $0x228] sm:$0xf]
    %v164 = vld [vmem:[%s1 + $0x22c] sm:$0xf]
    %v165 = vld [vmem:[%s1 + $0x230] sm:$0xf]
    %v166 = vld [vmem:[%s1 + $0x234] sm:$0xf]
    %v167 = vld [vmem:[%s1 + $0x238] sm:$0xf]
    %v168 = vld [vmem:[%s1 + $0x23c] sm:$0xf]
    %v169 = vld [vmem:[%s1 + $0x240] sm:$0xf]
    %v170 = vld [vmem:[%s1 + $0x244] sm:$0xf]
    %v171 = vld [vmem:[%s1 + $0x248] sm:$0xf]
    %v172 = vld [vmem:[%s1 + $0x24c] sm:$0xf]
    %v173 = vld [vmem:[%s1 + $0x250] sm:$0xf]
    %v174 = vld [vmem:[%s1 + $0x254] sm:$0xf]
    %v175 = vld [vmem:[%s1 + $0x258] sm:$0xf]
    %v176 = vld [vmem:[%s1 + $0x25c] sm:$0xf]
    %v177 = vld [vmem:[%s1 + $0x260] sm:$0xf]
    %v178 = vld [vmem:[%s1 + $0x264] sm:$0xf]
    %v179 = vld [vmem:[%s1 + $0x268] sm:$0xf]
    %v180 = vld [vmem:[%s1 + $0x26c] sm:$0xf]
    %v181 = vld [vmem:[%s1 + $0x270] sm:$0xf]
    %v182 = vld [vmem:[%s1 + $0x274] sm:$0xf]
    %v183 = vld [vmem:[%s1 + $0x278] sm:$0xf]
    %v184 = vld [vmem:[%s1 + $0x27c] sm:$0xf]
    %v185 = vld [vmem:[%s1 + $0x280] sm:$0xf]
    %v186 = vld [vmem:[%s1 + $0x284] sm:$0xf]
    %v187 = vld [vmem:[%s1 + $0x288] sm:$0xf]
    %v188 = vld [vmem:[%s1 + $0x28c] sm:$0xf]
    %v189 = vld [vmem:[%s1 + $0x290] sm:$0xf]
    %v190 = vld [vmem:[%s1 + $0x294] sm:$0xf]
    %v191 = vld [vmem:[%s1 + $0x298] sm:$0xf]
    %v192 = vld [vmem:[%s1 + $0x29c] sm:$0xf]
    %v193 = vld [vmem:[%s1 + $0x2a0] sm:$0xf]
    %v194 = vld [vmem:[%s1 + $0x2a4] sm:$0xf]
    %v195 = vld [vmem:[%s1 + $0x2a8] sm:$0xf]
    %v196 = vld [vmem:[%s1 + $0x2ac] sm:$0xf]
    %v197 = vld [vmem:[%s1 + $0x2b0] sm:$0xf]
    %v198 = vld [vmem:[%s1 + $0x2b4] sm:$0xf]
    %v199 = vld [vmem:[%s1 + $0x2b8] sm:$0xf]
    %v200 = vld [vmem:[%s1 + $0x2bc] sm:$0xf]
    %v201 = vld [vmem:[%s1 + $0x2c0] sm:$0xf]
    %v202 = vld [vmem:[%s1 + $0x2c4] sm:$0xf]
    %v203 = vld [vmem:[%s1 + $0x2c8] sm:$0xf]
    %v204 = vld [vmem:[%s1 + $0x2cc] sm:$0xf]
    %v205 = vld [vmem:[%s1 + $0x2d0] sm:$0xf]
    %v206 = vld [vmem:[%s1 + $0x2d4] sm:$0xf]
    %v207 = vld [vmem:[%s1 + $0x2d8] sm:$0xf]
    %v208 = vld [vmem:[%s1 + $0x2dc] sm:$0xf]
    %v209 = vld [vmem:[%s1 + $0x2e0] sm:$0xf]
    %v210 = vld [vmem:[%s1 + $0x2e4] sm:$0xf]
    %v211 = vld [vmem:[%s1 + $0x2e8] sm:$0xf]
    %v212 = vld [vmem:[%s1 + $0x2ec] sm:$0xf]
    %v213 = vld [vmem:[%s1 + $0x2f0] sm:$0xf]
    %v214 = vld [vmem:[%s1 + $0x2f4] sm:$0xf]
    %v215 = vld [vmem:[%s1 + $0x2f8] sm:$0xf]
    %v216 = vld [vmem:[%s1 + $0x2fc] sm:$0xf]
    %v217 = vld [vmem:[%s1 + $0x300] sm:$0xf]
    %v218 = vld [vmem:[%s1 + $0x304] sm:$0xf]
    %v219 = vld [vmem:[%s1 + $0x308] sm:$0xf]
    %v220 = vld [vmem:[%s1 + $0x30c] sm:$0xf]
    %v221 = vld [vmem:[%s1 + $0x310] sm:$0xf]
    %v222 = vld [vmem:[%s1 + $0x314] sm:$0xf]
    %v223 = vld [vmem:[%s1 + $0x318] sm:$0xf]
    %v224 = vld [vmem:[%s1 + $0x31c] sm:$0xf]
    %v225 = vld [vmem:[%s1 + $0x320] sm:$0xf]
    %v226 = vld [vmem:[%s1 + $0x324] sm:$0xf]
    %v227 = vld [vmem:[%s1 + $0x328] sm:$0xf]
    %v228 = vld [vmem:[%s1 + $0x32c] sm:$0xf]
    %v229 = vld [vmem:[%s1 + $0x330] sm:$0xf]
    %v230 = vld [vmem:[%s1 + $0x334] sm:$0xf]
    %v231 = vld [vmem:[%s1 + $0x338] sm:$0xf]
    %v232 = vld [vmem:[%s1 + $0x33c] sm:$0xf]
    %v233 = vld [vmem:[%s1 + $0x340] sm:$0xf]
    %v234 = vld [vmem:[%s1 + $0x344] sm:$0xf]
    %v235 = vld [vmem:[%s1 + $0x348] sm:$0xf]
    %v236 = vld [vmem:[%s1 + $0x34c] sm:$0xf]
    %v237 = vld [vmem:[%s1 + $0x350] sm:$0xf]
    %v238 = vld [vmem:[%s1 + $0x354] sm:$0xf]
    %v239 = vld [vmem:[%s1 + $0x358] sm:$0xf]
    %v240 = vld [vmem:[%s1 + $0x35c] sm:$0xf]
    %v241 = vld [vmem:[%s1 + $0x360] sm:$0xf]
    %v242 = vld [vmem:[%s1 + $0x364] sm:$0xf]
    %v243 = vld [vmem:[%s1 + $0x368] sm:$0xf]
    %v244 = vld [vmem:[%s1 + $0x36c] sm:$0xf]
    %v245 = vld [vmem:[%s1 + $0x370] sm:$0xf]
    %v246 = vld [vmem:[%s1 + $0x374] sm:$0xf]
    %v247 = vld [vmem:[%s1 + $0x378] sm:$0xf]
    %v248 = vld [vmem:[%s1 + $0x37c] sm:$0xf]
    %v249 = vld [vmem:[%s1 + $0x380] sm:$0xf]
    %v250 = vld [vmem:[%s1 + $0x384] sm:$0xf]
    %v251 = vld [vmem:[%s1 + $0x388] sm:$0xf]
    %v252 = vld [vmem:[%s1 + $0x38c] sm:$0xf]
    %v253 = vld [vmem:[%s1 + $0x390] sm:$0xf]
    %v254 = vld [vmem:[%s1 + $0x394] sm:$0xf]
    %v255 = vld [vmem:[%s1 + $0x398] sm:$0xf]
    %v256 = vld [vmem:[%s1 + $0x39c] sm:$0xf]
    %v257 = vld [vmem:[%s1 + $0x3a0] sm:$0xf]
    %v258 = vld [vmem:[%s1 + $0x3a4] sm:$0xf]
    %v259 = vld [vmem:[%s1 + $0x3a8] sm:$0xf]
    %v260 = vld [vmem:[%s1 + $0x3ac] sm:$0xf]
    %v261 = vld [vmem:[%s1 + $0x3b0] sm:$0xf]
    %v262 = vld [vmem:[%s1 + $0x3b4] sm:$0xf]
    %v263 = vld [vmem:[%s1 + $0x3b8] sm:$0xf]
    %v264 = vld [vmem:[%s1 + $0x3bc] sm:$0xf]
    %v265 = vld [vmem:[%s1 + $0x3c0] sm:$0xf]
    %v266 = vld [vmem:[%s1 + $0x3c4] sm:$0xf]
    %v267 = vld [vmem:[%s1 + $0x3c8] sm:$0xf]
    %v268 = vld [vmem:[%s1 + $0x3cc] sm:$0xf]
    %v269 = vld [vmem:[%s1 + $0x3d0] sm:$0xf]
    %v270 = vld [vmem:[%s1 + $0x3d4] sm:$0xf]
    %v271 = vld [vmem:[%s1 + $0x3d8] sm:$0xf]
    %v272 = vld [vmem:[%s1 + $0x3dc] sm:$0xf]
    %v273 = vld [vmem:[%s1 + $0x3e0] sm:$0xf]
    %v274 = vld [vmem:[%s1 + $0x3e4] sm:$0xf]
    %v275 = vld [vmem:[%s1 + $0x3e8] sm:$0xf]
    %v276 = vld [vmem:[%s1 + $0x3ec] sm:$0xf]
    %v277 = vld [vmem:[%s1 + $0x3f0] sm:$0xf]
    %v278 = vld [vmem:[%s1 + $0x3f4] sm:$0xf]
    %v279 = vld [vmem:[%s1 + $0x3f8] sm:$0xf]
    %v280 = vld [vmem:[%s1 + $0x3fc] sm:$0xf]
    %v281 = vld [vmem:[%s1 + $0x400] sm:$0xf]
    %v282 = vld [vmem:[%s1 + $0x404] sm:$0xf]
    %v283 = vld [vmem:[%s1 + $0x408] sm:$0xf]
    %v284 = vld [vmem:[%s1 + $0x40c] sm:$0xf]
    %v285 = vld [vmem:[%s1 + $0x410] sm:$0xf]
    %v286 = vld [vmem:[%s1 + $0x414] sm:$0xf]
    %v287 = vld [vmem:[%s1 + $0x418] sm:$0xf]
    %v288 = vld [vmem:[%s1 + $0x41c] sm:$0xf]
    %v289 = vld [vmem:[%s1 + $0x420] sm:$0xf]
    %v290 = vld [vmem:[%s1 + $0x424] sm:$0xf]
    %v291 = vld [vmem:[%s1 + $0x428] sm:$0xf]
    %v292 = vld [vmem:[%s1 + $0x42c] sm:$0xf]
    %v293 = vld [vmem:[%s1 + $0x430] sm:$0xf]
    %v294 = vld [vmem:[%s1 + $0x434] sm:$0xf]
    %v295 = vld [vmem:[%s1 + $0x438] sm:$0xf]
    %v296 = vld [vmem:[%s1 + $0x43c] sm:$0xf]
    %v297 = vld [vmem:[%s1 + $0x440] sm:$0xf]
    %v298 = vld [vmem:[%s1 + $0x444] sm:$0xf]
    %v299 = vld [vmem:[%s1 + $0x448] sm:$0xf]
    %v300 = vld [vmem:[%s1 + $0x44c] sm:$0xf]
    %v301 = vld [vmem:[%s1 + $0x450] sm:$0xf]
    %v302 = vld [vmem:[%s1 + $0x454] sm:$0xf]
    %v303 = vld [vmem:[%s1 + $0x458] sm:$0xf]
    %v304 = vld [vmem:[%s1 + $0x45c] sm:$0xf]
    %v305 = vld [vmem:[%s1 + $0x460] sm:$0xf]
    %v306 = vld [vmem:[%s1 + $0x464] sm:$0xf]
    %v307 = vld [vmem:[%s1 + $0x468] sm:$0xf]
    %v308 = vld [vmem:[%s1 + $0x46c] sm:$0xf]
    %v309 = vld [vmem:[%s1 + $0x470] sm:$0xf]
    %v310 = vld [vmem:[%s1 + $0x474] sm:$0xf]
    %v311 = vld [vmem:[%s1 + $0x478] sm:$0xf]
    %v312 = vld [vmem:[%s1 + $0x47c] sm:$0xf]
    %v313 = vld [vmem:[%s1 + $0x480] sm:$0xf]
    %v314 = vld [vmem:[%s1 + $0x484] sm:$0xf]
    %v315 = vld [vmem:[%s1 + $0x488] sm:$0xf]
    %v316 = vld [vmem:[%s1 + $0x48c] sm:$0xf]
    %v317 = vld [vmem:[%s1 + $0x490] sm:$0xf]
    %v318 = vld [vmem:[%s1 + $0x494] sm:$0xf]
    %v319 = vld [vmem:[%s1 + $0x498] sm:$0xf]
    %v320 = vld [vmem:[%s1 + $0x49c] sm:$0xf]
    %v321 = vld [vmem:[%s1 + $0x4a0] sm:$0xf]
    %v322 = vld [vmem:[%s1 + $0x4a4] sm:$0xf]
    %v323 = vld [vmem:[%s1 + $0x4a8] sm:$0xf]
    %v324 = vld [vmem:[%s1 + $0x4ac] sm:$0xf]
    %v325 = vld [vmem:[%s1 + $0x4b0] sm:$0xf]
    %v326 = vld [vmem:[%s1 + $0x4b4] sm:$0xf]
    %v327 = vld [vmem:[%s1 + $0x4b8] sm:$0xf]
    %v328 = vld [vmem:[%s1 + $0x4bc] sm:$0xf]
    %v329 = vld [vmem:[%s1 + $0x4c0] sm:$0xf]
    %v330 = vld [vmem:[%s1 + $0x4c4] sm:$0xf]
    %v331 = vld [vmem:[%s1 + $0x4c8] sm:$0xf]
    %v332 = vld [vmem:[%s1 + $0x4cc] sm:$0xf]
    %v333 = vld [vmem:[%s1 + $0x4d0] sm:$0xf]
    %v334 = vld [vmem:[%s1 + $0x4d4] sm:$0xf]
    %v335 = vld [vmem:[%s1 + $0x4d8] sm:$0xf]
    %v336 = vld [vmem:[%s1 + $0x4dc] sm:$0xf]
    %v337 = vld [vmem:[%s1 + $0x4e0] sm:$0xf]
    %v338 = vld [vmem:[%s1 + $0x4e4] sm:$0xf]
    %v339 = vld [vmem:[%s1 + $0x4e8] sm:$0xf]
    %v340 = vld [vmem:[%s1 + $0x4ec] sm:$0xf]
    %v341 = vld [vmem:[%s1 + $0x4f0] sm:$0xf]
    %v342 = vld [vmem:[%s1 + $0x4f4] sm:$0xf]
    %v343 = vld [vmem:[%s1 + $0x4f8] sm:$0xf]
    %v344 = vld [vmem:[%s1 + $0x4fc] sm:$0xf]
    %v345 = vld [vmem:[%s1 + $0x500] sm:$0xf]
    %v346 = vld [vmem:[%s1 + $0x504] sm:$0xf]
    %v347 = vld [vmem:[%s1 + $0x508] sm:$0xf]
    %v348 = vld [vmem:[%s1 + $0x50c] sm:$0xf]
    %v349 = vld [vmem:[%s1 + $0x510] sm:$0xf]
    %v350 = vld [vmem:[%s1 + $0x514] sm:$0xf]
    %v351 = vld [vmem:[%s1 + $0x518] sm:$0xf]
    %v352 = vld [vmem:[%s1 + $0x51c] sm:$0xf]
    %v353 = vld [vmem:[%s1 + $0x520] sm:$0xf]
    %v354 = vld [vmem:[%s1 + $0x524] sm:$0xf]
    %v355 = vld [vmem:[%s1 + $0x528] sm:$0xf]
    %v356 = vld [vmem:[%s1 + $0x52c] sm:$0xf]
    %v357 = vld [vmem:[%s1 + $0x530] sm:$0xf]
    %v358 = vld [vmem:[%s1 + $0x534] sm:$0xf]
    %v359 = vld [vmem:[%s1 + $0x538] sm:$0xf]
    %v360 = vld [vmem:[%s1 + $0x53c] sm:$0xf]
    %v361 = vld [vmem:[%s1 + $0x540] sm:$0xf]
    %v362 = vld [vmem:[%s1 + $0x544] sm:$0xf]
    %v363 = vld [vmem:[%s1 + $0x548] sm:$0xf]
    %v364 = vld [vmem:[%s1 + $0x54c] sm:$0xf]
    %v365 = vld [vmem:[%s1 + $0x550] sm:$0xf]
    %v366 = vld [vmem:[%s1 + $0x554] sm:$0xf]
    %v367 = vld [vmem:[%s1 + $0x558] sm:$0xf]
    %v368 = vld [vmem:[%s1 + $0x55c] sm:$0xf]
    %v369 = vld [vmem:[%s1 + $0x560] sm:$0xf]
    %v370 = vld [vmem:[%s1 + $0x564] sm:$0xf]
    %v371 = vld [vmem:[%s1 + $0x568] sm:$0xf]
    %v372 = vld [vmem:[%s1 + $0x56c] sm:$0xf]
    %v373 = vld [vmem:[%s1 + $0x570] sm:$0xf]
    %v374 = vld [vmem:[%s1 + $0x574] sm:$0xf]
    %v375 = vld [vmem:[%s1 + $0x578] sm:$0xf]
    %v376 = vld [vmem:[%s1 + $0x57c] sm:$0xf]
    %v377 = vld [vmem:[%s1 + $0x580] sm:$0xf]
    %v378 = vld [vmem:[%s1 + $0x584] sm:$0xf]
    %v379 = vld [vmem:[%s1 + $0x588] sm:$0xf]
    %v380 = vld [vmem:[%s1 + $0x58c] sm:$0xf]
    %v381 = vld [vmem:[%s1 + $0x590] sm:$0xf]
    %v382 = vld [vmem:[%s1 + $0x594] sm:$0xf]
    %v383 = vld [vmem:[%s1 + $0x598] sm:$0xf]
    %v384 = vld [vmem:[%s1 + $0x59c] sm:$0xf]
    %v385 = vld [vmem:[%s1 + $0x5a0] sm:$0xf]
    %v386 = vld [vmem:[%s1 + $0x5a4] sm:$0xf]
    %v387 = vld [vmem:[%s1 + $0x5a8] sm:$0xf]
    %v388 = vld [vmem:[%s1 + $0x5ac] sm:$0xf]
    %v389 = vld [vmem:[%s1 + $0x5b0] sm:$0xf]
    %v390 = vld [vmem:[%s1 + $0x5b4] sm:$0xf]
    %v391 = vld [vmem:[%s1 + $0x5b8] sm:$0xf]
    %v392 = vld [vmem:[%s1 + $0x5bc] sm:$0xf]
    %v393 = vld [vmem:[%s1 + $0x5c0] sm:$0xf]
    %v394 = vld [vmem:[%s1 + $0x5c4] sm:$0xf]
    %v395 = vld [vmem:[%s1 + $0x5c8] sm:$0xf]
    %v396 = vld [vmem:[%s1 + $0x5cc] sm:$0xf]
    %v397 = vld [vmem:[%s1 + $0x5d0] sm:$0xf]
    %v398 = vld [vmem:[%s1 + $0x5d4] sm:$0xf]
    %v399 = vld [vmem:[%s1 + $0x5d8] sm:$0xf]
    %v400 = vld [vmem:[%s1 + $0x5dc] sm:$0xf]
    %v401 = vld [vmem:[%s1 + $0x5e0] sm:$0xf]
    %v402 = vld [vmem:[%s1 + $0x5e4] sm:$0xf]
    %v403 = vld [vmem:[%s1 + $0x5e8] sm:$0xf]
    %v404 = vld [vmem:[%s1 + $0x5ec] sm:$0xf]
    %v405 = vld [vmem:[%s1 + $0x5f0] sm:$0xf]
    %v406 = vld [vmem:[%s1 + $0x5f4] sm:$0xf]
    %v407 = vld [vmem:[%s1 + $0x5f8] sm:$0xf]
    %v408 = vld [vmem:[%s1 + $0x5fc] sm:$0xf]
    %v409 = vld [vmem:[%s1 + $0x600] sm:$0xf]
    %v410 = vld [vmem:[%s1 + $0x604] sm:$0xf]
    %v411 = vld [vmem:[%s1 + $0x608] sm:$0xf]
    %v412 = vld [vmem:[%s1 + $0x60c] sm:$0xf]
    %v413 = vld [vmem:[%s1 + $0x610] sm:$0xf]
    %v414 = vld [vmem:[%s1 + $0x614] sm:$0xf]
    %v415 = vld [vmem:[%s1 + $0x618] sm:$0xf]
    %v416 = vld [vmem:[%s1 + $0x61c] sm:$0xf]
    %v417 = vld [vmem:[%s1 + $0x620] sm:$0xf]
    %v418 = vld [vmem:[%s1 + $0x624] sm:$0xf]
    %v419 = vld [vmem:[%s1 + $0x628] sm:$0xf]
    %v420 = vld [vmem:[%s1 + $0x62c] sm:$0xf]
    %v421 = vld [vmem:[%s1 + $0x630] sm:$0xf]
    %v422 = vld [vmem:[%s1 + $0x634] sm:$0xf]
    %v423 = vld [vmem:[%s1 + $0x638] sm:$0xf]
    %v424 = vld [vmem:[%s1 + $0x63c] sm:$0xf]
    %v425 = vld [vmem:[%s1 + $0x640] sm:$0xf]
    %v426 = vld [vmem:[%s1 + $0x644] sm:$0xf]
    %v427 = vld [vmem:[%s1 + $0x648] sm:$0xf]
    %v428 = vld [vmem:[%s1 + $0x64c] sm:$0xf]
    %v429 = vld [vmem:[%s1 + $0x650] sm:$0xf]
    %v430 = vld [vmem:[%s1 + $0x654] sm:$0xf]
    %v431 = vld [vmem:[%s1 + $0x658] sm:$0xf]
    %v432 = vld [vmem:[%s1 + $0x65c] sm:$0xf]
    %v433 = vld [vmem:[%s1 + $0x660] sm:$0xf]
    %v434 = vld [vmem:[%s1 + $0x664] sm:$0xf]
    %v435 = vld [vmem:[%s1 + $0x668] sm:$0xf]
    %v436 = vld [vmem:[%s1 + $0x66c] sm:$0xf]
    %v437 = vld [vmem:[%s1 + $0x670] sm:$0xf]
    %v438 = vld [vmem:[%s1 + $0x674] sm:$0xf]
    %v439 = vld [vmem:[%s1 + $0x678] sm:$0xf]
    %v440 = vld [vmem:[%s1 + $0x67c] sm:$0xf]
    %v441 = vld [vmem:[%s1 + $0x680] sm:$0xf]
    %v442 = vld [vmem:[%s1 + $0x684] sm:$0xf]
    %v443 = vld [vmem:[%s1 + $0x688] sm:$0xf]
    %v444 = vld [vmem:[%s1 + $0x68c] sm:$0xf]
    %v445 = vld [vmem:[%s1 + $0x690] sm:$0xf]
    %v446 = vld [vmem:[%s1 + $0x694] sm:$0xf]
    %v447 = vld [vmem:[%s1 + $0x698] sm:$0xf]
    %v448 = vld [vmem:[%s1 + $0x69c] sm:$0xf]
    %v449 = vld [vmem:[%s1 + $0x6a0] sm:$0xf]
    %v450 = vld [vmem:[%s1 + $0x6a4] sm:$0xf]
    %v451 = vld [vmem:[%s1 + $0x6a8] sm:$0xf]
    %v452 = vld [vmem:[%s1 + $0x6ac] sm:$0xf]
    %v453 = vld [vmem:[%s1 + $0x6b0] sm:$0xf]
    %v454 = vld [vmem:[%s1 + $0x6b4] sm:$0xf]
    %v455 = vld [vmem:[%s1 + $0x6b8] sm:$0xf]
    %v456 = vld [vmem:[%s1 + $0x6bc] sm:$0xf]
    %v457 = vld [vmem:[%s1 + $0x6c0] sm:$0xf]
    %v458 = vld [vmem:[%s1 + $0x6c4] sm:$0xf]
    %v459 = vld [vmem:[%s1 + $0x6c8] sm:$0xf]
    %v460 = vld [vmem:[%s1 + $0x6cc] sm:$0xf]
    %v461 = vld [vmem:[%s1 + $0x6d0] sm:$0xf]
    %v462 = vld [vmem:[%s1 + $0x6d4] sm:$0xf]
    %v463 = vld [vmem:[%s1 + $0x6d8] sm:$0xf]
    %v464 = vld [vmem:[%s1 + $0x6dc] sm:$0xf]
    %v465 = vld [vmem:[%s1 + $0x6e0] sm:$0xf]
    %v466 = vld [vmem:[%s1 + $0x6e4] sm:$0xf]
    %v467 = vld [vmem:[%s1 + $0x6e8] sm:$0xf]
    %v468 = vld [vmem:[%s1 + $0x6ec] sm:$0xf]
    %v469 = vld [vmem:[%s1 + $0x6f0] sm:$0xf]
    %v470 = vld [vmem:[%s1 + $0x6f4] sm:$0xf]
    %v471 = vld [vmem:[%s1 + $0x6f8] sm:$0xf]
    %v472 = vld [vmem:[%s1 + $0x6fc] sm:$0xf]
    %v473 = vld [vmem:[%s1 + $0x700] sm:$0xf]
    %v474 = vld [vmem:[%s1 + $0x704] sm:$0xf]
    %v475 = vld [vmem:[%s1 + $0x708] sm:$0xf]
    %v476 = vld [vmem:[%s1 + $0x70c] sm:$0xf]
    %v477 = vld [vmem:[%s1 + $0x710] sm:$0xf]
    %v478 = vld [vmem:[%s1 + $0x714] sm:$0xf]
    %v479 = vld [vmem:[%s1 + $0x718] sm:$0xf]
    %v480 = vld [vmem:[%s1 + $0x71c] sm:$0xf]
    %v481 = vld [vmem:[%s1 + $0x720] sm:$0xf]
    %v482 = vld [vmem:[%s1 + $0x724] sm:$0xf]
    %v483 = vld [vmem:[%s1 + $0x728] sm:$0xf]
    %v484 = vld [vmem:[%s1 + $0x72c] sm:$0xf]
    %v485 = vld [vmem:[%s1 + $0x730] sm:$0xf]
    %v486 = vld [vmem:[%s1 + $0x734] sm:$0xf]
    %v487 = vld [vmem:[%s1 + $0x738] sm:$0xf]
    %v488 = vld [vmem:[%s1 + $0x73c] sm:$0xf]
    %v489 = vld [vmem:[%s1 + $0x740] sm:$0xf]
    %v490 = vld [vmem:[%s1 + $0x744] sm:$0xf]
    %v491 = vld [vmem:[%s1 + $0x748] sm:$0xf]
    %v492 = vld [vmem:[%s1 + $0x74c] sm:$0xf]
    %v493 = vld [vmem:[%s1 + $0x750] sm:$0xf]
    %v494 = vld [vmem:[%s1 + $0x754] sm:$0xf]
    %v495 = vld [vmem:[%s1 + $0x758] sm:$0xf]
    %v496 = vld [vmem:[%s1 + $0x75c] sm:$0xf]
    %v497 = vld [vmem:[%s1 + $0x760] sm:$0xf]
    %v498 = vld [vmem:[%s1 + $0x764] sm:$0xf]
    %v499 = vld [vmem:[%s1 + $0x768] sm:$0xf]
    %v500 = vld [vmem:[%s1 + $0x76c] sm:$0xf]
    %v501 = vld [vmem:[%s1 + $0x770] sm:$0xf]
    %v502 = vld [vmem:[%s1 + $0x774] sm:$0xf]
    %v503 = vld [vmem:[%s1 + $0x778] sm:$0xf]
    %v504 = vld [vmem:[%s1 + $0x77c] sm:$0xf]
    %v505 = vld [vmem:[%s1 + $0x780] sm:$0xf]
    %v506 = vld [vmem:[%s1 + $0x784] sm:$0xf]
    %v507 = vld [vmem:[%s1 + $0x788] sm:$0xf]
    %v508 = vld [vmem:[%s1 + $0x78c] sm:$0xf]
    %v509 = vld [vmem:[%s1 + $0x790] sm:$0xf]
    %v510 = vld [vmem:[%s1 + $0x794] sm:$0xf]
    %v511 = vld [vmem:[%s1 + $0x798] sm:$0xf]
    %v512 = vld [vmem:[%s1 + $0x79c] sm:$0xf]
    %v513 = vld [vmem:[%s1 + $0x7a0] sm:$0xf]
    %v514 = vld [vmem:[%s1 + $0x7a4] sm:$0xf]
    %v515 = vld [vmem:[%s1 + $0x7a8] sm:$0xf]
    %v516 = vld [vmem:[%s1 + $0x7ac] sm:$0xf]
    %v517 = vld [vmem:[%s1 + $0x7b0] sm:$0xf]
    %v518 = vld [vmem:[%s1 + $0x7b4] sm:$0xf]
    %v519 = vld [vmem:[%s1 + $0x7b8] sm:$0xf]
    %v520 = vld [vmem:[%s1 + $0x7bc] sm:$0xf]
    %v521 = vld [vmem:[%s1 + $0x7c0] sm:$0xf]
    %v522 = vld [vmem:[%s1 + $0x7c4] sm:$0xf]
    %v523 = vld [vmem:[%s1 + $0x7c8] sm:$0xf]
    %v524 = vld [vmem:[%s1 + $0x7cc] sm:$0xf]
    %v525 = vld [vmem:[%s1 + $0x7d0] sm:$0xf]
    %v526 = vld [vmem:[%s1 + $0x7d4] sm:$0xf]
    %v527 = vld [vmem:[%s1 + $0x7d8] sm:$0xf]
    %v528 = vld [vmem:[%s1 + $0x7dc] sm:$0xf]
    %v529 = vld [vmem:[%s1 + $0x7e0] sm:$0xf]
    %v530 = vld [vmem:[%s1 + $0x7e4] sm:$0xf]
    %v531 = vld [vmem:[%s1 + $0x7e8] sm:$0xf]
    %v532 = vld [vmem:[%s1 + $0x7ec] sm:$0xf]
    %v533 = vld [vmem:[%s1 + $0x7f0] sm:$0xf]
    %v534 = vld [vmem:[%s1 + $0x7f4] sm:$0xf]
    %v535 = vld [vmem:[%s1 + $0x7f8] sm:$0xf]
    %v536 = vld [vmem:[%s1 + $0x7fc] sm:$0xf]
    %v537 = vld [vmem:[%s1 + $0x800] sm:$0xf]
    %v538 = vld [vmem:[%s1 + $0x804] sm:$0xf]
    %v539 = vld [vmem:[%s1 + $0x808] sm:$0xf]
    %v540 = vld [vmem:[%s1 + $0x80c] sm:$0xf]
    %v541 = vld [vmem:[%s1 + $0x810] sm:$0xf]
    %v542 = vld [vmem:[%s1 + $0x814] sm:$0xf]
    %v543 = vld [vmem:[%s1 + $0x818] sm:$0xf]
    %v544 = vld [vmem:[%s1 + $0x81c] sm:$0xf]
    %v545 = vld [vmem:[%s1 + $0x820] sm:$0xf]
    %v546 = vld [vmem:[%s1 + $0x824] sm:$0xf]
    %v547 = vld [vmem:[%s1 + $0x828] sm:$0xf]
    %v548 = vld [vmem:[%s1 + $0x82c] sm:$0xf]
    %v549 = vld [vmem:[%s1 + $0x830] sm:$0xf]
    %v550 = vld [vmem:[%s1 + $0x834] sm:$0xf]
    %v551 = vld [vmem:[%s1 + $0x838] sm:$0xf]
    %v552 = vld [vmem:[%s1 + $0x83c] sm:$0xf]
    %v553 = vld [vmem:[%s1 + $0x840] sm:$0xf]
    %v554 = vld [vmem:[%s1 + $0x844] sm:$0xf]
    %v555 = vld [vmem:[%s1 + $0x848] sm:$0xf]
    %v556 = vld [vmem:[%s1 + $0x84c] sm:$0xf]
    %v557 = vld [vmem:[%s1 + $0x850] sm:$0xf]
    %v558 = vld [vmem:[%s1 + $0x854] sm:$0xf]
    %v559 = vld [vmem:[%s1 + $0x858] sm:$0xf]
    %v560 = vld [vmem:[%s1 + $0x85c] sm:$0xf]
    %v561 = vld [vmem:[%s1 + $0x860] sm:$0xf]
    %v562 = vld [vmem:[%s1 + $0x864] sm:$0xf]
    %v563 = vld [vmem:[%s1 + $0x868] sm:$0xf]
    %v564 = vld [vmem:[%s1 + $0x86c] sm:$0xf]
    %v565 = vld [vmem:[%s1 + $0x870] sm:$0xf]
    %v566 = vld [vmem:[%s1 + $0x874] sm:$0xf]
    %v567 = vld [vmem:[%s1 + $0x878] sm:$0xf]
    %v568 = vld [vmem:[%s1 + $0x87c] sm:$0xf]
    %v569 = vld [vmem:[%s1 + $0x880] sm:$0xf]
    %v570 = vld [vmem:[%s1 + $0x884] sm:$0xf]
    %v571 = vld [vmem:[%s1 + $0x888] sm:$0xf]
    %v572 = vld [vmem:[%s1 + $0x88c] sm:$0xf]
    %v573 = vld [vmem:[%s1 + $0x890] sm:$0xf]
    %v574 = vld [vmem:[%s1 + $0x894] sm:$0xf]
    %v575 = vld [vmem:[%s1 + $0x898] sm:$0xf]
    %v576 = vld [vmem:[%s1 + $0x89c] sm:$0xf]
    %v577 = vld [vmem:[%s1 + $0x8a0] sm:$0xf]
    %v578 = vld [vmem:[%s1 + $0x8a4] sm:$0xf]
    %v579 = vld [vmem:[%s1 + $0x8a8] sm:$0xf]
    %v580 = vld [vmem:[%s1 + $0x8ac] sm:$0xf]
    %v581 = vld [vmem:[%s1 + $0x8b0] sm:$0xf]
    %v582 = vld [vmem:[%s1 + $0x8b4] sm:$0xf]
    %v583 = vld [vmem:[%s1 + $0x8b8] sm:$0xf]
    %v584 = vld [vmem:[%s1 + $0x8bc] sm:$0xf]
    %v585 = vld [vmem:[%s1 + $0x8c0] sm:$0xf]
    %v586 = vld [vmem:[%s1 + $0x8c4] sm:$0xf]
    %v587 = vld [vmem:[%s1 + $0x8c8] sm:$0xf]
    %v588 = vld [vmem:[%s1 + $0x8cc] sm:$0xf]
    %v589 = vld [vmem:[%s1 + $0x8d0] sm:$0xf]
    %v590 = vld [vmem:[%s1 + $0x8d4] sm:$0xf]
    %v591 = vld [vmem:[%s1 + $0x8d8] sm:$0xf]
    %v592 = vld [vmem:[%s1 + $0x8dc] sm:$0xf]
    %v593 = vld [vmem:[%s1 + $0x8e0] sm:$0xf]
    %v594 = vld [vmem:[%s1 + $0x8e4] sm:$0xf]
    %v595 = vld [vmem:[%s1 + $0x8e8] sm:$0xf]
    %v596 = vld [vmem:[%s1 + $0x8ec] sm:$0xf]
    %v597 = vld [vmem:[%s1 + $0x8f0] sm:$0xf]
    %v598 = vld [vmem:[%s1 + $0x8f4] sm:$0xf]
    %v599 = vld [vmem:[%s1 + $0x8f8] sm:$0xf]
    %v600 = vld [vmem:[%s1 + $0x8fc] sm:$0xf]
    %v601 = vld [vmem:[%s1 + $0x900] sm:$0xf]
    %v602 = vld [vmem:[%s1 + $0x904] sm:$0xf]
    %v603 = vld [vmem:[%s1 + $0x908] sm:$0xf]
    %v604 = vld [vmem:[%s1 + $0x90c] sm:$0xf]
    %v605 = vld [vmem:[%s1 + $0x910] sm:$0xf]
    %v606 = vld [vmem:[%s1 + $0x914] sm:$0xf]
    %v607 = vld [vmem:[%s1 + $0x918] sm:$0xf]
    %v608 = vld [vmem:[%s1 + $0x91c] sm:$0xf]
    %v609 = vld [vmem:[%s1 + $0x920] sm:$0xf]
    %v610 = vld [vmem:[%s1 + $0x924] sm:$0xf]
    %v611 = vld [vmem:[%s1 + $0x928] sm:$0xf]
    %v612 = vld [vmem:[%s1 + $0x92c] sm:$0xf]
    %v613 = vld [vmem:[%s1 + $0x930] sm:$0xf]
    %v614 = vld [vmem:[%s1 + $0x934] sm:$0xf]
    %v615 = vld [vmem:[%s1 + $0x938] sm:$0xf]
    %v616 = vld [vmem:[%s1 + $0x93c] sm:$0xf]
    %v617 = vld [vmem:[%s1 + $0x940] sm:$0xf]
    %v618 = vld [vmem:[%s1 + $0x944] sm:$0xf]
    %v619 = vld [vmem:[%s1 + $0x948] sm:$0xf]
    %v620 = vld [vmem:[%s1 + $0x94c] sm:$0xf]
    %v621 = vld [vmem:[%s1 + $0x950] sm:$0xf]
    %v622 = vld [vmem:[%s1 + $0x954] sm:$0xf]
    %v623 = vld [vmem:[%s1 + $0x958] sm:$0xf]
    %v624 = vld [vmem:[%s1 + $0x95c] sm:$0xf]
    %v625 = vld [vmem:[%s1 + $0x960] sm:$0xf]
    %v626 = vld [vmem:[%s1 + $0x964] sm:$0xf]
    %v627 = vld [vmem:[%s1 + $0x968] sm:$0xf]
    %v628 = vld [vmem:[%s1 + $0x96c] sm:$0xf]
    %v629 = vld [vmem:[%s1 + $0x970] sm:$0xf]
    %v630 = vld [vmem:[%s1 + $0x974] sm:$0xf]
    %v631 = vld [vmem:[%s1 + $0x978] sm:$0xf]
    %v632 = vld [vmem:[%s1 + $0x97c] sm:$0xf]
    %v633 = vld [vmem:[%s1 + $0x980] sm:$0xf]
    %v634 = vld [vmem:[%s1 + $0x984] sm:$0xf]
    %v635 = vld [vmem:[%s1 + $0x988] sm:$0xf]
    %v636 = vld [vmem:[%s1 + $0x98c] sm:$0xf]
    %v637 = vld [vmem:[%s1 + $0x990] sm:$0xf]
    %v638 = vld [vmem:[%s1 + $0x994] sm:$0xf]
    %v639 = vld [vmem:[%s1 + $0x998] sm:$0xf]
    %v640 = vld [vmem:[%s1 + $0x99c] sm:$0xf]
    %v641 = vld [vmem:[%s1 + $0x9a0] sm:$0xf]
    %v642 = vld [vmem:[%s1 + $0x9a4] sm:$0xf]
    %v643 = vld [vmem:[%s1 + $0x9a8] sm:$0xf]
    %v644 = vld [vmem:[%s1 + $0x9ac] sm:$0xf]
    %v645 = vld [vmem:[%s1 + $0x9b0] sm:$0xf]
    %v646 = vld [vmem:[%s1 + $0x9b4] sm:$0xf]
    %v647 = vld [vmem:[%s1 + $0x9b8] sm:$0xf]
    %v648 = vld [vmem:[%s1 + $0x9bc] sm:$0xf]
    %v649 = vld [vmem:[%s1 + $0x9c0] sm:$0xf]
    %v650 = vld [vmem:[%s1 + $0x9c4] sm:$0xf]
    %v651 = vld [vmem:[%s1 + $0x9c8] sm:$0xf]
    %v652 = vld [vmem:[%s1 + $0x9cc] sm:$0xf]
    %v653 = vld [vmem:[%s1 + $0x9d0] sm:$0xf]
    %v654 = vld [vmem:[%s1 + $0x9d4] sm:$0xf]
    %v655 = vld [vmem:[%s1 + $0x9d8] sm:$0xf]
    %v656 = vld [vmem:[%s1 + $0x9dc] sm:$0xf]
    %v657 = vld [vmem:[%s1 + $0x9e0] sm:$0xf]
    %v658 = vld [vmem:[%s1 + $0x9e4] sm:$0xf]
    %v659 = vld [vmem:[%s1 + $0x9e8] sm:$0xf]
    %v660 = vld [vmem:[%s1 + $0x9ec] sm:$0xf]
    %v661 = vld [vmem:[%s1 + $0x9f0] sm:$0xf]
    %v662 = vld [vmem:[%s1 + $0x9f4] sm:$0xf]
    %v663 = vld [vmem:[%s1 + $0x9f8] sm:$0xf]
    %v664 = vld [vmem:[%s1 + $0x9fc] sm:$0xf]
    %v665 = vld [vmem:[%s1 + $0xa00] sm:$0xf]
    %v666 = vld [vmem:[%s1 + $0xa04] sm:$0xf]
    %v667 = vld [vmem:[%s1 + $0xa08] sm:$0xf]
    %v668 = vld [vmem:[%s1 + $0xa0c] sm:$0xf]
    %v669 = vld [vmem:[%s1 + $0xa10] sm:$0xf]
    %v670 = vld [vmem:[%s1 + $0xa14] sm:$0xf]
    %v671 = vld [vmem:[%s1 + $0xa18] sm:$0xf]
    %v672 = vld [vmem:[%s1 + $0xa1c] sm:$0xf]
    %v673 = vld [vmem:[%s1 + $0xa20] sm:$0xf]
    %v674 = vld [vmem:[%s1 + $0xa24] sm:$0xf]
    %v675 = vld [vmem:[%s1 + $0xa28] sm:$0xf]
    %v676 = vld [vmem:[%s1 + $0xa2c] sm:$0xf]
    %v677 = vld [vmem:[%s1 + $0xa30] sm:$0xf]
    %v678 = vld [vmem:[%s1 + $0xa34] sm:$0xf]
    %v679 = vld [vmem:[%s1 + $0xa38] sm:$0xf]
    %v680 = vld [vmem:[%s1 + $0xa3c] sm:$0xf]
    %v681 = vld [vmem:[%s1 + $0xa40] sm:$0xf]
    %v682 = vld [vmem:[%s1 + $0xa44] sm:$0xf]
    %v683 = vld [vmem:[%s1 + $0xa48] sm:$0xf]
    %v684 = vld [vmem:[%s1 + $0xa4c] sm:$0xf]
    %v685 = vld [vmem:[%s1 + $0xa50] sm:$0xf]
    %v686 = vld [vmem:[%s1 + $0xa54] sm:$0xf]
    %v687 = vld [vmem:[%s1 + $0xa58] sm:$0xf]
    %v688 = vld [vmem:[%s1 + $0xa5c] sm:$0xf]
    %v689 = vld [vmem:[%s1 + $0xa60] sm:$0xf]
    %v690 = vld [vmem:[%s1 + $0xa64] sm:$0xf]
    %v691 = vld [vmem:[%s1 + $0xa68] sm:$0xf]
    %v692 = vld [vmem:[%s1 + $0xa6c] sm:$0xf]
    %v693 = vld [vmem:[%s1 + $0xa70] sm:$0xf]
    %v694 = vld [vmem:[%s1 + $0xa74] sm:$0xf]
    %v695 = vld [vmem:[%s1 + $0xa78] sm:$0xf]
    %v696 = vld [vmem:[%s1 + $0xa7c] sm:$0xf]
    %v697 = vld [vmem:[%s1 + $0xa80] sm:$0xf]
    %v698 = vld [vmem:[%s1 + $0xa84] sm:$0xf]
    %v699 = vld [vmem:[%s1 + $0xa88] sm:$0xf]
    %v700 = vld [vmem:[%s1 + $0xa8c] sm:$0xf]
    %v701 = vld [vmem:[%s1 + $0xa90] sm:$0xf]
    %v702 = vld [vmem:[%s1 + $0xa94] sm:$0xf]
    %v703 = vld [vmem:[%s1 + $0xa98] sm:$0xf]
    %v704 = vld [vmem:[%s1 + $0xa9c] sm:$0xf]
    %v705 = vld [vmem:[%s1 + $0xaa0] sm:$0xf]
    %v706 = vld [vmem:[%s1 + $0xaa4] sm:$0xf]
    %v707 = vld [vmem:[%s1 + $0xaa8] sm:$0xf]
    %v708 = vld [vmem:[%s1 + $0xaac] sm:$0xf]
    %v709 = vld [vmem:[%s1 + $0xab0] sm:$0xf]
    %v710 = vld [vmem:[%s1 + $0xab4] sm:$0xf]
    %v711 = vld [vmem:[%s1 + $0xab8] sm:$0xf]
    %v712 = vld [vmem:[%s1 + $0xabc] sm:$0xf]
    %v713 = vld [vmem:[%s1 + $0xac0] sm:$0xf]
    %v714 = vld [vmem:[%s1 + $0xac4] sm:$0xf]
    %v715 = vld [vmem:[%s1 + $0xac8] sm:$0xf]
    %v716 = vld [vmem:[%s1 + $0xacc] sm:$0xf]
    %v717 = vld [vmem:[%s1 + $0xad0] sm:$0xf]
    %v718 = vld [vmem:[%s1 + $0xad4] sm:$0xf]
    %v719 = vld [vmem:[%s1 + $0xad8] sm:$0xf]
    %v720 = vld [vmem:[%s1 + $0xadc] sm:$0xf]
    %v721 = vld [vmem:[%s1 + $0xae0] sm:$0xf]
    %v722 = vld [vmem:[%s1 + $0xae4] sm:$0xf]
    %v723 = vld [vmem:[%s1 + $0xae8] sm:$0xf]
    %v724 = vld [vmem:[%s1 + $0xaec] sm:$0xf]
    %v725 = vld [vmem:[%s1 + $0xaf0] sm:$0xf]
    %v726 = vld [vmem:[%s1 + $0xaf4] sm:$0xf]
    %v727 = vld [vmem:[%s1 + $0xaf8] sm:$0xf]
    %v728 = vld [vmem:[%s1 + $0xafc] sm:$0xf]
    %v729 = vld [vmem:[%s1 + $0xb00] sm:$0xf]
    %v730 = vld [vmem:[%s1 + $0xb04] sm:$0xf]
    %v731 = vld [vmem:[%s1 + $0xb08] sm:$0xf]
    %v732 = vld [vmem:[%s1 + $0xb0c] sm:$0xf]
    %v733 = vld [vmem:[%s1 + $0xb10] sm:$0xf]
    %v734 = vld [vmem:[%s1 + $0xb14] sm:$0xf]
    %v735 = vld [vmem:[%s1 + $0xb18] sm:$0xf]
    %v736 = vld [vmem:[%s1 + $0xb1c] sm:$0xf]
    %v737 = vld [vmem:[%s1 + $0xb20] sm:$0xf]
    %v738 = vld [vmem:[%s1 + $0xb24] sm:$0xf]
    %v739 = vld [vmem:[%s1 + $0xb28] sm:$0xf]
    %v740 = vld [vmem:[%s1 + $0xb2c] sm:$0xf]
    %v741 = vld [vmem:[%s1 + $0xb30] sm:$0xf]
    %v742 = vld [vmem:[%s1 + $0xb34] sm:$0xf]
    %v743 = vld [vmem:[%s1 + $0xb38] sm:$0xf]
    %v744 = vld [vmem:[%s1 + $0xb3c] sm:$0xf]
    %v745 = vld [vmem:[%s1 + $0xb40] sm:$0xf]
    %v746 = vld [vmem:[%s1 + $0xb44] sm:$0xf]
    %v747 = vld [vmem:[%s1 + $0xb48] sm:$0xf]
    %v748 = vld [vmem:[%s1 + $0xb4c] sm:$0xf]
    %v749 = vld [vmem:[%s1 + $0xb50] sm:$0xf]
    %v750 = vld [vmem:[%s1 + $0xb54] sm:$0xf]
    %v751 = vld [vmem:[%s1 + $0xb58] sm:$0xf]
    %v752 = vld [vmem:[%s1 + $0xb5c] sm:$0xf]
    %v753 = vld [vmem:[%s1 + $0xb60] sm:$0xf]
    %v754 = vld [vmem:[%s1 + $0xb64] sm:$0xf]
    %v755 = vld [vmem:[%s1 + $0xb68] sm:$0xf]
    %v756 = vld [vmem:[%s1 + $0xb6c] sm:$0xf]
    %v757 = vld [vmem:[%s1 + $0xb70] sm:$0xf]
    %v758 = vld [vmem:[%s1 + $0xb74] sm:$0xf]
    %v759 = vld [vmem:[%s1 + $0xb78] sm:$0xf]
    %v760 = vld [vmem:[%s1 + $0xb7c] sm:$0xf]
    %v761 = vld [vmem:[%s1 + $0xb80] sm:$0xf]
    %v762 = vld [vmem:[%s1 + $0xb84] sm:$0xf]
    %v763 = vld [vmem:[%s1 + $0xb88] sm:$0xf]
    %v764 = vld [vmem:[%s1 + $0xb8c] sm:$0xf]
    %v765 = vld [vmem:[%s1 + $0xb90] sm:$0xf]
    %v766 = vld [vmem:[%s1 + $0xb94] sm:$0xf]
    %v767 = vld [vmem:[%s1 + $0xb98] sm:$0xf]
    %v768 = vld [vmem:[%s1 + $0xb9c] sm:$0xf]
    %v769 = vld [vmem:[%s1 + $0xba0] sm:$0xf]
    %v770 = vld [vmem:[%s1 + $0xba4] sm:$0xf]
    %v771 = vld [vmem:[%s1 + $0xba8] sm:$0xf]
    %v772 = vld [vmem:[%s1 + $0xbac] sm:$0xf]
    %v773 = vld [vmem:[%s1 + $0xbb0] sm:$0xf]
    %v774 = vld [vmem:[%s1 + $0xbb4] sm:$0xf]
    %v775 = vld [vmem:[%s1 + $0xbb8] sm:$0xf]
    %v776 = vld [vmem:[%s1 + $0xbbc] sm:$0xf]
    %v777 = vld [vmem:[%s1 + $0xbc0] sm:$0xf]
    %v778 = vld [vmem:[%s1 + $0xbc4] sm:$0xf]
    %v779 = vld [vmem:[%s1 + $0xbc8] sm:$0xf]
    %v780 = vld [vmem:[%s1 + $0xbcc] sm:$0xf]
    %v781 = vld [vmem:[%s1 + $0xbd0] sm:$0xf]
    %v782 = vld [vmem:[%s1 + $0xbd4] sm:$0xf]
    %v783 = vld [vmem:[%s1 + $0xbd8] sm:$0xf]
    %v784 = vld [vmem:[%s1 + $0xbdc] sm:$0xf]
    %v785 = vld [vmem:[%s1 + $0xbe0] sm:$0xf]
    %v786 = vld [vmem:[%s1 + $0xbe4] sm:$0xf]
    %v787 = vld [vmem:[%s1 + $0xbe8] sm:$0xf]
    %v788 = vld [vmem:[%s1 + $0xbec] sm:$0xf]
    %v789 = vld [vmem:[%s1 + $0xbf0] sm:$0xf]
    %v790 = vld [vmem:[%s1 + $0xbf4] sm:$0xf]
    %v791 = vld [vmem:[%s1 + $0xbf8] sm:$0xf]
    %v792 = vld [vmem:[%s1 + $0xbfc] sm:$0xf]
    %v793 = vld [vmem:[%s1 + $0xc00] sm:$0xf]
    %v794 = vld [vmem:[%s1 + $0xc04] sm:$0xf]
    %v795 = vld [vmem:[%s1 + $0xc08] sm:$0xf]
    %v796 = vld [vmem:[%s1 + $0xc0c] sm:$0xf]
    %v797 = vld [vmem:[%s1 + $0xc10] sm:$0xf]
    %v798 = vld [vmem:[%s1 + $0xc14] sm:$0xf]
    %v799 = vld [vmem:[%s1 + $0xc18] sm:$0xf]
    %v800 = vld [vmem:[%s1 + $0xc1c] sm:$0xf]
    %v801 = vld [vmem:[%s1 + $0xc20] sm:$0xf]
    %v802 = vld [vmem:[%s1 + $0xc24] sm:$0xf]
    %v803 = vld [vmem:[%s1 + $0xc28] sm:$0xf]
    %v804 = vld [vmem:[%s1 + $0xc2c] sm:$0xf]
    %v805 = vld [vmem:[%s1 + $0xc30] sm:$0xf]
    %v806 = vld [vmem:[%s1 + $0xc34] sm:$0xf]
    %v807 = vld [vmem:[%s1 + $0xc38] sm:$0xf]
    %v808 = vld [vmem:[%s1 + $0xc3c] sm:$0xf]
    %v809 = vld [vmem:[%s1 + $0xc40] sm:$0xf]
    %v810 = vld [vmem:[%s1 + $0xc44] sm:$0xf]
    %v811 = vld [vmem:[%s1 + $0xc48] sm:$0xf]
    %v812 = vld [vmem:[%s1 + $0xc4c] sm:$0xf]
    %v813 = vld [vmem:[%s1 + $0xc50] sm:$0xf]
    %v814 = vld [vmem:[%s1 + $0xc54] sm:$0xf]
    %v815 = vld [vmem:[%s1 + $0xc58] sm:$0xf]
    %v816 = vld [vmem:[%s1 + $0xc5c] sm:$0xf]
    %v817 = vld [vmem:[%s1 + $0xc60] sm:$0xf]
    %v818 = vld [vmem:[%s1 + $0xc64] sm:$0xf]
    %v819 = vld [vmem:[%s1 + $0xc68] sm:$0xf]
    %v820 = vld [vmem:[%s1 + $0xc6c] sm:$0xf]
    %v821 = vld [vmem:[%s1 + $0xc70] sm:$0xf]
    %v822 = vld [vmem:[%s1 + $0xc74] sm:$0xf]
    %v823 = vld [vmem:[%s1 + $0xc78] sm:$0xf]
    %v824 = vld [vmem:[%s1 + $0xc7c] sm:$0xf]
    %v825 = vld [vmem:[%s1 + $0xc80] sm:$0xf]
    %v826 = vld [vmem:[%s1 + $0xc84] sm:$0xf]
    %v827 = vld [vmem:[%s1 + $0xc88] sm:$0xf]
    %v828 = vld [vmem:[%s1 + $0xc8c] sm:$0xf]
    %v829 = vld [vmem:[%s1 + $0xc90] sm:$0xf]
    %v830 = vld [vmem:[%s1 + $0xc94] sm:$0xf]
    %v831 = vld [vmem:[%s1 + $0xc98] sm:$0xf]
    %v832 = vld [vmem:[%s1 + $0xc9c] sm:$0xf]
    %v833 = vld [vmem:[%s1 + $0xca0] sm:$0xf]
    %v834 = vld [vmem:[%s1 + $0xca4] sm:$0xf]
    %v835 = vld [vmem:[%s1 + $0xca8] sm:$0xf]
    %v836 = vld [vmem:[%s1 + $0xcac] sm:$0xf]
    %v837 = vld [vmem:[%s1 + $0xcb0] sm:$0xf]
    %v838 = vld [vmem:[%s1 + $0xcb4] sm:$0xf]
    %v839 = vld [vmem:[%s1 + $0xcb8] sm:$0xf]
    %v840 = vld [vmem:[%s1 + $0xcbc] sm:$0xf]
    %v841 = vld [vmem:[%s1 + $0xcc0] sm:$0xf]
    %v842 = vld [vmem:[%s1 + $0xcc4] sm:$0xf]
    %v843 = vld [vmem:[%s1 + $0xcc8] sm:$0xf]
    %v844 = vld [vmem:[%s1 + $0xccc] sm:$0xf]
    %v845 = vld [vmem:[%s1 + $0xcd0] sm:$0xf]
    %v846 = vld [vmem:[%s1 + $0xcd4] sm:$0xf]
    %v847 = vld [vmem:[%s1 + $0xcd8] sm:$0xf]
    %v848 = vld [vmem:[%s1 + $0xcdc] sm:$0xf]
    %v849 = vld [vmem:[%s1 + $0xce0] sm:$0xf]
    %v850 = vld [vmem:[%s1 + $0xce4] sm:$0xf]
    %v851 = vld [vmem:[%s1 + $0xce8] sm:$0xf]
    %v852 = vld [vmem:[%s1 + $0xcec] sm:$0xf]
    %v853 = vld [vmem:[%s1 + $0xcf0] sm:$0xf]
    %v854 = vld [vmem:[%s1 + $0xcf4] sm:$0xf]
    %v855 = vld [vmem:[%s1 + $0xcf8] sm:$0xf]
    %v856 = vld [vmem:[%s1 + $0xcfc] sm:$0xf]
    %v857 = vld [vmem:[%s1 + $0xd00] sm:$0xf]
    %v858 = vld [vmem:[%s1 + $0xd04] sm:$0xf]
    %v859 = vld [vmem:[%s1 + $0xd08] sm:$0xf]
    %v860 = vld [vmem:[%s1 + $0xd0c] sm:$0xf]
    %v861 = vld [vmem:[%s1 + $0xd10] sm:$0xf]
    %v862 = vld [vmem:[%s1 + $0xd14] sm:$0xf]
    %v863 = vld [vmem:[%s1 + $0xd18] sm:$0xf]
    %v864 = vld [vmem:[%s1 + $0xd1c] sm:$0xf]
    %v865 = vld [vmem:[%s1 + $0xd20] sm:$0xf]
    %v866 = vld [vmem:[%s1 + $0xd24] sm:$0xf]
    %v867 = vld [vmem:[%s1 + $0xd28] sm:$0xf]
    %v868 = vld [vmem:[%s1 + $0xd2c] sm:$0xf]
    %v869 = vld [vmem:[%s1 + $0xd30] sm:$0xf]
    %v870 = vld [vmem:[%s1 + $0xd34] sm:$0xf]
    %v871 = vld [vmem:[%s1 + $0xd38] sm:$0xf]
    %v872 = vld [vmem:[%s1 + $0xd3c] sm:$0xf]
    %v873 = vld [vmem:[%s1 + $0xd40] sm:$0xf]
    %v874 = vld [vmem:[%s1 + $0xd44] sm:$0xf]
    %v875 = vld [vmem:[%s1 + $0xd48] sm:$0xf]
    %v876 = vld [vmem:[%s1 + $0xd4c] sm:$0xf]
    %v877 = vld [vmem:[%s1 + $0xd50] sm:$0xf]
    %v878 = vld [vmem:[%s1 + $0xd54] sm:$0xf]
    %v879 = vld [vmem:[%s1 + $0xd58] sm:$0xf]
    %v880 = vld [vmem:[%s1 + $0xd5c] sm:$0xf]
    %v881 = vld [vmem:[%s1 + $0xd60] sm:$0xf]
    %v882 = vld [vmem:[%s1 + $0xd64] sm:$0xf]
    %v883 = vld [vmem:[%s1 + $0xd68] sm:$0xf]
    %v884 = vld [vmem:[%s1 + $0xd6c] sm:$0xf]
    %v885 = vld [vmem:[%s1 + $0xd70] sm:$0xf]
    %v886 = vld [vmem:[%s1 + $0xd74] sm:$0xf]
    %v887 = vld [vmem:[%s1 + $0xd78] sm:$0xf]
    %v888 = vld [vmem:[%s1 + $0xd7c] sm:$0xf]
    %v889 = vld [vmem:[%s1 + $0xd80] sm:$0xf]
    %v890 = vld [vmem:[%s1 + $0xd84] sm:$0xf]
    %v891 = vld [vmem:[%s1 + $0xd88] sm:$0xf]
    %v892 = vld [vmem:[%s1 + $0xd8c] sm:$0xf]
    %v893 = vld [vmem:[%s1 + $0xd90] sm:$0xf]
    %v894 = vld [vmem:[%s1 + $0xd94] sm:$0xf]
    %v895 = vld [vmem:[%s1 + $0xd98] sm:$0xf]
    %v896 = vld [vmem:[%s1 + $0xd9c] sm:$0xf]
    %v897 = vld [vmem:[%s1 + $0xda0] sm:$0xf]
    %v898 = vld [vmem:[%s1 + $0xda4] sm:$0xf]
    %v899 = vld [vmem:[%s1 + $0xda8] sm:$0xf]
    %v900 = vld [vmem:[%s1 + $0xdac] sm:$0xf]
    %v901 = vld [vmem:[%s1 + $0xdb0] sm:$0xf]
    %v902 = vld [vmem:[%s1 + $0xdb4] sm:$0xf]
    %v903 = vld [vmem:[%s1 + $0xdb8] sm:$0xf]
    %v904 = vld [vmem:[%s1 + $0xdbc] sm:$0xf]
    %v905 = vld [vmem:[%s1 + $0xdc0] sm:$0xf]
    %v906 = vld [vmem:[%s1 + $0xdc4] sm:$0xf]
    %v907 = vld [vmem:[%s1 + $0xdc8] sm:$0xf]
    %v908 = vld [vmem:[%s1 + $0xdcc] sm:$0xf]
    %v909 = vld [vmem:[%s1 + $0xdd0] sm:$0xf]
    %v910 = vld [vmem:[%s1 + $0xdd4] sm:$0xf]
    %v911 = vld [vmem:[%s1 + $0xdd8] sm:$0xf]
    %v912 = vld [vmem:[%s1 + $0xddc] sm:$0xf]
    %v913 = vld [vmem:[%s1 + $0xde0] sm:$0xf]
    %v914 = vld [vmem:[%s1 + $0xde4] sm:$0xf]
    %v915 = vld [vmem:[%s1 + $0xde8] sm:$0xf]
    %v916 = vld [vmem:[%s1 + $0xdec] sm:$0xf]
    %v917 = vld [vmem:[%s1 + $0xdf0] sm:$0xf]
    %v918 = vld [vmem:[%s1 + $0xdf4] sm:$0xf]
    %v919 = vld [vmem:[%s1 + $0xdf8] sm:$0xf]
    %v920 = vld [vmem:[%s1 + $0xdfc] sm:$0xf]
    %v921 = vld [vmem:[%s1 + $0xe00] sm:$0xf]
    %v922 = vld [vmem:[%s1 + $0xe04] sm:$0xf]
    %v923 = vld [vmem:[%s1 + $0xe08] sm:$0xf]
    %v924 = vld [vmem:[%s1 + $0xe0c] sm:$0xf]
    %v925 = vld [vmem:[%s1 + $0xe10] sm:$0xf]
    %v926 = vld [vmem:[%s1 + $0xe14] sm:$0xf]
    %v927 = vld [vmem:[%s1 + $0xe18] sm:$0xf]
    %v928 = vld [vmem:[%s1 + $0xe1c] sm:$0xf]
    %v929 = vld [vmem:[%s1 + $0xe20] sm:$0xf]
    %v930 = vld [vmem:[%s1 + $0xe24] sm:$0xf]
    %v931 = vld [vmem:[%s1 + $0xe28] sm:$0xf]
    %v932 = vld [vmem:[%s1 + $0xe2c] sm:$0xf]
    %v933 = vld [vmem:[%s1 + $0xe30] sm:$0xf]
    %v934 = vld [vmem:[%s1 + $0xe34] sm:$0xf]
    %v935 = vld [vmem:[%s1 + $0xe38] sm:$0xf]
    %v936 = vld [vmem:[%s1 + $0xe3c] sm:$0xf]
    %v937 = vld [vmem:[%s1 + $0xe40] sm:$0xf]
    %v938 = vld [vmem:[%s1 + $0xe44] sm:$0xf]
    %v939 = vld [vmem:[%s1 + $0xe48] sm:$0xf]
    %v940 = vld [vmem:[%s1 + $0xe4c] sm:$0xf]
    %v941 = vld [vmem:[%s1 + $0xe50] sm:$0xf]
    %v942 = vld [vmem:[%s1 + $0xe54] sm:$0xf]
    %v943 = vld [vmem:[%s1 + $0xe58] sm:$0xf]
    %v944 = vld [vmem:[%s1 + $0xe5c] sm:$0xf]
    %v945 = vld [vmem:[%s1 + $0xe60] sm:$0xf]
    %v946 = vld [vmem:[%s1 + $0xe64] sm:$0xf]
    %v947 = vld [vmem:[%s1 + $0xe68] sm:$0xf]
    %v948 = vld [vmem:[%s1 + $0xe6c] sm:$0xf]
    %v949 = vld [vmem:[%s1 + $0xe70] sm:$0xf]
    %v950 = vld [vmem:[%s1 + $0xe74] sm:$0xf]
    %v951 = vld [vmem:[%s1 + $0xe78] sm:$0xf]
    %v952 = vld [vmem:[%s1 + $0xe7c] sm:$0xf]
    %v953 = vld [vmem:[%s1 + $0xe80] sm:$0xf]
    %v954 = vld [vmem:[%s1 + $0xe84] sm:$0xf]
    %v955 = vld [vmem:[%s1 + $0xe88] sm:$0xf]
    %v956 = vld [vmem:[%s1 + $0xe8c] sm:$0xf]
    %v957 = vld [vmem:[%s1 + $0xe90] sm:$0xf]
    %v958 = vld [vmem:[%s1 + $0xe94] sm:$0xf]
    %v959 = vld [vmem:[%s1 + $0xe98] sm:$0xf]
    %v960 = vld [vmem:[%s1 + $0xe9c] sm:$0xf]
    %v961 = vld [vmem:[%s1 + $0xea0] sm:$0xf]
    %v962 = vld [vmem:[%s1 + $0xea4] sm:$0xf]
    %v963 = vld [vmem:[%s1 + $0xea8] sm:$0xf]
    %v964 = vld [vmem:[%s1 + $0xeac] sm:$0xf]
    %v965 = vld [vmem:[%s1 + $0xeb0] sm:$0xf]
    %v966 = vld [vmem:[%s1 + $0xeb4] sm:$0xf]
    %v967 = vld [vmem:[%s1 + $0xeb8] sm:$0xf]
    %v968 = vld [vmem:[%s1 + $0xebc] sm:$0xf]
    %v969 = vld [vmem:[%s1 + $0xec0] sm:$0xf]
    %v970 = vld [vmem:[%s1 + $0xec4] sm:$0xf]
    %v971 = vld [vmem:[%s1 + $0xec8] sm:$0xf]
    %v972 = vld [vmem:[%s1 + $0xecc] sm:$0xf]
    %v973 = vld [vmem:[%s1 + $0xed0] sm:$0xf]
    %v974 = vld [vmem:[%s1 + $0xed4] sm:$0xf]
    %v975 = vld [vmem:[%s1 + $0xed8] sm:$0xf]
    %v976 = vld [vmem:[%s1 + $0xedc] sm:$0xf]
    %v977 = vld [vmem:[%s1 + $0xee0] sm:$0xf]
    %v978 = vld [vmem:[%s1 + $0xee4] sm:$0xf]
    %v979 = vld [vmem:[%s1 + $0xee8] sm:$0xf]
    %v980 = vld [vmem:[%s1 + $0xeec] sm:$0xf]
    %v981 = vld [vmem:[%s1 + $0xef0] sm:$0xf]
    %v982 = vld [vmem:[%s1 + $0xef4] sm:$0xf]
    %v983 = vld [vmem:[%s1 + $0xef8] sm:$0xf]
    %v984 = vld [vmem:[%s1 + $0xefc] sm:$0xf]
    %v985 = vld [vmem:[%s1 + $0xf00] sm:$0xf]
    %v986 = vld [vmem:[%s1 + $0xf04] sm:$0xf]
    %v987 = vld [vmem:[%s1 + $0xf08] sm:$0xf]
    %v988 = vld [vmem:[%s1 + $0xf0c] sm:$0xf]
    %v989 = vld [vmem:[%s1 + $0xf10] sm:$0xf]
    %v990 = vld [vmem:[%s1 + $0xf14] sm:$0xf]
    %v991 = vld [vmem:[%s1 + $0xf18] sm:$0xf]
    %v992 = vld [vmem:[%s1 + $0xf1c] sm:$0xf]
    %v993 = vld [vmem:[%s1 + $0xf20] sm:$0xf]
    %v994 = vld [vmem:[%s1 + $0xf24] sm:$0xf]
    %v995 = vld [vmem:[%s1 + $0xf28] sm:$0xf]
    %v996 = vld [vmem:[%s1 + $0xf2c] sm:$0xf]
    %v997 = vld [vmem:[%s1 + $0xf30] sm:$0xf]
    %v998 = vld [vmem:[%s1 + $0xf34] sm:$0xf]
    %v999 = vld [vmem:[%s1 + $0xf38] sm:$0xf]
    %v1000 = vld [vmem:[%s1 + $0xf3c] sm:$0xf]
    %v1001 = vld [vmem:[%s1 + $0xf40] sm:$0xf]
    %v1002 = vld [vmem:[%s1 + $0xf44] sm:$0xf]
    %v1003 = vld [vmem:[%s1 + $0xf48] sm:$0xf]
    %v1004 = vld [vmem:[%s1 + $0xf4c] sm:$0xf]
    %v1005 = vld [vmem:[%s1 + $0xf50] sm:$0xf]
    %v1006 = vld [vmem:[%s1 + $0xf54] sm:$0xf]
    %v1007 = vld [vmem:[%s1 + $0xf58] sm:$0xf]
    %v1008 = vld [vmem:[%s1 + $0xf5c] sm:$0xf]
    %v1009 = vld [vmem:[%s1 + $0xf60] sm:$0xf]
    %v1010 = vld [vmem:[%s1 + $0xf64] sm:$0xf]
    %v1011 = vld [vmem:[%s1 + $0xf68] sm:$0xf]
    %v1012 = vld [vmem:[%s1 + $0xf6c] sm:$0xf]
    %v1013 = vld [vmem:[%s1 + $0xf70] sm:$0xf]
    %v1014 = vld [vmem:[%s1 + $0xf74] sm:$0xf]
    %v1015 = vld [vmem:[%s1 + $0xf78] sm:$0xf]
    %v1016 = vld [vmem:[%s1 + $0xf7c] sm:$0xf]
    %v1017 = vld [vmem:[%s1 + $0xf80] sm:$0xf]
    %v1018 = vld [vmem:[%s1 + $0xf84] sm:$0xf]
    %v1019 = vld [vmem:[%s1 + $0xf88] sm:$0xf]
    %v1020 = vld [vmem:[%s1 + $0xf8c] sm:$0xf]
    %v1021 = vld [vmem:[%s1 + $0xf90] sm:$0xf]
    %v1022 = vld [vmem:[%s1 + $0xf94] sm:$0xf]
    %v1023 = vld [vmem:[%s1 + $0xf98] sm:$0xf]
    %v1024 = vld [vmem:[%s1 + $0xf9c] sm:$0xf]
    %v1025 = vld [vmem:[%s1 + $0xfa0] sm:$0xf]
    %v1026 = vld [vmem:[%s1 + $0xfa4] sm:$0xf]
    %v1027 = vld [vmem:[%s1 + $0xfa8] sm:$0xf]
    %v1028 = vld [vmem:[%s1 + $0xfac] sm:$0xf]
    %v1029 = vld [vmem:[%s1 + $0xfb0] sm:$0xf]
    %v1030 = vld [vmem:[%s1 + $0xfb4] sm:$0xf]
    %v1031 = vld [vmem:[%s1 + $0xfb8] sm:$0xf]
    %v1032 = vld [vmem:[%s1 + $0xfbc] sm:$0xf]
    %v1033 = vld [vmem:[%s1 + $0xfc0] sm:$0xf]
    %v1034 = vld [vmem:[%s1 + $0xfc4] sm:$0xf]
    %v1035 = vld [vmem:[%s1 + $0xfc8] sm:$0xf]
    %v1036 = vld [vmem:[%s1 + $0xfcc] sm:$0xf]
    %v1037 = vld [vmem:[%s1 + $0xfd0] sm:$0xf]
    %v1038 = vld [vmem:[%s1 + $0xfd4] sm:$0xf]
    %v1039 = vld [vmem:[%s1 + $0xfd8] sm:$0xf]
    %v1040 = vld [vmem:[%s1 + $0xfdc] sm:$0xf]
    %v1041 = vld [vmem:[%s1 + $0xfe0] sm:$0xf]
    %v1042 = vld [vmem:[%s1 + $0xfe4] sm:$0xf]
    %v1043 = vld [vmem:[%s1 + $0xfe8] sm:$0xf]
    %v1044 = vld [vmem:[%s1 + $0xfec] sm:$0xf]
    %v1045 = vld [vmem:[%s1 + $0xff0] sm:$0xf]
    %v1046 = vld [vmem:[%s1 + $0xff4] sm:$0xf]
    %v1047 = vld [vmem:[%s1 + $0xff8] sm:$0xf]
    %v1048 = vld [vmem:[%s1 + $0xffc] sm:$0xf]
    %v1049 = vld [vmem:[%s1 + $0x1000] sm:$0xf]
    %v1050 = vld [vmem:[%s1 + $0x1004] sm:$0xf]
    %v1051 = vld [vmem:[%s1 + $0x1008] sm:$0xf]
    %v1052 = vld [vmem:[%s1 + $0x100c] sm:$0xf]
    %v1053 = vld [vmem:[%s1 + $0x1010] sm:$0xf]
    %v1054 = vld [vmem:[%s1 + $0x1014] sm:$0xf]
    %v1055 = vld [vmem:[%s1 + $0x1018] sm:$0xf]
    %v1056 = vld [vmem:[%s1 + $0x101c] sm:$0xf]
    %v1057 = vld [vmem:[%s1 + $0x1020] sm:$0xf]
    %v1058 = vld [vmem:[%s1 + $0x1024] sm:$0xf]
    %v1059 = vld [vmem:[%s1 + $0x1028] sm:$0xf]
    %v1060 = vld [vmem:[%s1 + $0x102c] sm:$0xf]
    %v1061 = vld [vmem:[%s1 + $0x1030] sm:$0xf]
    %v1062 = vld [vmem:[%s1 + $0x1034] sm:$0xf]
    %v1063 = vld [vmem:[%s1 + $0x1038] sm:$0xf]
    %v1064 = vld [vmem:[%s1 + $0x103c] sm:$0xf]
    %v1065 = vld [vmem:[%s1 + $0x1040] sm:$0xf]
    %v1066 = vld [vmem:[%s1 + $0x1044] sm:$0xf]
    %v1067 = vld [vmem:[%s1 + $0x1048] sm:$0xf]
    %v1068 = vld [vmem:[%s1 + $0x104c] sm:$0xf]
    %v1069 = vld [vmem:[%s1 + $0x1050] sm:$0xf]
    %v1070 = vld [vmem:[%s1 + $0x1054] sm:$0xf]
    %v1071 = vld [vmem:[%s1 + $0x1058] sm:$0xf]
    %v1072 = vld [vmem:[%s1 + $0x105c] sm:$0xf]
    %v1073 = vld [vmem:[%s1 + $0x1060] sm:$0xf]
    %v1074 = vld [vmem:[%s1 + $0x1064] sm:$0xf]
    %v1075 = vld [vmem:[%s1 + $0x1068] sm:$0xf]
    %v1076 = vld [vmem:[%s1 + $0x106c] sm:$0xf]
    %v1077 = vld [vmem:[%s1 + $0x1070] sm:$0xf]
    %v1078 = vld [vmem:[%s1 + $0x1074] sm:$0xf]
    %v1079 = vld [vmem:[%s1 + $0x1078] sm:$0xf]
    %v1080 = vld [vmem:[%s1 + $0x107c] sm:$0xf]
    %v1081 = vld [vmem:[%s1 + $0x1080] sm:$0xf]
    %v1082 = vld [vmem:[%s1 + $0x1084] sm:$0xf]
    %v1083 = vld [vmem:[%s1 + $0x1088] sm:$0xf]
    %v1084 = vld [vmem:[%s1 + $0x108c] sm:$0xf]
    %v1085 = vld [vmem:[%s1 + $0x1090] sm:$0xf]
    %v1086 = vld [vmem:[%s1 + $0x1094] sm:$0xf]
    %v1087 = vld [vmem:[%s1 + $0x1098] sm:$0xf]
    %v1088 = vld [vmem:[%s1 + $0x109c] sm:$0xf]
    %v1089 = vld [vmem:[%s1 + $0x10a0] sm:$0xf]
    %v1090 = vld [vmem:[%s1 + $0x10a4] sm:$0xf]
    %v1091 = vld [vmem:[%s1 + $0x10a8] sm:$0xf]
    %v1092 = vld [vmem:[%s1 + $0x10ac] sm:$0xf]
    %v1093 = vld [vmem:[%s1 + $0x10b0] sm:$0xf]
    %v1094 = vld [vmem:[%s1 + $0x10b4] sm:$0xf]
    %v1095 = vld [vmem:[%s1 + $0x10b8] sm:$0xf]
    %v1096 = vld [vmem:[%s1 + $0x10bc] sm:$0xf]
    %v1097 = vld [vmem:[%s1 + $0x10c0] sm:$0xf]
    %v1098 = vld [vmem:[%s1 + $0x10c4] sm:$0xf]
    %v1099 = vld [vmem:[%s1 + $0x10c8] sm:$0xf]
    %v1100 = vld [vmem:[%s1 + $0x10cc] sm:$0xf]
    %v1101 = vld [vmem:[%s1 + $0x10d0] sm:$0xf]
    %v1102 = vld [vmem:[%s1 + $0x10d4] sm:$0xf]
    %v1103 = vld [vmem:[%s1 + $0x10d8] sm:$0xf]
    %v1104 = vld [vmem:[%s1 + $0x10dc] sm:$0xf]
    %v1105 = vld [vmem:[%s1 + $0x10e0] sm:$0xf]
    %v1106 = vld [vmem:[%s1 + $0x10e4] sm:$0xf]
    %v1107 = vld [vmem:[%s1 + $0x10e8] sm:$0xf]
    %v1108 = vld [vmem:[%s1 + $0x10ec] sm:$0xf]
    %v1109 = vld [vmem:[%s1 + $0x10f0] sm:$0xf]
    %v1110 = vld [vmem:[%s1 + $0x10f4] sm:$0xf]
    %v1111 = vld [vmem:[%s1 + $0x10f8] sm:$0xf]
    %v1112 = vld [vmem:[%s1 + $0x10fc] sm:$0xf]
    %v1113 = vld [vmem:[%s1 + $0x1100] sm:$0xf]
    %v1114 = vld [vmem:[%s1 + $0x1104] sm:$0xf]
    %v1115 = vld [vmem:[%s1 + $0x1108] sm:$0xf]
    %v1116 = vld [vmem:[%s1 + $0x110c] sm:$0xf]
    %v1117 = vld [vmem:[%s1 + $0x1110] sm:$0xf]
    %v1118 = vld [vmem:[%s1 + $0x1114] sm:$0xf]
    %v1119 = vld [vmem:[%s1 + $0x1118] sm:$0xf]
    %v1120 = vld [vmem:[%s1 + $0x111c] sm:$0xf]
    %v1121 = vld [vmem:[%s1 + $0x1120] sm:$0xf]
    %v1122 = vld [vmem:[%s1 + $0x1124] sm:$0xf]
    %v1123 = vld [vmem:[%s1 + $0x1128] sm:$0xf]
    %v1124 = vld [vmem:[%s1 + $0x112c] sm:$0xf]
    %v1125 = vld [vmem:[%s1 + $0x1130] sm:$0xf]
    %v1126 = vld [vmem:[%s1 + $0x1134] sm:$0xf]
    %v1127 = vld [vmem:[%s1 + $0x1138] sm:$0xf]
    %v1128 = vld [vmem:[%s1 + $0x113c] sm:$0xf]
    %v1129 = vld [vmem:[%s1 + $0x1140] sm:$0xf]
    %v1130 = vld [vmem:[%s1 + $0x1144] sm:$0xf]
    %v1131 = vld [vmem:[%s1 + $0x1148] sm:$0xf]
    %v1132 = vld [vmem:[%s1 + $0x114c] sm:$0xf]
    %v1133 = vld [vmem:[%s1 + $0x1150] sm:$0xf]
    %v1134 = vld [vmem:[%s1 + $0x1154] sm:$0xf]
    %v1135 = vld [vmem:[%s1 + $0x1158] sm:$0xf]
    %v1136 = vld [vmem:[%s1 + $0x115c] sm:$0xf]
    %v1137 = vld [vmem:[%s1 + $0x1160] sm:$0xf]
    %v1138 = vld [vmem:[%s1 + $0x1164] sm:$0xf]
    %v1139 = vld [vmem:[%s1 + $0x1168] sm:$0xf]
    %v1140 = vld [vmem:[%s1 + $0x116c] sm:$0xf]
    %v1141 = vld [vmem:[%s1 + $0x1170] sm:$0xf]
    %v1142 = vld [vmem:[%s1 + $0x1174] sm:$0xf]
    %v1143 = vld [vmem:[%s1 + $0x1178] sm:$0xf]
    %v1144 = vld [vmem:[%s1 + $0x117c] sm:$0xf]
    %v1145 = vld [vmem:[%s1 + $0x1180] sm:$0xf]
    %v1146 = vld [vmem:[%s1 + $0x1184] sm:$0xf]
    %v1147 = vld [vmem:[%s1 + $0x1188] sm:$0xf]
    %v1148 = vld [vmem:[%s1 + $0x118c] sm:$0xf]
    %v1149 = vld [vmem:[%s1 + $0x1190] sm:$0xf]
    %v1150 = vld [vmem:[%s1 + $0x1194] sm:$0xf]
    %v1151 = vld [vmem:[%s1 + $0x1198] sm:$0xf]
    %v1152 = vld [vmem:[%s1 + $0x119c] sm:$0xf]
    %v1153 = vld [vmem:[%s1 + $0x11a0] sm:$0xf]
    %v1154 = vld [vmem:[%s1 + $0x11a4] sm:$0xf]
    %v1155 = vld [vmem:[%s1 + $0x11a8] sm:$0xf]
    %v1156 = vld [vmem:[%s1 + $0x11ac] sm:$0xf]
    %v1157 = vld [vmem:[%s1 + $0x11b0] sm:$0xf]
    %v1158 = vld [vmem:[%s1 + $0x11b4] sm:$0xf]
    %v1159 = vld [vmem:[%s1 + $0x11b8] sm:$0xf]
    %v1160 = vld [vmem:[%s1 + $0x11bc] sm:$0xf]
    %v1161 = vld [vmem:[%s1 + $0x11c0] sm:$0xf]
    %v1162 = vld [vmem:[%s1 + $0x11c4] sm:$0xf]
    %v1163 = vld [vmem:[%s1 + $0x11c8] sm:$0xf]
    %v1164 = vld [vmem:[%s1 + $0x11cc] sm:$0xf]
    %v1165 = vld [vmem:[%s1 + $0x11d0] sm:$0xf]
    %v1166 = vld [vmem:[%s1 + $0x11d4] sm:$0xf]
    %v1167 = vld [vmem:[%s1 + $0x11d8] sm:$0xf]
    %v1168 = vld [vmem:[%s1 + $0x11dc] sm:$0xf]
    %v1169 = vld [vmem:[%s1 + $0x11e0] sm:$0xf]
    %v1170 = vld [vmem:[%s1 + $0x11e4] sm:$0xf]
    %v1171 = vld [vmem:[%s1 + $0x11e8] sm:$0xf]
    %v1172 = vld [vmem:[%s1 + $0x11ec] sm:$0xf]
    %v1173 = vld [vmem:[%s1 + $0x11f0] sm:$0xf]
    %v1174 = vld [vmem:[%s1 + $0x11f4] sm:$0xf]
    %v1175 = vld [vmem:[%s1 + $0x11f8] sm:$0xf]
    %v1176 = vld [vmem:[%s1 + $0x11fc] sm:$0xf]
    %v1177 = vld [vmem:[%s2] sm:$0x1]
    %v1179 = vlaneseq
    %v1180 = vshrl.u32 %v1179, 7
    %v1181 = vsub.s32 0, %v1180
    %v1182 = vrot.slane %v1177, %v1181
    %v1193 = vcombine.high %v16, %v16
    %v1195 = vunpack.c.l.s4 1966171168
    %v1196 = vunpack.c.0.s8 %v1195
    %v1197 = vlaneseq
    %v1198 = vshrl.u32 %v1197, 7
    %v1199 = vsub.s32 %v1196, %v1198
    %v1200 = vrot.slane %v16, %v1199
    %v1202 = vunpack.c.l.s4 1966171168
    %v1203 = vunpack.c.0.s8 %v1202
    %v1204 = vlaneseq
    %v1205 = vshrl.u32 %v1204, 7
    %v1206 = vsub.s32 %v1203, %v1205
    %v1207 = vrot.slane %v1193, %v1206
    %v1208 = vcombine.high %v1200, %v1200
    %v1209 = vcombine.high %v1207, %v1207
    %v1211 = vunpack.c.l.s4 1966171168
    %v1212 = vunpack.c.0.s8 %v1211
    %v1213 = vlaneseq
    %v1214 = vshrl.u32 %v1213, 7
    %v1215 = vsub.s32 %v1212, %v1214
    %v1216 = vrot.slane %v1200, %v1215
    %v1218 = vunpack.c.l.s4 1966171168
    %v1219 = vunpack.c.0.s8 %v1218
    %v1220 = vlaneseq
    %v1221 = vshrl.u32 %v1220, 7
    %v1222 = vsub.s32 %v1219, %v1221
    %v1223 = vrot.slane %v1207, %v1222
    %v1225 = vunpack.c.l.s4 1966171168
    %v1226 = vunpack.c.0.s8 %v1225
    %v1227 = vlaneseq
    %v1228 = vshrl.u32 %v1227, 7
    %v1229 = vsub.s32 %v1226, %v1228
    %v1230 = vrot.slane %v1208, %v1229
    %v1232 = vunpack.c.l.s4 1966171168
    %v1233 = vunpack.c.0.s8 %v1232
    %v1234 = vlaneseq
    %v1235 = vshrl.u32 %v1234, 7
    %v1236 = vsub.s32 %v1233, %v1235
    %v1237 = vrot.slane %v1209, %v1236
    %v1238 = vcombine.high %v1216, %v1216
    %v1239 = vcombine.high %v1223, %v1223
    %v1240 = vcombine.high %v1230, %v1230
    %v1241 = vcombine.high %v1237, %v1237
    %v1242 = vcombine.high %v17, %v17
    %v1244 = vunpack.c.l.s4 1966171168
    %v1245 = vunpack.c.0.s8 %v1244
    %v1246 = vlaneseq
    %v1247 = vshrl.u32 %v1246, 7
    %v1248 = vsub.s32 %v1245, %v1247
    %v1249 = vrot.slane %v17, %v1248
    %v1251 = vunpack.c.l.s4 1966171168
    %v1252 = vunpack.c.0.s8 %v1251
    %v1253 = vlaneseq
    %v1254 = vshrl.u32 %v1253, 7
    %v1255 = vsub.s32 %v1252, %v1254
    %v1256 = vrot.slane %v1242, %v1255
    %v1257 = vcombine.high %v1249, %v1249
    %v1258 = vcombine.high %v1256, %v1256
    %v1260 = vunpack.c.l.s4 1966171168
    %v1261 = vunpack.c.0.s8 %v1260
    %v1262 = vlaneseq
    %v1263 = vshrl.u32 %v1262, 7
    %v1264 = vsub.s32 %v1261, %v1263
    %v1265 = vrot.slane %v1249, %v1264
    %v1267 = vunpack.c.l.s4 1966171168
    %v1268 = vunpack.c.0.s8 %v1267
    %v1269 = vlaneseq
    %v1270 = vshrl.u32 %v1269, 7
    %v1271 = vsub.s32 %v1268, %v1270
    %v1272 = vrot.slane %v1256, %v1271
    %v1274 = vunpack.c.l.s4 1966171168
    %v1275 = vunpack.c.0.s8 %v1274
    %v1276 = vlaneseq
    %v1277 = vshrl.u32 %v1276, 7
    %v1278 = vsub.s32 %v1275, %v1277
    %v1279 = vrot.slane %v1257, %v1278
    %v1281 = vunpack.c.l.s4 1966171168
    %v1282 = vunpack.c.0.s8 %v1281
    %v1283 = vlaneseq
    %v1284 = vshrl.u32 %v1283, 7
    %v1285 = vsub.s32 %v1282, %v1284
    %v1286 = vrot.slane %v1258, %v1285
    %v1287 = vcombine.high %v1265, %v1265
    %v1288 = vcombine.high %v1272, %v1272
    %v1289 = vcombine.high %v1279, %v1279
    %v1290 = vcombine.high %v1286, %v1286
    %v1291 = vcombine.high %v18, %v18
    %v1293 = vunpack.c.l.s4 1966171168
    %v1294 = vunpack.c.0.s8 %v1293
    %v1295 = vlaneseq
    %v1296 = vshrl.u32 %v1295, 7
    %v1297 = vsub.s32 %v1294, %v1296
    %v1298 = vrot.slane %v18, %v1297
    %v1300 = vunpack.c.l.s4 1966171168
    %v1301 = vunpack.c.0.s8 %v1300
    %v1302 = vlaneseq
    %v1303 = vshrl.u32 %v1302, 7
    %v1304 = vsub.s32 %v1301, %v1303
    %v1305 = vrot.slane %v1291, %v1304
    %v1306 = vcombine.high %v1298, %v1298
    %v1307 = vcombine.high %v1305, %v1305
    %v1309 = vunpack.c.l.s4 1966171168
    %v1310 = vunpack.c.0.s8 %v1309
    %v1311 = vlaneseq
    %v1312 = vshrl.u32 %v1311, 7
    %v1313 = vsub.s32 %v1310, %v1312
    %v1314 = vrot.slane %v1298, %v1313
    %v1316 = vunpack.c.l.s4 1966171168
    %v1317 = vunpack.c.0.s8 %v1316
    %v1318 = vlaneseq
    %v1319 = vshrl.u32 %v1318, 7
    %v1320 = vsub.s32 %v1317, %v1319
    %v1321 = vrot.slane %v1305, %v1320
    %v1323 = vunpack.c.l.s4 1966171168
    %v1324 = vunpack.c.0.s8 %v1323
    %v1325 = vlaneseq
    %v1326 = vshrl.u32 %v1325, 7
    %v1327 = vsub.s32 %v1324, %v1326
    %v1328 = vrot.slane %v1306, %v1327
    %v1330 = vunpack.c.l.s4 1966171168
    %v1331 = vunpack.c.0.s8 %v1330
    %v1332 = vlaneseq
    %v1333 = vshrl.u32 %v1332, 7
    %v1334 = vsub.s32 %v1331, %v1333
    %v1335 = vrot.slane %v1307, %v1334
    %v1336 = vcombine.high %v1314, %v1314
    %v1337 = vcombine.high %v1321, %v1321
    %v1338 = vcombine.high %v1328, %v1328
    %v1339 = vcombine.high %v1335, %v1335
    %v1340 = vcombine.high %v19, %v19
    %v1342 = vunpack.c.l.s4 1966171168
    %v1343 = vunpack.c.0.s8 %v1342
    %v1344 = vlaneseq
    %v1345 = vshrl.u32 %v1344, 7
    %v1346 = vsub.s32 %v1343, %v1345
    %v1347 = vrot.slane %v19, %v1346
    %v1349 = vunpack.c.l.s4 1966171168
    %v1350 = vunpack.c.0.s8 %v1349
    %v1351 = vlaneseq
    %v1352 = vshrl.u32 %v1351, 7
    %v1353 = vsub.s32 %v1350, %v1352
    %v1354 = vrot.slane %v1340, %v1353
    %v1355 = vcombine.high %v1347, %v1347
    %v1356 = vcombine.high %v1354, %v1354
    %v1358 = vunpack.c.l.s4 1966171168
    %v1359 = vunpack.c.0.s8 %v1358
    %v1360 = vlaneseq
    %v1361 = vshrl.u32 %v1360, 7
    %v1362 = vsub.s32 %v1359, %v1361
    %v1363 = vrot.slane %v1347, %v1362
    %v1365 = vunpack.c.l.s4 1966171168
    %v1366 = vunpack.c.0.s8 %v1365
    %v1367 = vlaneseq
    %v1368 = vshrl.u32 %v1367, 7
    %v1369 = vsub.s32 %v1366, %v1368
    %v1370 = vrot.slane %v1354, %v1369
    %v1372 = vunpack.c.l.s4 1966171168
    %v1373 = vunpack.c.0.s8 %v1372
    %v1374 = vlaneseq
    %v1375 = vshrl.u32 %v1374, 7
    %v1376 = vsub.s32 %v1373, %v1375
    %v1377 = vrot.slane %v1355, %v1376
    %v1379 = vunpack.c.l.s4 1966171168
    %v1380 = vunpack.c.0.s8 %v1379
    %v1381 = vlaneseq
    %v1382 = vshrl.u32 %v1381, 7
    %v1383 = vsub.s32 %v1380, %v1382
    %v1384 = vrot.slane %v1356, %v1383
    %v1385 = vcombine.high %v1363, %v1363
    %v1386 = vcombine.high %v1370, %v1370
    %v1387 = vcombine.high %v1377, %v1377
    %v1388 = vcombine.high %v1384, %v1384
    %v1389 = vcombine.high %v20, %v20
    %v1391 = vunpack.c.l.s4 1966171168
    %v1392 = vunpack.c.0.s8 %v1391
    %v1393 = vlaneseq
    %v1394 = vshrl.u32 %v1393, 7
    %v1395 = vsub.s32 %v1392, %v1394
    %v1396 = vrot.slane %v20, %v1395
    %v1398 = vunpack.c.l.s4 1966171168
    %v1399 = vunpack.c.0.s8 %v1398
    %v1400 = vlaneseq
    %v1401 = vshrl.u32 %v1400, 7
    %v1402 = vsub.s32 %v1399, %v1401
    %v1403 = vrot.slane %v1389, %v1402
    %v1404 = vcombine.high %v1396, %v1396
    %v1405 = vcombine.high %v1403, %v1403
    %v1407 = vunpack.c.l.s4 1966171168
    %v1408 = vunpack.c.0.s8 %v1407
    %v1409 = vlaneseq
    %v1410 = vshrl.u32 %v1409, 7
    %v1411 = vsub.s32 %v1408, %v1410
    %v1412 = vrot.slane %v1396, %v1411
    %v1414 = vunpack.c.l.s4 1966171168
    %v1415 = vunpack.c.0.s8 %v1414
    %v1416 = vlaneseq
    %v1417 = vshrl.u32 %v1416, 7
    %v1418 = vsub.s32 %v1415, %v1417
    %v1419 = vrot.slane %v1403, %v1418
    %v1421 = vunpack.c.l.s4 1966171168
    %v1422 = vunpack.c.0.s8 %v1421
    %v1423 = vlaneseq
    %v1424 = vshrl.u32 %v1423, 7
    %v1425 = vsub.s32 %v1422, %v1424
    %v1426 = vrot.slane %v1404, %v1425
    %v1428 = vunpack.c.l.s4 1966171168
    %v1429 = vunpack.c.0.s8 %v1428
    %v1430 = vlaneseq
    %v1431 = vshrl.u32 %v1430, 7
    %v1432 = vsub.s32 %v1429, %v1431
    %v1433 = vrot.slane %v1405, %v1432
    %v1434 = vcombine.high %v1412, %v1412
    %v1435 = vcombine.high %v1419, %v1419
    %v1436 = vcombine.high %v1426, %v1426
    %v1437 = vcombine.high %v1433, %v1433
    %v1438 = vcombine.high %v21, %v21
    %v1440 = vunpack.c.l.s4 1966171168
    %v1441 = vunpack.c.0.s8 %v1440
    %v1442 = vlaneseq
    %v1443 = vshrl.u32 %v1442, 7
    %v1444 = vsub.s32 %v1441, %v1443
    %v1445 = vrot.slane %v21, %v1444
    %v1447 = vunpack.c.l.s4 1966171168
    %v1448 = vunpack.c.0.s8 %v1447
    %v1449 = vlaneseq
    %v1450 = vshrl.u32 %v1449, 7
    %v1451 = vsub.s32 %v1448, %v1450
    %v1452 = vrot.slane %v1438, %v1451
    %v1453 = vcombine.high %v1445, %v1445
    %v1454 = vcombine.high %v1452, %v1452
    %v1456 = vunpack.c.l.s4 1966171168
    %v1457 = vunpack.c.0.s8 %v1456
    %v1458 = vlaneseq
    %v1459 = vshrl.u32 %v1458, 7
    %v1460 = vsub.s32 %v1457, %v1459
    %v1461 = vrot.slane %v1445, %v1460
    %v1463 = vunpack.c.l.s4 1966171168
    %v1464 = vunpack.c.0.s8 %v1463
    %v1465 = vlaneseq
    %v1466 = vshrl.u32 %v1465, 7
    %v1467 = vsub.s32 %v1464, %v1466
    %v1468 = vrot.slane %v1452, %v1467
    %v1470 = vunpack.c.l.s4 1966171168
    %v1471 = vunpack.c.0.s8 %v1470
    %v1472 = vlaneseq
    %v1473 = vshrl.u32 %v1472, 7
    %v1474 = vsub.s32 %v1471, %v1473
    %v1475 = vrot.slane %v1453, %v1474
    %v1477 = vunpack.c.l.s4 1966171168
    %v1478 = vunpack.c.0.s8 %v1477
    %v1479 = vlaneseq
    %v1480 = vshrl.u32 %v1479, 7
    %v1481 = vsub.s32 %v1478, %v1480
    %v1482 = vrot.slane %v1454, %v1481
    %v1483 = vcombine.high %v1461, %v1461
    %v1484 = vcombine.high %v1468, %v1468
    %v1485 = vcombine.high %v1475, %v1475
    %v1486 = vcombine.high %v1482, %v1482
    %v1487 = vcombine.high %v22, %v22
    %v1489 = vunpack.c.l.s4 1966171168
    %v1490 = vunpack.c.0.s8 %v1489
    %v1491 = vlaneseq
    %v1492 = vshrl.u32 %v1491, 7
    %v1493 = vsub.s32 %v1490, %v1492
    %v1494 = vrot.slane %v22, %v1493
    %v1496 = vunpack.c.l.s4 1966171168
    %v1497 = vunpack.c.0.s8 %v1496
    %v1498 = vlaneseq
    %v1499 = vshrl.u32 %v1498, 7
    %v1500 = vsub.s32 %v1497, %v1499
    %v1501 = vrot.slane %v1487, %v1500
    %v1502 = vcombine.high %v1494, %v1494
    %v1503 = vcombine.high %v1501, %v1501
    %v1505 = vunpack.c.l.s4 1966171168
    %v1506 = vunpack.c.0.s8 %v1505
    %v1507 = vlaneseq
    %v1508 = vshrl.u32 %v1507, 7
    %v1509 = vsub.s32 %v1506, %v1508
    %v1510 = vrot.slane %v1494, %v1509
    %v1512 = vunpack.c.l.s4 1966171168
    %v1513 = vunpack.c.0.s8 %v1512
    %v1514 = vlaneseq
    %v1515 = vshrl.u32 %v1514, 7
    %v1516 = vsub.s32 %v1513, %v1515
    %v1517 = vrot.slane %v1501, %v1516
    %v1519 = vunpack.c.l.s4 1966171168
    %v1520 = vunpack.c.0.s8 %v1519
    %v1521 = vlaneseq
    %v1522 = vshrl.u32 %v1521, 7
    %v1523 = vsub.s32 %v1520, %v1522
    %v1524 = vrot.slane %v1502, %v1523
    %v1526 = vunpack.c.l.s4 1966171168
    %v1527 = vunpack.c.0.s8 %v1526
    %v1528 = vlaneseq
    %v1529 = vshrl.u32 %v1528, 7
    %v1530 = vsub.s32 %v1527, %v1529
    %v1531 = vrot.slane %v1503, %v1530
    %v1532 = vcombine.high %v1510, %v1510
    %v1533 = vcombine.high %v1517, %v1517
    %v1534 = vcombine.high %v1524, %v1524
    %v1535 = vcombine.high %v1531, %v1531
    %v1536 = vcombine.high %v23, %v23
    %v1538 = vunpack.c.l.s4 1966171168
    %v1539 = vunpack.c.0.s8 %v1538
    %v1540 = vlaneseq
    %v1541 = vshrl.u32 %v1540, 7
    %v1542 = vsub.s32 %v1539, %v1541
    %v1543 = vrot.slane %v23, %v1542
    %v1545 = vunpack.c.l.s4 1966171168
    %v1546 = vunpack.c.0.s8 %v1545
    %v1547 = vlaneseq
    %v1548 = vshrl.u32 %v1547, 7
    %v1549 = vsub.s32 %v1546, %v1548
    %v1550 = vrot.slane %v1536, %v1549
    %v1551 = vcombine.high %v1543, %v1543
    %v1552 = vcombine.high %v1550, %v1550
    %v1554 = vunpack.c.l.s4 1966171168
    %v1555 = vunpack.c.0.s8 %v1554
    %v1556 = vlaneseq
    %v1557 = vshrl.u32 %v1556, 7
    %v1558 = vsub.s32 %v1555, %v1557
    %v1559 = vrot.slane %v1543, %v1558
    %v1561 = vunpack.c.l.s4 1966171168
    %v1562 = vunpack.c.0.s8 %v1561
    %v1563 = vlaneseq
    %v1564 = vshrl.u32 %v1563, 7
    %v1565 = vsub.s32 %v1562, %v1564
    %v1566 = vrot.slane %v1550, %v1565
    %v1568 = vunpack.c.l.s4 1966171168
    %v1569 = vunpack.c.0.s8 %v1568
    %v1570 = vlaneseq
    %v1571 = vshrl.u32 %v1570, 7
    %v1572 = vsub.s32 %v1569, %v1571
    %v1573 = vrot.slane %v1551, %v1572
    %v1575 = vunpack.c.l.s4 1966171168
    %v1576 = vunpack.c.0.s8 %v1575
    %v1577 = vlaneseq
    %v1578 = vshrl.u32 %v1577, 7
    %v1579 = vsub.s32 %v1576, %v1578
    %v1580 = vrot.slane %v1552, %v1579
    %v1581 = vcombine.high %v1559, %v1559
    %v1582 = vcombine.high %v1566, %v1566
    %v1583 = vcombine.high %v1573, %v1573
    %v1584 = vcombine.high %v1580, %v1580
    %v1585 = vcombine.high %v24, %v24
    %v1587 = vunpack.c.l.s4 1966171168
    %v1588 = vunpack.c.0.s8 %v1587
    %v1589 = vlaneseq
    %v1590 = vshrl.u32 %v1589, 7
    %v1591 = vsub.s32 %v1588, %v1590
    %v1592 = vrot.slane %v24, %v1591
    %v1594 = vunpack.c.l.s4 1966171168
    %v1595 = vunpack.c.0.s8 %v1594
    %v1596 = vlaneseq
    %v1597 = vshrl.u32 %v1596, 7
    %v1598 = vsub.s32 %v1595, %v1597
    %v1599 = vrot.slane %v1585, %v1598
    %v1600 = vcombine.high %v1592, %v1592
    %v1601 = vcombine.high %v1599, %v1599
    %v1603 = vunpack.c.l.s4 1966171168
    %v1604 = vunpack.c.0.s8 %v1603
    %v1605 = vlaneseq
    %v1606 = vshrl.u32 %v1605, 7
    %v1607 = vsub.s32 %v1604, %v1606
    %v1608 = vrot.slane %v1592, %v1607
    %v1610 = vunpack.c.l.s4 1966171168
    %v1611 = vunpack.c.0.s8 %v1610
    %v1612 = vlaneseq
    %v1613 = vshrl.u32 %v1612, 7
    %v1614 = vsub.s32 %v1611, %v1613
    %v1615 = vrot.slane %v1599, %v1614
    %v1617 = vunpack.c.l.s4 1966171168
    %v1618 = vunpack.c.0.s8 %v1617
    %v1619 = vlaneseq
    %v1620 = vshrl.u32 %v1619, 7
    %v1621 = vsub.s32 %v1618, %v1620
    %v1622 = vrot.slane %v1600, %v1621
    %v1624 = vunpack.c.l.s4 1966171168
    %v1625 = vunpack.c.0.s8 %v1624
    %v1626 = vlaneseq
    %v1627 = vshrl.u32 %v1626, 7
    %v1628 = vsub.s32 %v1625, %v1627
    %v1629 = vrot.slane %v1601, %v1628
    %v1630 = vcombine.high %v1608, %v1608
    %v1631 = vcombine.high %v1615, %v1615
    %v1632 = vcombine.high %v1622, %v1622
    %v1633 = vcombine.high %v1629, %v1629
    %v2858 = vunpack.c.l.b16 %v25
    %v2859 = vunpack.c.l.b16 %v26
    %v2860 = vunpack.c.l.b16 %v27
    %v2861 = vunpack.c.l.b16 %v28
    %v2862 = vunpack.c.l.b16 %v29
    %v2863 = vunpack.c.l.b16 %v30
    %v2864 = vunpack.c.l.b16 %v31
    %v2865 = vunpack.c.l.b16 %v32
    %v2866 = vunpack.c.l.b16 %v33
    %v2867 = vunpack.c.l.b16 %v34
    %v2868 = vunpack.c.l.b16 %v35
    %v2869 = vunpack.c.l.b16 %v36
    %v2870 = vunpack.c.l.b16 %v37
    %v2871 = vunpack.c.l.b16 %v38
    %v2872 = vunpack.c.l.b16 %v39
    %v2873 = vunpack.c.l.b16 %v40
    %v2874 = vunpack.c.l.b16 %v41
    %v2875 = vunpack.c.l.b16 %v42
    %v2876 = vunpack.c.l.b16 %v43
    %v2877 = vunpack.c.l.b16 %v44
    %v2878 = vunpack.c.l.b16 %v45
    %v2879 = vunpack.c.l.b16 %v46
    %v2880 = vunpack.c.l.b16 %v47
    %v2881 = vunpack.c.l.b16 %v48
    %v2882 = vunpack.c.l.b16 %v49
    %v2883 = vunpack.c.l.b16 %v50
    %v2884 = vunpack.c.l.b16 %v51
    %v2885 = vunpack.c.l.b16 %v52
    %v2886 = vunpack.c.l.b16 %v53
    %v2887 = vunpack.c.l.b16 %v54
    %v2888 = vunpack.c.l.b16 %v55
    %v2889 = vunpack.c.l.b16 %v56
    %v2890 = vunpack.c.l.b16 %v57
    %v2891 = vunpack.c.l.b16 %v58
    %v2892 = vunpack.c.l.b16 %v59
    %v2893 = vunpack.c.l.b16 %v60
    %v2894 = vunpack.c.l.b16 %v61
    %v2895 = vunpack.c.l.b16 %v62
    %v2896 = vunpack.c.l.b16 %v63
    %v2897 = vunpack.c.l.b16 %v64
    %v2898 = vunpack.c.l.b16 %v65
    %v2899 = vunpack.c.l.b16 %v66
    %v2900 = vunpack.c.l.b16 %v67
    %v2901 = vunpack.c.l.b16 %v68
    %v2902 = vunpack.c.l.b16 %v69
    %v2903 = vunpack.c.l.b16 %v70
    %v2904 = vunpack.c.l.b16 %v71
    %v2905 = vunpack.c.l.b16 %v72
    %v2906 = vunpack.c.l.b16 %v73
    %v2907 = vunpack.c.l.b16 %v74
    %v2908 = vunpack.c.l.b16 %v75
    %v2909 = vunpack.c.l.b16 %v76
    %v2910 = vunpack.c.l.b16 %v77
    %v2911 = vunpack.c.l.b16 %v78
    %v2912 = vunpack.c.l.b16 %v79
    %v2913 = vunpack.c.l.b16 %v80
    %v2914 = vunpack.c.l.b16 %v81
    %v2915 = vunpack.c.l.b16 %v82
    %v2916 = vunpack.c.l.b16 %v83
    %v2917 = vunpack.c.l.b16 %v84
    %v2918 = vunpack.c.l.b16 %v85
    %v2919 = vunpack.c.l.b16 %v86
    %v2920 = vunpack.c.l.b16 %v87
    %v2921 = vunpack.c.l.b16 %v88
    %v2922 = vunpack.c.l.b16 %v89
    %v2923 = vunpack.c.l.b16 %v90
    %v2924 = vunpack.c.l.b16 %v91
    %v2925 = vunpack.c.l.b16 %v92
    %v2926 = vunpack.c.l.b16 %v93
    %v2927 = vunpack.c.l.b16 %v94
    %v2928 = vunpack.c.l.b16 %v95
    %v2929 = vunpack.c.l.b16 %v96
    %v2930 = vunpack.c.l.b16 %v97
    %v2931 = vunpack.c.l.b16 %v98
    %v2932 = vunpack.c.l.b16 %v99
    %v2933 = vunpack.c.l.b16 %v100
    %v2934 = vunpack.c.l.b16 %v101
    %v2935 = vunpack.c.l.b16 %v102
    %v2936 = vunpack.c.l.b16 %v103
    %v2937 = vunpack.c.l.b16 %v104
    %v2938 = vunpack.c.l.b16 %v105
    %v2939 = vunpack.c.l.b16 %v106
    %v2940 = vunpack.c.l.b16 %v107
    %v2941 = vunpack.c.l.b16 %v108
    %v2942 = vunpack.c.l.b16 %v109
    %v2943 = vunpack.c.l.b16 %v110
    %v2944 = vunpack.c.l.b16 %v111
    %v2945 = vunpack.c.l.b16 %v112
    %v2946 = vunpack.c.l.b16 %v113
    %v2947 = vunpack.c.l.b16 %v114
    %v2948 = vunpack.c.l.b16 %v115
    %v2949 = vunpack.c.l.b16 %v116
    %v2950 = vunpack.c.l.b16 %v117
    %v2951 = vunpack.c.l.b16 %v118
    %v2952 = vunpack.c.l.b16 %v119
    %v2953 = vunpack.c.l.b16 %v120
    %v2954 = vunpack.c.l.b16 %v121
    %v2955 = vunpack.c.l.b16 %v122
    %v2956 = vunpack.c.l.b16 %v123
    %v2957 = vunpack.c.l.b16 %v124
    %v2958 = vunpack.c.l.b16 %v125
    %v2959 = vunpack.c.l.b16 %v126
    %v2960 = vunpack.c.l.b16 %v127
    %v2961 = vunpack.c.l.b16 %v128
    %v2962 = vunpack.c.l.b16 %v129
    %v2963 = vunpack.c.l.b16 %v130
    %v2964 = vunpack.c.l.b16 %v131
    %v2965 = vunpack.c.l.b16 %v132
    %v2966 = vunpack.c.l.b16 %v133
    %v2967 = vunpack.c.l.b16 %v134
    %v2968 = vunpack.c.l.b16 %v135
    %v2969 = vunpack.c.l.b16 %v136
    %v2970 = vunpack.c.l.b16 %v137
    %v2971 = vunpack.c.l.b16 %v138
    %v2972 = vunpack.c.l.b16 %v139
    %v2973 = vunpack.c.l.b16 %v140
    %v2974 = vunpack.c.l.b16 %v141
    %v2975 = vunpack.c.l.b16 %v142
    %v2976 = vunpack.c.l.b16 %v143
    %v2977 = vunpack.c.l.b16 %v144
    %v2978 = vunpack.c.l.b16 %v145
    %v2979 = vunpack.c.l.b16 %v146
    %v2980 = vunpack.c.l.b16 %v147
    %v2981 = vunpack.c.l.b16 %v148
    %v2982 = vunpack.c.l.b16 %v149
    %v2983 = vunpack.c.l.b16 %v150
    %v2984 = vunpack.c.l.b16 %v151
    %v2985 = vunpack.c.l.b16 %v152
    %v2986 = vunpack.c.l.b16 %v153
    %v2987 = vunpack.c.l.b16 %v154
    %v2988 = vunpack.c.l.b16 %v155
    %v2989 = vunpack.c.l.b16 %v156
    %v2990 = vunpack.c.l.b16 %v157
    %v2991 = vunpack.c.l.b16 %v158
    %v2992 = vunpack.c.l.b16 %v159
    %v2993 = vunpack.c.l.b16 %v160
    %v2994 = vunpack.c.l.b16 %v161
    %v2995 = vunpack.c.l.b16 %v162
    %v2996 = vunpack.c.l.b16 %v163
    %v2997 = vunpack.c.l.b16 %v164
    %v2998 = vunpack.c.l.b16 %v165
    %v2999 = vunpack.c.l.b16 %v166
    %v3000 = vunpack.c.l.b16 %v167
    %v3001 = vunpack.c.l.b16 %v168
    %v3002 = vunpack.c.l.b16 %v169
    %v3003 = vunpack.c.l.b16 %v170
    %v3004 = vunpack.c.l.b16 %v171
    %v3005 = vunpack.c.l.b16 %v172
    %v3006 = vunpack.c.l.b16 %v173
    %v3007 = vunpack.c.l.b16 %v174
    %v3008 = vunpack.c.l.b16 %v175
    %v3009 = vunpack.c.l.b16 %v176
    %v3010 = vunpack.c.l.b16 %v177
    %v3011 = vunpack.c.l.b16 %v178
    %v3012 = vunpack.c.l.b16 %v179
    %v3013 = vunpack.c.l.b16 %v180
    %v3014 = vunpack.c.l.b16 %v181
    %v3015 = vunpack.c.l.b16 %v182
    %v3016 = vunpack.c.l.b16 %v183
    %v3017 = vunpack.c.l.b16 %v184
    %v3018 = vunpack.c.l.b16 %v185
    %v3019 = vunpack.c.l.b16 %v186
    %v3020 = vunpack.c.l.b16 %v187
    %v3021 = vunpack.c.l.b16 %v188
    %v3022 = vunpack.c.l.b16 %v189
    %v3023 = vunpack.c.l.b16 %v190
    %v3024 = vunpack.c.l.b16 %v191
    %v3025 = vunpack.c.l.b16 %v192
    %v3026 = vunpack.c.l.b16 %v193
    %v3027 = vunpack.c.l.b16 %v194
    %v3028 = vunpack.c.l.b16 %v195
    %v3029 = vunpack.c.l.b16 %v196
    %v3030 = vunpack.c.l.b16 %v197
    %v3031 = vunpack.c.l.b16 %v198
    %v3032 = vunpack.c.l.b16 %v199
    %v3033 = vunpack.c.l.b16 %v200
    %v3034 = vunpack.c.l.b16 %v201
    %v3035 = vunpack.c.l.b16 %v202
    %v3036 = vunpack.c.l.b16 %v203
    %v3037 = vunpack.c.l.b16 %v204
    %v3038 = vunpack.c.l.b16 %v205
    %v3039 = vunpack.c.l.b16 %v206
    %v3040 = vunpack.c.l.b16 %v207
    %v3041 = vunpack.c.l.b16 %v208
    %v3042 = vunpack.c.l.b16 %v209
    %v3043 = vunpack.c.l.b16 %v210
    %v3044 = vunpack.c.l.b16 %v211
    %v3045 = vunpack.c.l.b16 %v212
    %v3046 = vunpack.c.l.b16 %v213
    %v3047 = vunpack.c.l.b16 %v214
    %v3048 = vunpack.c.l.b16 %v215
    %v3049 = vunpack.c.l.b16 %v216
    %v3050 = vunpack.c.l.b16 %v217
    %v3051 = vunpack.c.l.b16 %v218
    %v3052 = vunpack.c.l.b16 %v219
    %v3053 = vunpack.c.l.b16 %v220
    %v3054 = vunpack.c.l.b16 %v221
    %v3055 = vunpack.c.l.b16 %v222
    %v3056 = vunpack.c.l.b16 %v223
    %v3057 = vunpack.c.l.b16 %v224
    %v3058 = vunpack.c.l.b16 %v225
    %v3059 = vunpack.c.l.b16 %v226
    %v3060 = vunpack.c.l.b16 %v227
    %v3061 = vunpack.c.l.b16 %v228
    %v3062 = vunpack.c.l.b16 %v229
    %v3063 = vunpack.c.l.b16 %v230
    %v3064 = vunpack.c.l.b16 %v231
    %v3065 = vunpack.c.l.b16 %v232
    %v3066 = vunpack.c.l.b16 %v233
    %v3067 = vunpack.c.l.b16 %v234
    %v3068 = vunpack.c.l.b16 %v235
    %v3069 = vunpack.c.l.b16 %v236
    %v3070 = vunpack.c.l.b16 %v237
    %v3071 = vunpack.c.l.b16 %v238
    %v3072 = vunpack.c.l.b16 %v239
    %v3073 = vunpack.c.l.b16 %v240
    %v3074 = vunpack.c.l.b16 %v241
    %v3075 = vunpack.c.l.b16 %v242
    %v3076 = vunpack.c.l.b16 %v243
    %v3077 = vunpack.c.l.b16 %v244
    %v3078 = vunpack.c.l.b16 %v245
    %v3079 = vunpack.c.l.b16 %v246
    %v3080 = vunpack.c.l.b16 %v247
    %v3081 = vunpack.c.l.b16 %v248
    %v3082 = vunpack.c.l.b16 %v249
    %v3083 = vunpack.c.l.b16 %v250
    %v3084 = vunpack.c.l.b16 %v251
    %v3085 = vunpack.c.l.b16 %v252
    %v3086 = vunpack.c.l.b16 %v253
    %v3087 = vunpack.c.l.b16 %v254
    %v3088 = vunpack.c.l.b16 %v255
    %v3089 = vunpack.c.l.b16 %v256
    %v3090 = vunpack.c.l.b16 %v257
    %v3091 = vunpack.c.l.b16 %v258
    %v3092 = vunpack.c.l.b16 %v259
    %v3093 = vunpack.c.l.b16 %v260
    %v3094 = vunpack.c.l.b16 %v261
    %v3095 = vunpack.c.l.b16 %v262
    %v3096 = vunpack.c.l.b16 %v263
    %v3097 = vunpack.c.l.b16 %v264
    %v3098 = vunpack.c.l.b16 %v265
    %v3099 = vunpack.c.l.b16 %v266
    %v3100 = vunpack.c.l.b16 %v267
    %v3101 = vunpack.c.l.b16 %v268
    %v3102 = vunpack.c.l.b16 %v269
    %v3103 = vunpack.c.l.b16 %v270
    %v3104 = vunpack.c.l.b16 %v271
    %v3105 = vunpack.c.l.b16 %v272
    %v3106 = vunpack.c.l.b16 %v273
    %v3107 = vunpack.c.l.b16 %v274
    %v3108 = vunpack.c.l.b16 %v275
    %v3109 = vunpack.c.l.b16 %v276
    %v3110 = vunpack.c.l.b16 %v277
    %v3111 = vunpack.c.l.b16 %v278
    %v3112 = vunpack.c.l.b16 %v279
    %v3113 = vunpack.c.l.b16 %v280
    %v3114 = vunpack.c.l.b16 %v281
    %v3115 = vunpack.c.l.b16 %v282
    %v3116 = vunpack.c.l.b16 %v283
    %v3117 = vunpack.c.l.b16 %v284
    %v3118 = vunpack.c.l.b16 %v285
    %v3119 = vunpack.c.l.b16 %v286
    %v3120 = vunpack.c.l.b16 %v287
    %v3121 = vunpack.c.l.b16 %v288
    %v3122 = vunpack.c.l.b16 %v289
    %v3123 = vunpack.c.l.b16 %v290
    %v3124 = vunpack.c.l.b16 %v291
    %v3125 = vunpack.c.l.b16 %v292
    %v3126 = vunpack.c.l.b16 %v293
    %v3127 = vunpack.c.l.b16 %v294
    %v3128 = vunpack.c.l.b16 %v295
    %v3129 = vunpack.c.l.b16 %v296
    %v3130 = vunpack.c.l.b16 %v297
    %v3131 = vunpack.c.l.b16 %v298
    %v3132 = vunpack.c.l.b16 %v299
    %v3133 = vunpack.c.l.b16 %v300
    %v3134 = vunpack.c.l.b16 %v301
    %v3135 = vunpack.c.l.b16 %v302
    %v3136 = vunpack.c.l.b16 %v303
    %v3137 = vunpack.c.l.b16 %v304
    %v3138 = vunpack.c.l.b16 %v305
    %v3139 = vunpack.c.l.b16 %v306
    %v3140 = vunpack.c.l.b16 %v307
    %v3141 = vunpack.c.l.b16 %v308
    %v3142 = vunpack.c.l.b16 %v309
    %v3143 = vunpack.c.l.b16 %v310
    %v3144 = vunpack.c.l.b16 %v311
    %v3145 = vunpack.c.l.b16 %v312
    %v3146 = vunpack.c.l.b16 %v313
    %v3147 = vunpack.c.l.b16 %v314
    %v3148 = vunpack.c.l.b16 %v315
    %v3149 = vunpack.c.l.b16 %v316
    %v3150 = vunpack.c.l.b16 %v317
    %v3151 = vunpack.c.l.b16 %v318
    %v3152 = vunpack.c.l.b16 %v319
    %v3153 = vunpack.c.l.b16 %v320
    %v3154 = vunpack.c.l.b16 %v321
    %v3155 = vunpack.c.l.b16 %v322
    %v3156 = vunpack.c.l.b16 %v323
    %v3157 = vunpack.c.l.b16 %v324
    %v3158 = vunpack.c.l.b16 %v325
    %v3159 = vunpack.c.l.b16 %v326
    %v3160 = vunpack.c.l.b16 %v327
    %v3161 = vunpack.c.l.b16 %v328
    %v3162 = vunpack.c.l.b16 %v329
    %v3163 = vunpack.c.l.b16 %v330
    %v3164 = vunpack.c.l.b16 %v331
    %v3165 = vunpack.c.l.b16 %v332
    %v3166 = vunpack.c.l.b16 %v333
    %v3167 = vunpack.c.l.b16 %v334
    %v3168 = vunpack.c.l.b16 %v335
    %v3169 = vunpack.c.l.b16 %v336
    %v3170 = vunpack.c.l.b16 %v337
    %v3171 = vunpack.c.l.b16 %v338
    %v3172 = vunpack.c.l.b16 %v339
    %v3173 = vunpack.c.l.b16 %v340
    %v3174 = vunpack.c.l.b16 %v341
    %v3175 = vunpack.c.l.b16 %v342
    %v3176 = vunpack.c.l.b16 %v343
    %v3177 = vunpack.c.l.b16 %v344
    %v3178 = vunpack.c.l.b16 %v345
    %v3179 = vunpack.c.l.b16 %v346
    %v3180 = vunpack.c.l.b16 %v347
    %v3181 = vunpack.c.l.b16 %v348
    %v3182 = vunpack.c.l.b16 %v349
    %v3183 = vunpack.c.l.b16 %v350
    %v3184 = vunpack.c.l.b16 %v351
    %v3185 = vunpack.c.l.b16 %v352
    %v3186 = vunpack.c.l.b16 %v353
    %v3187 = vunpack.c.l.b16 %v354
    %v3188 = vunpack.c.l.b16 %v355
    %v3189 = vunpack.c.l.b16 %v356
    %v3190 = vunpack.c.l.b16 %v357
    %v3191 = vunpack.c.l.b16 %v358
    %v3192 = vunpack.c.l.b16 %v359
    %v3193 = vunpack.c.l.b16 %v360
    %v3194 = vunpack.c.l.b16 %v361
    %v3195 = vunpack.c.l.b16 %v362
    %v3196 = vunpack.c.l.b16 %v363
    %v3197 = vunpack.c.l.b16 %v364
    %v3198 = vunpack.c.l.b16 %v365
    %v3199 = vunpack.c.l.b16 %v366
    %v3200 = vunpack.c.l.b16 %v367
    %v3201 = vunpack.c.l.b16 %v368
    %v3202 = vunpack.c.l.b16 %v369
    %v3203 = vunpack.c.l.b16 %v370
    %v3204 = vunpack.c.l.b16 %v371
    %v3205 = vunpack.c.l.b16 %v372
    %v3206 = vunpack.c.l.b16 %v373
    %v3207 = vunpack.c.l.b16 %v374
    %v3208 = vunpack.c.l.b16 %v375
    %v3209 = vunpack.c.l.b16 %v376
    %v3210 = vunpack.c.l.b16 %v377
    %v3211 = vunpack.c.l.b16 %v378
    %v3212 = vunpack.c.l.b16 %v379
    %v3213 = vunpack.c.l.b16 %v380
    %v3214 = vunpack.c.l.b16 %v381
    %v3215 = vunpack.c.l.b16 %v382
    %v3216 = vunpack.c.l.b16 %v383
    %v3217 = vunpack.c.l.b16 %v384
    %v3218 = vunpack.c.l.b16 %v385
    %v3219 = vunpack.c.l.b16 %v386
    %v3220 = vunpack.c.l.b16 %v387
    %v3221 = vunpack.c.l.b16 %v388
    %v3222 = vunpack.c.l.b16 %v389
    %v3223 = vunpack.c.l.b16 %v390
    %v3224 = vunpack.c.l.b16 %v391
    %v3225 = vunpack.c.l.b16 %v392
    %v3226 = vunpack.c.l.b16 %v393
    %v3227 = vunpack.c.l.b16 %v394
    %v3228 = vunpack.c.l.b16 %v395
    %v3229 = vunpack.c.l.b16 %v396
    %v3230 = vunpack.c.l.b16 %v397
    %v3231 = vunpack.c.l.b16 %v398
    %v3232 = vunpack.c.l.b16 %v399
    %v3233 = vunpack.c.l.b16 %v400
    %v3234 = vunpack.c.l.b16 %v401
    %v3235 = vunpack.c.l.b16 %v402
    %v3236 = vunpack.c.l.b16 %v403
    %v3237 = vunpack.c.l.b16 %v404
    %v3238 = vunpack.c.l.b16 %v405
    %v3239 = vunpack.c.l.b16 %v406
    %v3240 = vunpack.c.l.b16 %v407
    %v3241 = vunpack.c.l.b16 %v408
    %v3242 = vunpack.c.l.b16 %v409
    %v3243 = vunpack.c.l.b16 %v410
    %v3244 = vunpack.c.l.b16 %v411
    %v3245 = vunpack.c.l.b16 %v412
    %v3246 = vunpack.c.l.b16 %v413
    %v3247 = vunpack.c.l.b16 %v414
    %v3248 = vunpack.c.l.b16 %v415
    %v3249 = vunpack.c.l.b16 %v416
    %v3250 = vunpack.c.l.b16 %v417
    %v3251 = vunpack.c.l.b16 %v418
    %v3252 = vunpack.c.l.b16 %v419
    %v3253 = vunpack.c.l.b16 %v420
    %v3254 = vunpack.c.l.b16 %v421
    %v3255 = vunpack.c.l.b16 %v422
    %v3256 = vunpack.c.l.b16 %v423
    %v3257 = vunpack.c.l.b16 %v424
    %v3258 = vunpack.c.l.b16 %v425
    %v3259 = vunpack.c.l.b16 %v426
    %v3260 = vunpack.c.l.b16 %v427
    %v3261 = vunpack.c.l.b16 %v428
    %v3262 = vunpack.c.l.b16 %v429
    %v3263 = vunpack.c.l.b16 %v430
    %v3264 = vunpack.c.l.b16 %v431
    %v3265 = vunpack.c.l.b16 %v432
    %v3266 = vunpack.c.l.b16 %v433
    %v3267 = vunpack.c.l.b16 %v434
    %v3268 = vunpack.c.l.b16 %v435
    %v3269 = vunpack.c.l.b16 %v436
    %v3270 = vunpack.c.l.b16 %v437
    %v3271 = vunpack.c.l.b16 %v438
    %v3272 = vunpack.c.l.b16 %v439
    %v3273 = vunpack.c.l.b16 %v440
    %v3274 = vunpack.c.l.b16 %v441
    %v3275 = vunpack.c.l.b16 %v442
    %v3276 = vunpack.c.l.b16 %v443
    %v3277 = vunpack.c.l.b16 %v444
    %v3278 = vunpack.c.l.b16 %v445
    %v3279 = vunpack.c.l.b16 %v446
    %v3280 = vunpack.c.l.b16 %v447
    %v3281 = vunpack.c.l.b16 %v448
    %v3282 = vunpack.c.l.b16 %v449
    %v3283 = vunpack.c.l.b16 %v450
    %v3284 = vunpack.c.l.b16 %v451
    %v3285 = vunpack.c.l.b16 %v452
    %v3286 = vunpack.c.l.b16 %v453
    %v3287 = vunpack.c.l.b16 %v454
    %v3288 = vunpack.c.l.b16 %v455
    %v3289 = vunpack.c.l.b16 %v456
    %v3290 = vunpack.c.l.b16 %v457
    %v3291 = vunpack.c.l.b16 %v458
    %v3292 = vunpack.c.l.b16 %v459
    %v3293 = vunpack.c.l.b16 %v460
    %v3294 = vunpack.c.l.b16 %v461
    %v3295 = vunpack.c.l.b16 %v462
    %v3296 = vunpack.c.l.b16 %v463
    %v3297 = vunpack.c.l.b16 %v464
    %v3298 = vunpack.c.l.b16 %v465
    %v3299 = vunpack.c.l.b16 %v466
    %v3300 = vunpack.c.l.b16 %v467
    %v3301 = vunpack.c.l.b16 %v468
    %v3302 = vunpack.c.l.b16 %v469
    %v3303 = vunpack.c.l.b16 %v470
    %v3304 = vunpack.c.l.b16 %v471
    %v3305 = vunpack.c.l.b16 %v472
    %v3306 = vunpack.c.l.b16 %v473
    %v3307 = vunpack.c.l.b16 %v474
    %v3308 = vunpack.c.l.b16 %v475
    %v3309 = vunpack.c.l.b16 %v476
    %v3310 = vunpack.c.l.b16 %v477
    %v3311 = vunpack.c.l.b16 %v478
    %v3312 = vunpack.c.l.b16 %v479
    %v3313 = vunpack.c.l.b16 %v480
    %v3314 = vunpack.c.l.b16 %v481
    %v3315 = vunpack.c.l.b16 %v482
    %v3316 = vunpack.c.l.b16 %v483
    %v3317 = vunpack.c.l.b16 %v484
    %v3318 = vunpack.c.l.b16 %v485
    %v3319 = vunpack.c.l.b16 %v486
    %v3320 = vunpack.c.l.b16 %v487
    %v3321 = vunpack.c.l.b16 %v488
    %v3322 = vunpack.c.l.b16 %v489
    %v3323 = vunpack.c.l.b16 %v490
    %v3324 = vunpack.c.l.b16 %v491
    %v3325 = vunpack.c.l.b16 %v492
    %v3326 = vunpack.c.l.b16 %v493
    %v3327 = vunpack.c.l.b16 %v494
    %v3328 = vunpack.c.l.b16 %v495
    %v3329 = vunpack.c.l.b16 %v496
    %v3330 = vunpack.c.l.b16 %v497
    %v3331 = vunpack.c.l.b16 %v498
    %v3332 = vunpack.c.l.b16 %v499
    %v3333 = vunpack.c.l.b16 %v500
    %v3334 = vunpack.c.l.b16 %v501
    %v3335 = vunpack.c.l.b16 %v502
    %v3336 = vunpack.c.l.b16 %v503
    %v3337 = vunpack.c.l.b16 %v504
    %v3338 = vunpack.c.l.b16 %v505
    %v3339 = vunpack.c.l.b16 %v506
    %v3340 = vunpack.c.l.b16 %v507
    %v3341 = vunpack.c.l.b16 %v508
    %v3342 = vunpack.c.l.b16 %v509
    %v3343 = vunpack.c.l.b16 %v510
    %v3344 = vunpack.c.l.b16 %v511
    %v3345 = vunpack.c.l.b16 %v512
    %v3346 = vunpack.c.l.b16 %v513
    %v3347 = vunpack.c.l.b16 %v514
    %v3348 = vunpack.c.l.b16 %v515
    %v3349 = vunpack.c.l.b16 %v516
    %v3350 = vunpack.c.l.b16 %v517
    %v3351 = vunpack.c.l.b16 %v518
    %v3352 = vunpack.c.l.b16 %v519
    %v3353 = vunpack.c.l.b16 %v520
    %v3354 = vunpack.c.l.b16 %v521
    %v3355 = vunpack.c.l.b16 %v522
    %v3356 = vunpack.c.l.b16 %v523
    %v3357 = vunpack.c.l.b16 %v524
    %v3358 = vunpack.c.l.b16 %v525
    %v3359 = vunpack.c.l.b16 %v526
    %v3360 = vunpack.c.l.b16 %v527
    %v3361 = vunpack.c.l.b16 %v528
    %v3362 = vunpack.c.l.b16 %v529
    %v3363 = vunpack.c.l.b16 %v530
    %v3364 = vunpack.c.l.b16 %v531
    %v3365 = vunpack.c.l.b16 %v532
    %v3366 = vunpack.c.l.b16 %v533
    %v3367 = vunpack.c.l.b16 %v534
    %v3368 = vunpack.c.l.b16 %v535
    %v3369 = vunpack.c.l.b16 %v536
    %v3370 = vunpack.c.l.b16 %v537
    %v3371 = vunpack.c.l.b16 %v538
    %v3372 = vunpack.c.l.b16 %v539
    %v3373 = vunpack.c.l.b16 %v540
    %v3374 = vunpack.c.l.b16 %v541
    %v3375 = vunpack.c.l.b16 %v542
    %v3376 = vunpack.c.l.b16 %v543
    %v3377 = vunpack.c.l.b16 %v544
    %v3378 = vunpack.c.l.b16 %v545
    %v3379 = vunpack.c.l.b16 %v546
    %v3380 = vunpack.c.l.b16 %v547
    %v3381 = vunpack.c.l.b16 %v548
    %v3382 = vunpack.c.l.b16 %v549
    %v3383 = vunpack.c.l.b16 %v550
    %v3384 = vunpack.c.l.b16 %v551
    %v3385 = vunpack.c.l.b16 %v552
    %v3386 = vunpack.c.l.b16 %v553
    %v3387 = vunpack.c.l.b16 %v554
    %v3388 = vunpack.c.l.b16 %v555
    %v3389 = vunpack.c.l.b16 %v556
    %v3390 = vunpack.c.l.b16 %v557
    %v3391 = vunpack.c.l.b16 %v558
    %v3392 = vunpack.c.l.b16 %v559
    %v3393 = vunpack.c.l.b16 %v560
    %v3394 = vunpack.c.l.b16 %v561
    %v3395 = vunpack.c.l.b16 %v562
    %v3396 = vunpack.c.l.b16 %v563
    %v3397 = vunpack.c.l.b16 %v564
    %v3398 = vunpack.c.l.b16 %v565
    %v3399 = vunpack.c.l.b16 %v566
    %v3400 = vunpack.c.l.b16 %v567
    %v3401 = vunpack.c.l.b16 %v568
    %v3402 = vunpack.c.l.b16 %v569
    %v3403 = vunpack.c.l.b16 %v570
    %v3404 = vunpack.c.l.b16 %v571
    %v3405 = vunpack.c.l.b16 %v572
    %v3406 = vunpack.c.l.b16 %v573
    %v3407 = vunpack.c.l.b16 %v574
    %v3408 = vunpack.c.l.b16 %v575
    %v3409 = vunpack.c.l.b16 %v576
    %v3410 = vunpack.c.l.b16 %v577
    %v3411 = vunpack.c.l.b16 %v578
    %v3412 = vunpack.c.l.b16 %v579
    %v3413 = vunpack.c.l.b16 %v580
    %v3414 = vunpack.c.l.b16 %v581
    %v3415 = vunpack.c.l.b16 %v582
    %v3416 = vunpack.c.l.b16 %v583
    %v3417 = vunpack.c.l.b16 %v584
    %v3418 = vunpack.c.l.b16 %v585
    %v3419 = vunpack.c.l.b16 %v586
    %v3420 = vunpack.c.l.b16 %v587
    %v3421 = vunpack.c.l.b16 %v588
    %v3422 = vunpack.c.l.b16 %v589
    %v3423 = vunpack.c.l.b16 %v590
    %v3424 = vunpack.c.l.b16 %v591
    %v3425 = vunpack.c.l.b16 %v592
    %v3426 = vunpack.c.l.b16 %v593
    %v3427 = vunpack.c.l.b16 %v594
    %v3428 = vunpack.c.l.b16 %v595
    %v3429 = vunpack.c.l.b16 %v596
    %v3430 = vunpack.c.l.b16 %v597
    %v3431 = vunpack.c.l.b16 %v598
    %v3432 = vunpack.c.l.b16 %v599
    %v3433 = vunpack.c.l.b16 %v600
    %v3434 = vunpack.c.l.b16 %v601
    %v3435 = vunpack.c.l.b16 %v602
    %v3436 = vunpack.c.l.b16 %v603
    %v3437 = vunpack.c.l.b16 %v604
    %v3438 = vunpack.c.l.b16 %v605
    %v3439 = vunpack.c.l.b16 %v606
    %v3440 = vunpack.c.l.b16 %v607
    %v3441 = vunpack.c.l.b16 %v608
    %v3442 = vunpack.c.l.b16 %v609
    %v3443 = vunpack.c.l.b16 %v610
    %v3444 = vunpack.c.l.b16 %v611
    %v3445 = vunpack.c.l.b16 %v612
    %v3446 = vunpack.c.l.b16 %v613
    %v3447 = vunpack.c.l.b16 %v614
    %v3448 = vunpack.c.l.b16 %v615
    %v3449 = vunpack.c.l.b16 %v616
    %v3450 = vunpack.c.l.b16 %v617
    %v3451 = vunpack.c.l.b16 %v618
    %v3452 = vunpack.c.l.b16 %v619
    %v3453 = vunpack.c.l.b16 %v620
    %v3454 = vunpack.c.l.b16 %v621
    %v3455 = vunpack.c.l.b16 %v622
    %v3456 = vunpack.c.l.b16 %v623
    %v3457 = vunpack.c.l.b16 %v624
    %v3458 = vunpack.c.l.b16 %v625
    %v3459 = vunpack.c.l.b16 %v626
    %v3460 = vunpack.c.l.b16 %v627
    %v3461 = vunpack.c.l.b16 %v628
    %v3462 = vunpack.c.l.b16 %v629
    %v3463 = vunpack.c.l.b16 %v630
    %v3464 = vunpack.c.l.b16 %v631
    %v3465 = vunpack.c.l.b16 %v632
    %v3466 = vunpack.c.l.b16 %v633
    %v3467 = vunpack.c.l.b16 %v634
    %v3468 = vunpack.c.l.b16 %v635
    %v3469 = vunpack.c.l.b16 %v636
    %v3470 = vunpack.c.l.b16 %v637
    %v3471 = vunpack.c.l.b16 %v638
    %v3472 = vunpack.c.l.b16 %v639
    %v3473 = vunpack.c.l.b16 %v640
    %v3474 = vunpack.c.l.b16 %v641
    %v3475 = vunpack.c.l.b16 %v642
    %v3476 = vunpack.c.l.b16 %v643
    %v3477 = vunpack.c.l.b16 %v644
    %v3478 = vunpack.c.l.b16 %v645
    %v3479 = vunpack.c.l.b16 %v646
    %v3480 = vunpack.c.l.b16 %v647
    %v3481 = vunpack.c.l.b16 %v648
    %v3482 = vunpack.c.l.b16 %v649
    %v3483 = vunpack.c.l.b16 %v650
    %v3484 = vunpack.c.l.b16 %v651
    %v3485 = vunpack.c.l.b16 %v652
    %v3486 = vunpack.c.l.b16 %v653
    %v3487 = vunpack.c.l.b16 %v654
    %v3488 = vunpack.c.l.b16 %v655
    %v3489 = vunpack.c.l.b16 %v656
    %v3490 = vunpack.c.l.b16 %v657
    %v3491 = vunpack.c.l.b16 %v658
    %v3492 = vunpack.c.l.b16 %v659
    %v3493 = vunpack.c.l.b16 %v660
    %v3494 = vunpack.c.l.b16 %v661
    %v3495 = vunpack.c.l.b16 %v662
    %v3496 = vunpack.c.l.b16 %v663
    %v3497 = vunpack.c.l.b16 %v664
    %v3498 = vunpack.c.l.b16 %v665
    %v3499 = vunpack.c.l.b16 %v666
    %v3500 = vunpack.c.l.b16 %v667
    %v3501 = vunpack.c.l.b16 %v668
    %v3502 = vunpack.c.l.b16 %v669
    %v3503 = vunpack.c.l.b16 %v670
    %v3504 = vunpack.c.l.b16 %v671
    %v3505 = vunpack.c.l.b16 %v672
    %v3506 = vunpack.c.l.b16 %v673
    %v3507 = vunpack.c.l.b16 %v674
    %v3508 = vunpack.c.l.b16 %v675
    %v3509 = vunpack.c.l.b16 %v676
    %v3510 = vunpack.c.l.b16 %v677
    %v3511 = vunpack.c.l.b16 %v678
    %v3512 = vunpack.c.l.b16 %v679
    %v3513 = vunpack.c.l.b16 %v680
    %v3514 = vunpack.c.l.b16 %v681
    %v3515 = vunpack.c.l.b16 %v682
    %v3516 = vunpack.c.l.b16 %v683
    %v3517 = vunpack.c.l.b16 %v684
    %v3518 = vunpack.c.l.b16 %v685
    %v3519 = vunpack.c.l.b16 %v686
    %v3520 = vunpack.c.l.b16 %v687
    %v3521 = vunpack.c.l.b16 %v688
    %v3522 = vunpack.c.l.b16 %v689
    %v3523 = vunpack.c.l.b16 %v690
    %v3524 = vunpack.c.l.b16 %v691
    %v3525 = vunpack.c.l.b16 %v692
    %v3526 = vunpack.c.l.b16 %v693
    %v3527 = vunpack.c.l.b16 %v694
    %v3528 = vunpack.c.l.b16 %v695
    %v3529 = vunpack.c.l.b16 %v696
    %v3530 = vunpack.c.l.b16 %v697
    %v3531 = vunpack.c.l.b16 %v698
    %v3532 = vunpack.c.l.b16 %v699
    %v3533 = vunpack.c.l.b16 %v700
    %v3534 = vunpack.c.l.b16 %v701
    %v3535 = vunpack.c.l.b16 %v702
    %v3536 = vunpack.c.l.b16 %v703
    %v3537 = vunpack.c.l.b16 %v704
    %v3538 = vunpack.c.l.b16 %v705
    %v3539 = vunpack.c.l.b16 %v706
    %v3540 = vunpack.c.l.b16 %v707
    %v3541 = vunpack.c.l.b16 %v708
    %v3542 = vunpack.c.l.b16 %v709
    %v3543 = vunpack.c.l.b16 %v710
    %v3544 = vunpack.c.l.b16 %v711
    %v3545 = vunpack.c.l.b16 %v712
    %v3546 = vunpack.c.l.b16 %v713
    %v3547 = vunpack.c.l.b16 %v714
    %v3548 = vunpack.c.l.b16 %v715
    %v3549 = vunpack.c.l.b16 %v716
    %v3550 = vunpack.c.l.b16 %v717
    %v3551 = vunpack.c.l.b16 %v718
    %v3552 = vunpack.c.l.b16 %v719
    %v3553 = vunpack.c.l.b16 %v720
    %v3554 = vunpack.c.l.b16 %v721
    %v3555 = vunpack.c.l.b16 %v722
    %v3556 = vunpack.c.l.b16 %v723
    %v3557 = vunpack.c.l.b16 %v724
    %v3558 = vunpack.c.l.b16 %v725
    %v3559 = vunpack.c.l.b16 %v726
    %v3560 = vunpack.c.l.b16 %v727
    %v3561 = vunpack.c.l.b16 %v728
    %v3562 = vunpack.c.l.b16 %v729
    %v3563 = vunpack.c.l.b16 %v730
    %v3564 = vunpack.c.l.b16 %v731
    %v3565 = vunpack.c.l.b16 %v732
    %v3566 = vunpack.c.l.b16 %v733
    %v3567 = vunpack.c.l.b16 %v734
    %v3568 = vunpack.c.l.b16 %v735
    %v3569 = vunpack.c.l.b16 %v736
    %v3570 = vunpack.c.l.b16 %v737
    %v3571 = vunpack.c.l.b16 %v738
    %v3572 = vunpack.c.l.b16 %v739
    %v3573 = vunpack.c.l.b16 %v740
    %v3574 = vunpack.c.l.b16 %v741
    %v3575 = vunpack.c.l.b16 %v742
    %v3576 = vunpack.c.l.b16 %v743
    %v3577 = vunpack.c.l.b16 %v744
    %v3578 = vunpack.c.l.b16 %v745
    %v3579 = vunpack.c.l.b16 %v746
    %v3580 = vunpack.c.l.b16 %v747
    %v3581 = vunpack.c.l.b16 %v748
    %v3582 = vunpack.c.l.b16 %v749
    %v3583 = vunpack.c.l.b16 %v750
    %v3584 = vunpack.c.l.b16 %v751
    %v3585 = vunpack.c.l.b16 %v752
    %v3586 = vunpack.c.l.b16 %v753
    %v3587 = vunpack.c.l.b16 %v754
    %v3588 = vunpack.c.l.b16 %v755
    %v3589 = vunpack.c.l.b16 %v756
    %v3590 = vunpack.c.l.b16 %v757
    %v3591 = vunpack.c.l.b16 %v758
    %v3592 = vunpack.c.l.b16 %v759
    %v3593 = vunpack.c.l.b16 %v760
    %v3594 = vunpack.c.l.b16 %v761
    %v3595 = vunpack.c.l.b16 %v762
    %v3596 = vunpack.c.l.b16 %v763
    %v3597 = vunpack.c.l.b16 %v764
    %v3598 = vunpack.c.l.b16 %v765
    %v3599 = vunpack.c.l.b16 %v766
    %v3600 = vunpack.c.l.b16 %v767
    %v3601 = vunpack.c.l.b16 %v768
    %v3602 = vunpack.c.l.b16 %v769
    %v3603 = vunpack.c.l.b16 %v770
    %v3604 = vunpack.c.l.b16 %v771
    %v3605 = vunpack.c.l.b16 %v772
    %v3606 = vunpack.c.l.b16 %v773
    %v3607 = vunpack.c.l.b16 %v774
    %v3608 = vunpack.c.l.b16 %v775
    %v3609 = vunpack.c.l.b16 %v776
    %v3610 = vunpack.c.l.b16 %v777
    %v3611 = vunpack.c.l.b16 %v778
    %v3612 = vunpack.c.l.b16 %v779
    %v3613 = vunpack.c.l.b16 %v780
    %v3614 = vunpack.c.l.b16 %v781
    %v3615 = vunpack.c.l.b16 %v782
    %v3616 = vunpack.c.l.b16 %v783
    %v3617 = vunpack.c.l.b16 %v784
    %v3618 = vunpack.c.l.b16 %v785
    %v3619 = vunpack.c.l.b16 %v786
    %v3620 = vunpack.c.l.b16 %v787
    %v3621 = vunpack.c.l.b16 %v788
    %v3622 = vunpack.c.l.b16 %v789
    %v3623 = vunpack.c.l.b16 %v790
    %v3624 = vunpack.c.l.b16 %v791
    %v3625 = vunpack.c.l.b16 %v792
    %v3626 = vunpack.c.l.b16 %v793
    %v3627 = vunpack.c.l.b16 %v794
    %v3628 = vunpack.c.l.b16 %v795
    %v3629 = vunpack.c.l.b16 %v796
    %v3630 = vunpack.c.l.b16 %v797
    %v3631 = vunpack.c.l.b16 %v798
    %v3632 = vunpack.c.l.b16 %v799
    %v3633 = vunpack.c.l.b16 %v800
    %v3634 = vunpack.c.l.b16 %v801
    %v3635 = vunpack.c.l.b16 %v802
    %v3636 = vunpack.c.l.b16 %v803
    %v3637 = vunpack.c.l.b16 %v804
    %v3638 = vunpack.c.l.b16 %v805
    %v3639 = vunpack.c.l.b16 %v806
    %v3640 = vunpack.c.l.b16 %v807
    %v3641 = vunpack.c.l.b16 %v808
    %v3642 = vunpack.c.l.b16 %v809
    %v3643 = vunpack.c.l.b16 %v810
    %v3644 = vunpack.c.l.b16 %v811
    %v3645 = vunpack.c.l.b16 %v812
    %v3646 = vunpack.c.l.b16 %v813
    %v3647 = vunpack.c.l.b16 %v814
    %v3648 = vunpack.c.l.b16 %v815
    %v3649 = vunpack.c.l.b16 %v816
    %v3650 = vunpack.c.l.b16 %v817
    %v3651 = vunpack.c.l.b16 %v818
    %v3652 = vunpack.c.l.b16 %v819
    %v3653 = vunpack.c.l.b16 %v820
    %v3654 = vunpack.c.l.b16 %v821
    %v3655 = vunpack.c.l.b16 %v822
    %v3656 = vunpack.c.l.b16 %v823
    %v3657 = vunpack.c.l.b16 %v824
    %v3658 = vunpack.c.l.b16 %v825
    %v3659 = vunpack.c.l.b16 %v826
    %v3660 = vunpack.c.l.b16 %v827
    %v3661 = vunpack.c.l.b16 %v828
    %v3662 = vunpack.c.l.b16 %v829
    %v3663 = vunpack.c.l.b16 %v830
    %v3664 = vunpack.c.l.b16 %v831
    %v3665 = vunpack.c.l.b16 %v832
    %v3666 = vunpack.c.l.b16 %v833
    %v3667 = vunpack.c.l.b16 %v834
    %v3668 = vunpack.c.l.b16 %v835
    %v3669 = vunpack.c.l.b16 %v836
    %v3670 = vunpack.c.l.b16 %v837
    %v3671 = vunpack.c.l.b16 %v838
    %v3672 = vunpack.c.l.b16 %v839
    %v3673 = vunpack.c.l.b16 %v840
    %v3674 = vunpack.c.l.b16 %v841
    %v3675 = vunpack.c.l.b16 %v842
    %v3676 = vunpack.c.l.b16 %v843
    %v3677 = vunpack.c.l.b16 %v844
    %v3678 = vunpack.c.l.b16 %v845
    %v3679 = vunpack.c.l.b16 %v846
    %v3680 = vunpack.c.l.b16 %v847
    %v3681 = vunpack.c.l.b16 %v848
    %v3682 = vunpack.c.l.b16 %v849
    %v3683 = vunpack.c.l.b16 %v850
    %v3684 = vunpack.c.l.b16 %v851
    %v3685 = vunpack.c.l.b16 %v852
    %v3686 = vunpack.c.l.b16 %v853
    %v3687 = vunpack.c.l.b16 %v854
    %v3688 = vunpack.c.l.b16 %v855
    %v3689 = vunpack.c.l.b16 %v856
    %v3690 = vunpack.c.l.b16 %v857
    %v3691 = vunpack.c.l.b16 %v858
    %v3692 = vunpack.c.l.b16 %v859
    %v3693 = vunpack.c.l.b16 %v860
    %v3694 = vunpack.c.l.b16 %v861
    %v3695 = vunpack.c.l.b16 %v862
    %v3696 = vunpack.c.l.b16 %v863
    %v3697 = vunpack.c.l.b16 %v864
    %v3698 = vunpack.c.l.b16 %v865
    %v3699 = vunpack.c.l.b16 %v866
    %v3700 = vunpack.c.l.b16 %v867
    %v3701 = vunpack.c.l.b16 %v868
    %v3702 = vunpack.c.l.b16 %v869
    %v3703 = vunpack.c.l.b16 %v870
    %v3704 = vunpack.c.l.b16 %v871
    %v3705 = vunpack.c.l.b16 %v872
    %v3706 = vunpack.c.l.b16 %v873
    %v3707 = vunpack.c.l.b16 %v874
    %v3708 = vunpack.c.l.b16 %v875
    %v3709 = vunpack.c.l.b16 %v876
    %v3710 = vunpack.c.l.b16 %v877
    %v3711 = vunpack.c.l.b16 %v878
    %v3712 = vunpack.c.l.b16 %v879
    %v3713 = vunpack.c.l.b16 %v880
    %v3714 = vunpack.c.l.b16 %v881
    %v3715 = vunpack.c.l.b16 %v882
    %v3716 = vunpack.c.l.b16 %v883
    %v3717 = vunpack.c.l.b16 %v884
    %v3718 = vunpack.c.l.b16 %v885
    %v3719 = vunpack.c.l.b16 %v886
    %v3720 = vunpack.c.l.b16 %v887
    %v3721 = vunpack.c.l.b16 %v888
    %v3722 = vunpack.c.l.b16 %v889
    %v3723 = vunpack.c.l.b16 %v890
    %v3724 = vunpack.c.l.b16 %v891
    %v3725 = vunpack.c.l.b16 %v892
    %v3726 = vunpack.c.l.b16 %v893
    %v3727 = vunpack.c.l.b16 %v894
    %v3728 = vunpack.c.l.b16 %v895
    %v3729 = vunpack.c.l.b16 %v896
    %v3730 = vunpack.c.l.b16 %v897
    %v3731 = vunpack.c.l.b16 %v898
    %v3732 = vunpack.c.l.b16 %v899
    %v3733 = vunpack.c.l.b16 %v900
    %v3734 = vunpack.c.l.b16 %v901
    %v3735 = vunpack.c.l.b16 %v902
    %v3736 = vunpack.c.l.b16 %v903
    %v3737 = vunpack.c.l.b16 %v904
    %v3738 = vunpack.c.l.b16 %v905
    %v3739 = vunpack.c.l.b16 %v906
    %v3740 = vunpack.c.l.b16 %v907
    %v3741 = vunpack.c.l.b16 %v908
    %v3742 = vunpack.c.l.b16 %v909
    %v3743 = vunpack.c.l.b16 %v910
    %v3744 = vunpack.c.l.b16 %v911
    %v3745 = vunpack.c.l.b16 %v912
    %v3746 = vunpack.c.l.b16 %v913
    %v3747 = vunpack.c.l.b16 %v914
    %v3748 = vunpack.c.l.b16 %v915
    %v3749 = vunpack.c.l.b16 %v916
    %v3750 = vunpack.c.l.b16 %v917
    %v3751 = vunpack.c.l.b16 %v918
    %v3752 = vunpack.c.l.b16 %v919
    %v3753 = vunpack.c.l.b16 %v920
    %v3754 = vunpack.c.l.b16 %v921
    %v3755 = vunpack.c.l.b16 %v922
    %v3756 = vunpack.c.l.b16 %v923
    %v3757 = vunpack.c.l.b16 %v924
    %v3758 = vunpack.c.l.b16 %v925
    %v3759 = vunpack.c.l.b16 %v926
    %v3760 = vunpack.c.l.b16 %v927
    %v3761 = vunpack.c.l.b16 %v928
    %v3762 = vunpack.c.l.b16 %v929
    %v3763 = vunpack.c.l.b16 %v930
    %v3764 = vunpack.c.l.b16 %v931
    %v3765 = vunpack.c.l.b16 %v932
    %v3766 = vunpack.c.l.b16 %v933
    %v3767 = vunpack.c.l.b16 %v934
    %v3768 = vunpack.c.l.b16 %v935
    %v3769 = vunpack.c.l.b16 %v936
    %v3770 = vunpack.c.l.b16 %v937
    %v3771 = vunpack.c.l.b16 %v938
    %v3772 = vunpack.c.l.b16 %v939
    %v3773 = vunpack.c.l.b16 %v940
    %v3774 = vunpack.c.l.b16 %v941
    %v3775 = vunpack.c.l.b16 %v942
    %v3776 = vunpack.c.l.b16 %v943
    %v3777 = vunpack.c.l.b16 %v944
    %v3778 = vunpack.c.l.b16 %v945
    %v3779 = vunpack.c.l.b16 %v946
    %v3780 = vunpack.c.l.b16 %v947
    %v3781 = vunpack.c.l.b16 %v948
    %v3782 = vunpack.c.l.b16 %v949
    %v3783 = vunpack.c.l.b16 %v950
    %v3784 = vunpack.c.l.b16 %v951
    %v3785 = vunpack.c.l.b16 %v952
    %v3786 = vunpack.c.l.b16 %v953
    %v3787 = vunpack.c.l.b16 %v954
    %v3788 = vunpack.c.l.b16 %v955
    %v3789 = vunpack.c.l.b16 %v956
    %v3790 = vunpack.c.l.b16 %v957
    %v3791 = vunpack.c.l.b16 %v958
    %v3792 = vunpack.c.l.b16 %v959
    %v3793 = vunpack.c.l.b16 %v960
    %v3794 = vunpack.c.l.b16 %v961
    %v3795 = vunpack.c.l.b16 %v962
    %v3796 = vunpack.c.l.b16 %v963
    %v3797 = vunpack.c.l.b16 %v964
    %v3798 = vunpack.c.l.b16 %v965
    %v3799 = vunpack.c.l.b16 %v966
    %v3800 = vunpack.c.l.b16 %v967
    %v3801 = vunpack.c.l.b16 %v968
    %v3802 = vunpack.c.l.b16 %v969
    %v3803 = vunpack.c.l.b16 %v970
    %v3804 = vunpack.c.l.b16 %v971
    %v3805 = vunpack.c.l.b16 %v972
    %v3806 = vunpack.c.l.b16 %v973
    %v3807 = vunpack.c.l.b16 %v974
    %v3808 = vunpack.c.l.b16 %v975
    %v3809 = vunpack.c.l.b16 %v976
    %v3810 = vunpack.c.l.b16 %v977
    %v3811 = vunpack.c.l.b16 %v978
    %v3812 = vunpack.c.l.b16 %v979
    %v3813 = vunpack.c.l.b16 %v980
    %v3814 = vunpack.c.l.b16 %v981
    %v3815 = vunpack.c.l.b16 %v982
    %v3816 = vunpack.c.l.b16 %v983
    %v3817 = vunpack.c.l.b16 %v984
    %v3818 = vunpack.c.l.b16 %v985
    %v3819 = vunpack.c.l.b16 %v986
    %v3820 = vunpack.c.l.b16 %v987
    %v3821 = vunpack.c.l.b16 %v988
    %v3822 = vunpack.c.l.b16 %v989
    %v3823 = vunpack.c.l.b16 %v990
    %v3824 = vunpack.c.l.b16 %v991
    %v3825 = vunpack.c.l.b16 %v992
    %v3826 = vunpack.c.l.b16 %v993
    %v3827 = vunpack.c.l.b16 %v994
    %v3828 = vunpack.c.l.b16 %v995
    %v3829 = vunpack.c.l.b16 %v996
    %v3830 = vunpack.c.l.b16 %v997
    %v3831 = vunpack.c.l.b16 %v998
    %v3832 = vunpack.c.l.b16 %v999
    %v3833 = vunpack.c.l.b16 %v1000
    %v3834 = vunpack.c.l.b16 %v1001
    %v3835 = vunpack.c.l.b16 %v1002
    %v3836 = vunpack.c.l.b16 %v1003
    %v3837 = vunpack.c.l.b16 %v1004
    %v3838 = vunpack.c.l.b16 %v1005
    %v3839 = vunpack.c.l.b16 %v1006
    %v3840 = vunpack.c.l.b16 %v1007
    %v3841 = vunpack.c.l.b16 %v1008
    %v3842 = vunpack.c.l.b16 %v1009
    %v3843 = vunpack.c.l.b16 %v1010
    %v3844 = vunpack.c.l.b16 %v1011
    %v3845 = vunpack.c.l.b16 %v1012
    %v3846 = vunpack.c.l.b16 %v1013
    %v3847 = vunpack.c.l.b16 %v1014
    %v3848 = vunpack.c.l.b16 %v1015
    %v3849 = vunpack.c.l.b16 %v1016
    %v3850 = vunpack.c.l.b16 %v1017
    %v3851 = vunpack.c.l.b16 %v1018
    %v3852 = vunpack.c.l.b16 %v1019
    %v3853 = vunpack.c.l.b16 %v1020
    %v3854 = vunpack.c.l.b16 %v1021
    %v3855 = vunpack.c.l.b16 %v1022
    %v3856 = vunpack.c.l.b16 %v1023
    %v3857 = vunpack.c.l.b16 %v1024
    %v3858 = vunpack.c.l.b16 %v1025
    %v3859 = vunpack.c.l.b16 %v1026
    %v3860 = vunpack.c.l.b16 %v1027
    %v3861 = vunpack.c.l.b16 %v1028
    %v3862 = vunpack.c.l.b16 %v1029
    %v3863 = vunpack.c.l.b16 %v1030
    %v3864 = vunpack.c.l.b16 %v1031
    %v3865 = vunpack.c.l.b16 %v1032
    %v3866 = vunpack.c.l.b16 %v1033
    %v3867 = vunpack.c.l.b16 %v1034
    %v3868 = vunpack.c.l.b16 %v1035
    %v3869 = vunpack.c.l.b16 %v1036
    %v3870 = vunpack.c.l.b16 %v1037
    %v3871 = vunpack.c.l.b16 %v1038
    %v3872 = vunpack.c.l.b16 %v1039
    %v3873 = vunpack.c.l.b16 %v1040
    %v3874 = vunpack.c.l.b16 %v1041
    %v3875 = vunpack.c.l.b16 %v1042
    %v3876 = vunpack.c.l.b16 %v1043
    %v3877 = vunpack.c.l.b16 %v1044
    %v3878 = vunpack.c.l.b16 %v1045
    %v3879 = vunpack.c.l.b16 %v1046
    %v3880 = vunpack.c.l.b16 %v1047
    %v3881 = vunpack.c.l.b16 %v1048
    %v3882 = vunpack.c.l.b16 %v1049
    %v3883 = vunpack.c.l.b16 %v1050
    %v3884 = vunpack.c.l.b16 %v1051
    %v3885 = vunpack.c.l.b16 %v1052
    %v3886 = vunpack.c.l.b16 %v1053
    %v3887 = vunpack.c.l.b16 %v1054
    %v3888 = vunpack.c.l.b16 %v1055
    %v3889 = vunpack.c.l.b16 %v1056
    %v3890 = vunpack.c.l.b16 %v1057
    %v3891 = vunpack.c.l.b16 %v1058
    %v3892 = vunpack.c.l.b16 %v1059
    %v3893 = vunpack.c.l.b16 %v1060
    %v3894 = vunpack.c.l.b16 %v1061
    %v3895 = vunpack.c.l.b16 %v1062
    %v3896 = vunpack.c.l.b16 %v1063
    %v3897 = vunpack.c.l.b16 %v1064
    %v3898 = vunpack.c.l.b16 %v1065
    %v3899 = vunpack.c.l.b16 %v1066
    %v3900 = vunpack.c.l.b16 %v1067
    %v3901 = vunpack.c.l.b16 %v1068
    %v3902 = vunpack.c.l.b16 %v1069
    %v3903 = vunpack.c.l.b16 %v1070
    %v3904 = vunpack.c.l.b16 %v1071
    %v3905 = vunpack.c.l.b16 %v1072
    %v3906 = vunpack.c.l.b16 %v1073
    %v3907 = vunpack.c.l.b16 %v1074
    %v3908 = vunpack.c.l.b16 %v1075
    %v3909 = vunpack.c.l.b16 %v1076
    %v3910 = vunpack.c.l.b16 %v1077
    %v3911 = vunpack.c.l.b16 %v1078
    %v3912 = vunpack.c.l.b16 %v1079
    %v3913 = vunpack.c.l.b16 %v1080
    %v3914 = vunpack.c.l.b16 %v1081
    %v3915 = vunpack.c.l.b16 %v1082
    %v3916 = vunpack.c.l.b16 %v1083
    %v3917 = vunpack.c.l.b16 %v1084
    %v3918 = vunpack.c.l.b16 %v1085
    %v3919 = vunpack.c.l.b16 %v1086
    %v3920 = vunpack.c.l.b16 %v1087
    %v3921 = vunpack.c.l.b16 %v1088
    %v3922 = vunpack.c.l.b16 %v1089
    %v3923 = vunpack.c.l.b16 %v1090
    %v3924 = vunpack.c.l.b16 %v1091
    %v3925 = vunpack.c.l.b16 %v1092
    %v3926 = vunpack.c.l.b16 %v1093
    %v3927 = vunpack.c.l.b16 %v1094
    %v3928 = vunpack.c.l.b16 %v1095
    %v3929 = vunpack.c.l.b16 %v1096
    %v3930 = vunpack.c.l.b16 %v1097
    %v3931 = vunpack.c.l.b16 %v1098
    %v3932 = vunpack.c.l.b16 %v1099
    %v3933 = vunpack.c.l.b16 %v1100
    %v3934 = vunpack.c.l.b16 %v1101
    %v3935 = vunpack.c.l.b16 %v1102
    %v3936 = vunpack.c.l.b16 %v1103
    %v3937 = vunpack.c.l.b16 %v1104
    %v3938 = vunpack.c.l.b16 %v1105
    %v3939 = vunpack.c.l.b16 %v1106
    %v3940 = vunpack.c.l.b16 %v1107
    %v3941 = vunpack.c.l.b16 %v1108
    %v3942 = vunpack.c.l.b16 %v1109
    %v3943 = vunpack.c.l.b16 %v1110
    %v3944 = vunpack.c.l.b16 %v1111
    %v3945 = vunpack.c.l.b16 %v1112
    %v3946 = vunpack.c.l.b16 %v1113
    %v3947 = vunpack.c.l.b16 %v1114
    %v3948 = vunpack.c.l.b16 %v1115
    %v3949 = vunpack.c.l.b16 %v1116
    %v3950 = vunpack.c.l.b16 %v1117
    %v3951 = vunpack.c.l.b16 %v1118
    %v3952 = vunpack.c.l.b16 %v1119
    %v3953 = vunpack.c.l.b16 %v1120
    %v3954 = vunpack.c.l.b16 %v1121
    %v3955 = vunpack.c.l.b16 %v1122
    %v3956 = vunpack.c.l.b16 %v1123
    %v3957 = vunpack.c.l.b16 %v1124
    %v3958 = vunpack.c.l.b16 %v1125
    %v3959 = vunpack.c.l.b16 %v1126
    %v3960 = vunpack.c.l.b16 %v1127
    %v3961 = vunpack.c.l.b16 %v1128
    %v3962 = vunpack.c.l.b16 %v1129
    %v3963 = vunpack.c.l.b16 %v1130
    %v3964 = vunpack.c.l.b16 %v1131
    %v3965 = vunpack.c.l.b16 %v1132
    %v3966 = vunpack.c.l.b16 %v1133
    %v3967 = vunpack.c.l.b16 %v1134
    %v3968 = vunpack.c.l.b16 %v1135
    %v3969 = vunpack.c.l.b16 %v1136
    %v3970 = vunpack.c.l.b16 %v1137
    %v3971 = vunpack.c.l.b16 %v1138
    %v3972 = vunpack.c.l.b16 %v1139
    %v3973 = vunpack.c.l.b16 %v1140
    %v3974 = vunpack.c.l.b16 %v1141
    %v3975 = vunpack.c.l.b16 %v1142
    %v3976 = vunpack.c.l.b16 %v1143
    %v3977 = vunpack.c.l.b16 %v1144
    %v3978 = vunpack.c.l.b16 %v1145
    %v3979 = vunpack.c.l.b16 %v1146
    %v3980 = vunpack.c.l.b16 %v1147
    %v3981 = vunpack.c.l.b16 %v1148
    %v3982 = vunpack.c.l.b16 %v1149
    %v3983 = vunpack.c.l.b16 %v1150
    %v3984 = vunpack.c.l.b16 %v1151
    %v3985 = vunpack.c.l.b16 %v1152
    %v3986 = vunpack.c.l.b16 %v1153
    %v3987 = vunpack.c.l.b16 %v1154
    %v3988 = vunpack.c.l.b16 %v1155
    %v3989 = vunpack.c.l.b16 %v1156
    %v3990 = vunpack.c.l.b16 %v1157
    %v3991 = vunpack.c.l.b16 %v1158
    %v3992 = vunpack.c.l.b16 %v1159
    %v3993 = vunpack.c.l.b16 %v1160
    %v3994 = vunpack.c.l.b16 %v1161
    %v3995 = vunpack.c.l.b16 %v1162
    %v3996 = vunpack.c.l.b16 %v1163
    %v3997 = vunpack.c.l.b16 %v1164
    %v3998 = vunpack.c.l.b16 %v1165
    %v3999 = vunpack.c.l.b16 %v1166
    %v4000 = vunpack.c.l.b16 %v1167
    %v4001 = vunpack.c.l.b16 %v1168
    %v4002 = vunpack.c.l.b16 %v1169
    %v4003 = vunpack.c.l.b16 %v1170
    %v4004 = vunpack.c.l.b16 %v1171
    %v4005 = vunpack.c.l.b16 %v1172
    %v4006 = vunpack.c.l.b16 %v1173
    %v4007 = vunpack.c.l.b16 %v1174
    %v4008 = vunpack.c.l.b16 %v1175
    %v4009 = vunpack.c.l.b16 %v1176
    %v4010 = vpack.c.b16 %v2859, %v2858
    %v4011 = vpack.c.b16 %v2861, %v2860
    %v4012 = vpack.c.b16 %v2863, %v2862
    %v4013 = vpack.c.b16 %v2865, %v2864
    %v4014 = vpack.c.b16 %v2867, %v2866
    %v4015 = vpack.c.b16 %v2869, %v2868
    %v4016 = vpack.c.b16 %v2871, %v2870
    %v4017 = vpack.c.b16 %v2873, %v2872
    %v4018 = vpack.c.b16 %v2875, %v2874
    %v4019 = vpack.c.b16 %v2877, %v2876
    %v4020 = vpack.c.b16 %v2879, %v2878
    %v4021 = vpack.c.b16 %v2881, %v2880
    %v4022 = vpack.c.b16 %v2883, %v2882
    %v4023 = vpack.c.b16 %v2885, %v2884
    %v4024 = vpack.c.b16 %v2887, %v2886
    %v4025 = vpack.c.b16 %v2889, %v2888
    %v4026 = vpack.c.b16 %v2891, %v2890
    %v4027 = vpack.c.b16 %v2893, %v2892
    %v4028 = vpack.c.b16 %v2895, %v2894
    %v4029 = vpack.c.b16 %v2897, %v2896
    %v4030 = vpack.c.b16 %v2899, %v2898
    %v4031 = vpack.c.b16 %v2901, %v2900
    %v4032 = vpack.c.b16 %v2903, %v2902
    %v4033 = vpack.c.b16 %v2905, %v2904
    %v4034 = vpack.c.b16 %v2907, %v2906
    %v4035 = vpack.c.b16 %v2909, %v2908
    %v4036 = vpack.c.b16 %v2911, %v2910
    %v4037 = vpack.c.b16 %v2913, %v2912
    %v4038 = vpack.c.b16 %v2915, %v2914
    %v4039 = vpack.c.b16 %v2917, %v2916
    %v4040 = vpack.c.b16 %v2919, %v2918
    %v4041 = vpack.c.b16 %v2921, %v2920
    %v4042 = vpack.c.b16 %v2923, %v2922
    %v4043 = vpack.c.b16 %v2925, %v2924
    %v4044 = vpack.c.b16 %v2927, %v2926
    %v4045 = vpack.c.b16 %v2929, %v2928
    %v4046 = vpack.c.b16 %v2931, %v2930
    %v4047 = vpack.c.b16 %v2933, %v2932
    %v4048 = vpack.c.b16 %v2935, %v2934
    %v4049 = vpack.c.b16 %v2937, %v2936
    %v4050 = vpack.c.b16 %v2939, %v2938
    %v4051 = vpack.c.b16 %v2941, %v2940
    %v4052 = vpack.c.b16 %v2943, %v2942
    %v4053 = vpack.c.b16 %v2945, %v2944
    %v4054 = vpack.c.b16 %v2947, %v2946
    %v4055 = vpack.c.b16 %v2949, %v2948
    %v4056 = vpack.c.b16 %v2951, %v2950
    %v4057 = vpack.c.b16 %v2953, %v2952
    %v4058 = vpack.c.b16 %v2955, %v2954
    %v4059 = vpack.c.b16 %v2957, %v2956
    %v4060 = vpack.c.b16 %v2959, %v2958
    %v4061 = vpack.c.b16 %v2961, %v2960
    %v4062 = vpack.c.b16 %v2963, %v2962
    %v4063 = vpack.c.b16 %v2965, %v2964
    %v4064 = vpack.c.b16 %v2967, %v2966
    %v4065 = vpack.c.b16 %v2969, %v2968
    %v4066 = vpack.c.b16 %v2971, %v2970
    %v4067 = vpack.c.b16 %v2973, %v2972
    %v4068 = vpack.c.b16 %v2975, %v2974
    %v4069 = vpack.c.b16 %v2977, %v2976
    %v4070 = vpack.c.b16 %v2979, %v2978
    %v4071 = vpack.c.b16 %v2981, %v2980
    %v4072 = vpack.c.b16 %v2983, %v2982
    %v4073 = vpack.c.b16 %v2985, %v2984
    %v4074 = vpack.c.b16 %v2987, %v2986
    %v4075 = vpack.c.b16 %v2989, %v2988
    %v4076 = vpack.c.b16 %v2991, %v2990
    %v4077 = vpack.c.b16 %v2993, %v2992
    %v4078 = vpack.c.b16 %v2995, %v2994
    %v4079 = vpack.c.b16 %v2997, %v2996
    %v4080 = vpack.c.b16 %v2999, %v2998
    %v4081 = vpack.c.b16 %v3001, %v3000
    %v4082 = vpack.c.b16 %v3003, %v3002
    %v4083 = vpack.c.b16 %v3005, %v3004
    %v4084 = vpack.c.b16 %v3007, %v3006
    %v4085 = vpack.c.b16 %v3009, %v3008
    %v4086 = vpack.c.b16 %v3011, %v3010
    %v4087 = vpack.c.b16 %v3013, %v3012
    %v4088 = vpack.c.b16 %v3015, %v3014
    %v4089 = vpack.c.b16 %v3017, %v3016
    %v4090 = vpack.c.b16 %v3019, %v3018
    %v4091 = vpack.c.b16 %v3021, %v3020
    %v4092 = vpack.c.b16 %v3023, %v3022
    %v4093 = vpack.c.b16 %v3025, %v3024
    %v4094 = vpack.c.b16 %v3027, %v3026
    %v4095 = vpack.c.b16 %v3029, %v3028
    %v4096 = vpack.c.b16 %v3031, %v3030
    %v4097 = vpack.c.b16 %v3033, %v3032
    %v4098 = vpack.c.b16 %v3035, %v3034
    %v4099 = vpack.c.b16 %v3037, %v3036
    %v4100 = vpack.c.b16 %v3039, %v3038
    %v4101 = vpack.c.b16 %v3041, %v3040
    %v4102 = vpack.c.b16 %v3043, %v3042
    %v4103 = vpack.c.b16 %v3045, %v3044
    %v4104 = vpack.c.b16 %v3047, %v3046
    %v4105 = vpack.c.b16 %v3049, %v3048
    %v4106 = vpack.c.b16 %v3051, %v3050
    %v4107 = vpack.c.b16 %v3053, %v3052
    %v4108 = vpack.c.b16 %v3055, %v3054
    %v4109 = vpack.c.b16 %v3057, %v3056
    %v4110 = vpack.c.b16 %v3059, %v3058
    %v4111 = vpack.c.b16 %v3061, %v3060
    %v4112 = vpack.c.b16 %v3063, %v3062
    %v4113 = vpack.c.b16 %v3065, %v3064
    %v4114 = vpack.c.b16 %v3067, %v3066
    %v4115 = vpack.c.b16 %v3069, %v3068
    %v4116 = vpack.c.b16 %v3071, %v3070
    %v4117 = vpack.c.b16 %v3073, %v3072
    %v4118 = vpack.c.b16 %v3075, %v3074
    %v4119 = vpack.c.b16 %v3077, %v3076
    %v4120 = vpack.c.b16 %v3079, %v3078
    %v4121 = vpack.c.b16 %v3081, %v3080
    %v4122 = vpack.c.b16 %v3083, %v3082
    %v4123 = vpack.c.b16 %v3085, %v3084
    %v4124 = vpack.c.b16 %v3087, %v3086
    %v4125 = vpack.c.b16 %v3089, %v3088
    %v4126 = vpack.c.b16 %v3091, %v3090
    %v4127 = vpack.c.b16 %v3093, %v3092
    %v4128 = vpack.c.b16 %v3095, %v3094
    %v4129 = vpack.c.b16 %v3097, %v3096
    %v4130 = vpack.c.b16 %v3099, %v3098
    %v4131 = vpack.c.b16 %v3101, %v3100
    %v4132 = vpack.c.b16 %v3103, %v3102
    %v4133 = vpack.c.b16 %v3105, %v3104
    %v4134 = vpack.c.b16 %v3107, %v3106
    %v4135 = vpack.c.b16 %v3109, %v3108
    %v4136 = vpack.c.b16 %v3111, %v3110
    %v4137 = vpack.c.b16 %v3113, %v3112
    %v4138 = vpack.c.b16 %v3115, %v3114
    %v4139 = vpack.c.b16 %v3117, %v3116
    %v4140 = vpack.c.b16 %v3119, %v3118
    %v4141 = vpack.c.b16 %v3121, %v3120
    %v4142 = vpack.c.b16 %v3123, %v3122
    %v4143 = vpack.c.b16 %v3125, %v3124
    %v4144 = vpack.c.b16 %v3127, %v3126
    %v4145 = vpack.c.b16 %v3129, %v3128
    %v4146 = vpack.c.b16 %v3131, %v3130
    %v4147 = vpack.c.b16 %v3133, %v3132
    %v4148 = vpack.c.b16 %v3135, %v3134
    %v4149 = vpack.c.b16 %v3137, %v3136
    %v4150 = vpack.c.b16 %v3139, %v3138
    %v4151 = vpack.c.b16 %v3141, %v3140
    %v4152 = vpack.c.b16 %v3143, %v3142
    %v4153 = vpack.c.b16 %v3145, %v3144
    %v4154 = vpack.c.b16 %v3147, %v3146
    %v4155 = vpack.c.b16 %v3149, %v3148
    %v4156 = vpack.c.b16 %v3151, %v3150
    %v4157 = vpack.c.b16 %v3153, %v3152
    %v4158 = vpack.c.b16 %v3155, %v3154
    %v4159 = vpack.c.b16 %v3157, %v3156
    %v4160 = vpack.c.b16 %v3159, %v3158
    %v4161 = vpack.c.b16 %v3161, %v3160
    %v4162 = vpack.c.b16 %v3163, %v3162
    %v4163 = vpack.c.b16 %v3165, %v3164
    %v4164 = vpack.c.b16 %v3167, %v3166
    %v4165 = vpack.c.b16 %v3169, %v3168
    %v4166 = vpack.c.b16 %v3171, %v3170
    %v4167 = vpack.c.b16 %v3173, %v3172
    %v4168 = vpack.c.b16 %v3175, %v3174
    %v4169 = vpack.c.b16 %v3177, %v3176
    %v4170 = vpack.c.b16 %v3179, %v3178
    %v4171 = vpack.c.b16 %v3181, %v3180
    %v4172 = vpack.c.b16 %v3183, %v3182
    %v4173 = vpack.c.b16 %v3185, %v3184
    %v4174 = vpack.c.b16 %v3187, %v3186
    %v4175 = vpack.c.b16 %v3189, %v3188
    %v4176 = vpack.c.b16 %v3191, %v3190
    %v4177 = vpack.c.b16 %v3193, %v3192
    %v4178 = vpack.c.b16 %v3195, %v3194
    %v4179 = vpack.c.b16 %v3197, %v3196
    %v4180 = vpack.c.b16 %v3199, %v3198
    %v4181 = vpack.c.b16 %v3201, %v3200
    %v4182 = vpack.c.b16 %v3203, %v3202
    %v4183 = vpack.c.b16 %v3205, %v3204
    %v4184 = vpack.c.b16 %v3207, %v3206
    %v4185 = vpack.c.b16 %v3209, %v3208
    %v4186 = vpack.c.b16 %v3211, %v3210
    %v4187 = vpack.c.b16 %v3213, %v3212
    %v4188 = vpack.c.b16 %v3215, %v3214
    %v4189 = vpack.c.b16 %v3217, %v3216
    %v4190 = vpack.c.b16 %v3219, %v3218
    %v4191 = vpack.c.b16 %v3221, %v3220
    %v4192 = vpack.c.b16 %v3223, %v3222
    %v4193 = vpack.c.b16 %v3225, %v3224
    %v4194 = vpack.c.b16 %v3227, %v3226
    %v4195 = vpack.c.b16 %v3229, %v3228
    %v4196 = vpack.c.b16 %v3231, %v3230
    %v4197 = vpack.c.b16 %v3233, %v3232
    %v4198 = vpack.c.b16 %v3235, %v3234
    %v4199 = vpack.c.b16 %v3237, %v3236
    %v4200 = vpack.c.b16 %v3239, %v3238
    %v4201 = vpack.c.b16 %v3241, %v3240
    %v4202 = vpack.c.b16 %v3243, %v3242
    %v4203 = vpack.c.b16 %v3245, %v3244
    %v4204 = vpack.c.b16 %v3247, %v3246
    %v4205 = vpack.c.b16 %v3249, %v3248
    %v4206 = vpack.c.b16 %v3251, %v3250
    %v4207 = vpack.c.b16 %v3253, %v3252
    %v4208 = vpack.c.b16 %v3255, %v3254
    %v4209 = vpack.c.b16 %v3257, %v3256
    %v4210 = vpack.c.b16 %v3259, %v3258
    %v4211 = vpack.c.b16 %v3261, %v3260
    %v4212 = vpack.c.b16 %v3263, %v3262
    %v4213 = vpack.c.b16 %v3265, %v3264
    %v4214 = vpack.c.b16 %v3267, %v3266
    %v4215 = vpack.c.b16 %v3269, %v3268
    %v4216 = vpack.c.b16 %v3271, %v3270
    %v4217 = vpack.c.b16 %v3273, %v3272
    %v4218 = vpack.c.b16 %v3275, %v3274
    %v4219 = vpack.c.b16 %v3277, %v3276
    %v4220 = vpack.c.b16 %v3279, %v3278
    %v4221 = vpack.c.b16 %v3281, %v3280
    %v4222 = vpack.c.b16 %v3283, %v3282
    %v4223 = vpack.c.b16 %v3285, %v3284
    %v4224 = vpack.c.b16 %v3287, %v3286
    %v4225 = vpack.c.b16 %v3289, %v3288
    %v4226 = vpack.c.b16 %v3291, %v3290
    %v4227 = vpack.c.b16 %v3293, %v3292
    %v4228 = vpack.c.b16 %v3295, %v3294
    %v4229 = vpack.c.b16 %v3297, %v3296
    %v4230 = vpack.c.b16 %v3299, %v3298
    %v4231 = vpack.c.b16 %v3301, %v3300
    %v4232 = vpack.c.b16 %v3303, %v3302
    %v4233 = vpack.c.b16 %v3305, %v3304
    %v4234 = vpack.c.b16 %v3307, %v3306
    %v4235 = vpack.c.b16 %v3309, %v3308
    %v4236 = vpack.c.b16 %v3311, %v3310
    %v4237 = vpack.c.b16 %v3313, %v3312
    %v4238 = vpack.c.b16 %v3315, %v3314
    %v4239 = vpack.c.b16 %v3317, %v3316
    %v4240 = vpack.c.b16 %v3319, %v3318
    %v4241 = vpack.c.b16 %v3321, %v3320
    %v4242 = vpack.c.b16 %v3323, %v3322
    %v4243 = vpack.c.b16 %v3325, %v3324
    %v4244 = vpack.c.b16 %v3327, %v3326
    %v4245 = vpack.c.b16 %v3329, %v3328
    %v4246 = vpack.c.b16 %v3331, %v3330
    %v4247 = vpack.c.b16 %v3333, %v3332
    %v4248 = vpack.c.b16 %v3335, %v3334
    %v4249 = vpack.c.b16 %v3337, %v3336
    %v4250 = vpack.c.b16 %v3339, %v3338
    %v4251 = vpack.c.b16 %v3341, %v3340
    %v4252 = vpack.c.b16 %v3343, %v3342
    %v4253 = vpack.c.b16 %v3345, %v3344
    %v4254 = vpack.c.b16 %v3347, %v3346
    %v4255 = vpack.c.b16 %v3349, %v3348
    %v4256 = vpack.c.b16 %v3351, %v3350
    %v4257 = vpack.c.b16 %v3353, %v3352
    %v4258 = vpack.c.b16 %v3355, %v3354
    %v4259 = vpack.c.b16 %v3357, %v3356
    %v4260 = vpack.c.b16 %v3359, %v3358
    %v4261 = vpack.c.b16 %v3361, %v3360
    %v4262 = vpack.c.b16 %v3363, %v3362
    %v4263 = vpack.c.b16 %v3365, %v3364
    %v4264 = vpack.c.b16 %v3367, %v3366
    %v4265 = vpack.c.b16 %v3369, %v3368
    %v4266 = vpack.c.b16 %v3371, %v3370
    %v4267 = vpack.c.b16 %v3373, %v3372
    %v4268 = vpack.c.b16 %v3375, %v3374
    %v4269 = vpack.c.b16 %v3377, %v3376
    %v4270 = vpack.c.b16 %v3379, %v3378
    %v4271 = vpack.c.b16 %v3381, %v3380
    %v4272 = vpack.c.b16 %v3383, %v3382
    %v4273 = vpack.c.b16 %v3385, %v3384
    %v4274 = vpack.c.b16 %v3387, %v3386
    %v4275 = vpack.c.b16 %v3389, %v3388
    %v4276 = vpack.c.b16 %v3391, %v3390
    %v4277 = vpack.c.b16 %v3393, %v3392
    %v4278 = vpack.c.b16 %v3395, %v3394
    %v4279 = vpack.c.b16 %v3397, %v3396
    %v4280 = vpack.c.b16 %v3399, %v3398
    %v4281 = vpack.c.b16 %v3401, %v3400
    %v4282 = vpack.c.b16 %v3403, %v3402
    %v4283 = vpack.c.b16 %v3405, %v3404
    %v4284 = vpack.c.b16 %v3407, %v3406
    %v4285 = vpack.c.b16 %v3409, %v3408
    %v4286 = vpack.c.b16 %v3411, %v3410
    %v4287 = vpack.c.b16 %v3413, %v3412
    %v4288 = vpack.c.b16 %v3415, %v3414
    %v4289 = vpack.c.b16 %v3417, %v3416
    %v4290 = vpack.c.b16 %v3419, %v3418
    %v4291 = vpack.c.b16 %v3421, %v3420
    %v4292 = vpack.c.b16 %v3423, %v3422
    %v4293 = vpack.c.b16 %v3425, %v3424
    %v4294 = vpack.c.b16 %v3427, %v3426
    %v4295 = vpack.c.b16 %v3429, %v3428
    %v4296 = vpack.c.b16 %v3431, %v3430
    %v4297 = vpack.c.b16 %v3433, %v3432
    %v4298 = vpack.c.b16 %v3435, %v3434
    %v4299 = vpack.c.b16 %v3437, %v3436
    %v4300 = vpack.c.b16 %v3439, %v3438
    %v4301 = vpack.c.b16 %v3441, %v3440
    %v4302 = vpack.c.b16 %v3443, %v3442
    %v4303 = vpack.c.b16 %v3445, %v3444
    %v4304 = vpack.c.b16 %v3447, %v3446
    %v4305 = vpack.c.b16 %v3449, %v3448
    %v4306 = vpack.c.b16 %v3451, %v3450
    %v4307 = vpack.c.b16 %v3453, %v3452
    %v4308 = vpack.c.b16 %v3455, %v3454
    %v4309 = vpack.c.b16 %v3457, %v3456
    %v4310 = vpack.c.b16 %v3459, %v3458
    %v4311 = vpack.c.b16 %v3461, %v3460
    %v4312 = vpack.c.b16 %v3463, %v3462
    %v4313 = vpack.c.b16 %v3465, %v3464
    %v4314 = vpack.c.b16 %v3467, %v3466
    %v4315 = vpack.c.b16 %v3469, %v3468
    %v4316 = vpack.c.b16 %v3471, %v3470
    %v4317 = vpack.c.b16 %v3473, %v3472
    %v4318 = vpack.c.b16 %v3475, %v3474
    %v4319 = vpack.c.b16 %v3477, %v3476
    %v4320 = vpack.c.b16 %v3479, %v3478
    %v4321 = vpack.c.b16 %v3481, %v3480
    %v4322 = vpack.c.b16 %v3483, %v3482
    %v4323 = vpack.c.b16 %v3485, %v3484
    %v4324 = vpack.c.b16 %v3487, %v3486
    %v4325 = vpack.c.b16 %v3489, %v3488
    %v4326 = vpack.c.b16 %v3491, %v3490
    %v4327 = vpack.c.b16 %v3493, %v3492
    %v4328 = vpack.c.b16 %v3495, %v3494
    %v4329 = vpack.c.b16 %v3497, %v3496
    %v4330 = vpack.c.b16 %v3499, %v3498
    %v4331 = vpack.c.b16 %v3501, %v3500
    %v4332 = vpack.c.b16 %v3503, %v3502
    %v4333 = vpack.c.b16 %v3505, %v3504
    %v4334 = vpack.c.b16 %v3507, %v3506
    %v4335 = vpack.c.b16 %v3509, %v3508
    %v4336 = vpack.c.b16 %v3511, %v3510
    %v4337 = vpack.c.b16 %v3513, %v3512
    %v4338 = vpack.c.b16 %v3515, %v3514
    %v4339 = vpack.c.b16 %v3517, %v3516
    %v4340 = vpack.c.b16 %v3519, %v3518
    %v4341 = vpack.c.b16 %v3521, %v3520
    %v4342 = vpack.c.b16 %v3523, %v3522
    %v4343 = vpack.c.b16 %v3525, %v3524
    %v4344 = vpack.c.b16 %v3527, %v3526
    %v4345 = vpack.c.b16 %v3529, %v3528
    %v4346 = vpack.c.b16 %v3531, %v3530
    %v4347 = vpack.c.b16 %v3533, %v3532
    %v4348 = vpack.c.b16 %v3535, %v3534
    %v4349 = vpack.c.b16 %v3537, %v3536
    %v4350 = vpack.c.b16 %v3539, %v3538
    %v4351 = vpack.c.b16 %v3541, %v3540
    %v4352 = vpack.c.b16 %v3543, %v3542
    %v4353 = vpack.c.b16 %v3545, %v3544
    %v4354 = vpack.c.b16 %v3547, %v3546
    %v4355 = vpack.c.b16 %v3549, %v3548
    %v4356 = vpack.c.b16 %v3551, %v3550
    %v4357 = vpack.c.b16 %v3553, %v3552
    %v4358 = vpack.c.b16 %v3555, %v3554
    %v4359 = vpack.c.b16 %v3557, %v3556
    %v4360 = vpack.c.b16 %v3559, %v3558
    %v4361 = vpack.c.b16 %v3561, %v3560
    %v4362 = vpack.c.b16 %v3563, %v3562
    %v4363 = vpack.c.b16 %v3565, %v3564
    %v4364 = vpack.c.b16 %v3567, %v3566
    %v4365 = vpack.c.b16 %v3569, %v3568
    %v4366 = vpack.c.b16 %v3571, %v3570
    %v4367 = vpack.c.b16 %v3573, %v3572
    %v4368 = vpack.c.b16 %v3575, %v3574
    %v4369 = vpack.c.b16 %v3577, %v3576
    %v4370 = vpack.c.b16 %v3579, %v3578
    %v4371 = vpack.c.b16 %v3581, %v3580
    %v4372 = vpack.c.b16 %v3583, %v3582
    %v4373 = vpack.c.b16 %v3585, %v3584
    %v4374 = vpack.c.b16 %v3587, %v3586
    %v4375 = vpack.c.b16 %v3589, %v3588
    %v4376 = vpack.c.b16 %v3591, %v3590
    %v4377 = vpack.c.b16 %v3593, %v3592
    %v4378 = vpack.c.b16 %v3595, %v3594
    %v4379 = vpack.c.b16 %v3597, %v3596
    %v4380 = vpack.c.b16 %v3599, %v3598
    %v4381 = vpack.c.b16 %v3601, %v3600
    %v4382 = vpack.c.b16 %v3603, %v3602
    %v4383 = vpack.c.b16 %v3605, %v3604
    %v4384 = vpack.c.b16 %v3607, %v3606
    %v4385 = vpack.c.b16 %v3609, %v3608
    %v4386 = vpack.c.b16 %v3611, %v3610
    %v4387 = vpack.c.b16 %v3613, %v3612
    %v4388 = vpack.c.b16 %v3615, %v3614
    %v4389 = vpack.c.b16 %v3617, %v3616
    %v4390 = vpack.c.b16 %v3619, %v3618
    %v4391 = vpack.c.b16 %v3621, %v3620
    %v4392 = vpack.c.b16 %v3623, %v3622
    %v4393 = vpack.c.b16 %v3625, %v3624
    %v4394 = vpack.c.b16 %v3627, %v3626
    %v4395 = vpack.c.b16 %v3629, %v3628
    %v4396 = vpack.c.b16 %v3631, %v3630
    %v4397 = vpack.c.b16 %v3633, %v3632
    %v4398 = vpack.c.b16 %v3635, %v3634
    %v4399 = vpack.c.b16 %v3637, %v3636
    %v4400 = vpack.c.b16 %v3639, %v3638
    %v4401 = vpack.c.b16 %v3641, %v3640
    %v4402 = vpack.c.b16 %v3643, %v3642
    %v4403 = vpack.c.b16 %v3645, %v3644
    %v4404 = vpack.c.b16 %v3647, %v3646
    %v4405 = vpack.c.b16 %v3649, %v3648
    %v4406 = vpack.c.b16 %v3651, %v3650
    %v4407 = vpack.c.b16 %v3653, %v3652
    %v4408 = vpack.c.b16 %v3655, %v3654
    %v4409 = vpack.c.b16 %v3657, %v3656
    %v4410 = vpack.c.b16 %v3659, %v3658
    %v4411 = vpack.c.b16 %v3661, %v3660
    %v4412 = vpack.c.b16 %v3663, %v3662
    %v4413 = vpack.c.b16 %v3665, %v3664
    %v4414 = vpack.c.b16 %v3667, %v3666
    %v4415 = vpack.c.b16 %v3669, %v3668
    %v4416 = vpack.c.b16 %v3671, %v3670
    %v4417 = vpack.c.b16 %v3673, %v3672
    %v4418 = vpack.c.b16 %v3675, %v3674
    %v4419 = vpack.c.b16 %v3677, %v3676
    %v4420 = vpack.c.b16 %v3679, %v3678
    %v4421 = vpack.c.b16 %v3681, %v3680
    %v4422 = vpack.c.b16 %v3683, %v3682
    %v4423 = vpack.c.b16 %v3685, %v3684
    %v4424 = vpack.c.b16 %v3687, %v3686
    %v4425 = vpack.c.b16 %v3689, %v3688
    %v4426 = vpack.c.b16 %v3691, %v3690
    %v4427 = vpack.c.b16 %v3693, %v3692
    %v4428 = vpack.c.b16 %v3695, %v3694
    %v4429 = vpack.c.b16 %v3697, %v3696
    %v4430 = vpack.c.b16 %v3699, %v3698
    %v4431 = vpack.c.b16 %v3701, %v3700
    %v4432 = vpack.c.b16 %v3703, %v3702
    %v4433 = vpack.c.b16 %v3705, %v3704
    %v4434 = vpack.c.b16 %v3707, %v3706
    %v4435 = vpack.c.b16 %v3709, %v3708
    %v4436 = vpack.c.b16 %v3711, %v3710
    %v4437 = vpack.c.b16 %v3713, %v3712
    %v4438 = vpack.c.b16 %v3715, %v3714
    %v4439 = vpack.c.b16 %v3717, %v3716
    %v4440 = vpack.c.b16 %v3719, %v3718
    %v4441 = vpack.c.b16 %v3721, %v3720
    %v4442 = vpack.c.b16 %v3723, %v3722
    %v4443 = vpack.c.b16 %v3725, %v3724
    %v4444 = vpack.c.b16 %v3727, %v3726
    %v4445 = vpack.c.b16 %v3729, %v3728
    %v4446 = vpack.c.b16 %v3731, %v3730
    %v4447 = vpack.c.b16 %v3733, %v3732
    %v4448 = vpack.c.b16 %v3735, %v3734
    %v4449 = vpack.c.b16 %v3737, %v3736
    %v4450 = vpack.c.b16 %v3739, %v3738
    %v4451 = vpack.c.b16 %v3741, %v3740
    %v4452 = vpack.c.b16 %v3743, %v3742
    %v4453 = vpack.c.b16 %v3745, %v3744
    %v4454 = vpack.c.b16 %v3747, %v3746
    %v4455 = vpack.c.b16 %v3749, %v3748
    %v4456 = vpack.c.b16 %v3751, %v3750
    %v4457 = vpack.c.b16 %v3753, %v3752
    %v4458 = vpack.c.b16 %v3755, %v3754
    %v4459 = vpack.c.b16 %v3757, %v3756
    %v4460 = vpack.c.b16 %v3759, %v3758
    %v4461 = vpack.c.b16 %v3761, %v3760
    %v4462 = vpack.c.b16 %v3763, %v3762
    %v4463 = vpack.c.b16 %v3765, %v3764
    %v4464 = vpack.c.b16 %v3767, %v3766
    %v4465 = vpack.c.b16 %v3769, %v3768
    %v4466 = vpack.c.b16 %v3771, %v3770
    %v4467 = vpack.c.b16 %v3773, %v3772
    %v4468 = vpack.c.b16 %v3775, %v3774
    %v4469 = vpack.c.b16 %v3777, %v3776
    %v4470 = vpack.c.b16 %v3779, %v3778
    %v4471 = vpack.c.b16 %v3781, %v3780
    %v4472 = vpack.c.b16 %v3783, %v3782
    %v4473 = vpack.c.b16 %v3785, %v3784
    %v4474 = vpack.c.b16 %v3787, %v3786
    %v4475 = vpack.c.b16 %v3789, %v3788
    %v4476 = vpack.c.b16 %v3791, %v3790
    %v4477 = vpack.c.b16 %v3793, %v3792
    %v4478 = vpack.c.b16 %v3795, %v3794
    %v4479 = vpack.c.b16 %v3797, %v3796
    %v4480 = vpack.c.b16 %v3799, %v3798
    %v4481 = vpack.c.b16 %v3801, %v3800
    %v4482 = vpack.c.b16 %v3803, %v3802
    %v4483 = vpack.c.b16 %v3805, %v3804
    %v4484 = vpack.c.b16 %v3807, %v3806
    %v4485 = vpack.c.b16 %v3809, %v3808
    %v4486 = vpack.c.b16 %v3811, %v3810
    %v4487 = vpack.c.b16 %v3813, %v3812
    %v4488 = vpack.c.b16 %v3815, %v3814
    %v4489 = vpack.c.b16 %v3817, %v3816
    %v4490 = vpack.c.b16 %v3819, %v3818
    %v4491 = vpack.c.b16 %v3821, %v3820
    %v4492 = vpack.c.b16 %v3823, %v3822
    %v4493 = vpack.c.b16 %v3825, %v3824
    %v4494 = vpack.c.b16 %v3827, %v3826
    %v4495 = vpack.c.b16 %v3829, %v3828
    %v4496 = vpack.c.b16 %v3831, %v3830
    %v4497 = vpack.c.b16 %v3833, %v3832
    %v4498 = vpack.c.b16 %v3835, %v3834
    %v4499 = vpack.c.b16 %v3837, %v3836
    %v4500 = vpack.c.b16 %v3839, %v3838
    %v4501 = vpack.c.b16 %v3841, %v3840
    %v4502 = vpack.c.b16 %v3843, %v3842
    %v4503 = vpack.c.b16 %v3845, %v3844
    %v4504 = vpack.c.b16 %v3847, %v3846
    %v4505 = vpack.c.b16 %v3849, %v3848
    %v4506 = vpack.c.b16 %v3851, %v3850
    %v4507 = vpack.c.b16 %v3853, %v3852
    %v4508 = vpack.c.b16 %v3855, %v3854
    %v4509 = vpack.c.b16 %v3857, %v3856
    %v4510 = vpack.c.b16 %v3859, %v3858
    %v4511 = vpack.c.b16 %v3861, %v3860
    %v4512 = vpack.c.b16 %v3863, %v3862
    %v4513 = vpack.c.b16 %v3865, %v3864
    %v4514 = vpack.c.b16 %v3867, %v3866
    %v4515 = vpack.c.b16 %v3869, %v3868
    %v4516 = vpack.c.b16 %v3871, %v3870
    %v4517 = vpack.c.b16 %v3873, %v3872
    %v4518 = vpack.c.b16 %v3875, %v3874
    %v4519 = vpack.c.b16 %v3877, %v3876
    %v4520 = vpack.c.b16 %v3879, %v3878
    %v4521 = vpack.c.b16 %v3881, %v3880
    %v4522 = vpack.c.b16 %v3883, %v3882
    %v4523 = vpack.c.b16 %v3885, %v3884
    %v4524 = vpack.c.b16 %v3887, %v3886
    %v4525 = vpack.c.b16 %v3889, %v3888
    %v4526 = vpack.c.b16 %v3891, %v3890
    %v4527 = vpack.c.b16 %v3893, %v3892
    %v4528 = vpack.c.b16 %v3895, %v3894
    %v4529 = vpack.c.b16 %v3897, %v3896
    %v4530 = vpack.c.b16 %v3899, %v3898
    %v4531 = vpack.c.b16 %v3901, %v3900
    %v4532 = vpack.c.b16 %v3903, %v3902
    %v4533 = vpack.c.b16 %v3905, %v3904
    %v4534 = vpack.c.b16 %v3907, %v3906
    %v4535 = vpack.c.b16 %v3909, %v3908
    %v4536 = vpack.c.b16 %v3911, %v3910
    %v4537 = vpack.c.b16 %v3913, %v3912
    %v4538 = vpack.c.b16 %v3915, %v3914
    %v4539 = vpack.c.b16 %v3917, %v3916
    %v4540 = vpack.c.b16 %v3919, %v3918
    %v4541 = vpack.c.b16 %v3921, %v3920
    %v4542 = vpack.c.b16 %v3923, %v3922
    %v4543 = vpack.c.b16 %v3925, %v3924
    %v4544 = vpack.c.b16 %v3927, %v3926
    %v4545 = vpack.c.b16 %v3929, %v3928
    %v4546 = vpack.c.b16 %v3931, %v3930
    %v4547 = vpack.c.b16 %v3933, %v3932
    %v4548 = vpack.c.b16 %v3935, %v3934
    %v4549 = vpack.c.b16 %v3937, %v3936
    %v4550 = vpack.c.b16 %v3939, %v3938
    %v4551 = vpack.c.b16 %v3941, %v3940
    %v4552 = vpack.c.b16 %v3943, %v3942
    %v4553 = vpack.c.b16 %v3945, %v3944
    %v4554 = vpack.c.b16 %v3947, %v3946
    %v4555 = vpack.c.b16 %v3949, %v3948
    %v4556 = vpack.c.b16 %v3951, %v3950
    %v4557 = vpack.c.b16 %v3953, %v3952
    %v4558 = vpack.c.b16 %v3955, %v3954
    %v4559 = vpack.c.b16 %v3957, %v3956
    %v4560 = vpack.c.b16 %v3959, %v3958
    %v4561 = vpack.c.b16 %v3961, %v3960
    %v4562 = vpack.c.b16 %v3963, %v3962
    %v4563 = vpack.c.b16 %v3965, %v3964
    %v4564 = vpack.c.b16 %v3967, %v3966
    %v4565 = vpack.c.b16 %v3969, %v3968
    %v4566 = vpack.c.b16 %v3971, %v3970
    %v4567 = vpack.c.b16 %v3973, %v3972
    %v4568 = vpack.c.b16 %v3975, %v3974
    %v4569 = vpack.c.b16 %v3977, %v3976
    %v4570 = vpack.c.b16 %v3979, %v3978
    %v4571 = vpack.c.b16 %v3981, %v3980
    %v4572 = vpack.c.b16 %v3983, %v3982
    %v4573 = vpack.c.b16 %v3985, %v3984
    %v4574 = vpack.c.b16 %v3987, %v3986
    %v4575 = vpack.c.b16 %v3989, %v3988
    %v4576 = vpack.c.b16 %v3991, %v3990
    %v4577 = vpack.c.b16 %v3993, %v3992
    %v4578 = vpack.c.b16 %v3995, %v3994
    %v4579 = vpack.c.b16 %v3997, %v3996
    %v4580 = vpack.c.b16 %v3999, %v3998
    %v4581 = vpack.c.b16 %v4001, %v4000
    %v4582 = vpack.c.b16 %v4003, %v4002
    %v4583 = vpack.c.b16 %v4005, %v4004
    %v4584 = vpack.c.b16 %v4007, %v4006
    %v4585 = vpack.c.b16 %v4009, %v4008
    %5162 = vmatprep.subr.bf16.mxu0 0
    %5163 = vmatpush1.bf16.msra.mxu0 %v4010
    %5164 = vmatprep.subr.bf16.mxu0 0
    %5165 = vmatpush1.bf16.msra.mxu0 %v4011
    %5166 = vmatprep.subr.bf16.mxu0 0
    %5167 = vmatpush1.bf16.msra.mxu0 %v4012
    %5168 = vmatprep.subr.bf16.mxu0 0
    %5169 = vmatpush1.bf16.msra.mxu0 %v4013
    %5170 = vmatprep.subr.bf16.mxu0 0
    %5171 = vmatpush1.bf16.msra.mxu0 %v4014
    %5172 = vmatprep.subr.bf16.mxu0 0
    %5173 = vmatpush1.bf16.msra.mxu0 %v4015
    %5174 = vmatprep.subr.bf16.mxu0 0
    %5175 = vmatpush1.bf16.msra.mxu0 %v4016
    %5176 = vmatprep.subr.bf16.mxu0 0
    %5177 = vmatpush1.bf16.msra.mxu0 %v4017
    %5178 = vmatprep.subr.bf16.mxu0 0
    %5179 = vmatpush1.bf16.msra.mxu0 %v4018
    %5180 = vmatprep.subr.bf16.mxu0 0
    %5181 = vmatpush1.bf16.msra.mxu0 %v4019
    %5182 = vmatprep.subr.bf16.mxu0 0
    %5183 = vmatpush1.bf16.msra.mxu0 %v4020
    %5184 = vmatprep.subr.bf16.mxu0 0
    %5185 = vmatpush1.bf16.msra.mxu0 %v4021
    %5186 = vmatprep.subr.bf16.mxu0 0
    %5187 = vmatpush1.bf16.msra.mxu0 %v4022
    %5188 = vmatprep.subr.bf16.mxu0 0
    %5189 = vmatpush1.bf16.msra.mxu0 %v4023
    %5190 = vmatprep.subr.bf16.mxu0 0
    %5191 = vmatpush1.bf16.msra.mxu0 %v4024
    %5192 = vmatprep.subr.bf16.mxu0 0
    %5193 = vmatpush1.bf16.msra.mxu0 %v4025
    %5194 = vmatprep.mubr.bf16.mxu0 %v1230
    %5195 = vmatmul.mubr.bf16.gmra.mrb[0].mxu0 %v1216
    %v5196 = vpop.f32.mrb[0].mxu0
    %v5197 = vadd.f32 %v1182, %v5196
    %v5198 = vpop.f32.mrb[0].mxu0
    %v5199 = vpop.f32.mrb[0].mxu0
    %v5200 = vpop.f32.mrb[0].mxu0
    %5201 = vdwg.mxu0
    %5202 = vmatprep.subr.bf16.mxu0 0
    %5203 = vmatpush1.bf16.msra.mxu0 %v4026
    %5204 = vmatprep.subr.bf16.mxu0 0
    %5205 = vmatpush1.bf16.msra.mxu0 %v4027
    %5206 = vmatprep.subr.bf16.mxu0 0
    %5207 = vmatpush1.bf16.msra.mxu0 %v4028
    %5208 = vmatprep.subr.bf16.mxu0 0
    %5209 = vmatpush1.bf16.msra.mxu0 %v4029
    %5210 = vmatprep.subr.bf16.mxu0 0
    %5211 = vmatpush1.bf16.msra.mxu0 %v4030
    %5212 = vmatprep.subr.bf16.mxu0 0
    %5213 = vmatpush1.bf16.msra.mxu0 %v4031
    %5214 = vmatprep.subr.bf16.mxu0 0
    %5215 = vmatpush1.bf16.msra.mxu0 %v4032
    %5216 = vmatprep.subr.bf16.mxu0 0
    %5217 = vmatpush1.bf16.msra.mxu0 %v4033
    %5218 = vmatprep.subr.bf16.mxu0 0
    %5219 = vmatpush1.bf16.msra.mxu0 %v4034
    %5220 = vmatprep.subr.bf16.mxu0 0
    %5221 = vmatpush1.bf16.msra.mxu0 %v4035
    %5222 = vmatprep.subr.bf16.mxu0 0
    %5223 = vmatpush1.bf16.msra.mxu0 %v4036
    %5224 = vmatprep.subr.bf16.mxu0 0
    %5225 = vmatpush1.bf16.msra.mxu0 %v4037
    %5226 = vmatprep.subr.bf16.mxu0 0
    %5227 = vmatpush1.bf16.msra.mxu0 %v4038
    %5228 = vmatprep.subr.bf16.mxu0 0
    %5229 = vmatpush1.bf16.msra.mxu0 %v4039
    %5230 = vmatprep.subr.bf16.mxu0 0
    %5231 = vmatpush1.bf16.msra.mxu0 %v4040
    %5232 = vmatprep.subr.bf16.mxu0 0
    %5233 = vmatpush1.bf16.msra.mxu0 %v4041
    %5234 = vmatprep.mubr.bf16.mxu0 %v1240
    %5235 = vmatmul.mubr.bf16.gmra.mrb[0].mxu0 %v1238
    %v5236 = vpop.f32.mrb[0].mxu0
    %v5237 = vadd.f32 %v5197, %v5236
    %v5238 = vpop.f32.mrb[0].mxu0
    %v5239 = vpop.f32.mrb[0].mxu0
    %v5240 = vpop.f32.mrb[0].mxu0
    %5241 = vdwg.mxu0
    %5242 = vmatprep.subr.bf16.mxu0 0
    %5243 = vmatpush1.bf16.msra.mxu0 %v4042
    %5244 = vmatprep.subr.bf16.mxu0 0
    %5245 = vmatpush1.bf16.msra.mxu0 %v4043
    %5246 = vmatprep.subr.bf16.mxu0 0
    %5247 = vmatpush1.bf16.msra.mxu0 %v4044
    %5248 = vmatprep.subr.bf16.mxu0 0
    %5249 = vmatpush1.bf16.msra.mxu0 %v4045
    %5250 = vmatprep.subr.bf16.mxu0 0
    %5251 = vmatpush1.bf16.msra.mxu0 %v4046
    %5252 = vmatprep.subr.bf16.mxu0 0
    %5253 = vmatpush1.bf16.msra.mxu0 %v4047
    %5254 = vmatprep.subr.bf16.mxu0 0
    %5255 = vmatpush1.bf16.msra.mxu0 %v4048
    %5256 = vmatprep.subr.bf16.mxu0 0
    %5257 = vmatpush1.bf16.msra.mxu0 %v4049
    %5258 = vmatprep.subr.bf16.mxu0 0
    %5259 = vmatpush1.bf16.msra.mxu0 %v4050
    %5260 = vmatprep.subr.bf16.mxu0 0
    %5261 = vmatpush1.bf16.msra.mxu0 %v4051
    %5262 = vmatprep.subr.bf16.mxu0 0
    %5263 = vmatpush1.bf16.msra.mxu0 %v4052
    %5264 = vmatprep.subr.bf16.mxu0 0
    %5265 = vmatpush1.bf16.msra.mxu0 %v4053
    %5266 = vmatprep.subr.bf16.mxu0 0
    %5267 = vmatpush1.bf16.msra.mxu0 %v4054
    %5268 = vmatprep.subr.bf16.mxu0 0
    %5269 = vmatpush1.bf16.msra.mxu0 %v4055
    %5270 = vmatprep.subr.bf16.mxu0 0
    %5271 = vmatpush1.bf16.msra.mxu0 %v4056
    %5272 = vmatprep.subr.bf16.mxu0 0
    %5273 = vmatpush1.bf16.msra.mxu0 %v4057
    %5274 = vmatprep.mubr.bf16.mxu0 %v1237
    %5275 = vmatmul.mubr.bf16.gmra.mrb[0].mxu0 %v1223
    %v5276 = vpop.f32.mrb[0].mxu0
    %v5277 = vadd.f32 %v5237, %v5276
    %v5278 = vpop.f32.mrb[0].mxu0
    %v5279 = vpop.f32.mrb[0].mxu0
    %v5280 = vpop.f32.mrb[0].mxu0
    %5281 = vdwg.mxu0
    %5282 = vmatprep.subr.bf16.mxu0 0
    %5283 = vmatpush1.bf16.msra.mxu0 %v4058
    %5284 = vmatprep.subr.bf16.mxu0 0
    %5285 = vmatpush1.bf16.msra.mxu0 %v4059
    %5286 = vmatprep.subr.bf16.mxu0 0
    %5287 = vmatpush1.bf16.msra.mxu0 %v4060
    %5288 = vmatprep.subr.bf16.mxu0 0
    %5289 = vmatpush1.bf16.msra.mxu0 %v4061
    %5290 = vmatprep.subr.bf16.mxu0 0
    %5291 = vmatpush1.bf16.msra.mxu0 %v4062
    %5292 = vmatprep.subr.bf16.mxu0 0
    %5293 = vmatpush1.bf16.msra.mxu0 %v4063
    %5294 = vmatprep.subr.bf16.mxu0 0
    %5295 = vmatpush1.bf16.msra.mxu0 %v4064
    %5296 = vmatprep.subr.bf16.mxu0 0
    %5297 = vmatpush1.bf16.msra.mxu0 %v4065
    %5298 = vmatprep.subr.bf16.mxu0 0
    %5299 = vmatpush1.bf16.msra.mxu0 %v4066
    %5300 = vmatprep.subr.bf16.mxu0 0
    %5301 = vmatpush1.bf16.msra.mxu0 %v4067
    %5302 = vmatprep.subr.bf16.mxu0 0
    %5303 = vmatpush1.bf16.msra.mxu0 %v4068
    %5304 = vmatprep.subr.bf16.mxu0 0
    %5305 = vmatpush1.bf16.msra.mxu0 %v4069
    %5306 = vmatprep.subr.bf16.mxu0 0
    %5307 = vmatpush1.bf16.msra.mxu0 %v4070
    %5308 = vmatprep.subr.bf16.mxu0 0
    %5309 = vmatpush1.bf16.msra.mxu0 %v4071
    %5310 = vmatprep.subr.bf16.mxu0 0
    %5311 = vmatpush1.bf16.msra.mxu0 %v4072
    %5312 = vmatprep.subr.bf16.mxu0 0
    %5313 = vmatpush1.bf16.msra.mxu0 %v4073
    %5314 = vmatprep.mubr.bf16.mxu0 %v1241
    %5315 = vmatmul.mubr.bf16.gmra.mrb[0].mxu0 %v1239
    %v5316 = vpop.f32.mrb[0].mxu0
    %v5317 = vadd.f32 %v5277, %v5316
    %v5318 = vpop.f32.mrb[0].mxu0
    %v5319 = vpop.f32.mrb[0].mxu0
    %v5320 = vpop.f32.mrb[0].mxu0
    %5321 = vdwg.mxu0
    %5322 = vmatprep.subr.bf16.mxu0 0
    %5323 = vmatpush1.bf16.msra.mxu0 %v4074
    %5324 = vmatprep.subr.bf16.mxu0 0
    %5325 = vmatpush1.bf16.msra.mxu0 %v4075
    %5326 = vmatprep.subr.bf16.mxu0 0
    %5327 = vmatpush1.bf16.msra.mxu0 %v4076
    %5328 = vmatprep.subr.bf16.mxu0 0
    %5329 = vmatpush1.bf16.msra.mxu0 %v4077
    %5330 = vmatprep.subr.bf16.mxu0 0
    %5331 = vmatpush1.bf16.msra.mxu0 %v4078
    %5332 = vmatprep.subr.bf16.mxu0 0
    %5333 = vmatpush1.bf16.msra.mxu0 %v4079
    %5334 = vmatprep.subr.bf16.mxu0 0
    %5335 = vmatpush1.bf16.msra.mxu0 %v4080
    %5336 = vmatprep.subr.bf16.mxu0 0
    %5337 = vmatpush1.bf16.msra.mxu0 %v4081
    %5338 = vmatprep.subr.bf16.mxu0 0
    %5339 = vmatpush1.bf16.msra.mxu0 %v4082
    %5340 = vmatprep.subr.bf16.mxu0 0
    %5341 = vmatpush1.bf16.msra.mxu0 %v4083
    %5342 = vmatprep.subr.bf16.mxu0 0
    %5343 = vmatpush1.bf16.msra.mxu0 %v4084
    %5344 = vmatprep.subr.bf16.mxu0 0
    %5345 = vmatpush1.bf16.msra.mxu0 %v4085
    %5346 = vmatprep.subr.bf16.mxu0 0
    %5347 = vmatpush1.bf16.msra.mxu0 %v4086
    %5348 = vmatprep.subr.bf16.mxu0 0
    %5349 = vmatpush1.bf16.msra.mxu0 %v4087
    %5350 = vmatprep.subr.bf16.mxu0 0
    %5351 = vmatpush1.bf16.msra.mxu0 %v4088
    %5352 = vmatprep.subr.bf16.mxu0 0
    %5353 = vmatpush1.bf16.msra.mxu0 %v4089
    %5354 = vmatprep.mubr.bf16.mxu0 %v1279
    %5355 = vmatmul.mubr.bf16.gmra.mrb[0].mxu0 %v1265
    %v5356 = vpop.f32.mrb[0].mxu0
    %v5357 = vadd.f32 %v5317, %v5356
    %v5358 = vpop.f32.mrb[0].mxu0
    %v5359 = vpop.f32.mrb[0].mxu0
    %v5360 = vpop.f32.mrb[0].mxu0
    %5361 = vdwg.mxu0
    %5362 = vmatprep.subr.bf16.mxu0 0
    %5363 = vmatpush1.bf16.msra.mxu0 %v4090
    %5364 = vmatprep.subr.bf16.mxu0 0
    %5365 = vmatpush1.bf16.msra.mxu0 %v4091
    %5366 = vmatprep.subr.bf16.mxu0 0
    %5367 = vmatpush1.bf16.msra.mxu0 %v4092
    %5368 = vmatprep.subr.bf16.mxu0 0
    %5369 = vmatpush1.bf16.msra.mxu0 %v4093
    %5370 = vmatprep.subr.bf16.mxu0 0
    %5371 = vmatpush1.bf16.msra.mxu0 %v4094
    %5372 = vmatprep.subr.bf16.mxu0 0
    %5373 = vmatpush1.bf16.msra.mxu0 %v4095
    %5374 = vmatprep.subr.bf16.mxu0 0
    %5375 = vmatpush1.bf16.msra.mxu0 %v4096
    %5376 = vmatprep.subr.bf16.mxu0 0
    %5377 = vmatpush1.bf16.msra.mxu0 %v4097
    %5378 = vmatprep.subr.bf16.mxu0 0
    %5379 = vmatpush1.bf16.msra.mxu0 %v4098
    %5380 = vmatprep.subr.bf16.mxu0 0
    %5381 = vmatpush1.bf16.msra.mxu0 %v4099
    %5382 = vmatprep.subr.bf16.mxu0 0
    %5383 = vmatpush1.bf16.msra.mxu0 %v4100
    %5384 = vmatprep.subr.bf16.mxu0 0
    %5385 = vmatpush1.bf16.msra.mxu0 %v4101
    %5386 = vmatprep.subr.bf16.mxu0 0
    %5387 = vmatpush1.bf16.msra.mxu0 %v4102
    %5388 = vmatprep.subr.bf16.mxu0 0
    %5389 = vmatpush1.bf16.msra.mxu0 %v4103
    %5390 = vmatprep.subr.bf16.mxu0 0
    %5391 = vmatpush1.bf16.msra.mxu0 %v4104
    %5392 = vmatprep.subr.bf16.mxu0 0
    %5393 = vmatpush1.bf16.msra.mxu0 %v4105
    %5394 = vmatprep.mubr.bf16.mxu0 %v1289
    %5395 = vmatmul.mubr.bf16.gmra.mrb[0].mxu0 %v1287
    %v5396 = vpop.f32.mrb[0].mxu0
    %v5397 = vadd.f32 %v5357, %v5396
    %v5398 = vpop.f32.mrb[0].mxu0
    %v5399 = vpop.f32.mrb[0].mxu0
    %v5400 = vpop.f32.mrb[0].mxu0
    %5401 = vdwg.mxu0
    %5402 = vmatprep.subr.bf16.mxu0 0
    %5403 = vmatpush1.bf16.msra.mxu0 %v4106
    %5404 = vmatprep.subr.bf16.mxu0 0
    %5405 = vmatpush1.bf16.msra.mxu0 %v4107
    %5406 = vmatprep.subr.bf16.mxu0 0
    %5407 = vmatpush1.bf16.msra.mxu0 %v4108
    %5408 = vmatprep.subr.bf16.mxu0 0
    %5409 = vmatpush1.bf16.msra.mxu0 %v4109
    %5410 = vmatprep.subr.bf16.mxu0 0
    %5411 = vmatpush1.bf16.msra.mxu0 %v4110
    %5412 = vmatprep.subr.bf16.mxu0 0
    %5413 = vmatpush1.bf16.msra.mxu0 %v4111
    %5414 = vmatprep.subr.bf16.mxu0 0
    %5415 = vmatpush1.bf16.msra.mxu0 %v4112
    %5416 = vmatprep.subr.bf16.mxu0 0
    %5417 = vmatpush1.bf16.msra.mxu0 %v4113
    %5418 = vmatprep.subr.bf16.mxu0 0
    %5419 = vmatpush1.bf16.msra.mxu0 %v4114
    %5420 = vmatprep.subr.bf16.mxu0 0
    %5421 = vmatpush1.bf16.msra.mxu0 %v4115
    %5422 = vmatprep.subr.bf16.mxu0 0
    %5423 = vmatpush1.bf16.msra.mxu0 %v4116
    %5424 = vmatprep.subr.bf16.mxu0 0
    %5425 = vmatpush1.bf16.msra.mxu0 %v4117
    %5426 = vmatprep.subr.bf16.mxu0 0
    %5427 = vmatpush1.bf16.msra.mxu0 %v4118
    %5428 = vmatprep.subr.bf16.mxu0 0
    %5429 = vmatpush1.bf16.msra.mxu0 %v4119
    %5430 = vmatprep.subr.bf16.mxu0 0
    %5431 = vmatpush1.bf16.msra.mxu0 %v4120
    %5432 = vmatprep.subr.bf16.mxu0 0
    %5433 = vmatpush1.bf16.msra.mxu0 %v4121
    %5434 = vmatprep.mubr.bf16.mxu0 %v1286
    %5435 = vmatmul.mubr.bf16.gmra.mrb[0].mxu0 %v1272
    %v5436 = vpop.f32.mrb[0].mxu0
    %v5437 = vadd.f32 %v5397, %v5436
    %v5438 = vpop.f32.mrb[0].mxu0
    %v5439 = vpop.f32.mrb[0].mxu0
    %v5440 = vpop.f32.mrb[0].mxu0
    %5441 = vdwg.mxu0
    %5442 = vmatprep.subr.bf16.mxu0 0
    %5443 = vmatpush1.bf16.msra.mxu0 %v4122
    %5444 = vmatprep.subr.bf16.mxu0 0
    %5445 = vmatpush1.bf16.msra.mxu0 %v4123
    %5446 = vmatprep.subr.bf16.mxu0 0
    %5447 = vmatpush1.bf16.msra.mxu0 %v4124
    %5448 = vmatprep.subr.bf16.mxu0 0
    %5449 = vmatpush1.bf16.msra.mxu0 %v4125
    %5450 = vmatprep.subr.bf16.mxu0 0
    %5451 = vmatpush1.bf16.msra.mxu0 %v4126
    %5452 = vmatprep.subr.bf16.mxu0 0
    %5453 = vmatpush1.bf16.msra.mxu0 %v4127
    %5454 = vmatprep.subr.bf16.mxu0 0
    %5455 = vmatpush1.bf16.msra.mxu0 %v4128
    %5456 = vmatprep.subr.bf16.mxu0 0
    %5457 = vmatpush1.bf16.msra.mxu0 %v4129
    %5458 = vmatprep.subr.bf16.mxu0 0
    %5459 = vmatpush1.bf16.msra.mxu0 %v4130
    %5460 = vmatprep.subr.bf16.mxu0 0
    %5461 = vmatpush1.bf16.msra.mxu0 %v4131
    %5462 = vmatprep.subr.bf16.mxu0 0
    %5463 = vmatpush1.bf16.msra.mxu0 %v4132
    %5464 = vmatprep.subr.bf16.mxu0 0
    %5465 = vmatpush1.bf16.msra.mxu0 %v4133
    %5466 = vmatprep.subr.bf16.mxu0 0
    %5467 = vmatpush1.bf16.msra.mxu0 %v4134
    %5468 = vmatprep.subr.bf16.mxu0 0
    %5469 = vmatpush1.bf16.msra.mxu0 %v4135
    %5470 = vmatprep.subr.bf16.mxu0 0
    %5471 = vmatpush1.bf16.msra.mxu0 %v4136
    %5472 = vmatprep.subr.bf16.mxu0 0
    %5473 = vmatpush1.bf16.msra.mxu0 %v4137
    %5474 = vmatprep.mubr.bf16.mxu0 %v1290
    %5475 = vmatmul.mubr.bf16.gmra.mrb[0].mxu0 %v1288
    %v5476 = vpop.f32.mrb[0].mxu0
    %v5477 = vadd.f32 %v5437, %v5476
    %v5478 = vpop.f32.mrb[0].mxu0
    %v5479 = vpop.f32.mrb[0].mxu0
    %v5480 = vpop.f32.mrb[0].mxu0
    %5481 = vdwg.mxu0
    %5482 = vmatprep.subr.bf16.mxu0 0
    %5483 = vmatpush1.bf16.msra.mxu0 %v4138
    %5484 = vmatprep.subr.bf16.mxu0 0
    %5485 = vmatpush1.bf16.msra.mxu0 %v4139
    %5486 = vmatprep.subr.bf16.mxu0 0
    %5487 = vmatpush1.bf16.msra.mxu0 %v4140
    %5488 = vmatprep.subr.bf16.mxu0 0
    %5489 = vmatpush1.bf16.msra.mxu0 %v4141
    %5490 = vmatprep.subr.bf16.mxu0 0
    %5491 = vmatpush1.bf16.msra.mxu0 %v4142
    %5492 = vmatprep.subr.bf16.mxu0 0
    %5493 = vmatpush1.bf16.msra.mxu0 %v4143
    %5494 = vmatprep.subr.bf16.mxu0 0
    %5495 = vmatpush1.bf16.msra.mxu0 %v4144
    %5496 = vmatprep.subr.bf16.mxu0 0
    %5497 = vmatpush1.bf16.msra.mxu0 %v4145
    %5498 = vmatprep.subr.bf16.mxu0 0
    %5499 = vmatpush1.bf16.msra.mxu0 %v4146
    %5500 = vmatprep.subr.bf16.mxu0 0
    %5501 = vmatpush1.bf16.msra.mxu0 %v4147
    %5502 = vmatprep.subr.bf16.mxu0 0
    %5503 = vmatpush1.bf16.msra.mxu0 %v4148
    %5504 = vmatprep.subr.bf16.mxu0 0
    %5505 = vmatpush1.bf16.msra.mxu0 %v4149
    %5506 = vmatprep.subr.bf16.mxu0 0
    %5507 = vmatpush1.bf16.msra.mxu0 %v4150
    %5508 = vmatprep.subr.bf16.mxu0 0
    %5509 = vmatpush1.bf16.msra.mxu0 %v4151
    %5510 = vmatprep.subr.bf16.mxu0 0
    %5511 = vmatpush1.bf16.msra.mxu0 %v4152
    %5512 = vmatprep.subr.bf16.mxu0 0
    %5513 = vmatpush1.bf16.msra.mxu0 %v4153
    %5514 = vmatprep.mubr.bf16.mxu0 %v1328
    %5515 = vmatmul.mubr.bf16.gmra.mrb[0].mxu0 %v1314
    %v5516 = vpop.f32.mrb[0].mxu0
    %v5517 = vadd.f32 %v5477, %v5516
    %v5518 = vpop.f32.mrb[0].mxu0
    %v5519 = vpop.f32.mrb[0].mxu0
    %v5520 = vpop.f32.mrb[0].mxu0
    %5521 = vdwg.mxu0
    %5522 = vmatprep.subr.bf16.mxu0 0
    %5523 = vmatpush1.bf16.msra.mxu0 %v4154
    %5524 = vmatprep.subr.bf16.mxu0 0
    %5525 = vmatpush1.bf16.msra.mxu0 %v4155
    %5526 = vmatprep.subr.bf16.mxu0 0
    %5527 = vmatpush1.bf16.msra.mxu0 %v4156
    %5528 = vmatprep.subr.bf16.mxu0 0
    %5529 = vmatpush1.bf16.msra.mxu0 %v4157
    %5530 = vmatprep.subr.bf16.mxu0 0
    %5531 = vmatpush1.bf16.msra.mxu0 %v4158
    %5532 = vmatprep.subr.bf16.mxu0 0
    %5533 = vmatpush1.bf16.msra.mxu0 %v4159
    %5534 = vmatprep.subr.bf16.mxu0 0
    %5535 = vmatpush1.bf16.msra.mxu0 %v4160
    %5536 = vmatprep.subr.bf16.mxu0 0
    %5537 = vmatpush1.bf16.msra.mxu0 %v4161
    %5538 = vmatprep.subr.bf16.mxu0 0
    %5539 = vmatpush1.bf16.msra.mxu0 %v4162
    %5540 = vmatprep.subr.bf16.mxu0 0
    %5541 = vmatpush1.bf16.msra.mxu0 %v4163
    %5542 = vmatprep.subr.bf16.mxu0 0
    %5543 = vmatpush1.bf16.msra.mxu0 %v4164
    %5544 = vmatprep.subr.bf16.mxu0 0
    %5545 = vmatpush1.bf16.msra.mxu0 %v4165
    %5546 = vmatprep.subr.bf16.mxu0 0
    %5547 = vmatpush1.bf16.msra.mxu0 %v4166
    %5548 = vmatprep.subr.bf16.mxu0 0
    %5549 = vmatpush1.bf16.msra.mxu0 %v4167
    %5550 = vmatprep.subr.bf16.mxu0 0
    %5551 = vmatpush1.bf16.msra.mxu0 %v4168
    %5552 = vmatprep.subr.bf16.mxu0 0
    %5553 = vmatpush1.bf16.msra.mxu0 %v4169
    %5554 = vmatprep.mubr.bf16.mxu0 %v1338
    %5555 = vmatmul.mubr.bf16.gmra.mrb[0].mxu0 %v1336
    %v5556 = vpop.f32.mrb[0].mxu0
    %v5557 = vadd.f32 %v5517, %v5556
    %v5558 = vpop.f32.mrb[0].mxu0
    %v5559 = vpop.f32.mrb[0].mxu0
    %v5560 = vpop.f32.mrb[0].mxu0
    %5561 = vdwg.mxu0
    %5562 = vmatprep.subr.bf16.mxu0 0
    %5563 = vmatpush1.bf16.msra.mxu0 %v4170
    %5564 = vmatprep.subr.bf16.mxu0 0
    %5565 = vmatpush1.bf16.msra.mxu0 %v4171
    %5566 = vmatprep.subr.bf16.mxu0 0
    %5567 = vmatpush1.bf16.msra.mxu0 %v4172
    %5568 = vmatprep.subr.bf16.mxu0 0
    %5569 = vmatpush1.bf16.msra.mxu0 %v4173
    %5570 = vmatprep.subr.bf16.mxu0 0
    %5571 = vmatpush1.bf16.msra.mxu0 %v4174
    %5572 = vmatprep.subr.bf16.mxu0 0
    %5573 = vmatpush1.bf16.msra.mxu0 %v4175
    %5574 = vmatprep.subr.bf16.mxu0 0
    %5575 = vmatpush1.bf16.msra.mxu0 %v4176
    %5576 = vmatprep.subr.bf16.mxu0 0
    %5577 = vmatpush1.bf16.msra.mxu0 %v4177
    %5578 = vmatprep.subr.bf16.mxu0 0
    %5579 = vmatpush1.bf16.msra.mxu0 %v4178
    %5580 = vmatprep.subr.bf16.mxu0 0
    %5581 = vmatpush1.bf16.msra.mxu0 %v4179
    %5582 = vmatprep.subr.bf16.mxu0 0
    %5583 = vmatpush1.bf16.msra.mxu0 %v4180
    %5584 = vmatprep.subr.bf16.mxu0 0
    %5585 = vmatpush1.bf16.msra.mxu0 %v4181
    %5586 = vmatprep.subr.bf16.mxu0 0
    %5587 = vmatpush1.bf16.msra.mxu0 %v4182
    %5588 = vmatprep.subr.bf16.mxu0 0
    %5589 = vmatpush1.bf16.msra.mxu0 %v4183
    %5590 = vmatprep.subr.bf16.mxu0 0
    %5591 = vmatpush1.bf16.msra.mxu0 %v4184
    %5592 = vmatprep.subr.bf16.mxu0 0
    %5593 = vmatpush1.bf16.msra.mxu0 %v4185
    %5594 = vmatprep.mubr.bf16.mxu0 %v1335
    %5595 = vmatmul.mubr.bf16.gmra.mrb[0].mxu0 %v1321
    %v5596 = vpop.f32.mrb[0].mxu0
    %v5597 = vadd.f32 %v5557, %v5596
    %v5598 = vpop.f32.mrb[0].mxu0
    %v5599 = vpop.f32.mrb[0].mxu0
    %v5600 = vpop.f32.mrb[0].mxu0
    %5601 = vdwg.mxu0
    %5602 = vmatprep.subr.bf16.mxu0 0
    %5603 = vmatpush1.bf16.msra.mxu0 %v4186
    %5604 = vmatprep.subr.bf16.mxu0 0
    %5605 = vmatpush1.bf16.msra.mxu0 %v4187
    %5606 = vmatprep.subr.bf16.mxu0 0
    %5607 = vmatpush1.bf16.msra.mxu0 %v4188
    %5608 = vmatprep.subr.bf16.mxu0 0
    %5609 = vmatpush1.bf16.msra.mxu0 %v4189
    %5610 = vmatprep.subr.bf16.mxu0 0
    %5611 = vmatpush1.bf16.msra.mxu0 %v4190
    %5612 = vmatprep.subr.bf16.mxu0 0
    %5613 = vmatpush1.bf16.msra.mxu0 %v4191
    %5614 = vmatprep.subr.bf16.mxu0 0
    %5615 = vmatpush1.bf16.msra.mxu0 %v4192
    %5616 = vmatprep.subr.bf16.mxu0 0
    %5617 = vmatpush1.bf16.msra.mxu0 %v4193
    %5618 = vmatprep.subr.bf16.mxu0 0
    %5619 = vmatpush1.bf16.msra.mxu0 %v4194
    %5620 = vmatprep.subr.bf16.mxu0 0
    %5621 = vmatpush1.bf16.msra.mxu0 %v4195
    %5622 = vmatprep.subr.bf16.mxu0 0
    %5623 = vmatpush1.bf16.msra.mxu0 %v4196
    %5624 = vmatprep.subr.bf16.mxu0 0
    %5625 = vmatpush1.bf16.msra.mxu0 %v4197
    %5626 = vmatprep.subr.bf16.mxu0 0
    %5627 = vmatpush1.bf16.msra.mxu0 %v4198
    %5628 = vmatprep.subr.bf16.mxu0 0
    %5629 = vmatpush1.bf16.msra.mxu0 %v4199
    %5630 = vmatprep.subr.bf16.mxu0 0
    %5631 = vmatpush1.bf16.msra.mxu0 %v4200
    %5632 = vmatprep.subr.bf16.mxu0 0
    %5633 = vmatpush1.bf16.msra.mxu0 %v4201
    %5634 = vmatprep.mubr.bf16.mxu0 %v1339
    %5635 = vmatmul.mubr.bf16.gmra.mrb[0].mxu0 %v1337
    %v5636 = vpop.f32.mrb[0].mxu0
    %v5637 = vadd.f32 %v5597, %v5636
    %v5638 = vpop.f32.mrb[0].mxu0
    %v5639 = vpop.f32.mrb[0].mxu0
    %v5640 = vpop.f32.mrb[0].mxu0
    %5641 = vdwg.mxu0
    %5642 = vmatprep.subr.bf16.mxu0 0
    %5643 = vmatpush1.bf16.msra.mxu0 %v4202
    %5644 = vmatprep.subr.bf16.mxu0 0
    %5645 = vmatpush1.bf16.msra.mxu0 %v4203
    %5646 = vmatprep.subr.bf16.mxu0 0
    %5647 = vmatpush1.bf16.msra.mxu0 %v4204
    %5648 = vmatprep.subr.bf16.mxu0 0
    %5649 = vmatpush1.bf16.msra.mxu0 %v4205
    %5650 = vmatprep.subr.bf16.mxu0 0
    %5651 = vmatpush1.bf16.msra.mxu0 %v4206
    %5652 = vmatprep.subr.bf16.mxu0 0
    %5653 = vmatpush1.bf16.msra.mxu0 %v4207
    %5654 = vmatprep.subr.bf16.mxu0 0
    %5655 = vmatpush1.bf16.msra.mxu0 %v4208
    %5656 = vmatprep.subr.bf16.mxu0 0
    %5657 = vmatpush1.bf16.msra.mxu0 %v4209
    %5658 = vmatprep.subr.bf16.mxu0 0
    %5659 = vmatpush1.bf16.msra.mxu0 %v4210
    %5660 = vmatprep.subr.bf16.mxu0 0
    %5661 = vmatpush1.bf16.msra.mxu0 %v4211
    %5662 = vmatprep.subr.bf16.mxu0 0
    %5663 = vmatpush1.bf16.msra.mxu0 %v4212
    %5664 = vmatprep.subr.bf16.mxu0 0
    %5665 = vmatpush1.bf16.msra.mxu0 %v4213
    %5666 = vmatprep.subr.bf16.mxu0 0
    %5667 = vmatpush1.bf16.msra.mxu0 %v4214
    %5668 = vmatprep.subr.bf16.mxu0 0
    %5669 = vmatpush1.bf16.msra.mxu0 %v4215
    %5670 = vmatprep.subr.bf16.mxu0 0
    %5671 = vmatpush1.bf16.msra.mxu0 %v4216
    %5672 = vmatprep.subr.bf16.mxu0 0
    %5673 = vmatpush1.bf16.msra.mxu0 %v4217
    %5674 = vmatprep.mubr.bf16.mxu0 %v1377
    %5675 = vmatmul.mubr.bf16.gmra.mrb[0].mxu0 %v1363
    %v5676 = vpop.f32.mrb[0].mxu0
    %v5677 = vadd.f32 %v5637, %v5676
    %v5678 = vpop.f32.mrb[0].mxu0
    %v5679 = vpop.f32.mrb[0].mxu0
    %v5680 = vpop.f32.mrb[0].mxu0
    %5681 = vdwg.mxu0
    %5682 = vmatprep.subr.bf16.mxu0 0
    %5683 = vmatpush1.bf16.msra.mxu0 %v4218
    %5684 = vmatprep.subr.bf16.mxu0 0
    %5685 = vmatpush1.bf16.msra.mxu0 %v4219
    %5686 = vmatprep.subr.bf16.mxu0 0
    %5687 = vmatpush1.bf16.msra.mxu0 %v4220
    %5688 = vmatprep.subr.bf16.mxu0 0
    %5689 = vmatpush1.bf16.msra.mxu0 %v4221
    %5690 = vmatprep.subr.bf16.mxu0 0
    %5691 = vmatpush1.bf16.msra.mxu0 %v4222
    %5692 = vmatprep.subr.bf16.mxu0 0
    %5693 = vmatpush1.bf16.msra.mxu0 %v4223
    %5694 = vmatprep.subr.bf16.mxu0 0
    %5695 = vmatpush1.bf16.msra.mxu0 %v4224
    %5696 = vmatprep.subr.bf16.mxu0 0
    %5697 = vmatpush1.bf16.msra.mxu0 %v4225
    %5698 = vmatprep.subr.bf16.mxu0 0
    %5699 = vmatpush1.bf16.msra.mxu0 %v4226
    %5700 = vmatprep.subr.bf16.mxu0 0
    %5701 = vmatpush1.bf16.msra.mxu0 %v4227
    %5702 = vmatprep.subr.bf16.mxu0 0
    %5703 = vmatpush1.bf16.msra.mxu0 %v4228
    %5704 = vmatprep.subr.bf16.mxu0 0
    %5705 = vmatpush1.bf16.msra.mxu0 %v4229
    %5706 = vmatprep.subr.bf16.mxu0 0
    %5707 = vmatpush1.bf16.msra.mxu0 %v4230
    %5708 = vmatprep.subr.bf16.mxu0 0
    %5709 = vmatpush1.bf16.msra.mxu0 %v4231
    %5710 = vmatprep.subr.bf16.mxu0 0
    %5711 = vmatpush1.bf16.msra.mxu0 %v4232
    %5712 = vmatprep.subr.bf16.mxu0 0
    %5713 = vmatpush1.bf16.msra.mxu0 %v4233
    %5714 = vmatprep.mubr.bf16.mxu0 %v1387
    %5715 = vmatmul.mubr.bf16.gmra.mrb[0].mxu0 %v1385
    %v5716 = vpop.f32.mrb[0].mxu0
    %v5717 = vadd.f32 %v5677, %v5716
    %v5718 = vpop.f32.mrb[0].mxu0
    %v5719 = vpop.f32.mrb[0].mxu0
    %v5720 = vpop.f32.mrb[0].mxu0
    %5721 = vdwg.mxu0
    %5722 = vmatprep.subr.bf16.mxu0 0
    %5723 = vmatpush1.bf16.msra.mxu0 %v4234
    %5724 = vmatprep.subr.bf16.mxu0 0
    %5725 = vmatpush1.bf16.msra.mxu0 %v4235
    %5726 = vmatprep.subr.bf16.mxu0 0
    %5727 = vmatpush1.bf16.msra.mxu0 %v4236
    %5728 = vmatprep.subr.bf16.mxu0 0
    %5729 = vmatpush1.bf16.msra.mxu0 %v4237
    %5730 = vmatprep.subr.bf16.mxu0 0
    %5731 = vmatpush1.bf16.msra.mxu0 %v4238
    %5732 = vmatprep.subr.bf16.mxu0 0
    %5733 = vmatpush1.bf16.msra.mxu0 %v4239
    %5734 = vmatprep.subr.bf16.mxu0 0
    %5735 = vmatpush1.bf16.msra.mxu0 %v4240
    %5736 = vmatprep.subr.bf16.mxu0 0
    %5737 = vmatpush1.bf16.msra.mxu0 %v4241
    %5738 = vmatprep.subr.bf16.mxu0 0
    %5739 = vmatpush1.bf16.msra.mxu0 %v4242
    %5740 = vmatprep.subr.bf16.mxu0 0
    %5741 = vmatpush1.bf16.msra.mxu0 %v4243
    %5742 = vmatprep.subr.bf16.mxu0 0
    %5743 = vmatpush1.bf16.msra.mxu0 %v4244
    %5744 = vmatprep.subr.bf16.mxu0 0
    %5745 = vmatpush1.bf16.msra.mxu0 %v4245
    %5746 = vmatprep.subr.bf16.mxu0 0
    %5747 = vmatpush1.bf16.msra.mxu0 %v4246
    %5748 = vmatprep.subr.bf16.mxu0 0
    %5749 = vmatpush1.bf16.msra.mxu0 %v4247
    %5750 = vmatprep.subr.bf16.mxu0 0
    %5751 = vmatpush1.bf16.msra.mxu0 %v4248
    %5752 = vmatprep.subr.bf16.mxu0 0
    %5753 = vmatpush1.bf16.msra.mxu0 %v4249
    %5754 = vmatprep.mubr.bf16.mxu0 %v1384
    %5755 = vmatmul.mubr.bf16.gmra.mrb[0].mxu0 %v1370
    %v5756 = vpop.f32.mrb[0].mxu0
    %v5757 = vadd.f32 %v5717, %v5756
    %v5758 = vpop.f32.mrb[0].mxu0
    %v5759 = vpop.f32.mrb[0].mxu0
    %v5760 = vpop.f32.mrb[0].mxu0
    %5761 = vdwg.mxu0
    %5762 = vmatprep.subr.bf16.mxu0 0
    %5763 = vmatpush1.bf16.msra.mxu0 %v4250
    %5764 = vmatprep.subr.bf16.mxu0 0
    %5765 = vmatpush1.bf16.msra.mxu0 %v4251
    %5766 = vmatprep.subr.bf16.mxu0 0
    %5767 = vmatpush1.bf16.msra.mxu0 %v4252
    %5768 = vmatprep.subr.bf16.mxu0 0
    %5769 = vmatpush1.bf16.msra.mxu0 %v4253
    %5770 = vmatprep.subr.bf16.mxu0 0
    %5771 = vmatpush1.bf16.msra.mxu0 %v4254
    %5772 = vmatprep.subr.bf16.mxu0 0
    %5773 = vmatpush1.bf16.msra.mxu0 %v4255
    %5774 = vmatprep.subr.bf16.mxu0 0
    %5775 = vmatpush1.bf16.msra.mxu0 %v4256
    %5776 = vmatprep.subr.bf16.mxu0 0
    %5777 = vmatpush1.bf16.msra.mxu0 %v4257
    %5778 = vmatprep.subr.bf16.mxu0 0
    %5779 = vmatpush1.bf16.msra.mxu0 %v4258
    %5780 = vmatprep.subr.bf16.mxu0 0
    %5781 = vmatpush1.bf16.msra.mxu0 %v4259
    %5782 = vmatprep.subr.bf16.mxu0 0
    %5783 = vmatpush1.bf16.msra.mxu0 %v4260
    %5784 = vmatprep.subr.bf16.mxu0 0
    %5785 = vmatpush1.bf16.msra.mxu0 %v4261
    %5786 = vmatprep.subr.bf16.mxu0 0
    %5787 = vmatpush1.bf16.msra.mxu0 %v4262
    %5788 = vmatprep.subr.bf16.mxu0 0
    %5789 = vmatpush1.bf16.msra.mxu0 %v4263
    %5790 = vmatprep.subr.bf16.mxu0 0
    %5791 = vmatpush1.bf16.msra.mxu0 %v4264
    %5792 = vmatprep.subr.bf16.mxu0 0
    %5793 = vmatpush1.bf16.msra.mxu0 %v4265
    %5794 = vmatprep.mubr.bf16.mxu0 %v1388
    %5795 = vmatmul.mubr.bf16.gmra.mrb[0].mxu0 %v1386
    %v5796 = vpop.f32.mrb[0].mxu0
    %v5797 = vadd.f32 %v5757, %v5796
    %v5798 = vpop.f32.mrb[0].mxu0
    %v5799 = vpop.f32.mrb[0].mxu0
    %v5800 = vpop.f32.mrb[0].mxu0
    %5801 = vdwg.mxu0
    %5802 = vmatprep.subr.bf16.mxu0 0
    %5803 = vmatpush1.bf16.msra.mxu0 %v4266
    %5804 = vmatprep.subr.bf16.mxu0 0
    %5805 = vmatpush1.bf16.msra.mxu0 %v4267
    %5806 = vmatprep.subr.bf16.mxu0 0
    %5807 = vmatpush1.bf16.msra.mxu0 %v4268
    %5808 = vmatprep.subr.bf16.mxu0 0
    %5809 = vmatpush1.bf16.msra.mxu0 %v4269
    %5810 = vmatprep.subr.bf16.mxu0 0
    %5811 = vmatpush1.bf16.msra.mxu0 %v4270
    %5812 = vmatprep.subr.bf16.mxu0 0
    %5813 = vmatpush1.bf16.msra.mxu0 %v4271
    %5814 = vmatprep.subr.bf16.mxu0 0
    %5815 = vmatpush1.bf16.msra.mxu0 %v4272
    %5816 = vmatprep.subr.bf16.mxu0 0
    %5817 = vmatpush1.bf16.msra.mxu0 %v4273
    %5818 = vmatprep.subr.bf16.mxu0 0
    %5819 = vmatpush1.bf16.msra.mxu0 %v4274
    %5820 = vmatprep.subr.bf16.mxu0 0
    %5821 = vmatpush1.bf16.msra.mxu0 %v4275
    %5822 = vmatprep.subr.bf16.mxu0 0
    %5823 = vmatpush1.bf16.msra.mxu0 %v4276
    %5824 = vmatprep.subr.bf16.mxu0 0
    %5825 = vmatpush1.bf16.msra.mxu0 %v4277
    %5826 = vmatprep.subr.bf16.mxu0 0
    %5827 = vmatpush1.bf16.msra.mxu0 %v4278
    %5828 = vmatprep.subr.bf16.mxu0 0
    %5829 = vmatpush1.bf16.msra.mxu0 %v4279
    %5830 = vmatprep.subr.bf16.mxu0 0
    %5831 = vmatpush1.bf16.msra.mxu0 %v4280
    %5832 = vmatprep.subr.bf16.mxu0 0
    %5833 = vmatpush1.bf16.msra.mxu0 %v4281
    %5834 = vmatprep.mubr.bf16.mxu0 %v1426
    %5835 = vmatmul.mubr.bf16.gmra.mrb[0].mxu0 %v1412
    %v5836 = vpop.f32.mrb[0].mxu0
    %v5837 = vadd.f32 %v5797, %v5836
    %v5838 = vpop.f32.mrb[0].mxu0
    %v5839 = vpop.f32.mrb[0].mxu0
    %v5840 = vpop.f32.mrb[0].mxu0
    %5841 = vdwg.mxu0
    %5842 = vmatprep.subr.bf16.mxu0 0
    %5843 = vmatpush1.bf16.msra.mxu0 %v4282
    %5844 = vmatprep.subr.bf16.mxu0 0
    %5845 = vmatpush1.bf16.msra.mxu0 %v4283
    %5846 = vmatprep.subr.bf16.mxu0 0
    %5847 = vmatpush1.bf16.msra.mxu0 %v4284
    %5848 = vmatprep.subr.bf16.mxu0 0
    %5849 = vmatpush1.bf16.msra.mxu0 %v4285
    %5850 = vmatprep.subr.bf16.mxu0 0
    %5851 = vmatpush1.bf16.msra.mxu0 %v4286
    %5852 = vmatprep.subr.bf16.mxu0 0
    %5853 = vmatpush1.bf16.msra.mxu0 %v4287
    %5854 = vmatprep.subr.bf16.mxu0 0
    %5855 = vmatpush1.bf16.msra.mxu0 %v4288
    %5856 = vmatprep.subr.bf16.mxu0 0
    %5857 = vmatpush1.bf16.msra.mxu0 %v4289
    %5858 = vmatprep.subr.bf16.mxu0 0
    %5859 = vmatpush1.bf16.msra.mxu0 %v4290
    %5860 = vmatprep.subr.bf16.mxu0 0
    %5861 = vmatpush1.bf16.msra.mxu0 %v4291
    %5862 = vmatprep.subr.bf16.mxu0 0
    %5863 = vmatpush1.bf16.msra.mxu0 %v4292
    %5864 = vmatprep.subr.bf16.mxu0 0
    %5865 = vmatpush1.bf16.msra.mxu0 %v4293
    %5866 = vmatprep.subr.bf16.mxu0 0
    %5867 = vmatpush1.bf16.msra.mxu0 %v4294
    %5868 = vmatprep.subr.bf16.mxu0 0
    %5869 = vmatpush1.bf16.msra.mxu0 %v4295
    %5870 = vmatprep.subr.bf16.mxu0 0
    %5871 = vmatpush1.bf16.msra.mxu0 %v4296
    %5872 = vmatprep.subr.bf16.mxu0 0
    %5873 = vmatpush1.bf16.msra.mxu0 %v4297
    %5874 = vmatprep.mubr.bf16.mxu0 %v1436
    %5875 = vmatmul.mubr.bf16.gmra.mrb[0].mxu0 %v1434
    %v5876 = vpop.f32.mrb[0].mxu0
    %v5877 = vadd.f32 %v5837, %v5876
    %v5878 = vpop.f32.mrb[0].mxu0
    %v5879 = vpop.f32.mrb[0].mxu0
    %v5880 = vpop.f32.mrb[0].mxu0
    %5881 = vdwg.mxu0
    %5882 = vmatprep.subr.bf16.mxu0 0
    %5883 = vmatpush1.bf16.msra.mxu0 %v4298
    %5884 = vmatprep.subr.bf16.mxu0 0
    %5885 = vmatpush1.bf16.msra.mxu0 %v4299
    %5886 = vmatprep.subr.bf16.mxu0 0
    %5887 = vmatpush1.bf16.msra.mxu0 %v4300
    %5888 = vmatprep.subr.bf16.mxu0 0
    %5889 = vmatpush1.bf16.msra.mxu0 %v4301
    %5890 = vmatprep.subr.bf16.mxu0 0
    %5891 = vmatpush1.bf16.msra.mxu0 %v4302
    %5892 = vmatprep.subr.bf16.mxu0 0
    %5893 = vmatpush1.bf16.msra.mxu0 %v4303
    %5894 = vmatprep.subr.bf16.mxu0 0
    %5895 = vmatpush1.bf16.msra.mxu0 %v4304
    %5896 = vmatprep.subr.bf16.mxu0 0
    %5897 = vmatpush1.bf16.msra.mxu0 %v4305
    %5898 = vmatprep.subr.bf16.mxu0 0
    %5899 = vmatpush1.bf16.msra.mxu0 %v4306
    %5900 = vmatprep.subr.bf16.mxu0 0
    %5901 = vmatpush1.bf16.msra.mxu0 %v4307
    %5902 = vmatprep.subr.bf16.mxu0 0
    %5903 = vmatpush1.bf16.msra.mxu0 %v4308
    %5904 = vmatprep.subr.bf16.mxu0 0
    %5905 = vmatpush1.bf16.msra.mxu0 %v4309
    %5906 = vmatprep.subr.bf16.mxu0 0
    %5907 = vmatpush1.bf16.msra.mxu0 %v4310
    %5908 = vmatprep.subr.bf16.mxu0 0
    %5909 = vmatpush1.bf16.msra.mxu0 %v4311
    %5910 = vmatprep.subr.bf16.mxu0 0
    %5911 = vmatpush1.bf16.msra.mxu0 %v4312
    %5912 = vmatprep.subr.bf16.mxu0 0
    %5913 = vmatpush1.bf16.msra.mxu0 %v4313
    %5914 = vmatprep.mubr.bf16.mxu0 %v1433
    %5915 = vmatmul.mubr.bf16.gmra.mrb[0].mxu0 %v1419
    %v5916 = vpop.f32.mrb[0].mxu0
    %v5917 = vadd.f32 %v5877, %v5916
    %v5918 = vpop.f32.mrb[0].mxu0
    %v5919 = vpop.f32.mrb[0].mxu0
    %v5920 = vpop.f32.mrb[0].mxu0
    %5921 = vdwg.mxu0
    %5922 = vmatprep.subr.bf16.mxu0 0
    %5923 = vmatpush1.bf16.msra.mxu0 %v4314
    %5924 = vmatprep.subr.bf16.mxu0 0
    %5925 = vmatpush1.bf16.msra.mxu0 %v4315
    %5926 = vmatprep.subr.bf16.mxu0 0
    %5927 = vmatpush1.bf16.msra.mxu0 %v4316
    %5928 = vmatprep.subr.bf16.mxu0 0
    %5929 = vmatpush1.bf16.msra.mxu0 %v4317
    %5930 = vmatprep.subr.bf16.mxu0 0
    %5931 = vmatpush1.bf16.msra.mxu0 %v4318
    %5932 = vmatprep.subr.bf16.mxu0 0
    %5933 = vmatpush1.bf16.msra.mxu0 %v4319
    %5934 = vmatprep.subr.bf16.mxu0 0
    %5935 = vmatpush1.bf16.msra.mxu0 %v4320
    %5936 = vmatprep.subr.bf16.mxu0 0
    %5937 = vmatpush1.bf16.msra.mxu0 %v4321
    %5938 = vmatprep.subr.bf16.mxu0 0
    %5939 = vmatpush1.bf16.msra.mxu0 %v4322
    %5940 = vmatprep.subr.bf16.mxu0 0
    %5941 = vmatpush1.bf16.msra.mxu0 %v4323
    %5942 = vmatprep.subr.bf16.mxu0 0
    %5943 = vmatpush1.bf16.msra.mxu0 %v4324
    %5944 = vmatprep.subr.bf16.mxu0 0
    %5945 = vmatpush1.bf16.msra.mxu0 %v4325
    %5946 = vmatprep.subr.bf16.mxu0 0
    %5947 = vmatpush1.bf16.msra.mxu0 %v4326
    %5948 = vmatprep.subr.bf16.mxu0 0
    %5949 = vmatpush1.bf16.msra.mxu0 %v4327
    %5950 = vmatprep.subr.bf16.mxu0 0
    %5951 = vmatpush1.bf16.msra.mxu0 %v4328
    %5952 = vmatprep.subr.bf16.mxu0 0
    %5953 = vmatpush1.bf16.msra.mxu0 %v4329
    %5954 = vmatprep.mubr.bf16.mxu0 %v1437
    %5955 = vmatmul.mubr.bf16.gmra.mrb[0].mxu0 %v1435
    %v5956 = vpop.f32.mrb[0].mxu0
    %v5957 = vadd.f32 %v5917, %v5956
    %v5958 = vpop.f32.mrb[0].mxu0
    %v5959 = vpop.f32.mrb[0].mxu0
    %v5960 = vpop.f32.mrb[0].mxu0
    %5961 = vdwg.mxu0
    %5962 = vmatprep.subr.bf16.mxu0 0
    %5963 = vmatpush1.bf16.msra.mxu0 %v4330
    %5964 = vmatprep.subr.bf16.mxu0 0
    %5965 = vmatpush1.bf16.msra.mxu0 %v4331
    %5966 = vmatprep.subr.bf16.mxu0 0
    %5967 = vmatpush1.bf16.msra.mxu0 %v4332
    %5968 = vmatprep.subr.bf16.mxu0 0
    %5969 = vmatpush1.bf16.msra.mxu0 %v4333
    %5970 = vmatprep.subr.bf16.mxu0 0
    %5971 = vmatpush1.bf16.msra.mxu0 %v4334
    %5972 = vmatprep.subr.bf16.mxu0 0
    %5973 = vmatpush1.bf16.msra.mxu0 %v4335
    %5974 = vmatprep.subr.bf16.mxu0 0
    %5975 = vmatpush1.bf16.msra.mxu0 %v4336
    %5976 = vmatprep.subr.bf16.mxu0 0
    %5977 = vmatpush1.bf16.msra.mxu0 %v4337
    %5978 = vmatprep.subr.bf16.mxu0 0
    %5979 = vmatpush1.bf16.msra.mxu0 %v4338
    %5980 = vmatprep.subr.bf16.mxu0 0
    %5981 = vmatpush1.bf16.msra.mxu0 %v4339
    %5982 = vmatprep.subr.bf16.mxu0 0
    %5983 = vmatpush1.bf16.msra.mxu0 %v4340
    %5984 = vmatprep.subr.bf16.mxu0 0
    %5985 = vmatpush1.bf16.msra.mxu0 %v4341
    %5986 = vmatprep.subr.bf16.mxu0 0
    %5987 = vmatpush1.bf16.msra.mxu0 %v4342
    %5988 = vmatprep.subr.bf16.mxu0 0
    %5989 = vmatpush1.bf16.msra.mxu0 %v4343
    %5990 = vmatprep.subr.bf16.mxu0 0
    %5991 = vmatpush1.bf16.msra.mxu0 %v4344
    %5992 = vmatprep.subr.bf16.mxu0 0
    %5993 = vmatpush1.bf16.msra.mxu0 %v4345
    %5994 = vmatprep.mubr.bf16.mxu0 %v1475
    %5995 = vmatmul.mubr.bf16.gmra.mrb[0].mxu0 %v1461
    %v5996 = vpop.f32.mrb[0].mxu0
    %v5997 = vadd.f32 %v5957, %v5996
    %v5998 = vpop.f32.mrb[0].mxu0
    %v5999 = vpop.f32.mrb[0].mxu0
    %v6000 = vpop.f32.mrb[0].mxu0
    %6001 = vdwg.mxu0
    %6002 = vmatprep.subr.bf16.mxu0 0
    %6003 = vmatpush1.bf16.msra.mxu0 %v4346
    %6004 = vmatprep.subr.bf16.mxu0 0
    %6005 = vmatpush1.bf16.msra.mxu0 %v4347
    %6006 = vmatprep.subr.bf16.mxu0 0
    %6007 = vmatpush1.bf16.msra.mxu0 %v4348
    %6008 = vmatprep.subr.bf16.mxu0 0
    %6009 = vmatpush1.bf16.msra.mxu0 %v4349
    %6010 = vmatprep.subr.bf16.mxu0 0
    %6011 = vmatpush1.bf16.msra.mxu0 %v4350
    %6012 = vmatprep.subr.bf16.mxu0 0
    %6013 = vmatpush1.bf16.msra.mxu0 %v4351
    %6014 = vmatprep.subr.bf16.mxu0 0
    %6015 = vmatpush1.bf16.msra.mxu0 %v4352
    %6016 = vmatprep.subr.bf16.mxu0 0
    %6017 = vmatpush1.bf16.msra.mxu0 %v4353
    %6018 = vmatprep.subr.bf16.mxu0 0
    %6019 = vmatpush1.bf16.msra.mxu0 %v4354
    %6020 = vmatprep.subr.bf16.mxu0 0
    %6021 = vmatpush1.bf16.msra.mxu0 %v4355
    %6022 = vmatprep.subr.bf16.mxu0 0
    %6023 = vmatpush1.bf16.msra.mxu0 %v4356
    %6024 = vmatprep.subr.bf16.mxu0 0
    %6025 = vmatpush1.bf16.msra.mxu0 %v4357
    %6026 = vmatprep.subr.bf16.mxu0 0
    %6027 = vmatpush1.bf16.msra.mxu0 %v4358
    %6028 = vmatprep.subr.bf16.mxu0 0
    %6029 = vmatpush1.bf16.msra.mxu0 %v4359
    %6030 = vmatprep.subr.bf16.mxu0 0
    %6031 = vmatpush1.bf16.msra.mxu0 %v4360
    %6032 = vmatprep.subr.bf16.mxu0 0
    %6033 = vmatpush1.bf16.msra.mxu0 %v4361
    %6034 = vmatprep.mubr.bf16.mxu0 %v1485
    %6035 = vmatmul.mubr.bf16.gmra.mrb[0].mxu0 %v1483
    %v6036 = vpop.f32.mrb[0].mxu0
    %v6037 = vadd.f32 %v5997, %v6036
    %v6038 = vpop.f32.mrb[0].mxu0
    %v6039 = vpop.f32.mrb[0].mxu0
    %v6040 = vpop.f32.mrb[0].mxu0
    %6041 = vdwg.mxu0
    %6042 = vmatprep.subr.bf16.mxu0 0
    %6043 = vmatpush1.bf16.msra.mxu0 %v4362
    %6044 = vmatprep.subr.bf16.mxu0 0
    %6045 = vmatpush1.bf16.msra.mxu0 %v4363
    %6046 = vmatprep.subr.bf16.mxu0 0
    %6047 = vmatpush1.bf16.msra.mxu0 %v4364
    %6048 = vmatprep.subr.bf16.mxu0 0
    %6049 = vmatpush1.bf16.msra.mxu0 %v4365
    %6050 = vmatprep.subr.bf16.mxu0 0
    %6051 = vmatpush1.bf16.msra.mxu0 %v4366
    %6052 = vmatprep.subr.bf16.mxu0 0
    %6053 = vmatpush1.bf16.msra.mxu0 %v4367
    %6054 = vmatprep.subr.bf16.mxu0 0
    %6055 = vmatpush1.bf16.msra.mxu0 %v4368
    %6056 = vmatprep.subr.bf16.mxu0 0
    %6057 = vmatpush1.bf16.msra.mxu0 %v4369
    %6058 = vmatprep.subr.bf16.mxu0 0
    %6059 = vmatpush1.bf16.msra.mxu0 %v4370
    %6060 = vmatprep.subr.bf16.mxu0 0
    %6061 = vmatpush1.bf16.msra.mxu0 %v4371
    %6062 = vmatprep.subr.bf16.mxu0 0
    %6063 = vmatpush1.bf16.msra.mxu0 %v4372
    %6064 = vmatprep.subr.bf16.mxu0 0
    %6065 = vmatpush1.bf16.msra.mxu0 %v4373
    %6066 = vmatprep.subr.bf16.mxu0 0
    %6067 = vmatpush1.bf16.msra.mxu0 %v4374
    %6068 = vmatprep.subr.bf16.mxu0 0
    %6069 = vmatpush1.bf16.msra.mxu0 %v4375
    %6070 = vmatprep.subr.bf16.mxu0 0
    %6071 = vmatpush1.bf16.msra.mxu0 %v4376
    %6072 = vmatprep.subr.bf16.mxu0 0
    %6073 = vmatpush1.bf16.msra.mxu0 %v4377
    %6074 = vmatprep.mubr.bf16.mxu0 %v1482
    %6075 = vmatmul.mubr.bf16.gmra.mrb[0].mxu0 %v1468
    %v6076 = vpop.f32.mrb[0].mxu0
    %v6077 = vadd.f32 %v6037, %v6076
    %v6078 = vpop.f32.mrb[0].mxu0
    %v6079 = vpop.f32.mrb[0].mxu0
    %v6080 = vpop.f32.mrb[0].mxu0
    %6081 = vdwg.mxu0
    %6082 = vmatprep.subr.bf16.mxu0 0
    %6083 = vmatpush1.bf16.msra.mxu0 %v4378
    %6084 = vmatprep.subr.bf16.mxu0 0
    %6085 = vmatpush1.bf16.msra.mxu0 %v4379
    %6086 = vmatprep.subr.bf16.mxu0 0
    %6087 = vmatpush1.bf16.msra.mxu0 %v4380
    %6088 = vmatprep.subr.bf16.mxu0 0
    %6089 = vmatpush1.bf16.msra.mxu0 %v4381
    %6090 = vmatprep.subr.bf16.mxu0 0
    %6091 = vmatpush1.bf16.msra.mxu0 %v4382
    %6092 = vmatprep.subr.bf16.mxu0 0
    %6093 = vmatpush1.bf16.msra.mxu0 %v4383
    %6094 = vmatprep.subr.bf16.mxu0 0
    %6095 = vmatpush1.bf16.msra.mxu0 %v4384
    %6096 = vmatprep.subr.bf16.mxu0 0
    %6097 = vmatpush1.bf16.msra.mxu0 %v4385
    %6098 = vmatprep.subr.bf16.mxu0 0
    %6099 = vmatpush1.bf16.msra.mxu0 %v4386
    %6100 = vmatprep.subr.bf16.mxu0 0
    %6101 = vmatpush1.bf16.msra.mxu0 %v4387
    %6102 = vmatprep.subr.bf16.mxu0 0
    %6103 = vmatpush1.bf16.msra.mxu0 %v4388
    %6104 = vmatprep.subr.bf16.mxu0 0
    %6105 = vmatpush1.bf16.msra.mxu0 %v4389
    %6106 = vmatprep.subr.bf16.mxu0 0
    %6107 = vmatpush1.bf16.msra.mxu0 %v4390
    %6108 = vmatprep.subr.bf16.mxu0 0
    %6109 = vmatpush1.bf16.msra.mxu0 %v4391
    %6110 = vmatprep.subr.bf16.mxu0 0
    %6111 = vmatpush1.bf16.msra.mxu0 %v4392
    %6112 = vmatprep.subr.bf16.mxu0 0
    %6113 = vmatpush1.bf16.msra.mxu0 %v4393
    %6114 = vmatprep.mubr.bf16.mxu0 %v1486
    %6115 = vmatmul.mubr.bf16.gmra.mrb[0].mxu0 %v1484
    %v6116 = vpop.f32.mrb[0].mxu0
    %v6117 = vadd.f32 %v6077, %v6116
    %v6118 = vpop.f32.mrb[0].mxu0
    %v6119 = vpop.f32.mrb[0].mxu0
    %v6120 = vpop.f32.mrb[0].mxu0
    %6121 = vdwg.mxu0
    %6122 = vmatprep.subr.bf16.mxu0 0
    %6123 = vmatpush1.bf16.msra.mxu0 %v4394
    %6124 = vmatprep.subr.bf16.mxu0 0
    %6125 = vmatpush1.bf16.msra.mxu0 %v4395
    %6126 = vmatprep.subr.bf16.mxu0 0
    %6127 = vmatpush1.bf16.msra.mxu0 %v4396
    %6128 = vmatprep.subr.bf16.mxu0 0
    %6129 = vmatpush1.bf16.msra.mxu0 %v4397
    %6130 = vmatprep.subr.bf16.mxu0 0
    %6131 = vmatpush1.bf16.msra.mxu0 %v4398
    %6132 = vmatprep.subr.bf16.mxu0 0
    %6133 = vmatpush1.bf16.msra.mxu0 %v4399
    %6134 = vmatprep.subr.bf16.mxu0 0
    %6135 = vmatpush1.bf16.msra.mxu0 %v4400
    %6136 = vmatprep.subr.bf16.mxu0 0
    %6137 = vmatpush1.bf16.msra.mxu0 %v4401
    %6138 = vmatprep.subr.bf16.mxu0 0
    %6139 = vmatpush1.bf16.msra.mxu0 %v4402
    %6140 = vmatprep.subr.bf16.mxu0 0
    %6141 = vmatpush1.bf16.msra.mxu0 %v4403
    %6142 = vmatprep.subr.bf16.mxu0 0
    %6143 = vmatpush1.bf16.msra.mxu0 %v4404
    %6144 = vmatprep.subr.bf16.mxu0 0
    %6145 = vmatpush1.bf16.msra.mxu0 %v4405
    %6146 = vmatprep.subr.bf16.mxu0 0
    %6147 = vmatpush1.bf16.msra.mxu0 %v4406
    %6148 = vmatprep.subr.bf16.mxu0 0
    %6149 = vmatpush1.bf16.msra.mxu0 %v4407
    %6150 = vmatprep.subr.bf16.mxu0 0
    %6151 = vmatpush1.bf16.msra.mxu0 %v4408
    %6152 = vmatprep.subr.bf16.mxu0 0
    %6153 = vmatpush1.bf16.msra.mxu0 %v4409
    %6154 = vmatprep.mubr.bf16.mxu0 %v1524
    %6155 = vmatmul.mubr.bf16.gmra.mrb[0].mxu0 %v1510
    %v6156 = vpop.f32.mrb[0].mxu0
    %v6157 = vadd.f32 %v6117, %v6156
    %v6158 = vpop.f32.mrb[0].mxu0
    %v6159 = vpop.f32.mrb[0].mxu0
    %v6160 = vpop.f32.mrb[0].mxu0
    %6161 = vdwg.mxu0
    %6162 = vmatprep.subr.bf16.mxu0 0
    %6163 = vmatpush1.bf16.msra.mxu0 %v4410
    %6164 = vmatprep.subr.bf16.mxu0 0
    %6165 = vmatpush1.bf16.msra.mxu0 %v4411
    %6166 = vmatprep.subr.bf16.mxu0 0
    %6167 = vmatpush1.bf16.msra.mxu0 %v4412
    %6168 = vmatprep.subr.bf16.mxu0 0
    %6169 = vmatpush1.bf16.msra.mxu0 %v4413
    %6170 = vmatprep.subr.bf16.mxu0 0
    %6171 = vmatpush1.bf16.msra.mxu0 %v4414
    %6172 = vmatprep.subr.bf16.mxu0 0
    %6173 = vmatpush1.bf16.msra.mxu0 %v4415
    %6174 = vmatprep.subr.bf16.mxu0 0
    %6175 = vmatpush1.bf16.msra.mxu0 %v4416
    %6176 = vmatprep.subr.bf16.mxu0 0
    %6177 = vmatpush1.bf16.msra.mxu0 %v4417
    %6178 = vmatprep.subr.bf16.mxu0 0
    %6179 = vmatpush1.bf16.msra.mxu0 %v4418
    %6180 = vmatprep.subr.bf16.mxu0 0
    %6181 = vmatpush1.bf16.msra.mxu0 %v4419
    %6182 = vmatprep.subr.bf16.mxu0 0
    %6183 = vmatpush1.bf16.msra.mxu0 %v4420
    %6184 = vmatprep.subr.bf16.mxu0 0
    %6185 = vmatpush1.bf16.msra.mxu0 %v4421
    %6186 = vmatprep.subr.bf16.mxu0 0
    %6187 = vmatpush1.bf16.msra.mxu0 %v4422
    %6188 = vmatprep.subr.bf16.mxu0 0
    %6189 = vmatpush1.bf16.msra.mxu0 %v4423
    %6190 = vmatprep.subr.bf16.mxu0 0
    %6191 = vmatpush1.bf16.msra.mxu0 %v4424
    %6192 = vmatprep.subr.bf16.mxu0 0
    %6193 = vmatpush1.bf16.msra.mxu0 %v4425
    %6194 = vmatprep.mubr.bf16.mxu0 %v1534
    %6195 = vmatmul.mubr.bf16.gmra.mrb[0].mxu0 %v1532
    %v6196 = vpop.f32.mrb[0].mxu0
    %v6197 = vadd.f32 %v6157, %v6196
    %v6198 = vpop.f32.mrb[0].mxu0
    %v6199 = vpop.f32.mrb[0].mxu0
    %v6200 = vpop.f32.mrb[0].mxu0
    %6201 = vdwg.mxu0
    %6202 = vmatprep.subr.bf16.mxu0 0
    %6203 = vmatpush1.bf16.msra.mxu0 %v4426
    %6204 = vmatprep.subr.bf16.mxu0 0
    %6205 = vmatpush1.bf16.msra.mxu0 %v4427
    %6206 = vmatprep.subr.bf16.mxu0 0
    %6207 = vmatpush1.bf16.msra.mxu0 %v4428
    %6208 = vmatprep.subr.bf16.mxu0 0
    %6209 = vmatpush1.bf16.msra.mxu0 %v4429
    %6210 = vmatprep.subr.bf16.mxu0 0
    %6211 = vmatpush1.bf16.msra.mxu0 %v4430
    %6212 = vmatprep.subr.bf16.mxu0 0
    %6213 = vmatpush1.bf16.msra.mxu0 %v4431
    %6214 = vmatprep.subr.bf16.mxu0 0
    %6215 = vmatpush1.bf16.msra.mxu0 %v4432
    %6216 = vmatprep.subr.bf16.mxu0 0
    %6217 = vmatpush1.bf16.msra.mxu0 %v4433
    %6218 = vmatprep.subr.bf16.mxu0 0
    %6219 = vmatpush1.bf16.msra.mxu0 %v4434
    %6220 = vmatprep.subr.bf16.mxu0 0
    %6221 = vmatpush1.bf16.msra.mxu0 %v4435
    %6222 = vmatprep.subr.bf16.mxu0 0
    %6223 = vmatpush1.bf16.msra.mxu0 %v4436
    %6224 = vmatprep.subr.bf16.mxu0 0
    %6225 = vmatpush1.bf16.msra.mxu0 %v4437
    %6226 = vmatprep.subr.bf16.mxu0 0
    %6227 = vmatpush1.bf16.msra.mxu0 %v4438
    %6228 = vmatprep.subr.bf16.mxu0 0
    %6229 = vmatpush1.bf16.msra.mxu0 %v4439
    %6230 = vmatprep.subr.bf16.mxu0 0
    %6231 = vmatpush1.bf16.msra.mxu0 %v4440
    %6232 = vmatprep.subr.bf16.mxu0 0
    %6233 = vmatpush1.bf16.msra.mxu0 %v4441
    %6234 = vmatprep.mubr.bf16.mxu0 %v1531
    %6235 = vmatmul.mubr.bf16.gmra.mrb[0].mxu0 %v1517
    %v6236 = vpop.f32.mrb[0].mxu0
    %v6237 = vadd.f32 %v6197, %v6236
    %v6238 = vpop.f32.mrb[0].mxu0
    %v6239 = vpop.f32.mrb[0].mxu0
    %v6240 = vpop.f32.mrb[0].mxu0
    %6241 = vdwg.mxu0
    %6242 = vmatprep.subr.bf16.mxu0 0
    %6243 = vmatpush1.bf16.msra.mxu0 %v4442
    %6244 = vmatprep.subr.bf16.mxu0 0
    %6245 = vmatpush1.bf16.msra.mxu0 %v4443
    %6246 = vmatprep.subr.bf16.mxu0 0
    %6247 = vmatpush1.bf16.msra.mxu0 %v4444
    %6248 = vmatprep.subr.bf16.mxu0 0
    %6249 = vmatpush1.bf16.msra.mxu0 %v4445
    %6250 = vmatprep.subr.bf16.mxu0 0
    %6251 = vmatpush1.bf16.msra.mxu0 %v4446
    %6252 = vmatprep.subr.bf16.mxu0 0
    %6253 = vmatpush1.bf16.msra.mxu0 %v4447
    %6254 = vmatprep.subr.bf16.mxu0 0
    %6255 = vmatpush1.bf16.msra.mxu0 %v4448
    %6256 = vmatprep.subr.bf16.mxu0 0
    %6257 = vmatpush1.bf16.msra.mxu0 %v4449
    %6258 = vmatprep.subr.bf16.mxu0 0
    %6259 = vmatpush1.bf16.msra.mxu0 %v4450
    %6260 = vmatprep.subr.bf16.mxu0 0
    %6261 = vmatpush1.bf16.msra.mxu0 %v4451
    %6262 = vmatprep.subr.bf16.mxu0 0
    %6263 = vmatpush1.bf16.msra.mxu0 %v4452
    %6264 = vmatprep.subr.bf16.mxu0 0
    %6265 = vmatpush1.bf16.msra.mxu0 %v4453
    %6266 = vmatprep.subr.bf16.mxu0 0
    %6267 = vmatpush1.bf16.msra.mxu0 %v4454
    %6268 = vmatprep.subr.bf16.mxu0 0
    %6269 = vmatpush1.bf16.msra.mxu0 %v4455
    %6270 = vmatprep.subr.bf16.mxu0 0
    %6271 = vmatpush1.bf16.msra.mxu0 %v4456
    %6272 = vmatprep.subr.bf16.mxu0 0
    %6273 = vmatpush1.bf16.msra.mxu0 %v4457
    %6274 = vmatprep.mubr.bf16.mxu0 %v1535
    %6275 = vmatmul.mubr.bf16.gmra.mrb[0].mxu0 %v1533
    %v6276 = vpop.f32.mrb[0].mxu0
    %v6277 = vadd.f32 %v6237, %v6276
    %v6278 = vpop.f32.mrb[0].mxu0
    %v6279 = vpop.f32.mrb[0].mxu0
    %v6280 = vpop.f32.mrb[0].mxu0
    %6281 = vdwg.mxu0
    %6282 = vmatprep.subr.bf16.mxu0 0
    %6283 = vmatpush1.bf16.msra.mxu0 %v4458
    %6284 = vmatprep.subr.bf16.mxu0 0
    %6285 = vmatpush1.bf16.msra.mxu0 %v4459
    %6286 = vmatprep.subr.bf16.mxu0 0
    %6287 = vmatpush1.bf16.msra.mxu0 %v4460
    %6288 = vmatprep.subr.bf16.mxu0 0
    %6289 = vmatpush1.bf16.msra.mxu0 %v4461
    %6290 = vmatprep.subr.bf16.mxu0 0
    %6291 = vmatpush1.bf16.msra.mxu0 %v4462
    %6292 = vmatprep.subr.bf16.mxu0 0
    %6293 = vmatpush1.bf16.msra.mxu0 %v4463
    %6294 = vmatprep.subr.bf16.mxu0 0
    %6295 = vmatpush1.bf16.msra.mxu0 %v4464
    %6296 = vmatprep.subr.bf16.mxu0 0
    %6297 = vmatpush1.bf16.msra.mxu0 %v4465
    %6298 = vmatprep.subr.bf16.mxu0 0
    %6299 = vmatpush1.bf16.msra.mxu0 %v4466
    %6300 = vmatprep.subr.bf16.mxu0 0
    %6301 = vmatpush1.bf16.msra.mxu0 %v4467
    %6302 = vmatprep.subr.bf16.mxu0 0
    %6303 = vmatpush1.bf16.msra.mxu0 %v4468
    %6304 = vmatprep.subr.bf16.mxu0 0
    %6305 = vmatpush1.bf16.msra.mxu0 %v4469
    %6306 = vmatprep.subr.bf16.mxu0 0
    %6307 = vmatpush1.bf16.msra.mxu0 %v4470
    %6308 = vmatprep.subr.bf16.mxu0 0
    %6309 = vmatpush1.bf16.msra.mxu0 %v4471
    %6310 = vmatprep.subr.bf16.mxu0 0
    %6311 = vmatpush1.bf16.msra.mxu0 %v4472
    %6312 = vmatprep.subr.bf16.mxu0 0
    %6313 = vmatpush1.bf16.msra.mxu0 %v4473
    %6314 = vmatprep.mubr.bf16.mxu0 %v1573
    %6315 = vmatmul.mubr.bf16.gmra.mrb[0].mxu0 %v1559
    %v6316 = vpop.f32.mrb[0].mxu0
    %v6317 = vadd.f32 %v6277, %v6316
    %v6318 = vpop.f32.mrb[0].mxu0
    %v6319 = vpop.f32.mrb[0].mxu0
    %v6320 = vpop.f32.mrb[0].mxu0
    %6321 = vdwg.mxu0
    %6322 = vmatprep.subr.bf16.mxu0 0
    %6323 = vmatpush1.bf16.msra.mxu0 %v4474
    %6324 = vmatprep.subr.bf16.mxu0 0
    %6325 = vmatpush1.bf16.msra.mxu0 %v4475
    %6326 = vmatprep.subr.bf16.mxu0 0
    %6327 = vmatpush1.bf16.msra.mxu0 %v4476
    %6328 = vmatprep.subr.bf16.mxu0 0
    %6329 = vmatpush1.bf16.msra.mxu0 %v4477
    %6330 = vmatprep.subr.bf16.mxu0 0
    %6331 = vmatpush1.bf16.msra.mxu0 %v4478
    %6332 = vmatprep.subr.bf16.mxu0 0
    %6333 = vmatpush1.bf16.msra.mxu0 %v4479
    %6334 = vmatprep.subr.bf16.mxu0 0
    %6335 = vmatpush1.bf16.msra.mxu0 %v4480
    %6336 = vmatprep.subr.bf16.mxu0 0
    %6337 = vmatpush1.bf16.msra.mxu0 %v4481
    %6338 = vmatprep.subr.bf16.mxu0 0
    %6339 = vmatpush1.bf16.msra.mxu0 %v4482
    %6340 = vmatprep.subr.bf16.mxu0 0
    %6341 = vmatpush1.bf16.msra.mxu0 %v4483
    %6342 = vmatprep.subr.bf16.mxu0 0
    %6343 = vmatpush1.bf16.msra.mxu0 %v4484
    %6344 = vmatprep.subr.bf16.mxu0 0
    %6345 = vmatpush1.bf16.msra.mxu0 %v4485
    %6346 = vmatprep.subr.bf16.mxu0 0
    %6347 = vmatpush1.bf16.msra.mxu0 %v4486
    %6348 = vmatprep.subr.bf16.mxu0 0
    %6349 = vmatpush1.bf16.msra.mxu0 %v4487
    %6350 = vmatprep.subr.bf16.mxu0 0
    %6351 = vmatpush1.bf16.msra.mxu0 %v4488
    %6352 = vmatprep.subr.bf16.mxu0 0
    %6353 = vmatpush1.bf16.msra.mxu0 %v4489
    %6354 = vmatprep.mubr.bf16.mxu0 %v1583
    %6355 = vmatmul.mubr.bf16.gmra.mrb[0].mxu0 %v1581
    %v6356 = vpop.f32.mrb[0].mxu0
    %v6357 = vadd.f32 %v6317, %v6356
    %v6358 = vpop.f32.mrb[0].mxu0
    %v6359 = vpop.f32.mrb[0].mxu0
    %v6360 = vpop.f32.mrb[0].mxu0
    %6361 = vdwg.mxu0
    %6362 = vmatprep.subr.bf16.mxu0 0
    %6363 = vmatpush1.bf16.msra.mxu0 %v4490
    %6364 = vmatprep.subr.bf16.mxu0 0
    %6365 = vmatpush1.bf16.msra.mxu0 %v4491
    %6366 = vmatprep.subr.bf16.mxu0 0
    %6367 = vmatpush1.bf16.msra.mxu0 %v4492
    %6368 = vmatprep.subr.bf16.mxu0 0
    %6369 = vmatpush1.bf16.msra.mxu0 %v4493
    %6370 = vmatprep.subr.bf16.mxu0 0
    %6371 = vmatpush1.bf16.msra.mxu0 %v4494
    %6372 = vmatprep.subr.bf16.mxu0 0
    %6373 = vmatpush1.bf16.msra.mxu0 %v4495
    %6374 = vmatprep.subr.bf16.mxu0 0
    %6375 = vmatpush1.bf16.msra.mxu0 %v4496
    %6376 = vmatprep.subr.bf16.mxu0 0
    %6377 = vmatpush1.bf16.msra.mxu0 %v4497
    %6378 = vmatprep.subr.bf16.mxu0 0
    %6379 = vmatpush1.bf16.msra.mxu0 %v4498
    %6380 = vmatprep.subr.bf16.mxu0 0
    %6381 = vmatpush1.bf16.msra.mxu0 %v4499
    %6382 = vmatprep.subr.bf16.mxu0 0
    %6383 = vmatpush1.bf16.msra.mxu0 %v4500
    %6384 = vmatprep.subr.bf16.mxu0 0
    %6385 = vmatpush1.bf16.msra.mxu0 %v4501
    %6386 = vmatprep.subr.bf16.mxu0 0
    %6387 = vmatpush1.bf16.msra.mxu0 %v4502
    %6388 = vmatprep.subr.bf16.mxu0 0
    %6389 = vmatpush1.bf16.msra.mxu0 %v4503
    %6390 = vmatprep.subr.bf16.mxu0 0
    %6391 = vmatpush1.bf16.msra.mxu0 %v4504
    %6392 = vmatprep.subr.bf16.mxu0 0
    %6393 = vmatpush1.bf16.msra.mxu0 %v4505
    %6394 = vmatprep.mubr.bf16.mxu0 %v1580
    %6395 = vmatmul.mubr.bf16.gmra.mrb[0].mxu0 %v1566
    %v6396 = vpop.f32.mrb[0].mxu0
    %v6397 = vadd.f32 %v6357, %v6396
    %v6398 = vpop.f32.mrb[0].mxu0
    %v6399 = vpop.f32.mrb[0].mxu0
    %v6400 = vpop.f32.mrb[0].mxu0
    %6401 = vdwg.mxu0
    %6402 = vmatprep.subr.bf16.mxu0 0
    %6403 = vmatpush1.bf16.msra.mxu0 %v4506
    %6404 = vmatprep.subr.bf16.mxu0 0
    %6405 = vmatpush1.bf16.msra.mxu0 %v4507
    %6406 = vmatprep.subr.bf16.mxu0 0
    %6407 = vmatpush1.bf16.msra.mxu0 %v4508
    %6408 = vmatprep.subr.bf16.mxu0 0
    %6409 = vmatpush1.bf16.msra.mxu0 %v4509
    %6410 = vmatprep.subr.bf16.mxu0 0
    %6411 = vmatpush1.bf16.msra.mxu0 %v4510
    %6412 = vmatprep.subr.bf16.mxu0 0
    %6413 = vmatpush1.bf16.msra.mxu0 %v4511
    %6414 = vmatprep.subr.bf16.mxu0 0
    %6415 = vmatpush1.bf16.msra.mxu0 %v4512
    %6416 = vmatprep.subr.bf16.mxu0 0
    %6417 = vmatpush1.bf16.msra.mxu0 %v4513
    %6418 = vmatprep.subr.bf16.mxu0 0
    %6419 = vmatpush1.bf16.msra.mxu0 %v4514
    %6420 = vmatprep.subr.bf16.mxu0 0
    %6421 = vmatpush1.bf16.msra.mxu0 %v4515
    %6422 = vmatprep.subr.bf16.mxu0 0
    %6423 = vmatpush1.bf16.msra.mxu0 %v4516
    %6424 = vmatprep.subr.bf16.mxu0 0
    %6425 = vmatpush1.bf16.msra.mxu0 %v4517
    %6426 = vmatprep.subr.bf16.mxu0 0
    %6427 = vmatpush1.bf16.msra.mxu0 %v4518
    %6428 = vmatprep.subr.bf16.mxu0 0
    %6429 = vmatpush1.bf16.msra.mxu0 %v4519
    %6430 = vmatprep.subr.bf16.mxu0 0
    %6431 = vmatpush1.bf16.msra.mxu0 %v4520
    %6432 = vmatprep.subr.bf16.mxu0 0
    %6433 = vmatpush1.bf16.msra.mxu0 %v4521
    %6434 = vmatprep.mubr.bf16.mxu0 %v1584
    %6435 = vmatmul.mubr.bf16.gmra.mrb[0].mxu0 %v1582
    %v6436 = vpop.f32.mrb[0].mxu0
    %v6437 = vadd.f32 %v6397, %v6436
    %v6438 = vpop.f32.mrb[0].mxu0
    %v6439 = vpop.f32.mrb[0].mxu0
    %v6440 = vpop.f32.mrb[0].mxu0
    %6441 = vdwg.mxu0
    %6442 = vmatprep.subr.bf16.mxu0 0
    %6443 = vmatpush1.bf16.msra.mxu0 %v4522
    %6444 = vmatprep.subr.bf16.mxu0 0
    %6445 = vmatpush1.bf16.msra.mxu0 %v4523
    %6446 = vmatprep.subr.bf16.mxu0 0
    %6447 = vmatpush1.bf16.msra.mxu0 %v4524
    %6448 = vmatprep.subr.bf16.mxu0 0
    %6449 = vmatpush1.bf16.msra.mxu0 %v4525
    %6450 = vmatprep.subr.bf16.mxu0 0
    %6451 = vmatpush1.bf16.msra.mxu0 %v4526
    %6452 = vmatprep.subr.bf16.mxu0 0
    %6453 = vmatpush1.bf16.msra.mxu0 %v4527
    %6454 = vmatprep.subr.bf16.mxu0 0
    %6455 = vmatpush1.bf16.msra.mxu0 %v4528
    %6456 = vmatprep.subr.bf16.mxu0 0
    %6457 = vmatpush1.bf16.msra.mxu0 %v4529
    %6458 = vmatprep.subr.bf16.mxu0 0
    %6459 = vmatpush1.bf16.msra.mxu0 %v4530
    %6460 = vmatprep.subr.bf16.mxu0 0
    %6461 = vmatpush1.bf16.msra.mxu0 %v4531
    %6462 = vmatprep.subr.bf16.mxu0 0
    %6463 = vmatpush1.bf16.msra.mxu0 %v4532
    %6464 = vmatprep.subr.bf16.mxu0 0
    %6465 = vmatpush1.bf16.msra.mxu0 %v4533
    %6466 = vmatprep.subr.bf16.mxu0 0
    %6467 = vmatpush1.bf16.msra.mxu0 %v4534
    %6468 = vmatprep.subr.bf16.mxu0 0
    %6469 = vmatpush1.bf16.msra.mxu0 %v4535
    %6470 = vmatprep.subr.bf16.mxu0 0
    %6471 = vmatpush1.bf16.msra.mxu0 %v4536
    %6472 = vmatprep.subr.bf16.mxu0 0
    %6473 = vmatpush1.bf16.msra.mxu0 %v4537
    %6474 = vmatprep.mubr.bf16.mxu0 %v1622
    %6475 = vmatmul.mubr.bf16.gmra.mrb[0].mxu0 %v1608
    %v6476 = vpop.f32.mrb[0].mxu0
    %v6477 = vadd.f32 %v6437, %v6476
    %v6478 = vpop.f32.mrb[0].mxu0
    %v6479 = vpop.f32.mrb[0].mxu0
    %v6480 = vpop.f32.mrb[0].mxu0
    %6481 = vdwg.mxu0
    %6482 = vmatprep.subr.bf16.mxu0 0
    %6483 = vmatpush1.bf16.msra.mxu0 %v4538
    %6484 = vmatprep.subr.bf16.mxu0 0
    %6485 = vmatpush1.bf16.msra.mxu0 %v4539
    %6486 = vmatprep.subr.bf16.mxu0 0
    %6487 = vmatpush1.bf16.msra.mxu0 %v4540
    %6488 = vmatprep.subr.bf16.mxu0 0
    %6489 = vmatpush1.bf16.msra.mxu0 %v4541
    %6490 = vmatprep.subr.bf16.mxu0 0
    %6491 = vmatpush1.bf16.msra.mxu0 %v4542
    %6492 = vmatprep.subr.bf16.mxu0 0
    %6493 = vmatpush1.bf16.msra.mxu0 %v4543
    %6494 = vmatprep.subr.bf16.mxu0 0
    %6495 = vmatpush1.bf16.msra.mxu0 %v4544
    %6496 = vmatprep.subr.bf16.mxu0 0
    %6497 = vmatpush1.bf16.msra.mxu0 %v4545
    %6498 = vmatprep.subr.bf16.mxu0 0
    %6499 = vmatpush1.bf16.msra.mxu0 %v4546
    %6500 = vmatprep.subr.bf16.mxu0 0
    %6501 = vmatpush1.bf16.msra.mxu0 %v4547
    %6502 = vmatprep.subr.bf16.mxu0 0
    %6503 = vmatpush1.bf16.msra.mxu0 %v4548
    %6504 = vmatprep.subr.bf16.mxu0 0
    %6505 = vmatpush1.bf16.msra.mxu0 %v4549
    %6506 = vmatprep.subr.bf16.mxu0 0
    %6507 = vmatpush1.bf16.msra.mxu0 %v4550
    %6508 = vmatprep.subr.bf16.mxu0 0
    %6509 = vmatpush1.bf16.msra.mxu0 %v4551
    %6510 = vmatprep.subr.bf16.mxu0 0
    %6511 = vmatpush1.bf16.msra.mxu0 %v4552
    %6512 = vmatprep.subr.bf16.mxu0 0
    %6513 = vmatpush1.bf16.msra.mxu0 %v4553
    %6514 = vmatprep.mubr.bf16.mxu0 %v1632
    %6515 = vmatmul.mubr.bf16.gmra.mrb[0].mxu0 %v1630
    %v6516 = vpop.f32.mrb[0].mxu0
    %v6517 = vadd.f32 %v6477, %v6516
    %v6518 = vpop.f32.mrb[0].mxu0
    %v6519 = vpop.f32.mrb[0].mxu0
    %v6520 = vpop.f32.mrb[0].mxu0
    %6521 = vdwg.mxu0
    %6522 = vmatprep.subr.bf16.mxu0 0
    %6523 = vmatpush1.bf16.msra.mxu0 %v4554
    %6524 = vmatprep.subr.bf16.mxu0 0
    %6525 = vmatpush1.bf16.msra.mxu0 %v4555
    %6526 = vmatprep.subr.bf16.mxu0 0
    %6527 = vmatpush1.bf16.msra.mxu0 %v4556
    %6528 = vmatprep.subr.bf16.mxu0 0
    %6529 = vmatpush1.bf16.msra.mxu0 %v4557
    %6530 = vmatprep.subr.bf16.mxu0 0
    %6531 = vmatpush1.bf16.msra.mxu0 %v4558
    %6532 = vmatprep.subr.bf16.mxu0 0
    %6533 = vmatpush1.bf16.msra.mxu0 %v4559
    %6534 = vmatprep.subr.bf16.mxu0 0
    %6535 = vmatpush1.bf16.msra.mxu0 %v4560
    %6536 = vmatprep.subr.bf16.mxu0 0
    %6537 = vmatpush1.bf16.msra.mxu0 %v4561
    %6538 = vmatprep.subr.bf16.mxu0 0
    %6539 = vmatpush1.bf16.msra.mxu0 %v4562
    %6540 = vmatprep.subr.bf16.mxu0 0
    %6541 = vmatpush1.bf16.msra.mxu0 %v4563
    %6542 = vmatprep.subr.bf16.mxu0 0
    %6543 = vmatpush1.bf16.msra.mxu0 %v4564
    %6544 = vmatprep.subr.bf16.mxu0 0
    %6545 = vmatpush1.bf16.msra.mxu0 %v4565
    %6546 = vmatprep.subr.bf16.mxu0 0
    %6547 = vmatpush1.bf16.msra.mxu0 %v4566
    %6548 = vmatprep.subr.bf16.mxu0 0
    %6549 = vmatpush1.bf16.msra.mxu0 %v4567
    %6550 = vmatprep.subr.bf16.mxu0 0
    %6551 = vmatpush1.bf16.msra.mxu0 %v4568
    %6552 = vmatprep.subr.bf16.mxu0 0
    %6553 = vmatpush1.bf16.msra.mxu0 %v4569
    %6554 = vmatprep.mubr.bf16.mxu0 %v1629
    %6555 = vmatmul.mubr.bf16.gmra.mrb[0].mxu0 %v1615
    %v6556 = vpop.f32.mrb[0].mxu0
    %v6557 = vadd.f32 %v6517, %v6556
    %v6558 = vpop.f32.mrb[0].mxu0
    %v6559 = vpop.f32.mrb[0].mxu0
    %v6560 = vpop.f32.mrb[0].mxu0
    %6561 = vdwg.mxu0
    %6562 = vmatprep.subr.bf16.mxu0 0
    %6563 = vmatpush1.bf16.msra.mxu0 %v4570
    %6564 = vmatprep.subr.bf16.mxu0 0
    %6565 = vmatpush1.bf16.msra.mxu0 %v4571
    %6566 = vmatprep.subr.bf16.mxu0 0
    %6567 = vmatpush1.bf16.msra.mxu0 %v4572
    %6568 = vmatprep.subr.bf16.mxu0 0
    %6569 = vmatpush1.bf16.msra.mxu0 %v4573
    %6570 = vmatprep.subr.bf16.mxu0 0
    %6571 = vmatpush1.bf16.msra.mxu0 %v4574
    %6572 = vmatprep.subr.bf16.mxu0 0
    %6573 = vmatpush1.bf16.msra.mxu0 %v4575
    %6574 = vmatprep.subr.bf16.mxu0 0
    %6575 = vmatpush1.bf16.msra.mxu0 %v4576
    %6576 = vmatprep.subr.bf16.mxu0 0
    %6577 = vmatpush1.bf16.msra.mxu0 %v4577
    %6578 = vmatprep.subr.bf16.mxu0 0
    %6579 = vmatpush1.bf16.msra.mxu0 %v4578
    %6580 = vmatprep.subr.bf16.mxu0 0
    %6581 = vmatpush1.bf16.msra.mxu0 %v4579
    %6582 = vmatprep.subr.bf16.mxu0 0
    %6583 = vmatpush1.bf16.msra.mxu0 %v4580
    %6584 = vmatprep.subr.bf16.mxu0 0
    %6585 = vmatpush1.bf16.msra.mxu0 %v4581
    %6586 = vmatprep.subr.bf16.mxu0 0
    %6587 = vmatpush1.bf16.msra.mxu0 %v4582
    %6588 = vmatprep.subr.bf16.mxu0 0
    %6589 = vmatpush1.bf16.msra.mxu0 %v4583
    %6590 = vmatprep.subr.bf16.mxu0 0
    %6591 = vmatpush1.bf16.msra.mxu0 %v4584
    %6592 = vmatprep.subr.bf16.mxu0 0
    %6593 = vmatpush1.bf16.msra.mxu0 %v4585
    %6594 = vmatprep.mubr.bf16.mxu0 %v1633
    %6595 = vmatmul.mubr.bf16.gmra.mrb[0].mxu0 %v1631
    %v6596 = vpop.f32.mrb[0].mxu0
    %v6597 = vadd.f32 %v6557, %v6596
    %v6598 = vpop.f32.mrb[0].mxu0
    %v6599 = vpop.f32.mrb[0].mxu0
    %v6600 = vpop.f32.mrb[0].mxu0
    %6601 = vdwg.mxu0
    %v6602 = vmax.f32 %v6597, 0.0
    %6603 = vst [vmem:[#allocation2] sm:$0x3] %v6602
    // Predicated region
    $region14: #{center_forward.3} parent=1 // pred_check
      _
    $region15: #{center_forward.3} parent=1 // pred_check_branch
      %6605 = sbr.rel (0) target = $region17
    $region16: #{center_forward.3} parent=1 // pred_region
      %s6607 = ssub.s32 32, 32
      %6608 = vsyncadd [#allocation3], %s6607
      %s6610 = sshll.u32 [#allocation2], 4
      %s6611 = int_to_ptr.vmem [resolvable:$true] %s6610
      %6613 = dma.vmem_to_hbm [thread:$0]  %s6611, 32, %s3, [#allocation3]
    $region17: #{center_forward.3} parent=1 // pred_fallthru
      _
    // Predicated region
    $region18: #{center_forward.3} parent=1 // pred_check
      _
    $region19: #{center_forward.3} parent=1 // pred_check_branch
      %6615 = sbr.rel (0) target = $region21
    $region20: #{center_forward.3} parent=1 // pred_region
      %6616 = dma.done [#allocation3], 32
    $region21: #{center_forward.3} parent=1 // pred_fallthru
      _
    %6617 = vsyncpa [#allocation3], 1

</llo_original>
